<compile_context>
chip_gen: v6e
topology: v6e:2x2x1
jax: 0.10.0
libtpu: 0.0.40
codegen_flags: <defaults>
</compile_context>

<pallas_src>
import functools

import jax
import jax.numpy as jnp
from jax.experimental import pallas as pl
from jax.experimental.pallas import tpu as pltpu

EPS = 1e-5


# ---------------------------------------------------------------------------
# Pass A: conv1 (1x1) as a matmul + partial BN1 statistics (sum / sum-of-sq).
def _conv1_kernel(x_ref, w1_ref, y1_ref, st_ref):
    y1 = jnp.dot(x_ref[...], w1_ref[...], preferred_element_type=jnp.float32)
    y1_ref[...] = y1
    p = y1.shape[1]
    st_ref[...] = jnp.concatenate(
        [jnp.sum(y1, axis=0, keepdims=True),
         jnp.sum(y1 * y1, axis=0, keepdims=True),
         jnp.zeros((6, p), jnp.float32)], axis=0)


# ---------------------------------------------------------------------------
# Pass B: BN1 + ReLU, conv2 (3x3, pad=1) as 9 accumulating MXU matmuls over a
# bf16-staged (prev|cur|next) row window, + partial BN2 statistics.
def _conv2_kernel(tm, wp, y1p_ref, y1c_ref, y1n_ref, mp_ref, mc_ref, mn_ref,
                  s1_ref, t1_ref, w2_ref, y2_ref, st_ref, apad_ref):
    p = y1c_ref.shape[1]

    def act(y_ref, m_ref):
        # BN affine (precomputed scale/shift) + ReLU, halo rows re-zeroed so
        # conv2 sees zero padding; emitted directly in bf16 for the MXU.
        a = jnp.maximum(y_ref[...] * s1_ref[...] + t1_ref[...], 0.0) * m_ref[...]
        return a.astype(jnp.bfloat16)

    # Stage prev / cur / next tiles (sublane-aligned writes: tm % 16 == 0).
    apad_ref[pl.ds(0, tm), :] = act(y1p_ref, mp_ref)
    apad_ref[pl.ds(tm, tm), :] = act(y1c_ref, mc_ref)
    apad_ref[pl.ds(2 * tm, tm), :] = act(y1n_ref, mn_ref)

    acc = jnp.zeros((tm, p), jnp.float32)
    for t in range(9):
        ky, kx = t // 3, t % 3
        off = (ky - 1) * wp + (kx - 1)
        tap = apad_ref[pl.ds(tm + off, tm), :]          # shifted window slice
        acc = acc + jnp.dot(tap, w2_ref[t], preferred_element_type=jnp.float32)

    y2 = acc * mc_ref[...]                               # zero halo output rows
    y2_ref[...] = y2
    st_ref[...] = jnp.concatenate(
        [jnp.sum(y2, axis=0, keepdims=True),
         jnp.sum(y2 * y2, axis=0, keepdims=True),
         jnp.zeros((6, p), jnp.float32)], axis=0)


# ---------------------------------------------------------------------------
# Pass C: BN2 + ReLU + conv3 (1x1) + partial BN3 statistics.
def _conv3_kernel(y2_ref, mc_ref, s2_ref, t2_ref, w3_ref, y3_ref, st_ref):
    a2 = (jnp.maximum(y2_ref[...] * s2_ref[...] + t2_ref[...], 0.0)
          * mc_ref[...]).astype(jnp.bfloat16)
    y3 = jnp.dot(a2, w3_ref[...], preferred_element_type=jnp.float32)
    y3_ref[...] = y3
    c = y3.shape[1]
    st_ref[...] = jnp.concatenate(
        [jnp.sum(y3, axis=0, keepdims=True),
         jnp.sum(y3 * y3, axis=0, keepdims=True),
         jnp.zeros((6, c), jnp.float32)], axis=0)


# ---------------------------------------------------------------------------
# Pass D: BN3 + residual add (f32) + ReLU.
def _epilogue_kernel(y3_ref, x_ref, s3_ref, t3_ref, o_ref):
    o_ref[...] = jnp.maximum(
        y3_ref[...] * s3_ref[...] + t3_ref[...] + x_ref[...], 0.0)


# ---------------------------------------------------------------------------
def _bn_affine(stats, gamma, beta, count):
    """Reduce per-tile partial sums -> per-channel BN scale/shift (f32)."""
    p = stats.shape[-1]
    st = stats.reshape(-1, 8, p)
    s = jnp.sum(st[:, 0], axis=0)
    ss = jnp.sum(st[:, 1], axis=0)
    mean = s / count
    var = ss / count - mean * mean          # single-pass variance (f32 sums)
    scale = gamma * jax.lax.rsqrt(var + EPS)
    shift = beta - mean * scale
    return scale.reshape(1, p), shift.reshape(1, p)


def bottleneck_forward(x_nchw, params, tile_rows=256):
    """Pallas implementation of Bottleneck.forward (stride=1, downsample=None)."""
    N, Cin, H, W = x_nchw.shape
    P = params["w1"].shape[0]                       # planes
    Cout = 4 * P
    assert Cin == Cout, "identity residual requires inplanes == planes * 4"

    Hp, Wp = H + 2, W + 2
    Npad = N * Hp * Wp
    TM = tile_rows
    assert TM % 16 == 0 and TM >= Wp + 2, "tile must cover the 3x3 row halo"
    nt = -(-Npad // TM)
    Nr = nt * TM
    count = float(N * H * W)

    # NCHW -> NHWC, one-pixel zero spatial halo, flatten, zero tail to Nr rows.
    x_nhwc = jnp.transpose(x_nchw, (0, 2, 3, 1)).astype(jnp.float32)
    x_flat = jnp.pad(x_nhwc, ((0, 0), (1, 1), (1, 1), (0, 0))).reshape(Npad, Cin)
    x_flat = jnp.pad(x_flat, ((0, Nr - Npad), (0, 0)))
    x_bf16 = x_flat.astype(jnp.bfloat16)            # conv1 input / DMA in bf16

    # Interior-pixel mask (1.0 inside, 0.0 on halo / tail rows), shape (Nr, 1).
    mask = jnp.pad(jnp.ones((N, H, W, 1), jnp.float32),
                   ((0, 0), (1, 1), (1, 1), (0, 0))).reshape(Npad, 1)
    mask = jnp.pad(mask, ((0, Nr - Npad), (0, 0)))

    # Kernel-friendly weight layouts (bf16 for the MXU).
    w1 = jnp.transpose(params["w1"][:, :, 0, 0]).astype(jnp.bfloat16)          # (Cin, P)
    w2 = jnp.transpose(params["w2"], (2, 3, 1, 0)).reshape(9, P, P)            # (tap, Pin, Pout)
    w2 = w2.astype(jnp.bfloat16)
    w3 = jnp.transpose(params["w3"][:, :, 0, 0]).astype(jnp.bfloat16)          # (P, 4P)
    g1, b1 = params["g1"].astype(jnp.float32), params["b1"].astype(jnp.float32)
    g2, b2 = params["g2"].astype(jnp.float32), params["b2"].astype(jnp.float32)
    g3, b3 = params["g3"].astype(jnp.float32), params["b3"].astype(jnp.float32)

    parallel = pltpu.CompilerParams(dimension_semantics=("parallel",))
    row = lambda c: pl.BlockSpec((TM, c), lambda i: (i, 0))
    prev = lambda c: pl.BlockSpec((TM, c), lambda i: (jnp.maximum(i - 1, 0), 0))
    nxt = lambda c: pl.BlockSpec((TM, c), lambda i: (jnp.minimum(i + 1, nt - 1), 0))
    const2 = lambda shape: pl.BlockSpec(shape, lambda i: (0, 0))
    stat = lambda c: pl.BlockSpec((8, c), lambda i: (i, 0))

    # ---- Pass A: conv1 + BN1 partial stats ----------------------------------
    y1, st1 = pl.pallas_call(
        _conv1_kernel,
        grid=(nt,),
        in_specs=[row(Cin), const2((Cin, P))],
        out_specs=[row(P), stat(P)],
        out_shape=[jax.ShapeDtypeStruct((Nr, P), jnp.float32),
                   jax.ShapeDtypeStruct((nt * 8, P), jnp.float32)],
        compiler_params=parallel,
    )(x_bf16, w1)
    scale1, shift1 = _bn_affine(st1, g1, b1, count)

    # ---- Pass B: BN1 + ReLU + conv2 (3x3) + BN2 partial stats ----------------
    y2, st2 = pl.pallas_call(
        functools.partial(_conv2_kernel, TM, Wp),
        grid=(nt,),
        in_specs=[prev(P), row(P), nxt(P),
                  prev(1), row(1), nxt(1),
                  const2((1, P)), const2((1, P)),
                  pl.BlockSpec((9, P, P), lambda i: (0, 0, 0))],
        out_specs=[row(P), stat(P)],
        out_shape=[jax.ShapeDtypeStruct((Nr, P), jnp.float32),
                   jax.ShapeDtypeStruct((nt * 8, P), jnp.float32)],
        scratch_shapes=[pltpu.VMEM((3 * TM, P), jnp.bfloat16)],
        compiler_params=parallel,
    )(y1, y1, y1, mask, mask, mask, scale1, shift1, w2)
    scale2, shift2 = _bn_affine(st2, g2, b2, count)

    # ---- Pass C: BN2 + ReLU + conv3 (1x1) + BN3 partial stats ----------------
    y3, st3 = pl.pallas_call(
        _conv3_kernel,
        grid=(nt,),
        in_specs=[row(P), row(1), const2((1, P)), const2((1, P)),
                  const2((P, Cout))],
        out_specs=[row(Cout), stat(Cout)],
        out_shape=[jax.ShapeDtypeStruct((Nr, Cout), jnp.float32),
                   jax.ShapeDtypeStruct((nt * 8, Cout), jnp.float32)],
        compiler_params=parallel,
    )(y2, mask, scale2, shift2, w3)
    scale3, shift3 = _bn_affine(st3, g3, b3, count)

    # ---- Pass D: BN3 + residual (f32) + ReLU ---------------------------------
    out_flat = pl.pallas_call(
        _epilogue_kernel,
        grid=(nt,),
        in_specs=[row(Cout), row(Cout), const2((1, Cout)), const2((1, Cout))],
        out_specs=row(Cout),
        out_shape=jax.ShapeDtypeStruct((Nr, Cout), jnp.float32),
        compiler_params=parallel,
    )(y3, x_flat, scale3, shift3)

    # Drop tail + halo rows/cols and return to NCHW.
    out = out_flat[:Npad].reshape(N, Hp, Wp, Cout)[:, 1:H + 1, 1:W + 1, :]
    return jnp.transpose(out, (0, 3, 1, 2))


# ---------------------------------------------------------------------------
def bottleneck_ref(x_nchw, params):
    """Pure-JAX reference with identical semantics.

    Conv operands are cast to bf16 (f32 accumulation) to mirror the kernel's
    MXU precision; BatchNorm (training-mode batch stats, biased variance,
    eps=1e-5), ReLU and the residual add are computed in f32.
    """
    x = jnp.transpose(x_nchw, (0, 2, 3, 1)).astype(jnp.float32)

    def conv(a, w_oihw, pad):
        w_hwio = jnp.transpose(w_oihw, (2, 3, 1, 0))
        return jax.lax.conv_general_dilated(
            a.astype(jnp.bfloat16), w_hwio.astype(jnp.bfloat16), (1, 1), pad,
            dimension_numbers=("NHWC", "HWIO", "NHWC"),
            preferred_element_type=jnp.float32)

    def bn(a, g, b):
        mu = jnp.mean(a, axis=(0, 1, 2), keepdims=True)
        var = jnp.mean(jnp.square(a - mu), axis=(0, 1, 2), keepdims=True)
        return ((a - mu) * jax.lax.rsqrt(var + EPS)
                * g.reshape(1, 1, 1, -1) + b.reshape(1, 1, 1, -1))

    out = jax.nn.relu(bn(conv(x, params["w1"], "VALID"), params["g1"], params["b1"]))
    out = jax.nn.relu(bn(conv(out, params["w2"], "SAME"), params["g2"], params["b2"]))
    out = bn(conv(out, params["w3"], "VALID"), params["g3"], params["b3"])
    out = jax.nn.relu(out + x)
    return jnp.transpose(out, (0, 3, 1, 2))


if __name__ == "__main__":
    planes, inplanes = 8, 32          # expansion=4, downsample=None -> inplanes == planes*4
    N, H, W = 2, 16, 16

    key = jax.random.PRNGKey(0)
    k = jax.random.split(key, 4)
    x = jax.random.normal(k[0], (N, inplanes, H, W), jnp.float32)

    # Deterministic parameter init (shapes follow Bottleneck.__init__;
    # BatchNorm weight=1 / bias=0 like PyTorch's default init).
    params = {
        "w1": jax.random.normal(k[1], (planes, inplanes, 1, 1), jnp.float32) * 0.1,
        "w2": jax.random.normal(k[2], (planes, planes, 3, 3), jnp.float32) * 0.1,
        "w3": jax.random.normal(k[3], (planes * 4, planes, 1, 1), jnp.float32) * 0.1,
        "g1": jnp.ones((planes,), jnp.float32),      "b1": jnp.zeros((planes,), jnp.float32),
        "g2": jnp.ones((planes,), jnp.float32),      "b2": jnp.zeros((planes,), jnp.float32),
        "g3": jnp.ones((planes * 4,), jnp.float32),  "b3": jnp.zeros((planes * 4,), jnp.float32),
    }

    fwd = jax.jit(bottleneck_forward)
    out = jax.block_until_ready(fwd(x, params))
    ref = jax.block_until_ready(bottleneck_ref(x, params))

    assert out.shape == (N, inplanes, H, W)
    max_err = float(jnp.max(jnp.abs(out - ref)))
    if max_err < 1e-2:
        print("KERNEL_OK")
    else:
        raise SystemExit(f"mismatch: max abs err {max_err}")
</pallas_src>

<mosaic_0001>
module attributes {stable_mosaic.version = 11 : i64} {
  func.func @_conv1_kernel(%arg0: i32, %arg1: memref<256x32xbf16, #tpu.memory_space<vmem>>, %arg2: memref<32x8xbf16, #tpu.memory_space<vmem>>, %arg3: memref<256x8xf32, #tpu.memory_space<vmem>>, %arg4: memref<8x8xf32, #tpu.memory_space<vmem>>) attributes {dimension_semantics = [#tpu.dimension_semantics<parallel>], iteration_bounds = array<i64: 3>, scalar_prefetch = 0 : i64, scratch_operands = 0 : i64, tpu.core_type = #tpu.core_type<tc>, window_params = [{transform_indices = @transform_0, window_bounds = array<i64: 256, 32>}, {pipeline_mode = #tpu.pipeline_mode<synchronous>, transform_indices = @transform_1, window_bounds = array<i64: 32, 8>}, {transform_indices = @transform_2, window_bounds = array<i64: 256, 8>}, {transform_indices = @transform_3, window_bounds = array<i64: 8, 8>}]} {
    %c0 = arith.constant 0 : index
    %c0_0 = arith.constant 0 : index
    %0 = vector.load %arg1[%c0, %c0_0] : memref<256x32xbf16, #tpu.memory_space<vmem>>, vector<256x32xbf16>
    %c0_1 = arith.constant 0 : index
    %c0_2 = arith.constant 0 : index
    %1 = vector.load %arg2[%c0_1, %c0_2] : memref<32x8xbf16, #tpu.memory_space<vmem>>, vector<32x8xbf16>
    %cst = arith.constant dense<0.000000e+00> : vector<256x8xf32>
    %2 = tpu.matmul %0, %1, %cst {dimension_numbers = #tpu.dot_dimension_numbers<[1], [0], [0], [1], [0, 0, 1, 1], [], []>} : vector<256x32xbf16>, vector<32x8xbf16>, vector<256x8xf32> -> vector<256x8xf32>
    %c0_3 = arith.constant 0 : index
    %c0_4 = arith.constant 0 : index
    %3 = vector.load %arg3[%c0_3, %c0_4] : memref<256x8xf32, #tpu.memory_space<vmem>>, vector<256x8xf32>
    tpu.vector_store %arg3[%c0_3, %c0_4], %2 {strides = array<i32>} : memref<256x8xf32, #tpu.memory_space<vmem>>, vector<256x8xf32>,
    %cst_5 = arith.constant dense<0.000000e+00> : vector<8xf32>
    %4 = vector.multi_reduction <add>, %2, %cst_5 [0] : vector<256x8xf32> to vector<8xf32>
    %5 = vector.shape_cast %4 : vector<8xf32> to vector<1x8xf32>
    %6 = arith.mulf %2, %2 : vector<256x8xf32>
    %cst_6 = arith.constant dense<0.000000e+00> : vector<8xf32>
    %7 = vector.multi_reduction <add>, %6, %cst_6 [0] : vector<256x8xf32> to vector<8xf32>
    %8 = vector.shape_cast %7 : vector<8xf32> to vector<1x8xf32>
    %cst_7 = arith.constant 0.000000e+00 : f32
    %9 = vector.broadcast %cst_7 : f32 to vector<6x8xf32>
    %10 = tpu.concatenate %5, %8, %9 in 0 : vector<1x8xf32>, vector<1x8xf32>, vector<6x8xf32> -> vector<8x8xf32>
    %c0_8 = arith.constant 0 : index
    %c0_9 = arith.constant 0 : index
    %11 = vector.load %arg4[%c0_8, %c0_9] : memref<8x8xf32, #tpu.memory_space<vmem>>, vector<8x8xf32>
    tpu.vector_store %arg4[%c0_8, %c0_9], %10 {strides = array<i32>} : memref<8x8xf32, #tpu.memory_space<vmem>>, vector<8x8xf32>,
    return
  }
  func.func @transform_0(%arg0: i32) -> (i32, i32) {
    %c0_i32 = arith.constant 0 : i32
    %c0_i32_0 = arith.constant 0 : i32
    return %arg0, %c0_i32 : i32, i32
  }
  func.func @transform_1(%arg0: i32) -> (i32, i32) {
    %c0_i32 = arith.constant 0 : i32
    %c0_i32_0 = arith.constant 0 : i32
    %c0_i32_1 = arith.constant 0 : i32
    return %c0_i32, %c0_i32_0 : i32, i32
  }
  func.func @transform_2(%arg0: i32) -> (i32, i32) {
    %c0_i32 = arith.constant 0 : i32
    %c0_i32_0 = arith.constant 0 : i32
    return %arg0, %c0_i32 : i32, i32
  }
  func.func @transform_3(%arg0: i32) -> (i32, i32) {
    %c0_i32 = arith.constant 0 : i32
    %c0_i32_0 = arith.constant 0 : i32
    return %arg0, %c0_i32 : i32, i32
  }
}

module attributes {stable_mosaic.version = 11 : i64} {
  func.func @_conv2_kernel(%arg0: i32, %arg1: memref<256x8xf32, #tpu.memory_space<vmem>>, %arg2: memref<256x8xf32, #tpu.memory_space<vmem>>, %arg3: memref<256x8xf32, #tpu.memory_space<vmem>>, %arg4: memref<256x1xf32, #tpu.memory_space<vmem>>, %arg5: memref<256x1xf32, #tpu.memory_space<vmem>>, %arg6: memref<256x1xf32, #tpu.memory_space<vmem>>, %arg7: memref<1x8xf32, #tpu.memory_space<vmem>>, %arg8: memref<1x8xf32, #tpu.memory_space<vmem>>, %arg9: memref<9x8x8xbf16, #tpu.memory_space<vmem>>, %arg10: memref<256x8xf32, #tpu.memory_space<vmem>>, %arg11: memref<8x8xf32, #tpu.memory_space<vmem>>, %arg12: memref<768x8xbf16, #tpu.memory_space<vmem>>) attributes {dimension_semantics = [#tpu.dimension_semantics<parallel>], iteration_bounds = array<i64: 3>, scalar_prefetch = 0 : i64, scratch_operands = 1 : i64, tpu.core_type = #tpu.core_type<tc>, window_params = [{transform_indices = @transform_0, window_bounds = array<i64: 256, 8>}, {transform_indices = @transform_1, window_bounds = array<i64: 256, 8>}, {transform_indices = @transform_2, window_bounds = array<i64: 256, 8>}, {transform_indices = @transform_3, window_bounds = array<i64: 256, 1>}, {transform_indices = @transform_4, window_bounds = array<i64: 256, 1>}, {transform_indices = @transform_5, window_bounds = array<i64: 256, 1>}, {pipeline_mode = #tpu.pipeline_mode<synchronous>, transform_indices = @transform_6, window_bounds = array<i64: 1, 8>}, {pipeline_mode = #tpu.pipeline_mode<synchronous>, transform_indices = @transform_7, window_bounds = array<i64: 1, 8>}, {pipeline_mode = #tpu.pipeline_mode<synchronous>, transform_indices = @transform_8, window_bounds = array<i64: 9, 8, 8>}, {transform_indices = @transform_9, window_bounds = array<i64: 256, 8>}, {transform_indices = @transform_10, window_bounds = array<i64: 8, 8>}]} {
    %c0 = arith.constant 0 : index
    %c0_0 = arith.constant 0 : index
    %0 = vector.load %arg1[%c0, %c0_0] : memref<256x8xf32, #tpu.memory_space<vmem>>, vector<256x8xf32>
    %c0_1 = arith.constant 0 : index
    %c0_2 = arith.constant 0 : index
    %1 = vector.load %arg7[%c0_1, %c0_2] : memref<1x8xf32, #tpu.memory_space<vmem>>, vector<1x8xf32>
    %2 = vector.broadcast %1 : vector<1x8xf32> to vector<256x8xf32>
    %3 = arith.mulf %0, %2 : vector<256x8xf32>
    %c0_3 = arith.constant 0 : index
    %c0_4 = arith.constant 0 : index
    %4 = vector.load %arg8[%c0_3, %c0_4] : memref<1x8xf32, #tpu.memory_space<vmem>>, vector<1x8xf32>
    %5 = vector.broadcast %4 : vector<1x8xf32> to vector<256x8xf32>
    %6 = arith.addf %3, %5 : vector<256x8xf32>
    %cst = arith.constant 0.000000e+00 : f32
    %7 = vector.broadcast %cst : f32 to vector<256x8xf32>
    %8 = arith.maximumf %6, %7 : vector<256x8xf32>
    %c0_5 = arith.constant 0 : index
    %c0_6 = arith.constant 0 : index
    %9 = vector.load %arg4[%c0_5, %c0_6] : memref<256x1xf32, #tpu.memory_space<vmem>>, vector<256x1xf32>
    %10 = vector.broadcast %9 : vector<256x1xf32> to vector<256x8xf32>
    %11 = arith.mulf %8, %10 : vector<256x8xf32>
    %12 = arith.truncf %11 : vector<256x8xf32> to vector<256x8xbf16>
    %c0_7 = arith.constant 0 : index
    %c0_8 = arith.constant 0 : index
    %13 = vector.load %arg12[%c0_7, %c0_8] : memref<768x8xbf16, #tpu.memory_space<vmem>>, vector<256x8xbf16>
    tpu.vector_store %arg12[%c0_7, %c0_8], %12 {strides = array<i32>} : memref<768x8xbf16, #tpu.memory_space<vmem>>, vector<256x8xbf16>,
    %c0_9 = arith.constant 0 : index
    %c0_10 = arith.constant 0 : index
    %14 = vector.load %arg2[%c0_9, %c0_10] : memref<256x8xf32, #tpu.memory_space<vmem>>, vector<256x8xf32>
    %c0_11 = arith.constant 0 : index
    %c0_12 = arith.constant 0 : index
    %15 = vector.load %arg7[%c0_11, %c0_12] : memref<1x8xf32, #tpu.memory_space<vmem>>, vector<1x8xf32>
    %16 = vector.broadcast %15 : vector<1x8xf32> to vector<256x8xf32>
    %17 = arith.mulf %14, %16 : vector<256x8xf32>
    %c0_13 = arith.constant 0 : index
    %c0_14 = arith.constant 0 : index
    %18 = vector.load %arg8[%c0_13, %c0_14] : memref<1x8xf32, #tpu.memory_space<vmem>>, vector<1x8xf32>
    %19 = vector.broadcast %18 : vector<1x8xf32> to vector<256x8xf32>
    %20 = arith.addf %17, %19 : vector<256x8xf32>
    %cst_15 = arith.constant 0.000000e+00 : f32
    %21 = vector.broadcast %cst_15 : f32 to vector<256x8xf32>
    %22 = arith.maximumf %20, %21 : vector<256x8xf32>
    %c0_16 = arith.constant 0 : index
    %c0_17 = arith.constant 0 : index
    %23 = vector.load %arg5[%c0_16, %c0_17] : memref<256x1xf32, #tpu.memory_space<vmem>>, vector<256x1xf32>
    %24 = vector.broadcast %23 : vector<256x1xf32> to vector<256x8xf32>
    %25 = arith.mulf %22, %24 : vector<256x8xf32>
    %26 = arith.truncf %25 : vector<256x8xf32> to vector<256x8xbf16>
    %c256 = arith.constant 256 : index
    %c0_18 = arith.constant 0 : index
    %27 = vector.load %arg12[%c256, %c0_18] : memref<768x8xbf16, #tpu.memory_space<vmem>>, vector<256x8xbf16>
    tpu.vector_store %arg12[%c256, %c0_18], %26 {strides = array<i32>} : memref<768x8xbf16, #tpu.memory_space<vmem>>, vector<256x8xbf16>,
    %c0_19 = arith.constant 0 : index
    %c0_20 = arith.constant 0 : index
    %28 = vector.load %arg3[%c0_19, %c0_20] : memref<256x8xf32, #tpu.memory_space<vmem>>, vector<256x8xf32>
    %c0_21 = arith.constant 0 : index
    %c0_22 = arith.constant 0 : index
    %29 = vector.load %arg7[%c0_21, %c0_22] : memref<1x8xf32, #tpu.memory_space<vmem>>, vector<1x8xf32>
    %30 = vector.broadcast %29 : vector<1x8xf32> to vector<256x8xf32>
    %31 = arith.mulf %28, %30 : vector<256x8xf32>
    %c0_23 = arith.constant 0 : index
    %c0_24 = arith.constant 0 : index
    %32 = vector.load %arg8[%c0_23, %c0_24] : memref<1x8xf32, #tpu.memory_space<vmem>>, vector<1x8xf32>
    %33 = vector.broadcast %32 : vector<1x8xf32> to vector<256x8xf32>
    %34 = arith.addf %31, %33 : vector<256x8xf32>
    %cst_25 = arith.constant 0.000000e+00 : f32
    %35 = vector.broadcast %cst_25 : f32 to vector<256x8xf32>
    %36 = arith.maximumf %34, %35 : vector<256x8xf32>
    %c0_26 = arith.constant 0 : index
    %c0_27 = arith.constant 0 : index
    %37 = vector.load %arg6[%c0_26, %c0_27] : memref<256x1xf32, #tpu.memory_space<vmem>>, vector<256x1xf32>
    %38 = vector.broadcast %37 : vector<256x1xf32> to vector<256x8xf32>
    %39 = arith.mulf %36, %38 : vector<256x8xf32>
    %40 = arith.truncf %39 : vector<256x8xf32> to vector<256x8xbf16>
    %c512 = arith.constant 512 : index
    %c0_28 = arith.constant 0 : index
    %41 = vector.load %arg12[%c512, %c0_28] : memref<768x8xbf16, #tpu.memory_space<vmem>>, vector<256x8xbf16>
    tpu.vector_store %arg12[%c512, %c0_28], %40 {strides = array<i32>} : memref<768x8xbf16, #tpu.memory_space<vmem>>, vector<256x8xbf16>,
    %cst_29 = arith.constant 0.000000e+00 : f32
    %42 = vector.broadcast %cst_29 : f32 to vector<256x8xf32>
    %c237 = arith.constant 237 : index
    %c0_30 = arith.constant 0 : index
    %43 = vector.load %arg12[%c237, %c0_30] : memref<768x8xbf16, #tpu.memory_space<vmem>>, vector<256x8xbf16>
    %c0_31 = arith.constant 0 : index
    %c0_32 = arith.constant 0 : index
    %c0_33 = arith.constant 0 : index
    %44 = vector.load %arg9[%c0_31, %c0_32, %c0_33] : memref<9x8x8xbf16, #tpu.memory_space<vmem>>, vector<1x8x8xbf16>
    %45 = vector.shape_cast %44 : vector<1x8x8xbf16> to vector<8x8xbf16>
    %cst_34 = arith.constant dense<0.000000e+00> : vector<256x8xf32>
    %46 = tpu.matmul %43, %45, %cst_34 {dimension_numbers = #tpu.dot_dimension_numbers<[1], [0], [0], [1], [0, 0, 1, 1], [], []>} : vector<256x8xbf16>, vector<8x8xbf16>, vector<256x8xf32> -> vector<256x8xf32>
    %47 = arith.addf %42, %46 : vector<256x8xf32>
    %c238 = arith.constant 238 : index
    %c0_35 = arith.constant 0 : index
    %48 = vector.load %arg12[%c238, %c0_35] : memref<768x8xbf16, #tpu.memory_space<vmem>>, vector<256x8xbf16>
    %c1 = arith.constant 1 : index
    %c0_36 = arith.constant 0 : index
    %c0_37 = arith.constant 0 : index
    %49 = vector.load %arg9[%c1, %c0_36, %c0_37] : memref<9x8x8xbf16, #tpu.memory_space<vmem>>, vector<1x8x8xbf16>
    %50 = vector.shape_cast %49 : vector<1x8x8xbf16> to vector<8x8xbf16>
    %cst_38 = arith.constant dense<0.000000e+00> : vector<256x8xf32>
    %51 = tpu.matmul %48, %50, %cst_38 {dimension_numbers = #tpu.dot_dimension_numbers<[1], [0], [0], [1], [0, 0, 1, 1], [], []>} : vector<256x8xbf16>, vector<8x8xbf16>, vector<256x8xf32> -> vector<256x8xf32>
    %52 = arith.addf %47, %51 : vector<256x8xf32>
    %c239 = arith.constant 239 : index
    %c0_39 = arith.constant 0 : index
    %53 = vector.load %arg12[%c239, %c0_39] : memref<768x8xbf16, #tpu.memory_space<vmem>>, vector<256x8xbf16>
    %c2 = arith.constant 2 : index
    %c0_40 = arith.constant 0 : index
    %c0_41 = arith.constant 0 : index
    %54 = vector.load %arg9[%c2, %c0_40, %c0_41] : memref<9x8x8xbf16, #tpu.memory_space<vmem>>, vector<1x8x8xbf16>
    %55 = vector.shape_cast %54 : vector<1x8x8xbf16> to vector<8x8xbf16>
    %cst_42 = arith.constant dense<0.000000e+00> : vector<256x8xf32>
    %56 = tpu.matmul %53, %55, %cst_42 {dimension_numbers = #tpu.dot_dimension_numbers<[1], [0], [0], [1], [0, 0, 1, 1], [], []>} : vector<256x8xbf16>, vector<8x8xbf16>, vector<256x8xf32> -> vector<256x8xf32>
    %57 = arith.addf %52, %56 : vector<256x8xf32>
    %c255 = arith.constant 255 : index
    %c0_43 = arith.constant 0 : index
    %58 = vector.load %arg12[%c255, %c0_43] : memref<768x8xbf16, #tpu.memory_space<vmem>>, vector<256x8xbf16>
    %c3 = arith.constant 3 : index
    %c0_44 = arith.constant 0 : index
    %c0_45 = arith.constant 0 : index
    %59 = vector.load %arg9[%c3, %c0_44, %c0_45] : memref<9x8x8xbf16, #tpu.memory_space<vmem>>, vector<1x8x8xbf16>
    %60 = vector.shape_cast %59 : vector<1x8x8xbf16> to vector<8x8xbf16>
    %cst_46 = arith.constant dense<0.000000e+00> : vector<256x8xf32>
    %61 = tpu.matmul %58, %60, %cst_46 {dimension_numbers = #tpu.dot_dimension_numbers<[1], [0], [0], [1], [0, 0, 1, 1], [], []>} : vector<256x8xbf16>, vector<8x8xbf16>, vector<256x8xf32> -> vector<256x8xf32>
    %62 = arith.addf %57, %61 : vector<256x8xf32>
    %c256_47 = arith.constant 256 : index
    %c0_48 = arith.constant 0 : index
    %63 = vector.load %arg12[%c256_47, %c0_48] : memref<768x8xbf16, #tpu.memory_space<vmem>>, vector<256x8xbf16>
    %c4 = arith.constant 4 : index
    %c0_49 = arith.constant 0 : index
    %c0_50 = arith.constant 0 : index
    %64 = vector.load %arg9[%c4, %c0_49, %c0_50] : memref<9x8x8xbf16, #tpu.memory_space<vmem>>, vector<1x8x8xbf16>
    %65 = vector.shape_cast %64 : vector<1x8x8xbf16> to vector<8x8xbf16>
    %cst_51 = arith.constant dense<0.000000e+00> : vector<256x8xf32>
    %66 = tpu.matmul %63, %65, %cst_51 {dimension_numbers = #tpu.dot_dimension_numbers<[1], [0], [0], [1], [0, 0, 1, 1], [], []>} : vector<256x8xbf16>, vector<8x8xbf16>, vector<256x8xf32> -> vector<256x8xf32>
    %67 = arith.addf %62, %66 : vector<256x8xf32>
    %c257 = arith.constant 257 : index
    %c0_52 = arith.constant 0 : index
    %68 = vector.load %arg12[%c257, %c0_52] : memref<768x8xbf16, #tpu.memory_space<vmem>>, vector<256x8xbf16>
    %c5 = arith.constant 5 : index
    %c0_53 = arith.constant 0 : index
    %c0_54 = arith.constant 0 : index
    %69 = vector.load %arg9[%c5, %c0_53, %c0_54] : memref<9x8x8xbf16, #tpu.memory_space<vmem>>, vector<1x8x8xbf16>
    %70 = vector.shape_cast %69 : vector<1x8x8xbf16> to vector<8x8xbf16>
    %cst_55 = arith.constant dense<0.000000e+00> : vector<256x8xf32>
    %71 = tpu.matmul %68, %70, %cst_55 {dimension_numbers = #tpu.dot_dimension_numbers<[1], [0], [0], [1], [0, 0, 1, 1], [], []>} : vector<256x8xbf16>, vector<8x8xbf16>, vector<256x8xf32> -> vector<256x8xf32>
    %72 = arith.addf %67, %71 : vector<256x8xf32>
    %c273 = arith.constant 273 : index
    %c0_56 = arith.constant 0 : index
    %73 = vector.load %arg12[%c273, %c0_56] : memref<768x8xbf16, #tpu.memory_space<vmem>>, vector<256x8xbf16>
    %c6 = arith.constant 6 : index
    %c0_57 = arith.constant 0 : index
    %c0_58 = arith.constant 0 : index
    %74 = vector.load %arg9[%c6, %c0_57, %c0_58] : memref<9x8x8xbf16, #tpu.memory_space<vmem>>, vector<1x8x8xbf16>
    %75 = vector.shape_cast %74 : vector<1x8x8xbf16> to vector<8x8xbf16>
    %cst_59 = arith.constant dense<0.000000e+00> : vector<256x8xf32>
    %76 = tpu.matmul %73, %75, %cst_59 {dimension_numbers = #tpu.dot_dimension_numbers<[1], [0], [0], [1], [0, 0, 1, 1], [], []>} : vector<256x8xbf16>, vector<8x8xbf16>, vector<256x8xf32> -> vector<256x8xf32>
    %77 = arith.addf %72, %76 : vector<256x8xf32>
    %c274 = arith.constant 274 : index
    %c0_60 = arith.constant 0 : index
    %78 = vector.load %arg12[%c274, %c0_60] : memref<768x8xbf16, #tpu.memory_space<vmem>>, vector<256x8xbf16>
    %c7 = arith.constant 7 : index
    %c0_61 = arith.constant 0 : index
    %c0_62 = arith.constant 0 : index
    %79 = vector.load %arg9[%c7, %c0_61, %c0_62] : memref<9x8x8xbf16, #tpu.memory_space<vmem>>, vector<1x8x8xbf16>
    %80 = vector.shape_cast %79 : vector<1x8x8xbf16> to vector<8x8xbf16>
    %cst_63 = arith.constant dense<0.000000e+00> : vector<256x8xf32>
    %81 = tpu.matmul %78, %80, %cst_63 {dimension_numbers = #tpu.dot_dimension_numbers<[1], [0], [0], [1], [0, 0, 1, 1], [], []>} : vector<256x8xbf16>, vector<8x8xbf16>, vector<256x8xf32> -> vector<256x8xf32>
    %82 = arith.addf %77, %81 : vector<256x8xf32>
    %c275 = arith.constant 275 : index
    %c0_64 = arith.constant 0 : index
    %83 = vector.load %arg12[%c275, %c0_64] : memref<768x8xbf16, #tpu.memory_space<vmem>>, vector<256x8xbf16>
    %c8 = arith.constant 8 : index
    %c0_65 = arith.constant 0 : index
    %c0_66 = arith.constant 0 : index
    %84 = vector.load %arg9[%c8, %c0_65, %c0_66] : memref<9x8x8xbf16, #tpu.memory_space<vmem>>, vector<1x8x8xbf16>
    %85 = vector.shape_cast %84 : vector<1x8x8xbf16> to vector<8x8xbf16>
    %cst_67 = arith.constant dense<0.000000e+00> : vector<256x8xf32>
    %86 = tpu.matmul %83, %85, %cst_67 {dimension_numbers = #tpu.dot_dimension_numbers<[1], [0], [0], [1], [0, 0, 1, 1], [], []>} : vector<256x8xbf16>, vector<8x8xbf16>, vector<256x8xf32> -> vector<256x8xf32>
    %87 = arith.addf %82, %86 : vector<256x8xf32>
    %c0_68 = arith.constant 0 : index
    %c0_69 = arith.constant 0 : index
    %88 = vector.load %arg5[%c0_68, %c0_69] : memref<256x1xf32, #tpu.memory_space<vmem>>, vector<256x1xf32>
    %89 = vector.broadcast %88 : vector<256x1xf32> to vector<256x8xf32>
    %90 = arith.mulf %87, %89 : vector<256x8xf32>
    %c0_70 = arith.constant 0 : index
    %c0_71 = arith.constant 0 : index
    %91 = vector.load %arg10[%c0_70, %c0_71] : memref<256x8xf32, #tpu.memory_space<vmem>>, vector<256x8xf32>
    tpu.vector_store %arg10[%c0_70, %c0_71], %90 {strides = array<i32>} : memref<256x8xf32, #tpu.memory_space<vmem>>, vector<256x8xf32>,
    %cst_72 = arith.constant dense<0.000000e+00> : vector<8xf32>
    %92 = vector.multi_reduction <add>, %90, %cst_72 [0] : vector<256x8xf32> to vector<8xf32>
    %93 = vector.shape_cast %92 : vector<8xf32> to vector<1x8xf32>
    %94 = arith.mulf %90, %90 : vector<256x8xf32>
    %cst_73 = arith.constant dense<0.000000e+00> : vector<8xf32>
    %95 = vector.multi_reduction <add>, %94, %cst_73 [0] : vector<256x8xf32> to vector<8xf32>
    %96 = vector.shape_cast %95 : vector<8xf32> to vector<1x8xf32>
    %cst_74 = arith.constant 0.000000e+00 : f32
    %97 = vector.broadcast %cst_74 : f32 to vector<6x8xf32>
    %98 = tpu.concatenate %93, %96, %97 in 0 : vector<1x8xf32>, vector<1x8xf32>, vector<6x8xf32> -> vector<8x8xf32>
    %c0_75 = arith.constant 0 : index
    %c0_76 = arith.constant 0 : index
    %99 = vector.load %arg11[%c0_75, %c0_76] : memref<8x8xf32, #tpu.memory_space<vmem>>, vector<8x8xf32>
    tpu.vector_store %arg11[%c0_75, %c0_76], %98 {strides = array<i32>} : memref<8x8xf32, #tpu.memory_space<vmem>>, vector<8x8xf32>,
    return
  }
  func.func @transform_0(%arg0: i32) -> (i32, i32) {
    %c1_i32 = arith.constant 1 : i32
    %0 = arith.subi %arg0, %c1_i32 : i32
    %c0_i32 = arith.constant 0 : i32
    %1 = arith.maxsi %0, %c0_i32 : i32
    %c0_i32_0 = arith.constant 0 : i32
    %c0_i32_1 = arith.constant 0 : i32
    return %1, %c0_i32_0 : i32, i32
  }
  func.func @transform_1(%arg0: i32) -> (i32, i32) {
    %c0_i32 = arith.constant 0 : i32
    %c0_i32_0 = arith.constant 0 : i32
    return %arg0, %c0_i32 : i32, i32
  }
  func.func @transform_2(%arg0: i32) -> (i32, i32) {
    %c1_i32 = arith.constant 1 : i32
    %0 = arith.addi %arg0, %c1_i32 : i32
    %c2_i32 = arith.constant 2 : i32
    %1 = arith.minsi %0, %c2_i32 : i32
    %c0_i32 = arith.constant 0 : i32
    %c0_i32_0 = arith.constant 0 : i32
    return %1, %c0_i32 : i32, i32
  }
  func.func @transform_3(%arg0: i32) -> (i32, i32) {
    %c1_i32 = arith.constant 1 : i32
    %0 = arith.subi %arg0, %c1_i32 : i32
    %c0_i32 = arith.constant 0 : i32
    %1 = arith.maxsi %0, %c0_i32 : i32
    %c0_i32_0 = arith.constant 0 : i32
    %c0_i32_1 = arith.constant 0 : i32
    return %1, %c0_i32_0 : i32, i32
  }
  func.func @transform_4(%arg0: i32) -> (i32, i32) {
    %c0_i32 = arith.constant 0 : i32
    %c0_i32_0 = arith.constant 0 : i32
    return %arg0, %c0_i32 : i32, i32
  }
  func.func @transform_5(%arg0: i32) -> (i32, i32) {
    %c1_i32 = arith.constant 1 : i32
    %0 = arith.addi %arg0, %c1_i32 : i32
    %c2_i32 = arith.constant 2 : i32
    %1 = arith.minsi %0, %c2_i32 : i32
    %c0_i32 = arith.constant 0 : i32
    %c0_i32_0 = arith.constant 0 : i32
    return %1, %c0_i32 : i32, i32
  }
  func.func @transform_6(%arg0: i32) -> (i32, i32) {
    %c0_i32 = arith.constant 0 : i32
    %c0_i32_0 = arith.constant 0 : i32
    %c0_i32_1 = arith.constant 0 : i32
    return %c0_i32, %c0_i32_0 : i32, i32
  }
  func.func @transform_7(%arg0: i32) -> (i32, i32) {
    %c0_i32 = arith.constant 0 : i32
    %c0_i32_0 = arith.constant 0 : i32
    %c0_i32_1 = arith.constant 0 : i32
    return %c0_i32, %c0_i32_0 : i32, i32
  }
  func.func @transform_8(%arg0: i32) -> (i32, i32, i32) {
    %c0_i32 = arith.constant 0 : i32
    %c0_i32_0 = arith.constant 0 : i32
    %c0_i32_1 = arith.constant 0 : i32
    %c0_i32_2 = arith.constant 0 : i32
    return %c0_i32, %c0_i32_0, %c0_i32_1 : i32, i32, i32
  }
  func.func @transform_9(%arg0: i32) -> (i32, i32) {
    %c0_i32 = arith.constant 0 : i32
    %c0_i32_0 = arith.constant 0 : i32
    return %arg0, %c0_i32 : i32, i32
  }
  func.func @transform_10(%arg0: i32) -> (i32, i32) {
    %c0_i32 = arith.constant 0 : i32
    %c0_i32_0 = arith.constant 0 : i32
    return %arg0, %c0_i32 : i32, i32
  }
}

module attributes {stable_mosaic.version = 11 : i64} {
  func.func @_conv3_kernel(%arg0: i32, %arg1: memref<256x8xf32, #tpu.memory_space<vmem>>, %arg2: memref<256x1xf32, #tpu.memory_space<vmem>>, %arg3: memref<1x8xf32, #tpu.memory_space<vmem>>, %arg4: memref<1x8xf32, #tpu.memory_space<vmem>>, %arg5: memref<8x32xbf16, #tpu.memory_space<vmem>>, %arg6: memref<256x32xf32, #tpu.memory_space<vmem>>, %arg7: memref<8x32xf32, #tpu.memory_space<vmem>>) attributes {dimension_semantics = [#tpu.dimension_semantics<parallel>], iteration_bounds = array<i64: 3>, scalar_prefetch = 0 : i64, scratch_operands = 0 : i64, tpu.core_type = #tpu.core_type<tc>, window_params = [{transform_indices = @transform_0, window_bounds = array<i64: 256, 8>}, {transform_indices = @transform_1, window_bounds = array<i64: 256, 1>}, {pipeline_mode = #tpu.pipeline_mode<synchronous>, transform_indices = @transform_2, window_bounds = array<i64: 1, 8>}, {pipeline_mode = #tpu.pipeline_mode<synchronous>, transform_indices = @transform_3, window_bounds = array<i64: 1, 8>}, {pipeline_mode = #tpu.pipeline_mode<synchronous>, transform_indices = @transform_4, window_bounds = array<i64: 8, 32>}, {transform_indices = @transform_5, window_bounds = array<i64: 256, 32>}, {transform_indices = @transform_6, window_bounds = array<i64: 8, 32>}]} {
    %c0 = arith.constant 0 : index
    %c0_0 = arith.constant 0 : index
    %0 = vector.load %arg1[%c0, %c0_0] : memref<256x8xf32, #tpu.memory_space<vmem>>, vector<256x8xf32>
    %c0_1 = arith.constant 0 : index
    %c0_2 = arith.constant 0 : index
    %1 = vector.load %arg3[%c0_1, %c0_2] : memref<1x8xf32, #tpu.memory_space<vmem>>, vector<1x8xf32>
    %2 = vector.broadcast %1 : vector<1x8xf32> to vector<256x8xf32>
    %3 = arith.mulf %0, %2 : vector<256x8xf32>
    %c0_3 = arith.constant 0 : index
    %c0_4 = arith.constant 0 : index
    %4 = vector.load %arg4[%c0_3, %c0_4] : memref<1x8xf32, #tpu.memory_space<vmem>>, vector<1x8xf32>
    %5 = vector.broadcast %4 : vector<1x8xf32> to vector<256x8xf32>
    %6 = arith.addf %3, %5 : vector<256x8xf32>
    %cst = arith.constant 0.000000e+00 : f32
    %7 = vector.broadcast %cst : f32 to vector<256x8xf32>
    %8 = arith.maximumf %6, %7 : vector<256x8xf32>
    %c0_5 = arith.constant 0 : index
    %c0_6 = arith.constant 0 : index
    %9 = vector.load %arg2[%c0_5, %c0_6] : memref<256x1xf32, #tpu.memory_space<vmem>>, vector<256x1xf32>
    %10 = vector.broadcast %9 : vector<256x1xf32> to vector<256x8xf32>
    %11 = arith.mulf %8, %10 : vector<256x8xf32>
    %12 = arith.truncf %11 : vector<256x8xf32> to vector<256x8xbf16>
    %c0_7 = arith.constant 0 : index
    %c0_8 = arith.constant 0 : index
    %13 = vector.load %arg5[%c0_7, %c0_8] : memref<8x32xbf16, #tpu.memory_space<vmem>>, vector<8x32xbf16>
    %cst_9 = arith.constant dense<0.000000e+00> : vector<256x32xf32>
    %14 = tpu.matmul %12, %13, %cst_9 {dimension_numbers = #tpu.dot_dimension_numbers<[1], [0], [0], [1], [0, 0, 1, 1], [], []>} : vector<256x8xbf16>, vector<8x32xbf16>, vector<256x32xf32> -> vector<256x32xf32>
    %c0_10 = arith.constant 0 : index
    %c0_11 = arith.constant 0 : index
    %15 = vector.load %arg6[%c0_10, %c0_11] : memref<256x32xf32, #tpu.memory_space<vmem>>, vector<256x32xf32>
    tpu.vector_store %arg6[%c0_10, %c0_11], %14 {strides = array<i32>} : memref<256x32xf32, #tpu.memory_space<vmem>>, vector<256x32xf32>,
    %cst_12 = arith.constant dense<0.000000e+00> : vector<32xf32>
    %16 = vector.multi_reduction <add>, %14, %cst_12 [0] : vector<256x32xf32> to vector<32xf32>
    %17 = vector.shape_cast %16 : vector<32xf32> to vector<1x32xf32>
    %18 = arith.mulf %14, %14 : vector<256x32xf32>
    %cst_13 = arith.constant dense<0.000000e+00> : vector<32xf32>
    %19 = vector.multi_reduction <add>, %18, %cst_13 [0] : vector<256x32xf32> to vector<32xf32>
    %20 = vector.shape_cast %19 : vector<32xf32> to vector<1x32xf32>
    %cst_14 = arith.constant 0.000000e+00 : f32
    %21 = vector.broadcast %cst_14 : f32 to vector<6x32xf32>
    %22 = tpu.concatenate %17, %20, %21 in 0 : vector<1x32xf32>, vector<1x32xf32>, vector<6x32xf32> -> vector<8x32xf32>
    %c0_15 = arith.constant 0 : index
    %c0_16 = arith.constant 0 : index
    %23 = vector.load %arg7[%c0_15, %c0_16] : memref<8x32xf32, #tpu.memory_space<vmem>>, vector<8x32xf32>
    tpu.vector_store %arg7[%c0_15, %c0_16], %22 {strides = array<i32>} : memref<8x32xf32, #tpu.memory_space<vmem>>, vector<8x32xf32>,
    return
  }
  func.func @transform_0(%arg0: i32) -> (i32, i32) {
    %c0_i32 = arith.constant 0 : i32
    %c0_i32_0 = arith.constant 0 : i32
    return %arg0, %c0_i32 : i32, i32
  }
  func.func @transform_1(%arg0: i32) -> (i32, i32) {
    %c0_i32 = arith.constant 0 : i32
    %c0_i32_0 = arith.constant 0 : i32
    return %arg0, %c0_i32 : i32, i32
  }
  func.func @transform_2(%arg0: i32) -> (i32, i32) {
    %c0_i32 = arith.constant 0 : i32
    %c0_i32_0 = arith.constant 0 : i32
    %c0_i32_1 = arith.constant 0 : i32
    return %c0_i32, %c0_i32_0 : i32, i32
  }
  func.func @transform_3(%arg0: i32) -> (i32, i32) {
    %c0_i32 = arith.constant 0 : i32
    %c0_i32_0 = arith.constant 0 : i32
    %c0_i32_1 = arith.constant 0 : i32
    return %c0_i32, %c0_i32_0 : i32, i32
  }
  func.func @transform_4(%arg0: i32) -> (i32, i32) {
    %c0_i32 = arith.constant 0 : i32
    %c0_i32_0 = arith.constant 0 : i32
    %c0_i32_1 = arith.constant 0 : i32
    return %c0_i32, %c0_i32_0 : i32, i32
  }
  func.func @transform_5(%arg0: i32) -> (i32, i32) {
    %c0_i32 = arith.constant 0 : i32
    %c0_i32_0 = arith.constant 0 : i32
    return %arg0, %c0_i32 : i32, i32
  }
  func.func @transform_6(%arg0: i32) -> (i32, i32) {
    %c0_i32 = arith.constant 0 : i32
    %c0_i32_0 = arith.constant 0 : i32
    return %arg0, %c0_i32 : i32, i32
  }
}

module attributes {stable_mosaic.version = 11 : i64} {
  func.func @_epilogue_kernel(%arg0: i32, %arg1: memref<256x32xf32, #tpu.memory_space<vmem>>, %arg2: memref<256x32xf32, #tpu.memory_space<vmem>>, %arg3: memref<1x32xf32, #tpu.memory_space<vmem>>, %arg4: memref<1x32xf32, #tpu.memory_space<vmem>>, %arg5: memref<256x32xf32, #tpu.memory_space<vmem>>) attributes {dimension_semantics = [#tpu.dimension_semantics<parallel>], iteration_bounds = array<i64: 3>, scalar_prefetch = 0 : i64, scratch_operands = 0 : i64, tpu.core_type = #tpu.core_type<tc>, window_params = [{transform_indices = @transform_0, window_bounds = array<i64: 256, 32>}, {transform_indices = @transform_1, window_bounds = array<i64: 256, 32>}, {pipeline_mode = #tpu.pipeline_mode<synchronous>, transform_indices = @transform_2, window_bounds = array<i64: 1, 32>}, {pipeline_mode = #tpu.pipeline_mode<synchronous>, transform_indices = @transform_3, window_bounds = array<i64: 1, 32>}, {transform_indices = @transform_4, window_bounds = array<i64: 256, 32>}]} {
    %c0 = arith.constant 0 : index
    %c0_0 = arith.constant 0 : index
    %0 = vector.load %arg1[%c0, %c0_0] : memref<256x32xf32, #tpu.memory_space<vmem>>, vector<256x32xf32>
    %c0_1 = arith.constant 0 : index
    %c0_2 = arith.constant 0 : index
    %1 = vector.load %arg3[%c0_1, %c0_2] : memref<1x32xf32, #tpu.memory_space<vmem>>, vector<1x32xf32>
    %2 = vector.broadcast %1 : vector<1x32xf32> to vector<256x32xf32>
    %3 = arith.mulf %0, %2 : vector<256x32xf32>
    %c0_3 = arith.constant 0 : index
    %c0_4 = arith.constant 0 : index
    %4 = vector.load %arg4[%c0_3, %c0_4] : memref<1x32xf32, #tpu.memory_space<vmem>>, vector<1x32xf32>
    %5 = vector.broadcast %4 : vector<1x32xf32> to vector<256x32xf32>
    %6 = arith.addf %3, %5 : vector<256x32xf32>
    %c0_5 = arith.constant 0 : index
    %c0_6 = arith.constant 0 : index
    %7 = vector.load %arg2[%c0_5, %c0_6] : memref<256x32xf32, #tpu.memory_space<vmem>>, vector<256x32xf32>
    %8 = arith.addf %6, %7 : vector<256x32xf32>
    %cst = arith.constant 0.000000e+00 : f32
    %9 = vector.broadcast %cst : f32 to vector<256x32xf32>
    %10 = arith.maximumf %8, %9 : vector<256x32xf32>
    %c0_7 = arith.constant 0 : index
    %c0_8 = arith.constant 0 : index
    %11 = vector.load %arg5[%c0_7, %c0_8] : memref<256x32xf32, #tpu.memory_space<vmem>>, vector<256x32xf32>
    tpu.vector_store %arg5[%c0_7, %c0_8], %10 {strides = array<i32>} : memref<256x32xf32, #tpu.memory_space<vmem>>, vector<256x32xf32>,
    return
  }
  func.func @transform_0(%arg0: i32) -> (i32, i32) {
    %c0_i32 = arith.constant 0 : i32
    %c0_i32_0 = arith.constant 0 : i32
    return %arg0, %c0_i32 : i32, i32
  }
  func.func @transform_1(%arg0: i32) -> (i32, i32) {
    %c0_i32 = arith.constant 0 : i32
    %c0_i32_0 = arith.constant 0 : i32
    return %arg0, %c0_i32 : i32, i32
  }
  func.func @transform_2(%arg0: i32) -> (i32, i32) {
    %c0_i32 = arith.constant 0 : i32
    %c0_i32_0 = arith.constant 0 : i32
    %c0_i32_1 = arith.constant 0 : i32
    return %c0_i32, %c0_i32_0 : i32, i32
  }
  func.func @transform_3(%arg0: i32) -> (i32, i32) {
    %c0_i32 = arith.constant 0 : i32
    %c0_i32_0 = arith.constant 0 : i32
    %c0_i32_1 = arith.constant 0 : i32
    return %c0_i32, %c0_i32_0 : i32, i32
  }
  func.func @transform_4(%arg0: i32) -> (i32, i32) {
    %c0_i32 = arith.constant 0 : i32
    %c0_i32_0 = arith.constant 0 : i32
    return %arg0, %c0_i32 : i32, i32
  }
}

</mosaic_0001>

<llo_original>
// kernel: bottleneck_forward.4
$region0: #{bottleneck_forward.4}
  #allocation0 [shape = 'u32[]', space=smem, size = 0x4, offset = 0x4, fixed_abs, tag = 'smem constant byte address 0x4 - core index']
  #allocation1 [shape = 'u32[144,128]{1,0:T(1,128)}', space=vmem, size = 0x12000, scoped, tag = 'internal scratch']
  %s0 = inlined_call_operand.vmem [shape: bf16[768,32], index: 0, kind: input, shape index: {}]
  %s1 = inlined_call_operand.vmem [shape: bf16[32,8], index: 1, kind: input, shape index: {}]
  %s2 = inlined_call_operand.vmem [shape: f32[768,8], index: 2, kind: output, shape index: {0}]
  %s3 = inlined_call_operand.vmem [shape: f32[24,8], index: 3, kind: output, shape index: {1}]
  %4 = xla_tuple %s2, %s3
  %s5 = sld [smem:[#allocation0]]
  $region49: #{bottleneck_forward.4} parent=0
    _
  %s7 = ssub.s32 1, %s5
  %s8 = scalar_select 0, %s7, %s5
  loop: start=0, step=1, limit=5
  $region2: #{bottleneck_forward.4} parent=0 // loop_pre_header
    _
  $region3: #{bottleneck_forward.4} parent=0 // loop_header
    %s10 = sphi 0, %s14
    %p11 = scmp.ge.s32.totalorder %s10, 5
    %s20 = sphi 0, %s22
    %s23 = sphi 0, %s20
    %s24 = sphi 0, %s23
    %s40 = sphi 0, %s24
    %s44 = sphi 0, %s44
    %s46 = sphi 0, %s44
    %s47 = sphi 0, %s46
    %s61 = sphi 0, %s47
    %s67 = sphi 0, %s69
    %s70 = sphi 0, %s67
    %s71 = sphi 0, %s70
    %s87 = sphi 0, %s71
    %s93 = sphi 0, %s95
    %s96 = sphi 0, %s93
    %s97 = sphi 0, %s96
    %s113 = sphi 0, %s97
  $region4: #{bottleneck_forward.4} parent=0 // loop_header_branch
    %13 = sbr.rel (%p11) target = $region8
  $region5: #{bottleneck_forward.4} parent=0 // loop_body
    %s15 = ssub.s32 %s10, 1
    %s16 = ssub.s32 %s10, 2
    %s17 = sadd.s32 %s10, 1
    %s18 = ssub.s32 %s10, %s17
    %p19 = scmp.eq.s32.totalorder %s18, 0
    %s21 = sadd.s32 %s20, 1
    %s22 = scalar_select %p19, %s20, %s21
    %p25 = pneg %p19
    %p26 = scmp.eq.s32.totalorder %s10, 2
    %p27 = por %p25, %p26
    %p28 = scmp.ne.s32.totalorder %s20, %s23
    %p29 = scmp.eq.s32.totalorder %s10, 0
    %p30 = por %p28, %p29
    %p31 = scmp.ne.s32.totalorder %s20, %s23
    %p32 = scmp.eq.s32.totalorder %s15, 2
    %p33 = por %p31, %p32
    %p34 = scmp.ne.s32.totalorder %s23, %s24
    %p35 = scmp.eq.s32.totalorder %s15, 0
    %p36 = por %p34, %p35
    %p37 = scmp.ne.s32.totalorder %s23, %s24
    %p38 = scmp.eq.s32.totalorder %s16, 2
    %p39 = por %p37, %p38
    %p41 = scmp.ne.s32.totalorder %s24, %s40
    %p42 = scmp.eq.s32.totalorder %s16, 0
    %p43 = por %p41, %p42
    %s45 = sadd.s32 %s44, 1
    %p48 = scmp.eq.s32.totalorder %s10, 2
    %p49 = scmp.ne.s32.totalorder %s44, %s46
    %p50 = scmp.eq.s32.totalorder %s10, 0
    %p51 = por %p49, %p50
    %p52 = scmp.ne.s32.totalorder %s44, %s46
    %p53 = scmp.eq.s32.totalorder %s15, 2
    %p54 = por %p52, %p53
    %p55 = scmp.ne.s32.totalorder %s46, %s47
    %p56 = scmp.eq.s32.totalorder %s15, 0
    %p57 = por %p55, %p56
    %p58 = scmp.ne.s32.totalorder %s46, %s47
    %p59 = scmp.eq.s32.totalorder %s16, 2
    %p60 = por %p58, %p59
    %p62 = scmp.ne.s32.totalorder %s47, %s61
    %p63 = scmp.eq.s32.totalorder %s16, 0
    %p64 = por %p62, %p63
    %s65 = ssub.s32 %s10, %s17
    %p66 = scmp.eq.s32.totalorder %s65, 0
    %s68 = sadd.s32 %s67, 1
    %s69 = scalar_select %p66, %s67, %s68
    %p72 = pneg %p66
    %p73 = scmp.eq.s32.totalorder %s10, 2
    %p74 = por %p72, %p73
    %p75 = scmp.ne.s32.totalorder %s67, %s70
    %p76 = scmp.eq.s32.totalorder %s10, 0
    %p77 = por %p75, %p76
    %p78 = scmp.ne.s32.totalorder %s67, %s70
    %p79 = scmp.eq.s32.totalorder %s15, 2
    %p80 = por %p78, %p79
    %p81 = scmp.ne.s32.totalorder %s70, %s71
    %p82 = scmp.eq.s32.totalorder %s15, 0
    %p83 = por %p81, %p82
    %p84 = scmp.ne.s32.totalorder %s70, %s71
    %p85 = scmp.eq.s32.totalorder %s16, 2
    %p86 = por %p84, %p85
    %p88 = scmp.ne.s32.totalorder %s71, %s87
    %p89 = scmp.eq.s32.totalorder %s16, 0
    %p90 = por %p88, %p89
    %s91 = ssub.s32 %s10, %s17
    %p92 = scmp.eq.s32.totalorder %s91, 0
    %s94 = sadd.s32 %s93, 1
    %s95 = scalar_select %p92, %s93, %s94
    %p98 = pneg %p92
    %p99 = scmp.eq.s32.totalorder %s10, 2
    %p100 = por %p98, %p99
    %p101 = scmp.ne.s32.totalorder %s93, %s96
    %p102 = scmp.eq.s32.totalorder %s10, 0
    %p103 = por %p101, %p102
    %p104 = scmp.ne.s32.totalorder %s93, %s96
    %p105 = scmp.eq.s32.totalorder %s15, 2
    %p106 = por %p104, %p105
    %p107 = scmp.ne.s32.totalorder %s96, %s97
    %p108 = scmp.eq.s32.totalorder %s15, 0
    %p109 = por %p107, %p108
    %p110 = scmp.ne.s32.totalorder %s96, %s97
    %p111 = scmp.eq.s32.totalorder %s16, 2
    %p112 = por %p110, %p111
    %p114 = scmp.ne.s32.totalorder %s97, %s113
    %p115 = scmp.eq.s32.totalorder %s16, 0
    %p116 = por %p114, %p115
    %p117 = scmp.le.s32.totalorder 1, %s10
    %p118 = scmp.lt.s32.totalorder %s10, 4
    %p119 = pnand %p117, %p118
    %p120 = pneg %p119
    // Predicated region
    $region9: #{bottleneck_forward.4} parent=5 // pred_check
      _
    $region10: #{bottleneck_forward.4} parent=5 // pred_check_branch
      %122 = sbr.rel (%p119) target = $region12
    $region11: #{bottleneck_forward.4} parent=5 // pred_region
      %s123 = ssub.s32 %s10, 1
      // Predicated region
      $region13: #{bottleneck_forward.4} parent=11 // pred_check
        %p124 = pneg %p57
      $region14: #{bottleneck_forward.4} parent=11 // pred_check_branch
        %126 = sbr.rel (%p124) target = $region16
      $region15: #{bottleneck_forward.4} parent=11 // pred_region
        _
      $region16: #{bottleneck_forward.4} parent=11 // pred_fallthru
        _
    $region12: #{bottleneck_forward.4} parent=5 // pred_fallthru
      _
    %p127 = scmp.lt.s32.totalorder %s10, 3
    // Predicated region
    $region17: #{bottleneck_forward.4} parent=5 // pred_check
      %p128 = pneg %p127
    $region18: #{bottleneck_forward.4} parent=5 // pred_check_branch
      %130 = sbr.rel (%p128) target = $region20
    $region19: #{bottleneck_forward.4} parent=5 // pred_region
      // Predicated region
      $region21: #{bottleneck_forward.4} parent=19 // pred_check
        %p131 = pneg %p30
      $region22: #{bottleneck_forward.4} parent=19 // pred_check_branch
        %133 = sbr.rel (%p131) target = $region24
      $region23: #{bottleneck_forward.4} parent=19 // pred_region
        %s134 = smul.u32 32, %s10
        %p135 = scmp.lt.s32.totalorder %s134, 95
        %s136 = scalar_select %p135, %s134, 95
        %s137 = smul.addr %s136, 4
        %s138 = scalar_lea.vmem %s0, %s137
        %s139 = smul.u32 32, %s10
      $region24: #{bottleneck_forward.4} parent=19 // pred_fallthru
        _
    $region20: #{bottleneck_forward.4} parent=5 // pred_fallthru
      _
    %p140 = scmp.le.s32.totalorder 1, %s10
    %p141 = scmp.lt.s32.totalorder %s10, 4
    %p142 = pnand %p140, %p141
    %p143 = pneg %p142
    // Predicated region
    $region25: #{bottleneck_forward.4} parent=5 // pred_check
      _
    $region26: #{bottleneck_forward.4} parent=5 // pred_check_branch
      %145 = sbr.rel (%p142) target = $region28
    $region27: #{bottleneck_forward.4} parent=5 // pred_region
      %s146 = ssub.s32 %s10, 1
      %s147 = smul.u32 32, %s15
      %p148 = scmp.lt.s32.totalorder %s147, 95
      %s149 = scalar_select %p148, %s147, 95
      %s150 = smul.addr %s149, 4
      %s151 = scalar_lea.vmem %s0, %s150
      %p152 = pneg %p36
      %p153 = pneg %p33
      %p154 = pneg %p57
      %p155 = pneg %p54
      %p156 = pneg %p83
      %p157 = pneg %p80
      %s158 = smul.u32 32, %s15
      %p159 = scmp.lt.s32.totalorder %s158, 95
      %s160 = scalar_select %p159, %s158, 95
      %s161 = smul.addr %s160, 8
      %s162 = scalar_lea.vmem %s2, %s161
      %p163 = pneg %p109
      %p164 = pneg %p106
      %p165 = scmp.lt.s32.totalorder %s15, 2
      %s166 = scalar_select %p165, %s15, 2
      %s167 = smul.addr %s166, 8
      %s168 = scalar_lea.vmem %s3, %s167
      %s169 = smul.u32 32, %s15
      %p170 = scmp.lt.s32.totalorder %s169, 95
      %s171 = scalar_select %p170, %s169, 95
      %s172 = smul.addr %s171, 4
      %s173 = scalar_lea.vmem %s0, %s172
      %s174 = smul.u32 32, %s15
      %s175 = smul.u32 32, %s15
      %p176 = scmp.lt.s32.totalorder %s175, 95
      %s177 = scalar_select %p176, %s175, 95
      %s178 = smul.addr %s177, 8
      %s179 = scalar_lea.vmem %s2, %s178
      %s180 = smul.u32 32, %s15
      %p181 = scmp.lt.s32.totalorder %s15, 2
      %s182 = scalar_select %p181, %s15, 2
      %s183 = smul.addr %s182, 8
      %s184 = scalar_lea.vmem %s3, %s183
      %v186 = vld [vmem:[%s173] sm:$0xf]
      %v187 = vld [vmem:[%s173 + $0x4] sm:$0xf]
      %v188 = vld [vmem:[%s173 + $0x8] sm:$0xf]
      %v189 = vld [vmem:[%s173 + $0xc] sm:$0xf]
      %v190 = vld [vmem:[%s173 + $0x10] sm:$0xf]
      %v191 = vld [vmem:[%s173 + $0x14] sm:$0xf]
      %v192 = vld [vmem:[%s173 + $0x18] sm:$0xf]
      %v193 = vld [vmem:[%s173 + $0x1c] sm:$0xf]
      %v194 = vld [vmem:[%s173 + $0x20] sm:$0xf]
      %v195 = vld [vmem:[%s173 + $0x24] sm:$0xf]
      %v196 = vld [vmem:[%s173 + $0x28] sm:$0xf]
      %v197 = vld [vmem:[%s173 + $0x2c] sm:$0xf]
      %v198 = vld [vmem:[%s173 + $0x30] sm:$0xf]
      %v199 = vld [vmem:[%s173 + $0x34] sm:$0xf]
      %v200 = vld [vmem:[%s173 + $0x38] sm:$0xf]
      %v201 = vld [vmem:[%s173 + $0x3c] sm:$0xf]
      %v202 = vld [vmem:[%s173 + $0x40] sm:$0xf]
      %v203 = vld [vmem:[%s173 + $0x44] sm:$0xf]
      %v204 = vld [vmem:[%s173 + $0x48] sm:$0xf]
      %v205 = vld [vmem:[%s173 + $0x4c] sm:$0xf]
      %v206 = vld [vmem:[%s173 + $0x50] sm:$0xf]
      %v207 = vld [vmem:[%s173 + $0x54] sm:$0xf]
      %v208 = vld [vmem:[%s173 + $0x58] sm:$0xf]
      %v209 = vld [vmem:[%s173 + $0x5c] sm:$0xf]
      %v210 = vld [vmem:[%s173 + $0x60] sm:$0xf]
      %v211 = vld [vmem:[%s173 + $0x64] sm:$0xf]
      %v212 = vld [vmem:[%s173 + $0x68] sm:$0xf]
      %v213 = vld [vmem:[%s173 + $0x6c] sm:$0xf]
      %v214 = vld [vmem:[%s173 + $0x70] sm:$0xf]
      %v215 = vld [vmem:[%s173 + $0x74] sm:$0xf]
      %v216 = vld [vmem:[%s173 + $0x78] sm:$0xf]
      %v217 = vld [vmem:[%s173 + $0x7c] sm:$0xf]
      %v218 = vld [vmem:[%s1] sm:$0xf]
      %v219 = vld [vmem:[%s1 + $0x4] sm:$0xf]
      %v220 = vld [vmem:[%s1 + $0x8] sm:$0xf]
      %v221 = vld [vmem:[%s1 + $0xc] sm:$0xf]
      %v254 = vunpack.c.l.b16 %v186
      %v255 = vunpack.c.l.b16 %v187
      %v256 = vunpack.c.l.b16 %v188
      %v257 = vunpack.c.l.b16 %v189
      %v258 = vunpack.c.l.b16 %v190
      %v259 = vunpack.c.l.b16 %v191
      %v260 = vunpack.c.l.b16 %v192
      %v261 = vunpack.c.l.b16 %v193
      %v262 = vunpack.c.l.b16 %v194
      %v263 = vunpack.c.l.b16 %v195
      %v264 = vunpack.c.l.b16 %v196
      %v265 = vunpack.c.l.b16 %v197
      %v266 = vunpack.c.l.b16 %v198
      %v267 = vunpack.c.l.b16 %v199
      %v268 = vunpack.c.l.b16 %v200
      %v269 = vunpack.c.l.b16 %v201
      %v270 = vunpack.c.l.b16 %v202
      %v271 = vunpack.c.l.b16 %v203
      %v272 = vunpack.c.l.b16 %v204
      %v273 = vunpack.c.l.b16 %v205
      %v274 = vunpack.c.l.b16 %v206
      %v275 = vunpack.c.l.b16 %v207
      %v276 = vunpack.c.l.b16 %v208
      %v277 = vunpack.c.l.b16 %v209
      %v278 = vunpack.c.l.b16 %v210
      %v279 = vunpack.c.l.b16 %v211
      %v280 = vunpack.c.l.b16 %v212
      %v281 = vunpack.c.l.b16 %v213
      %v282 = vunpack.c.l.b16 %v214
      %v283 = vunpack.c.l.b16 %v215
      %v284 = vunpack.c.l.b16 %v216
      %v285 = vunpack.c.l.b16 %v217
      %v286 = vpack.c.b16 %v255, %v254
      %v287 = vpack.c.b16 %v257, %v256
      %v288 = vpack.c.b16 %v259, %v258
      %v289 = vpack.c.b16 %v261, %v260
      %v290 = vpack.c.b16 %v263, %v262
      %v291 = vpack.c.b16 %v265, %v264
      %v292 = vpack.c.b16 %v267, %v266
      %v293 = vpack.c.b16 %v269, %v268
      %v294 = vpack.c.b16 %v271, %v270
      %v295 = vpack.c.b16 %v273, %v272
      %v296 = vpack.c.b16 %v275, %v274
      %v297 = vpack.c.b16 %v277, %v276
      %v298 = vpack.c.b16 %v279, %v278
      %v299 = vpack.c.b16 %v281, %v280
      %v300 = vpack.c.b16 %v283, %v282
      %v301 = vpack.c.b16 %v285, %v284
      %v306 = vunpack.c.l.b16 %v218
      %v307 = vunpack.c.l.b16 %v219
      %v308 = vunpack.c.l.b16 %v220
      %v309 = vunpack.c.l.b16 %v221
      %v310 = vpack.c.b16 %v307, %v306
      %v311 = vpack.c.b16 %v309, %v308
      %vm314 = vcmask 261120
      %v316 = vsel %vm314, %v286, 0
      %v319 = vsel %vm314, %v287, 0
      %v322 = vsel %vm314, %v288, 0
      %v325 = vsel %vm314, %v289, 0
      %v328 = vsel %vm314, %v290, 0
      %v331 = vsel %vm314, %v291, 0
      %v334 = vsel %vm314, %v292, 0
      %v337 = vsel %vm314, %v293, 0
      %v340 = vsel %vm314, %v294, 0
      %v343 = vsel %vm314, %v295, 0
      %v346 = vsel %vm314, %v296, 0
      %v349 = vsel %vm314, %v297, 0
      %v352 = vsel %vm314, %v298, 0
      %v355 = vsel %vm314, %v299, 0
      %v358 = vsel %vm314, %v300, 0
      %v361 = vsel %vm314, %v301, 0
      %363 = vmatprep.subr.bf16.mxu0 0
      %364 = vmatpush1.bf16.msra.mxu0 0
      %365 = vmatprep.subr.bf16.mxu0 0
      %366 = vmatpush1.bf16.msra.mxu0 0
      %367 = vmatprep.subr.bf16.mxu0 0
      %368 = vmatpush1.bf16.msra.mxu0 0
      %369 = vmatprep.subr.bf16.mxu0 0
      %370 = vmatpush1.bf16.msra.mxu0 0
      %371 = vmatprep.subr.bf16.mxu0 0
      %372 = vmatpush1.bf16.msra.mxu0 0
      %373 = vmatprep.subr.bf16.mxu0 0
      %374 = vmatpush1.bf16.msra.mxu0 0
      %375 = vmatprep.subr.bf16.mxu0 0
      %376 = vmatpush1.bf16.msra.mxu0 %v311
      %377 = vmatprep.subr.bf16.mxu0 0
      %378 = vmatpush1.bf16.msra.mxu0 %v310
      %379 = vmatprep.subr.bf16.mxu0 0
      %380 = vmatpush2.bf16.msra.mxu0 0
      %381 = vmatprep.subr.bf16.mxu0 0
      %382 = vmatpush2.bf16.msra.mxu0 0
      %383 = vmatprep.subr.bf16.mxu0 0
      %384 = vmatpush2.bf16.msra.mxu0 0
      %385 = vmatprep.subr.bf16.mxu0 0
      %386 = vmatpush2.bf16.msra.mxu0 0
      %387 = vmatprep.subr.bf16.mxu0 0
      %388 = vmatpush2.bf16.msra.mxu0 0
      %389 = vmatprep.subr.bf16.mxu0 0
      %390 = vmatpush2.bf16.msra.mxu0 0
      %391 = vmatprep.subr.bf16.mxu0 0
      %392 = vmatpush2.bf16.msra.mxu0 0
      %393 = vmatprep.subr.bf16.mxu0 0
      %394 = vmatpush2.bf16.msra.mxu0 0
      %395 = vmatprep.mubr.bf16.mxu0 0
      %396 = vmatmul.mubr.bf16.gmra.mxu0 %v316
      %v397 = vpop.f32.mrf.mxu0
      %v398 = vadd.f32 0.0, %v397
      %v399 = vpop.f32.mrf.mxu0
      %v400 = vpop.f32.mrf.mxu0
      %v401 = vadd.f32 0.0, %v400
      %v402 = vpop.f32.mrf.mxu0
      %403 = vmatprep.mubr.bf16.mxu0 0
      %404 = vmatmul.mubr.bf16.gmra.mxu0 %v319
      %v405 = vpop.f32.mrf.mxu0
      %v406 = vadd.f32 0.0, %v405
      %v407 = vpop.f32.mrf.mxu0
      %v408 = vpop.f32.mrf.mxu0
      %v409 = vadd.f32 0.0, %v408
      %v410 = vpop.f32.mrf.mxu0
      %411 = vmatprep.mubr.bf16.mxu0 0
      %412 = vmatmul.mubr.bf16.gmra.mxu0 %v322
      %v413 = vpop.f32.mrf.mxu0
      %v414 = vadd.f32 0.0, %v413
      %v415 = vpop.f32.mrf.mxu0
      %v416 = vpop.f32.mrf.mxu0
      %v417 = vadd.f32 0.0, %v416
      %v418 = vpop.f32.mrf.mxu0
      %419 = vmatprep.mubr.bf16.mxu0 0
      %420 = vmatmul.mubr.bf16.gmra.mxu0 %v325
      %v421 = vpop.f32.mrf.mxu0
      %v422 = vadd.f32 0.0, %v421
      %v423 = vpop.f32.mrf.mxu0
      %v424 = vpop.f32.mrf.mxu0
      %v425 = vadd.f32 0.0, %v424
      %v426 = vpop.f32.mrf.mxu0
      %427 = vmatprep.mubr.bf16.mxu0 0
      %428 = vmatmul.mubr.bf16.gmra.mxu0 %v328
      %v429 = vpop.f32.mrf.mxu0
      %v430 = vadd.f32 0.0, %v429
      %v431 = vpop.f32.mrf.mxu0
      %v432 = vpop.f32.mrf.mxu0
      %v433 = vadd.f32 0.0, %v432
      %v434 = vpop.f32.mrf.mxu0
      %435 = vmatprep.mubr.bf16.mxu0 0
      %436 = vmatmul.mubr.bf16.gmra.mxu0 %v331
      %v437 = vpop.f32.mrf.mxu0
      %v438 = vadd.f32 0.0, %v437
      %v439 = vpop.f32.mrf.mxu0
      %v440 = vpop.f32.mrf.mxu0
      %v441 = vadd.f32 0.0, %v440
      %v442 = vpop.f32.mrf.mxu0
      %443 = vmatprep.mubr.bf16.mxu0 0
      %444 = vmatmul.mubr.bf16.gmra.mxu0 %v334
      %v445 = vpop.f32.mrf.mxu0
      %v446 = vadd.f32 0.0, %v445
      %v447 = vpop.f32.mrf.mxu0
      %v448 = vpop.f32.mrf.mxu0
      %v449 = vadd.f32 0.0, %v448
      %v450 = vpop.f32.mrf.mxu0
      %451 = vmatprep.mubr.bf16.mxu0 0
      %452 = vmatmul.mubr.bf16.gmra.mxu0 %v337
      %v453 = vpop.f32.mrf.mxu0
      %v454 = vadd.f32 0.0, %v453
      %v455 = vpop.f32.mrf.mxu0
      %v456 = vpop.f32.mrf.mxu0
      %v457 = vadd.f32 0.0, %v456
      %v458 = vpop.f32.mrf.mxu0
      %459 = vmatprep.mubr.bf16.mxu0 0
      %460 = vmatmul.mubr.bf16.gmra.mxu0 %v340
      %v461 = vpop.f32.mrf.mxu0
      %v462 = vadd.f32 0.0, %v461
      %v463 = vpop.f32.mrf.mxu0
      %v464 = vpop.f32.mrf.mxu0
      %v465 = vadd.f32 0.0, %v464
      %v466 = vpop.f32.mrf.mxu0
      %467 = vmatprep.mubr.bf16.mxu0 0
      %468 = vmatmul.mubr.bf16.gmra.mxu0 %v343
      %v469 = vpop.f32.mrf.mxu0
      %v470 = vadd.f32 0.0, %v469
      %v471 = vpop.f32.mrf.mxu0
      %v472 = vpop.f32.mrf.mxu0
      %v473 = vadd.f32 0.0, %v472
      %v474 = vpop.f32.mrf.mxu0
      %475 = vmatprep.mubr.bf16.mxu0 0
      %476 = vmatmul.mubr.bf16.gmra.mxu0 %v346
      %v477 = vpop.f32.mrf.mxu0
      %v478 = vadd.f32 0.0, %v477
      %v479 = vpop.f32.mrf.mxu0
      %v480 = vpop.f32.mrf.mxu0
      %v481 = vadd.f32 0.0, %v480
      %v482 = vpop.f32.mrf.mxu0
      %483 = vmatprep.mubr.bf16.mxu0 0
      %484 = vmatmul.mubr.bf16.gmra.mxu0 %v349
      %v485 = vpop.f32.mrf.mxu0
      %v486 = vadd.f32 0.0, %v485
      %v487 = vpop.f32.mrf.mxu0
      %v488 = vpop.f32.mrf.mxu0
      %v489 = vadd.f32 0.0, %v488
      %v490 = vpop.f32.mrf.mxu0
      %491 = vmatprep.mubr.bf16.mxu0 0
      %492 = vmatmul.mubr.bf16.gmra.mxu0 %v352
      %v493 = vpop.f32.mrf.mxu0
      %v494 = vadd.f32 0.0, %v493
      %v495 = vpop.f32.mrf.mxu0
      %v496 = vpop.f32.mrf.mxu0
      %v497 = vadd.f32 0.0, %v496
      %v498 = vpop.f32.mrf.mxu0
      %499 = vmatprep.mubr.bf16.mxu0 0
      %500 = vmatmul.mubr.bf16.gmra.mxu0 %v355
      %v501 = vpop.f32.mrf.mxu0
      %v502 = vadd.f32 0.0, %v501
      %v503 = vpop.f32.mrf.mxu0
      %v504 = vpop.f32.mrf.mxu0
      %v505 = vadd.f32 0.0, %v504
      %v506 = vpop.f32.mrf.mxu0
      %507 = vmatprep.mubr.bf16.mxu0 0
      %508 = vmatmul.mubr.bf16.gmra.mxu0 %v358
      %v509 = vpop.f32.mrf.mxu0
      %v510 = vadd.f32 0.0, %v509
      %v511 = vpop.f32.mrf.mxu0
      %v512 = vpop.f32.mrf.mxu0
      %v513 = vadd.f32 0.0, %v512
      %v514 = vpop.f32.mrf.mxu0
      %515 = vmatprep.mubr.bf16.mxu0 0
      %516 = vmatmul.mubr.bf16.gmra.mxu0 %v361
      %v517 = vpop.f32.mrf.mxu0
      %v518 = vadd.f32 0.0, %v517
      %v519 = vpop.f32.mrf.mxu0
      %v520 = vpop.f32.mrf.mxu0
      %v521 = vadd.f32 0.0, %v520
      %v522 = vpop.f32.mrf.mxu0
      %523 = vdwg.mxu0
      %vm524 = vcmask 64512
      %525 = vst.msk [vmem:[%s179] sm:$0xff] %vm524, %v398
      %526 = vst.msk [vmem:[%s179 + $0x8] sm:$0xff] %vm524, %v401
      %527 = vst.msk [vmem:[%s179 + $0x10] sm:$0xff] %vm524, %v406
      %528 = vst.msk [vmem:[%s179 + $0x18] sm:$0xff] %vm524, %v409
      %529 = vst.msk [vmem:[%s179 + $0x20] sm:$0xff] %vm524, %v414
      %530 = vst.msk [vmem:[%s179 + $0x28] sm:$0xff] %vm524, %v417
      %531 = vst.msk [vmem:[%s179 + $0x30] sm:$0xff] %vm524, %v422
      %532 = vst.msk [vmem:[%s179 + $0x38] sm:$0xff] %vm524, %v425
      %533 = vst.msk [vmem:[%s179 + $0x40] sm:$0xff] %vm524, %v430
      %534 = vst.msk [vmem:[%s179 + $0x48] sm:$0xff] %vm524, %v433
      %535 = vst.msk [vmem:[%s179 + $0x50] sm:$0xff] %vm524, %v438
      %536 = vst.msk [vmem:[%s179 + $0x58] sm:$0xff] %vm524, %v441
      %537 = vst.msk [vmem:[%s179 + $0x60] sm:$0xff] %vm524, %v446
      %538 = vst.msk [vmem:[%s179 + $0x68] sm:$0xff] %vm524, %v449
      %539 = vst.msk [vmem:[%s179 + $0x70] sm:$0xff] %vm524, %v454
      %540 = vst.msk [vmem:[%s179 + $0x78] sm:$0xff] %vm524, %v457
      %541 = vst.msk [vmem:[%s179 + $0x80] sm:$0xff] %vm524, %v462
      %542 = vst.msk [vmem:[%s179 + $0x88] sm:$0xff] %vm524, %v465
      %543 = vst.msk [vmem:[%s179 + $0x90] sm:$0xff] %vm524, %v470
      %544 = vst.msk [vmem:[%s179 + $0x98] sm:$0xff] %vm524, %v473
      %545 = vst.msk [vmem:[%s179 + $0xa0] sm:$0xff] %vm524, %v478
      %546 = vst.msk [vmem:[%s179 + $0xa8] sm:$0xff] %vm524, %v481
      %547 = vst.msk [vmem:[%s179 + $0xb0] sm:$0xff] %vm524, %v486
      %548 = vst.msk [vmem:[%s179 + $0xb8] sm:$0xff] %vm524, %v489
      %549 = vst.msk [vmem:[%s179 + $0xc0] sm:$0xff] %vm524, %v494
      %550 = vst.msk [vmem:[%s179 + $0xc8] sm:$0xff] %vm524, %v497
      %551 = vst.msk [vmem:[%s179 + $0xd0] sm:$0xff] %vm524, %v502
      %552 = vst.msk [vmem:[%s179 + $0xd8] sm:$0xff] %vm524, %v505
      %553 = vst.msk [vmem:[%s179 + $0xe0] sm:$0xff] %vm524, %v510
      %554 = vst.msk [vmem:[%s179 + $0xe8] sm:$0xff] %vm524, %v513
      %555 = vst.msk [vmem:[%s179 + $0xf0] sm:$0xff] %vm524, %v518
      %556 = vst.msk [vmem:[%s179 + $0xf8] sm:$0xff] %vm524, %v521
      %v557 = vsel %vm524, %v398, 0.0
      %v558 = vsel %vm524, %v401, 0.0
      %v559 = vadd.f32 %v557, %v558
      %v560 = vsel %vm524, %v406, 0.0
      %v561 = vadd.f32 %v559, %v560
      %v562 = vsel %vm524, %v409, 0.0
      %v563 = vadd.f32 %v561, %v562
      %v564 = vsel %vm524, %v414, 0.0
      %v565 = vadd.f32 %v563, %v564
      %v566 = vsel %vm524, %v417, 0.0
      %v567 = vadd.f32 %v565, %v566
      %v568 = vsel %vm524, %v422, 0.0
      %v569 = vadd.f32 %v567, %v568
      %v570 = vsel %vm524, %v425, 0.0
      %v571 = vadd.f32 %v569, %v570
      %v572 = vsel %vm524, %v430, 0.0
      %v573 = vadd.f32 %v571, %v572
      %v574 = vsel %vm524, %v433, 0.0
      %v575 = vadd.f32 %v573, %v574
      %v576 = vsel %vm524, %v438, 0.0
      %v577 = vadd.f32 %v575, %v576
      %v578 = vsel %vm524, %v441, 0.0
      %v579 = vadd.f32 %v577, %v578
      %v580 = vsel %vm524, %v446, 0.0
      %v581 = vadd.f32 %v579, %v580
      %v582 = vsel %vm524, %v449, 0.0
      %v583 = vadd.f32 %v581, %v582
      %v584 = vsel %vm524, %v454, 0.0
      %v585 = vadd.f32 %v583, %v584
      %v586 = vsel %vm524, %v457, 0.0
      %v587 = vadd.f32 %v585, %v586
      %v588 = vsel %vm524, %v462, 0.0
      %v589 = vadd.f32 %v587, %v588
      %v590 = vsel %vm524, %v465, 0.0
      %v591 = vadd.f32 %v589, %v590
      %v592 = vsel %vm524, %v470, 0.0
      %v593 = vadd.f32 %v591, %v592
      %v594 = vsel %vm524, %v473, 0.0
      %v595 = vadd.f32 %v593, %v594
      %v596 = vsel %vm524, %v478, 0.0
      %v597 = vadd.f32 %v595, %v596
      %v598 = vsel %vm524, %v481, 0.0
      %v599 = vadd.f32 %v597, %v598
      %v600 = vsel %vm524, %v486, 0.0
      %v601 = vadd.f32 %v599, %v600
      %v602 = vsel %vm524, %v489, 0.0
      %v603 = vadd.f32 %v601, %v602
      %v604 = vsel %vm524, %v494, 0.0
      %v605 = vadd.f32 %v603, %v604
      %v606 = vsel %vm524, %v497, 0.0
      %v607 = vadd.f32 %v605, %v606
      %v608 = vsel %vm524, %v502, 0.0
      %v609 = vadd.f32 %v607, %v608
      %v610 = vsel %vm524, %v505, 0.0
      %v611 = vadd.f32 %v609, %v610
      %v612 = vsel %vm524, %v510, 0.0
      %v613 = vadd.f32 %v611, %v612
      %v614 = vsel %vm524, %v513, 0.0
      %v615 = vadd.f32 %v613, %v614
      %v616 = vsel %vm524, %v518, 0.0
      %v617 = vadd.f32 %v615, %v616
      %v618 = vsel %vm524, %v521, 0.0
      %v619 = vadd.f32 %v617, %v618
      %v620 = vrot.slane %v619, 4
      %v621 = vadd.f32 %v619, %v620
      %v622 = vrot.slane %v621, 2
      %v623 = vadd.f32 %v621, %v622
      %v624 = vrot.slane %v623, 1
      %v625 = vadd.f32 %v623, %v624
      %v626 = vmul.f32 %v398, %v398
      %v627 = vmul.f32 %v401, %v401
      %v628 = vmul.f32 %v406, %v406
      %v629 = vmul.f32 %v409, %v409
      %v630 = vmul.f32 %v414, %v414
      %v631 = vmul.f32 %v417, %v417
      %v632 = vmul.f32 %v422, %v422
      %v633 = vmul.f32 %v425, %v425
      %v634 = vmul.f32 %v430, %v430
      %v635 = vmul.f32 %v433, %v433
      %v636 = vmul.f32 %v438, %v438
      %v637 = vmul.f32 %v441, %v441
      %v638 = vmul.f32 %v446, %v446
      %v639 = vmul.f32 %v449, %v449
      %v640 = vmul.f32 %v454, %v454
      %v641 = vmul.f32 %v457, %v457
      %v642 = vmul.f32 %v462, %v462
      %v643 = vmul.f32 %v465, %v465
      %v644 = vmul.f32 %v470, %v470
      %v645 = vmul.f32 %v473, %v473
      %v646 = vmul.f32 %v478, %v478
      %v647 = vmul.f32 %v481, %v481
      %v648 = vmul.f32 %v486, %v486
      %v649 = vmul.f32 %v489, %v489
      %v650 = vmul.f32 %v494, %v494
      %v651 = vmul.f32 %v497, %v497
      %v652 = vmul.f32 %v502, %v502
      %v653 = vmul.f32 %v505, %v505
      %v654 = vmul.f32 %v510, %v510
      %v655 = vmul.f32 %v513, %v513
      %v656 = vmul.f32 %v518, %v518
      %v657 = vmul.f32 %v521, %v521
      %v658 = vsel %vm524, %v626, 0.0
      %v659 = vsel %vm524, %v627, 0.0
      %v660 = vadd.f32 %v658, %v659
      %v661 = vsel %vm524, %v628, 0.0
      %v662 = vadd.f32 %v660, %v661
      %v663 = vsel %vm524, %v629, 0.0
      %v664 = vadd.f32 %v662, %v663
      %v665 = vsel %vm524, %v630, 0.0
      %v666 = vadd.f32 %v664, %v665
      %v667 = vsel %vm524, %v631, 0.0
      %v668 = vadd.f32 %v666, %v667
      %v669 = vsel %vm524, %v632, 0.0
      %v670 = vadd.f32 %v668, %v669
      %v671 = vsel %vm524, %v633, 0.0
      %v672 = vadd.f32 %v670, %v671
      %v673 = vsel %vm524, %v634, 0.0
      %v674 = vadd.f32 %v672, %v673
      %v675 = vsel %vm524, %v635, 0.0
      %v676 = vadd.f32 %v674, %v675
      %v677 = vsel %vm524, %v636, 0.0
      %v678 = vadd.f32 %v676, %v677
      %v679 = vsel %vm524, %v637, 0.0
      %v680 = vadd.f32 %v678, %v679
      %v681 = vsel %vm524, %v638, 0.0
      %v682 = vadd.f32 %v680, %v681
      %v683 = vsel %vm524, %v639, 0.0
      %v684 = vadd.f32 %v682, %v683
      %v685 = vsel %vm524, %v640, 0.0
      %v686 = vadd.f32 %v684, %v685
      %v687 = vsel %vm524, %v641, 0.0
      %v688 = vadd.f32 %v686, %v687
      %v689 = vsel %vm524, %v642, 0.0
      %v690 = vadd.f32 %v688, %v689
      %v691 = vsel %vm524, %v643, 0.0
      %v692 = vadd.f32 %v690, %v691
      %v693 = vsel %vm524, %v644, 0.0
      %v694 = vadd.f32 %v692, %v693
      %v695 = vsel %vm524, %v645, 0.0
      %v696 = vadd.f32 %v694, %v695
      %v697 = vsel %vm524, %v646, 0.0
      %v698 = vadd.f32 %v696, %v697
      %v699 = vsel %vm524, %v647, 0.0
      %v700 = vadd.f32 %v698, %v699
      %v701 = vsel %vm524, %v648, 0.0
      %v702 = vadd.f32 %v700, %v701
      %v703 = vsel %vm524, %v649, 0.0
      %v704 = vadd.f32 %v702, %v703
      %v705 = vsel %vm524, %v650, 0.0
      %v706 = vadd.f32 %v704, %v705
      %v707 = vsel %vm524, %v651, 0.0
      %v708 = vadd.f32 %v706, %v707
      %v709 = vsel %vm524, %v652, 0.0
      %v710 = vadd.f32 %v708, %v709
      %v711 = vsel %vm524, %v653, 0.0
      %v712 = vadd.f32 %v710, %v711
      %v713 = vsel %vm524, %v654, 0.0
      %v714 = vadd.f32 %v712, %v713
      %v715 = vsel %vm524, %v655, 0.0
      %v716 = vadd.f32 %v714, %v715
      %v717 = vsel %vm524, %v656, 0.0
      %v718 = vadd.f32 %v716, %v717
      %v719 = vsel %vm524, %v657, 0.0
      %v720 = vadd.f32 %v718, %v719
      %v721 = vrot.slane %v720, 4
      %v722 = vadd.f32 %v720, %v721
      %v723 = vrot.slane %v722, 2
      %v724 = vadd.f32 %v722, %v723
      %v725 = vrot.slane %v724, 1
      %v726 = vadd.f32 %v724, %v725
      %vm727 = vcmask 1040384
      %v728 = vsel %vm727, %v625, %v726
      %vm729 = vcmask 1041408
      %v730 = vsel %vm729, %v728, 0.0
      %731 = vst.msk [vmem:[%s184] sm:$0xff] %vm524, %v730
      %s732 = smul.u32 32, %s15
      %p733 = scmp.lt.s32.totalorder %s732, 95
      %s734 = scalar_select %p733, %s732, 95
      %s735 = smul.addr %s734, 8
      %s736 = scalar_lea.vmem %s2, %s735
      %p737 = scmp.lt.s32.totalorder %s15, 2
      %s738 = scalar_select %p737, %s15, 2
      %s739 = smul.addr %s738, 8
      %s740 = scalar_lea.vmem %s3, %s739
      // Predicated region
      $region29: #{bottleneck_forward.4} parent=27 // pred_check
        %p741 = pneg %p80
      $region30: #{bottleneck_forward.4} parent=27 // pred_check_branch
        %743 = sbr.rel (%p741) target = $region32
      $region31: #{bottleneck_forward.4} parent=27 // pred_region
        %s744 = smul.u32 32, %s15
      $region32: #{bottleneck_forward.4} parent=27 // pred_fallthru
        _
      // Predicated region
      $region33: #{bottleneck_forward.4} parent=27 // pred_check
        %p745 = pneg %p106
      $region34: #{bottleneck_forward.4} parent=27 // pred_check_branch
        %747 = sbr.rel (%p745) target = $region36
      $region35: #{bottleneck_forward.4} parent=27 // pred_region
        _
      $region36: #{bottleneck_forward.4} parent=27 // pred_fallthru
        _
    $region28: #{bottleneck_forward.4} parent=5 // pred_fallthru
      _
    %p748 = scmp.le.s32.totalorder 2, %s10
    // Predicated region
    $region37: #{bottleneck_forward.4} parent=5 // pred_check
      %p749 = pneg %p748
    $region38: #{bottleneck_forward.4} parent=5 // pred_check_branch
      %751 = sbr.rel (%p749) target = $region40
    $region39: #{bottleneck_forward.4} parent=5 // pred_region
      %s752 = ssub.s32 %s10, 2
      // Predicated region
      $region41: #{bottleneck_forward.4} parent=39 // pred_check
        %p753 = pneg %p86
      $region42: #{bottleneck_forward.4} parent=39 // pred_check_branch
        %755 = sbr.rel (%p753) target = $region44
      $region43: #{bottleneck_forward.4} parent=39 // pred_region
        %s756 = smul.u32 32, %s16
        %p757 = scmp.lt.s32.totalorder %s756, 95
        %s758 = scalar_select %p757, %s756, 95
        %s759 = smul.addr %s758, 8
        %s760 = scalar_lea.vmem %s2, %s759
      $region44: #{bottleneck_forward.4} parent=39 // pred_fallthru
        _
      // Predicated region
      $region45: #{bottleneck_forward.4} parent=39 // pred_check
        %p761 = pneg %p112
      $region46: #{bottleneck_forward.4} parent=39 // pred_check_branch
        %763 = sbr.rel (%p761) target = $region48
      $region47: #{bottleneck_forward.4} parent=39 // pred_region
        %p764 = scmp.lt.s32.totalorder %s16, 2
        %s765 = scalar_select %p764, %s16, 2
        %s766 = smul.addr %s765, 8
        %s767 = scalar_lea.vmem %s3, %s766
      $region48: #{bottleneck_forward.4} parent=39 // pred_fallthru
        _
    $region40: #{bottleneck_forward.4} parent=5 // pred_fallthru
      _
  $region6: #{bottleneck_forward.4} parent=0 // loop_footer
    %s14 = sadd.s32 1, %s10
  $region7: #{bottleneck_forward.4} parent=0 // loop_footer_branch
    %9 = sbr.rel target = $region3
  $region8: #{bottleneck_forward.4} parent=0 // loop_exit
    _

// kernel: bottleneck_forward.6
$region0: #{bottleneck_forward.6}
  #allocation0 [shape = 'u32[]', space=smem, size = 0x4, offset = 0x4, fixed_abs, tag = 'smem constant byte address 0x4 - core index']
  #allocation1 [shape = 'u32[144,128]{1,0:T(1,128)}', space=vmem, size = 0x12000, scoped, tag = 'internal scratch']
  %s0 = inlined_call_operand.vmem [shape: f32[768,8], index: 0, kind: input, shape index: {}]
  %s1 = inlined_call_operand.vmem [shape: f32[768,1], index: 1, kind: input, shape index: {}]
  %s2 = inlined_call_operand.vmem [shape: f32[1,8], index: 2, kind: input, shape index: {}]
  %s3 = inlined_call_operand.vmem [shape: f32[1,8], index: 3, kind: input, shape index: {}]
  %s4 = inlined_call_operand.vmem [shape: bf16[8,32], index: 4, kind: input, shape index: {}]
  %s5 = inlined_call_operand.vmem [shape: f32[768,32], index: 5, kind: output, shape index: {0}]
  %s6 = inlined_call_operand.vmem [shape: f32[24,32], index: 6, kind: output, shape index: {1}]
  %7 = xla_tuple %s5, %s6
  %s8 = sld [smem:[#allocation0]]
  $region61: #{bottleneck_forward.6} parent=0
    _
  %s10 = ssub.s32 1, %s8
  %s11 = scalar_select 0, %s10, %s8
  loop: start=0, step=1, limit=5
  $region2: #{bottleneck_forward.6} parent=0 // loop_pre_header
    _
  $region3: #{bottleneck_forward.6} parent=0 // loop_header
    %s13 = sphi 0, %s17
    %p14 = scmp.ge.s32.totalorder %s13, 5
    %s23 = sphi 0, %s25
    %s26 = sphi 0, %s23
    %s27 = sphi 0, %s26
    %s43 = sphi 0, %s27
    %s49 = sphi 0, %s51
    %s52 = sphi 0, %s49
    %s53 = sphi 0, %s52
    %s69 = sphi 0, %s53
    %s73 = sphi 0, %s73
    %s75 = sphi 0, %s73
    %s76 = sphi 0, %s75
    %s90 = sphi 0, %s76
    %s94 = sphi 0, %s94
    %s96 = sphi 0, %s94
    %s97 = sphi 0, %s96
    %s111 = sphi 0, %s97
    %s115 = sphi 0, %s115
    %s117 = sphi 0, %s115
    %s118 = sphi 0, %s117
    %s132 = sphi 0, %s118
    %s138 = sphi 0, %s140
    %s141 = sphi 0, %s138
    %s142 = sphi 0, %s141
    %s158 = sphi 0, %s142
    %s164 = sphi 0, %s166
    %s167 = sphi 0, %s164
    %s168 = sphi 0, %s167
    %s184 = sphi 0, %s168
  $region4: #{bottleneck_forward.6} parent=0 // loop_header_branch
    %16 = sbr.rel (%p14) target = $region8
  $region5: #{bottleneck_forward.6} parent=0 // loop_body
    %s18 = ssub.s32 %s13, 1
    %s19 = ssub.s32 %s13, 2
    %s20 = sadd.s32 %s13, 1
    %s21 = ssub.s32 %s13, %s20
    %p22 = scmp.eq.s32.totalorder %s21, 0
    %s24 = sadd.s32 %s23, 1
    %s25 = scalar_select %p22, %s23, %s24
    %p28 = pneg %p22
    %p29 = scmp.eq.s32.totalorder %s13, 2
    %p30 = por %p28, %p29
    %p31 = scmp.ne.s32.totalorder %s23, %s26
    %p32 = scmp.eq.s32.totalorder %s13, 0
    %p33 = por %p31, %p32
    %p34 = scmp.ne.s32.totalorder %s23, %s26
    %p35 = scmp.eq.s32.totalorder %s18, 2
    %p36 = por %p34, %p35
    %p37 = scmp.ne.s32.totalorder %s26, %s27
    %p38 = scmp.eq.s32.totalorder %s18, 0
    %p39 = por %p37, %p38
    %p40 = scmp.ne.s32.totalorder %s26, %s27
    %p41 = scmp.eq.s32.totalorder %s19, 2
    %p42 = por %p40, %p41
    %p44 = scmp.ne.s32.totalorder %s27, %s43
    %p45 = scmp.eq.s32.totalorder %s19, 0
    %p46 = por %p44, %p45
    %s47 = ssub.s32 %s13, %s20
    %p48 = scmp.eq.s32.totalorder %s47, 0
    %s50 = sadd.s32 %s49, 1
    %s51 = scalar_select %p48, %s49, %s50
    %p54 = pneg %p48
    %p55 = scmp.eq.s32.totalorder %s13, 2
    %p56 = por %p54, %p55
    %p57 = scmp.ne.s32.totalorder %s49, %s52
    %p58 = scmp.eq.s32.totalorder %s13, 0
    %p59 = por %p57, %p58
    %p60 = scmp.ne.s32.totalorder %s49, %s52
    %p61 = scmp.eq.s32.totalorder %s18, 2
    %p62 = por %p60, %p61
    %p63 = scmp.ne.s32.totalorder %s52, %s53
    %p64 = scmp.eq.s32.totalorder %s18, 0
    %p65 = por %p63, %p64
    %p66 = scmp.ne.s32.totalorder %s52, %s53
    %p67 = scmp.eq.s32.totalorder %s19, 2
    %p68 = por %p66, %p67
    %p70 = scmp.ne.s32.totalorder %s53, %s69
    %p71 = scmp.eq.s32.totalorder %s19, 0
    %p72 = por %p70, %p71
    %s74 = sadd.s32 %s73, 1
    %p77 = scmp.eq.s32.totalorder %s13, 2
    %p78 = scmp.ne.s32.totalorder %s73, %s75
    %p79 = scmp.eq.s32.totalorder %s13, 0
    %p80 = por %p78, %p79
    %p81 = scmp.ne.s32.totalorder %s73, %s75
    %p82 = scmp.eq.s32.totalorder %s18, 2
    %p83 = por %p81, %p82
    %p84 = scmp.ne.s32.totalorder %s75, %s76
    %p85 = scmp.eq.s32.totalorder %s18, 0
    %p86 = por %p84, %p85
    %p87 = scmp.ne.s32.totalorder %s75, %s76
    %p88 = scmp.eq.s32.totalorder %s19, 2
    %p89 = por %p87, %p88
    %p91 = scmp.ne.s32.totalorder %s76, %s90
    %p92 = scmp.eq.s32.totalorder %s19, 0
    %p93 = por %p91, %p92
    %s95 = sadd.s32 %s94, 1
    %p98 = scmp.eq.s32.totalorder %s13, 2
    %p99 = scmp.ne.s32.totalorder %s94, %s96
    %p100 = scmp.eq.s32.totalorder %s13, 0
    %p101 = por %p99, %p100
    %p102 = scmp.ne.s32.totalorder %s94, %s96
    %p103 = scmp.eq.s32.totalorder %s18, 2
    %p104 = por %p102, %p103
    %p105 = scmp.ne.s32.totalorder %s96, %s97
    %p106 = scmp.eq.s32.totalorder %s18, 0
    %p107 = por %p105, %p106
    %p108 = scmp.ne.s32.totalorder %s96, %s97
    %p109 = scmp.eq.s32.totalorder %s19, 2
    %p110 = por %p108, %p109
    %p112 = scmp.ne.s32.totalorder %s97, %s111
    %p113 = scmp.eq.s32.totalorder %s19, 0
    %p114 = por %p112, %p113
    %s116 = sadd.s32 %s115, 1
    %p119 = scmp.eq.s32.totalorder %s13, 2
    %p120 = scmp.ne.s32.totalorder %s115, %s117
    %p121 = scmp.eq.s32.totalorder %s13, 0
    %p122 = por %p120, %p121
    %p123 = scmp.ne.s32.totalorder %s115, %s117
    %p124 = scmp.eq.s32.totalorder %s18, 2
    %p125 = por %p123, %p124
    %p126 = scmp.ne.s32.totalorder %s117, %s118
    %p127 = scmp.eq.s32.totalorder %s18, 0
    %p128 = por %p126, %p127
    %p129 = scmp.ne.s32.totalorder %s117, %s118
    %p130 = scmp.eq.s32.totalorder %s19, 2
    %p131 = por %p129, %p130
    %p133 = scmp.ne.s32.totalorder %s118, %s132
    %p134 = scmp.eq.s32.totalorder %s19, 0
    %p135 = por %p133, %p134
    %s136 = ssub.s32 %s13, %s20
    %p137 = scmp.eq.s32.totalorder %s136, 0
    %s139 = sadd.s32 %s138, 1
    %s140 = scalar_select %p137, %s138, %s139
    %p143 = pneg %p137
    %p144 = scmp.eq.s32.totalorder %s13, 2
    %p145 = por %p143, %p144
    %p146 = scmp.ne.s32.totalorder %s138, %s141
    %p147 = scmp.eq.s32.totalorder %s13, 0
    %p148 = por %p146, %p147
    %p149 = scmp.ne.s32.totalorder %s138, %s141
    %p150 = scmp.eq.s32.totalorder %s18, 2
    %p151 = por %p149, %p150
    %p152 = scmp.ne.s32.totalorder %s141, %s142
    %p153 = scmp.eq.s32.totalorder %s18, 0
    %p154 = por %p152, %p153
    %p155 = scmp.ne.s32.totalorder %s141, %s142
    %p156 = scmp.eq.s32.totalorder %s19, 2
    %p157 = por %p155, %p156
    %p159 = scmp.ne.s32.totalorder %s142, %s158
    %p160 = scmp.eq.s32.totalorder %s19, 0
    %p161 = por %p159, %p160
    %s162 = ssub.s32 %s13, %s20
    %p163 = scmp.eq.s32.totalorder %s162, 0
    %s165 = sadd.s32 %s164, 1
    %s166 = scalar_select %p163, %s164, %s165
    %p169 = pneg %p163
    %p170 = scmp.eq.s32.totalorder %s13, 2
    %p171 = por %p169, %p170
    %p172 = scmp.ne.s32.totalorder %s164, %s167
    %p173 = scmp.eq.s32.totalorder %s13, 0
    %p174 = por %p172, %p173
    %p175 = scmp.ne.s32.totalorder %s164, %s167
    %p176 = scmp.eq.s32.totalorder %s18, 2
    %p177 = por %p175, %p176
    %p178 = scmp.ne.s32.totalorder %s167, %s168
    %p179 = scmp.eq.s32.totalorder %s18, 0
    %p180 = por %p178, %p179
    %p181 = scmp.ne.s32.totalorder %s167, %s168
    %p182 = scmp.eq.s32.totalorder %s19, 2
    %p183 = por %p181, %p182
    %p185 = scmp.ne.s32.totalorder %s168, %s184
    %p186 = scmp.eq.s32.totalorder %s19, 0
    %p187 = por %p185, %p186
    %p188 = scmp.le.s32.totalorder 1, %s13
    %p189 = scmp.lt.s32.totalorder %s13, 4
    %p190 = pnand %p188, %p189
    %p191 = pneg %p190
    // Predicated region
    $region9: #{bottleneck_forward.6} parent=5 // pred_check
      _
    $region10: #{bottleneck_forward.6} parent=5 // pred_check_branch
      %193 = sbr.rel (%p190) target = $region12
    $region11: #{bottleneck_forward.6} parent=5 // pred_region
      %s194 = ssub.s32 %s13, 1
      // Predicated region
      $region13: #{bottleneck_forward.6} parent=11 // pred_check
        %p195 = pneg %p86
      $region14: #{bottleneck_forward.6} parent=11 // pred_check_branch
        %197 = sbr.rel (%p195) target = $region16
      $region15: #{bottleneck_forward.6} parent=11 // pred_region
        _
      $region16: #{bottleneck_forward.6} parent=11 // pred_fallthru
        _
      // Predicated region
      $region17: #{bottleneck_forward.6} parent=11 // pred_check
        %p198 = pneg %p107
      $region18: #{bottleneck_forward.6} parent=11 // pred_check_branch
        %200 = sbr.rel (%p198) target = $region20
      $region19: #{bottleneck_forward.6} parent=11 // pred_region
        _
      $region20: #{bottleneck_forward.6} parent=11 // pred_fallthru
        _
      // Predicated region
      $region21: #{bottleneck_forward.6} parent=11 // pred_check
        %p201 = pneg %p128
      $region22: #{bottleneck_forward.6} parent=11 // pred_check_branch
        %203 = sbr.rel (%p201) target = $region24
      $region23: #{bottleneck_forward.6} parent=11 // pred_region
        _
      $region24: #{bottleneck_forward.6} parent=11 // pred_fallthru
        _
    $region12: #{bottleneck_forward.6} parent=5 // pred_fallthru
      _
    %p204 = scmp.lt.s32.totalorder %s13, 3
    // Predicated region
    $region25: #{bottleneck_forward.6} parent=5 // pred_check
      %p205 = pneg %p204
    $region26: #{bottleneck_forward.6} parent=5 // pred_check_branch
      %207 = sbr.rel (%p205) target = $region28
    $region27: #{bottleneck_forward.6} parent=5 // pred_region
      // Predicated region
      $region29: #{bottleneck_forward.6} parent=27 // pred_check
        %p208 = pneg %p33
      $region30: #{bottleneck_forward.6} parent=27 // pred_check_branch
        %210 = sbr.rel (%p208) target = $region32
      $region31: #{bottleneck_forward.6} parent=27 // pred_region
        %s211 = smul.u32 32, %s13
        %p212 = scmp.lt.s32.totalorder %s211, 95
        %s213 = scalar_select %p212, %s211, 95
        %s214 = smul.addr %s213, 8
        %s215 = scalar_lea.vmem %s0, %s214
        %s216 = smul.u32 32, %s13
      $region32: #{bottleneck_forward.6} parent=27 // pred_fallthru
        _
      // Predicated region
      $region33: #{bottleneck_forward.6} parent=27 // pred_check
        %p217 = pneg %p59
      $region34: #{bottleneck_forward.6} parent=27 // pred_check_branch
        %219 = sbr.rel (%p217) target = $region36
      $region35: #{bottleneck_forward.6} parent=27 // pred_region
        %s220 = smul.u32 32, %s13
        %p221 = scmp.lt.s32.totalorder %s220, 95
        %s222 = scalar_select %p221, %s220, 95
        %s223 = smul.addr %s222, 8
        %s224 = scalar_lea.vmem %s1, %s223
        %s225 = smul.u32 32, %s13
      $region36: #{bottleneck_forward.6} parent=27 // pred_fallthru
        _
    $region28: #{bottleneck_forward.6} parent=5 // pred_fallthru
      _
    %p226 = scmp.le.s32.totalorder 1, %s13
    %p227 = scmp.lt.s32.totalorder %s13, 4
    %p228 = pnand %p226, %p227
    %p229 = pneg %p228
    // Predicated region
    $region37: #{bottleneck_forward.6} parent=5 // pred_check
      _
    $region38: #{bottleneck_forward.6} parent=5 // pred_check_branch
      %231 = sbr.rel (%p228) target = $region40
    $region39: #{bottleneck_forward.6} parent=5 // pred_region
      %s232 = ssub.s32 %s13, 1
      %s233 = smul.u32 32, %s18
      %p234 = scmp.lt.s32.totalorder %s233, 95
      %s235 = scalar_select %p234, %s233, 95
      %s236 = smul.addr %s235, 8
      %s237 = scalar_lea.vmem %s0, %s236
      %p238 = pneg %p39
      %p239 = pneg %p36
      %s240 = smul.u32 32, %s18
      %p241 = scmp.lt.s32.totalorder %s240, 95
      %s242 = scalar_select %p241, %s240, 95
      %s243 = smul.addr %s242, 8
      %s244 = scalar_lea.vmem %s1, %s243
      %p245 = pneg %p65
      %p246 = pneg %p62
      %p247 = pneg %p86
      %p248 = pneg %p83
      %p249 = pneg %p107
      %p250 = pneg %p104
      %p251 = pneg %p128
      %p252 = pneg %p125
      %p253 = pneg %p154
      %p254 = pneg %p151
      %s255 = smul.u32 32, %s18
      %p256 = scmp.lt.s32.totalorder %s255, 95
      %s257 = scalar_select %p256, %s255, 95
      %s258 = smul.addr %s257, 8
      %s259 = scalar_lea.vmem %s5, %s258
      %p260 = pneg %p180
      %p261 = pneg %p177
      %p262 = scmp.lt.s32.totalorder %s18, 2
      %s263 = scalar_select %p262, %s18, 2
      %s264 = smul.addr %s263, 8
      %s265 = scalar_lea.vmem %s6, %s264
      %s266 = smul.u32 32, %s18
      %p267 = scmp.lt.s32.totalorder %s266, 95
      %s268 = scalar_select %p267, %s266, 95
      %s269 = smul.addr %s268, 8
      %s270 = scalar_lea.vmem %s0, %s269
      %s271 = smul.u32 32, %s18
      %s272 = smul.u32 32, %s18
      %p273 = scmp.lt.s32.totalorder %s272, 95
      %s274 = scalar_select %p273, %s272, 95
      %s275 = smul.addr %s274, 8
      %s276 = scalar_lea.vmem %s1, %s275
      %s277 = smul.u32 32, %s18
      %s278 = smul.u32 32, %s18
      %p279 = scmp.lt.s32.totalorder %s278, 95
      %s280 = scalar_select %p279, %s278, 95
      %s281 = smul.addr %s280, 8
      %s282 = scalar_lea.vmem %s5, %s281
      %s283 = smul.u32 32, %s18
      %p284 = scmp.lt.s32.totalorder %s18, 2
      %s285 = scalar_select %p284, %s18, 2
      %s286 = smul.addr %s285, 8
      %s287 = scalar_lea.vmem %s6, %s286
      %v289 = vld [vmem:[%s270] sm:$0xff]
      %v290 = vld [vmem:[%s270 + $0x8] sm:$0xff]
      %v291 = vld [vmem:[%s270 + $0x10] sm:$0xff]
      %v292 = vld [vmem:[%s270 + $0x18] sm:$0xff]
      %v293 = vld [vmem:[%s270 + $0x20] sm:$0xff]
      %v294 = vld [vmem:[%s270 + $0x28] sm:$0xff]
      %v295 = vld [vmem:[%s270 + $0x30] sm:$0xff]
      %v296 = vld [vmem:[%s270 + $0x38] sm:$0xff]
      %v297 = vld [vmem:[%s270 + $0x40] sm:$0xff]
      %v298 = vld [vmem:[%s270 + $0x48] sm:$0xff]
      %v299 = vld [vmem:[%s270 + $0x50] sm:$0xff]
      %v300 = vld [vmem:[%s270 + $0x58] sm:$0xff]
      %v301 = vld [vmem:[%s270 + $0x60] sm:$0xff]
      %v302 = vld [vmem:[%s270 + $0x68] sm:$0xff]
      %v303 = vld [vmem:[%s270 + $0x70] sm:$0xff]
      %v304 = vld [vmem:[%s270 + $0x78] sm:$0xff]
      %v305 = vld [vmem:[%s270 + $0x80] sm:$0xff]
      %v306 = vld [vmem:[%s270 + $0x88] sm:$0xff]
      %v307 = vld [vmem:[%s270 + $0x90] sm:$0xff]
      %v308 = vld [vmem:[%s270 + $0x98] sm:$0xff]
      %v309 = vld [vmem:[%s270 + $0xa0] sm:$0xff]
      %v310 = vld [vmem:[%s270 + $0xa8] sm:$0xff]
      %v311 = vld [vmem:[%s270 + $0xb0] sm:$0xff]
      %v312 = vld [vmem:[%s270 + $0xb8] sm:$0xff]
      %v313 = vld [vmem:[%s270 + $0xc0] sm:$0xff]
      %v314 = vld [vmem:[%s270 + $0xc8] sm:$0xff]
      %v315 = vld [vmem:[%s270 + $0xd0] sm:$0xff]
      %v316 = vld [vmem:[%s270 + $0xd8] sm:$0xff]
      %v317 = vld [vmem:[%s270 + $0xe0] sm:$0xff]
      %v318 = vld [vmem:[%s270 + $0xe8] sm:$0xff]
      %v319 = vld [vmem:[%s270 + $0xf0] sm:$0xff]
      %v320 = vld [vmem:[%s270 + $0xf8] sm:$0xff]
      %v321 = vld [vmem:[%s2] sm:$0x1]
      %v323 = vlaneseq
      %v324 = vshrl.u32 %v323, 7
      %v325 = vsub.s32 0, %v324
      %v326 = vrot.slane %v321, %v325
      %v328 = vmul.f32 %v289, %v326
      %v329 = vmul.f32 %v290, %v326
      %v330 = vmul.f32 %v291, %v326
      %v331 = vmul.f32 %v292, %v326
      %v332 = vmul.f32 %v293, %v326
      %v333 = vmul.f32 %v294, %v326
      %v334 = vmul.f32 %v295, %v326
      %v335 = vmul.f32 %v296, %v326
      %v336 = vmul.f32 %v297, %v326
      %v337 = vmul.f32 %v298, %v326
      %v338 = vmul.f32 %v299, %v326
      %v339 = vmul.f32 %v300, %v326
      %v340 = vmul.f32 %v301, %v326
      %v341 = vmul.f32 %v302, %v326
      %v342 = vmul.f32 %v303, %v326
      %v343 = vmul.f32 %v304, %v326
      %v344 = vmul.f32 %v305, %v326
      %v345 = vmul.f32 %v306, %v326
      %v346 = vmul.f32 %v307, %v326
      %v347 = vmul.f32 %v308, %v326
      %v348 = vmul.f32 %v309, %v326
      %v349 = vmul.f32 %v310, %v326
      %v350 = vmul.f32 %v311, %v326
      %v351 = vmul.f32 %v312, %v326
      %v352 = vmul.f32 %v313, %v326
      %v353 = vmul.f32 %v314, %v326
      %v354 = vmul.f32 %v315, %v326
      %v355 = vmul.f32 %v316, %v326
      %v356 = vmul.f32 %v317, %v326
      %v357 = vmul.f32 %v318, %v326
      %v358 = vmul.f32 %v319, %v326
      %v359 = vmul.f32 %v320, %v326
      %v360 = vld [vmem:[%s3] sm:$0x1]
      %v362 = vlaneseq
      %v363 = vshrl.u32 %v362, 7
      %v364 = vsub.s32 0, %v363
      %v365 = vrot.slane %v360, %v364
      %v367 = vadd.f32 %v328, %v365
      %v368 = vadd.f32 %v329, %v365
      %v369 = vadd.f32 %v330, %v365
      %v370 = vadd.f32 %v331, %v365
      %v371 = vadd.f32 %v332, %v365
      %v372 = vadd.f32 %v333, %v365
      %v373 = vadd.f32 %v334, %v365
      %v374 = vadd.f32 %v335, %v365
      %v375 = vadd.f32 %v336, %v365
      %v376 = vadd.f32 %v337, %v365
      %v377 = vadd.f32 %v338, %v365
      %v378 = vadd.f32 %v339, %v365
      %v379 = vadd.f32 %v340, %v365
      %v380 = vadd.f32 %v341, %v365
      %v381 = vadd.f32 %v342, %v365
      %v382 = vadd.f32 %v343, %v365
      %v383 = vadd.f32 %v344, %v365
      %v384 = vadd.f32 %v345, %v365
      %v385 = vadd.f32 %v346, %v365
      %v386 = vadd.f32 %v347, %v365
      %v387 = vadd.f32 %v348, %v365
      %v388 = vadd.f32 %v349, %v365
      %v389 = vadd.f32 %v350, %v365
      %v390 = vadd.f32 %v351, %v365
      %v391 = vadd.f32 %v352, %v365
      %v392 = vadd.f32 %v353, %v365
      %v393 = vadd.f32 %v354, %v365
      %v394 = vadd.f32 %v355, %v365
      %v395 = vadd.f32 %v356, %v365
      %v396 = vadd.f32 %v357, %v365
      %v397 = vadd.f32 %v358, %v365
      %v398 = vadd.f32 %v359, %v365
      %v399 = vmax.f32 %v367, 0.0
      %v400 = vmax.f32 %v368, 0.0
      %v401 = vmax.f32 %v369, 0.0
      %v402 = vmax.f32 %v370, 0.0
      %v403 = vmax.f32 %v371, 0.0
      %v404 = vmax.f32 %v372, 0.0
      %v405 = vmax.f32 %v373, 0.0
      %v406 = vmax.f32 %v374, 0.0
      %v407 = vmax.f32 %v375, 0.0
      %v408 = vmax.f32 %v376, 0.0
      %v409 = vmax.f32 %v377, 0.0
      %v410 = vmax.f32 %v378, 0.0
      %v411 = vmax.f32 %v379, 0.0
      %v412 = vmax.f32 %v380, 0.0
      %v413 = vmax.f32 %v381, 0.0
      %v414 = vmax.f32 %v382, 0.0
      %v415 = vmax.f32 %v383, 0.0
      %v416 = vmax.f32 %v384, 0.0
      %v417 = vmax.f32 %v385, 0.0
      %v418 = vmax.f32 %v386, 0.0
      %v419 = vmax.f32 %v387, 0.0
      %v420 = vmax.f32 %v388, 0.0
      %v421 = vmax.f32 %v389, 0.0
      %v422 = vmax.f32 %v390, 0.0
      %v423 = vmax.f32 %v391, 0.0
      %v424 = vmax.f32 %v392, 0.0
      %v425 = vmax.f32 %v393, 0.0
      %v426 = vmax.f32 %v394, 0.0
      %v427 = vmax.f32 %v395, 0.0
      %v428 = vmax.f32 %v396, 0.0
      %v429 = vmax.f32 %v397, 0.0
      %v430 = vmax.f32 %v398, 0.0
      %v431 = vld [vmem:[%s276] sm:$0xff]
      %v432 = vld [vmem:[%s276 + $0x8] sm:$0xff]
      %v433 = vld [vmem:[%s276 + $0x10] sm:$0xff]
      %v434 = vld [vmem:[%s276 + $0x18] sm:$0xff]
      %v435 = vld [vmem:[%s276 + $0x20] sm:$0xff]
      %v436 = vld [vmem:[%s276 + $0x28] sm:$0xff]
      %v437 = vld [vmem:[%s276 + $0x30] sm:$0xff]
      %v438 = vld [vmem:[%s276 + $0x38] sm:$0xff]
      %v439 = vld [vmem:[%s276 + $0x40] sm:$0xff]
      %v440 = vld [vmem:[%s276 + $0x48] sm:$0xff]
      %v441 = vld [vmem:[%s276 + $0x50] sm:$0xff]
      %v442 = vld [vmem:[%s276 + $0x58] sm:$0xff]
      %v443 = vld [vmem:[%s276 + $0x60] sm:$0xff]
      %v444 = vld [vmem:[%s276 + $0x68] sm:$0xff]
      %v445 = vld [vmem:[%s276 + $0x70] sm:$0xff]
      %v446 = vld [vmem:[%s276 + $0x78] sm:$0xff]
      %v447 = vld [vmem:[%s276 + $0x80] sm:$0xff]
      %v448 = vld [vmem:[%s276 + $0x88] sm:$0xff]
      %v449 = vld [vmem:[%s276 + $0x90] sm:$0xff]
      %v450 = vld [vmem:[%s276 + $0x98] sm:$0xff]
      %v451 = vld [vmem:[%s276 + $0xa0] sm:$0xff]
      %v452 = vld [vmem:[%s276 + $0xa8] sm:$0xff]
      %v453 = vld [vmem:[%s276 + $0xb0] sm:$0xff]
      %v454 = vld [vmem:[%s276 + $0xb8] sm:$0xff]
      %v455 = vld [vmem:[%s276 + $0xc0] sm:$0xff]
      %v456 = vld [vmem:[%s276 + $0xc8] sm:$0xff]
      %v457 = vld [vmem:[%s276 + $0xd0] sm:$0xff]
      %v458 = vld [vmem:[%s276 + $0xd8] sm:$0xff]
      %v459 = vld [vmem:[%s276 + $0xe0] sm:$0xff]
      %v460 = vld [vmem:[%s276 + $0xe8] sm:$0xff]
      %v461 = vld [vmem:[%s276 + $0xf0] sm:$0xff]
      %v462 = vld [vmem:[%s276 + $0xf8] sm:$0xff]
      %464 = vset.pattern.permute.xlu0 0
      %465 = vperm.xlu0 %464, %v431
      %v466 = vpop.permute.xlu0 %465
      %469 = vset.pattern.permute.xlu0 0
      %470 = vperm.xlu0 %469, %v432
      %v471 = vpop.permute.xlu0 %470
      %474 = vset.pattern.permute.xlu0 0
      %475 = vperm.xlu0 %474, %v433
      %v476 = vpop.permute.xlu0 %475
      %479 = vset.pattern.permute.xlu0 0
      %480 = vperm.xlu0 %479, %v434
      %v481 = vpop.permute.xlu0 %480
      %484 = vset.pattern.permute.xlu0 0
      %485 = vperm.xlu0 %484, %v435
      %v486 = vpop.permute.xlu0 %485
      %489 = vset.pattern.permute.xlu0 0
      %490 = vperm.xlu0 %489, %v436
      %v491 = vpop.permute.xlu0 %490
      %494 = vset.pattern.permute.xlu0 0
      %495 = vperm.xlu0 %494, %v437
      %v496 = vpop.permute.xlu0 %495
      %499 = vset.pattern.permute.xlu0 0
      %500 = vperm.xlu0 %499, %v438
      %v501 = vpop.permute.xlu0 %500
      %504 = vset.pattern.permute.xlu0 0
      %505 = vperm.xlu0 %504, %v439
      %v506 = vpop.permute.xlu0 %505
      %509 = vset.pattern.permute.xlu0 0
      %510 = vperm.xlu0 %509, %v440
      %v511 = vpop.permute.xlu0 %510
      %514 = vset.pattern.permute.xlu0 0
      %515 = vperm.xlu0 %514, %v441
      %v516 = vpop.permute.xlu0 %515
      %519 = vset.pattern.permute.xlu0 0
      %520 = vperm.xlu0 %519, %v442
      %v521 = vpop.permute.xlu0 %520
      %524 = vset.pattern.permute.xlu0 0
      %525 = vperm.xlu0 %524, %v443
      %v526 = vpop.permute.xlu0 %525
      %529 = vset.pattern.permute.xlu0 0
      %530 = vperm.xlu0 %529, %v444
      %v531 = vpop.permute.xlu0 %530
      %534 = vset.pattern.permute.xlu0 0
      %535 = vperm.xlu0 %534, %v445
      %v536 = vpop.permute.xlu0 %535
      %539 = vset.pattern.permute.xlu0 0
      %540 = vperm.xlu0 %539, %v446
      %v541 = vpop.permute.xlu0 %540
      %544 = vset.pattern.permute.xlu0 0
      %545 = vperm.xlu0 %544, %v447
      %v546 = vpop.permute.xlu0 %545
      %549 = vset.pattern.permute.xlu0 0
      %550 = vperm.xlu0 %549, %v448
      %v551 = vpop.permute.xlu0 %550
      %554 = vset.pattern.permute.xlu0 0
      %555 = vperm.xlu0 %554, %v449
      %v556 = vpop.permute.xlu0 %555
      %559 = vset.pattern.permute.xlu0 0
      %560 = vperm.xlu0 %559, %v450
      %v561 = vpop.permute.xlu0 %560
      %564 = vset.pattern.permute.xlu0 0
      %565 = vperm.xlu0 %564, %v451
      %v566 = vpop.permute.xlu0 %565
      %569 = vset.pattern.permute.xlu0 0
      %570 = vperm.xlu0 %569, %v452
      %v571 = vpop.permute.xlu0 %570
      %574 = vset.pattern.permute.xlu0 0
      %575 = vperm.xlu0 %574, %v453
      %v576 = vpop.permute.xlu0 %575
      %579 = vset.pattern.permute.xlu0 0
      %580 = vperm.xlu0 %579, %v454
      %v581 = vpop.permute.xlu0 %580
      %584 = vset.pattern.permute.xlu0 0
      %585 = vperm.xlu0 %584, %v455
      %v586 = vpop.permute.xlu0 %585
      %589 = vset.pattern.permute.xlu0 0
      %590 = vperm.xlu0 %589, %v456
      %v591 = vpop.permute.xlu0 %590
      %594 = vset.pattern.permute.xlu0 0
      %595 = vperm.xlu0 %594, %v457
      %v596 = vpop.permute.xlu0 %595
      %599 = vset.pattern.permute.xlu0 0
      %600 = vperm.xlu0 %599, %v458
      %v601 = vpop.permute.xlu0 %600
      %604 = vset.pattern.permute.xlu0 0
      %605 = vperm.xlu0 %604, %v459
      %v606 = vpop.permute.xlu0 %605
      %609 = vset.pattern.permute.xlu0 0
      %610 = vperm.xlu0 %609, %v460
      %v611 = vpop.permute.xlu0 %610
      %614 = vset.pattern.permute.xlu0 0
      %615 = vperm.xlu0 %614, %v461
      %v616 = vpop.permute.xlu0 %615
      %619 = vset.pattern.permute.xlu0 0
      %620 = vperm.xlu0 %619, %v462
      %v621 = vpop.permute.xlu0 %620
      %v623 = vmul.f32 %v399, %v466
      %v624 = vmul.f32 %v400, %v471
      %v625 = vmul.f32 %v401, %v476
      %v626 = vmul.f32 %v402, %v481
      %v627 = vmul.f32 %v403, %v486
      %v628 = vmul.f32 %v404, %v491
      %v629 = vmul.f32 %v405, %v496
      %v630 = vmul.f32 %v406, %v501
      %v631 = vmul.f32 %v407, %v506
      %v632 = vmul.f32 %v408, %v511
      %v633 = vmul.f32 %v409, %v516
      %v634 = vmul.f32 %v410, %v521
      %v635 = vmul.f32 %v411, %v526
      %v636 = vmul.f32 %v412, %v531
      %v637 = vmul.f32 %v413, %v536
      %v638 = vmul.f32 %v414, %v541
      %v639 = vmul.f32 %v415, %v546
      %v640 = vmul.f32 %v416, %v551
      %v641 = vmul.f32 %v417, %v556
      %v642 = vmul.f32 %v418, %v561
      %v643 = vmul.f32 %v419, %v566
      %v644 = vmul.f32 %v420, %v571
      %v645 = vmul.f32 %v421, %v576
      %v646 = vmul.f32 %v422, %v581
      %v647 = vmul.f32 %v423, %v586
      %v648 = vmul.f32 %v424, %v591
      %v649 = vmul.f32 %v425, %v596
      %v650 = vmul.f32 %v426, %v601
      %v651 = vmul.f32 %v427, %v606
      %v652 = vmul.f32 %v428, %v611
      %v653 = vmul.f32 %v429, %v616
      %v654 = vmul.f32 %v430, %v621
      %v655 = vpack.c.bf16 %v624, %v623
      %v656 = vpack.c.bf16 %v626, %v625
      %v657 = vpack.c.bf16 %v628, %v627
      %v658 = vpack.c.bf16 %v630, %v629
      %v659 = vpack.c.bf16 %v632, %v631
      %v660 = vpack.c.bf16 %v634, %v633
      %v661 = vpack.c.bf16 %v636, %v635
      %v662 = vpack.c.bf16 %v638, %v637
      %v663 = vpack.c.bf16 %v640, %v639
      %v664 = vpack.c.bf16 %v642, %v641
      %v665 = vpack.c.bf16 %v644, %v643
      %v666 = vpack.c.bf16 %v646, %v645
      %v667 = vpack.c.bf16 %v648, %v647
      %v668 = vpack.c.bf16 %v650, %v649
      %v669 = vpack.c.bf16 %v652, %v651
      %v670 = vpack.c.bf16 %v654, %v653
      %v671 = vld [vmem:[%s4] sm:$0xf]
      %vm672 = vcmask 64512
      %v674 = vsel %vm672, %v655, 0
      %v677 = vsel %vm672, %v656, 0
      %v680 = vsel %vm672, %v657, 0
      %v683 = vsel %vm672, %v658, 0
      %v686 = vsel %vm672, %v659, 0
      %v689 = vsel %vm672, %v660, 0
      %v692 = vsel %vm672, %v661, 0
      %v695 = vsel %vm672, %v662, 0
      %v698 = vsel %vm672, %v663, 0
      %v701 = vsel %vm672, %v664, 0
      %v704 = vsel %vm672, %v665, 0
      %v707 = vsel %vm672, %v666, 0
      %v710 = vsel %vm672, %v667, 0
      %v713 = vsel %vm672, %v668, 0
      %v716 = vsel %vm672, %v669, 0
      %v719 = vsel %vm672, %v670, 0
      %vm721 = vcmask 1043456
      %v723 = vsel %vm721, %v671, 0
      %725 = vmatprep.subr.bf16.mxu0 0
      %726 = vmatpush1.bf16.msra.mxu0 0
      %727 = vmatprep.subr.bf16.mxu0 0
      %728 = vmatpush1.bf16.msra.mxu0 0
      %729 = vmatprep.subr.bf16.mxu0 0
      %730 = vmatpush1.bf16.msra.mxu0 0
      %731 = vmatprep.subr.bf16.mxu0 0
      %732 = vmatpush1.bf16.msra.mxu0 0
      %733 = vmatprep.subr.bf16.mxu0 0
      %734 = vmatpush1.bf16.msra.mxu0 0
      %735 = vmatprep.subr.bf16.mxu0 0
      %736 = vmatpush1.bf16.msra.mxu0 0
      %737 = vmatprep.subr.bf16.mxu0 0
      %738 = vmatpush1.bf16.msra.mxu0 0
      %739 = vmatprep.subr.bf16.mxu0 0
      %740 = vmatpush1.bf16.msra.mxu0 %v723
      %741 = vmatprep.subr.bf16.mxu0 0
      %742 = vmatpush2.bf16.msra.mxu0 0
      %743 = vmatprep.subr.bf16.mxu0 0
      %744 = vmatpush2.bf16.msra.mxu0 0
      %745 = vmatprep.subr.bf16.mxu0 0
      %746 = vmatpush2.bf16.msra.mxu0 0
      %747 = vmatprep.subr.bf16.mxu0 0
      %748 = vmatpush2.bf16.msra.mxu0 0
      %749 = vmatprep.subr.bf16.mxu0 0
      %750 = vmatpush2.bf16.msra.mxu0 0
      %751 = vmatprep.subr.bf16.mxu0 0
      %752 = vmatpush2.bf16.msra.mxu0 0
      %753 = vmatprep.subr.bf16.mxu0 0
      %754 = vmatpush2.bf16.msra.mxu0 0
      %755 = vmatprep.subr.bf16.mxu0 0
      %756 = vmatpush2.bf16.msra.mxu0 0
      %757 = vmatprep.mubr.bf16.mxu0 0
      %758 = vmatmul.mubr.bf16.gmra.mxu0 %v674
      %v759 = vpop.f32.mrf.mxu0
      %v760 = vadd.f32 0.0, %v759
      %v761 = vpop.f32.mrf.mxu0
      %v762 = vpop.f32.mrf.mxu0
      %v763 = vadd.f32 0.0, %v762
      %v764 = vpop.f32.mrf.mxu0
      %765 = vmatprep.mubr.bf16.mxu0 0
      %766 = vmatmul.mubr.bf16.gmra.mxu0 %v677
      %v767 = vpop.f32.mrf.mxu0
      %v768 = vadd.f32 0.0, %v767
      %v769 = vpop.f32.mrf.mxu0
      %v770 = vpop.f32.mrf.mxu0
      %v771 = vadd.f32 0.0, %v770
      %v772 = vpop.f32.mrf.mxu0
      %773 = vmatprep.mubr.bf16.mxu0 0
      %774 = vmatmul.mubr.bf16.gmra.mxu0 %v680
      %v775 = vpop.f32.mrf.mxu0
      %v776 = vadd.f32 0.0, %v775
      %v777 = vpop.f32.mrf.mxu0
      %v778 = vpop.f32.mrf.mxu0
      %v779 = vadd.f32 0.0, %v778
      %v780 = vpop.f32.mrf.mxu0
      %781 = vmatprep.mubr.bf16.mxu0 0
      %782 = vmatmul.mubr.bf16.gmra.mxu0 %v683
      %v783 = vpop.f32.mrf.mxu0
      %v784 = vadd.f32 0.0, %v783
      %v785 = vpop.f32.mrf.mxu0
      %v786 = vpop.f32.mrf.mxu0
      %v787 = vadd.f32 0.0, %v786
      %v788 = vpop.f32.mrf.mxu0
      %789 = vmatprep.mubr.bf16.mxu0 0
      %790 = vmatmul.mubr.bf16.gmra.mxu0 %v686
      %v791 = vpop.f32.mrf.mxu0
      %v792 = vadd.f32 0.0, %v791
      %v793 = vpop.f32.mrf.mxu0
      %v794 = vpop.f32.mrf.mxu0
      %v795 = vadd.f32 0.0, %v794
      %v796 = vpop.f32.mrf.mxu0
      %797 = vmatprep.mubr.bf16.mxu0 0
      %798 = vmatmul.mubr.bf16.gmra.mxu0 %v689
      %v799 = vpop.f32.mrf.mxu0
      %v800 = vadd.f32 0.0, %v799
      %v801 = vpop.f32.mrf.mxu0
      %v802 = vpop.f32.mrf.mxu0
      %v803 = vadd.f32 0.0, %v802
      %v804 = vpop.f32.mrf.mxu0
      %805 = vmatprep.mubr.bf16.mxu0 0
      %806 = vmatmul.mubr.bf16.gmra.mxu0 %v692
      %v807 = vpop.f32.mrf.mxu0
      %v808 = vadd.f32 0.0, %v807
      %v809 = vpop.f32.mrf.mxu0
      %v810 = vpop.f32.mrf.mxu0
      %v811 = vadd.f32 0.0, %v810
      %v812 = vpop.f32.mrf.mxu0
      %813 = vmatprep.mubr.bf16.mxu0 0
      %814 = vmatmul.mubr.bf16.gmra.mxu0 %v695
      %v815 = vpop.f32.mrf.mxu0
      %v816 = vadd.f32 0.0, %v815
      %v817 = vpop.f32.mrf.mxu0
      %v818 = vpop.f32.mrf.mxu0
      %v819 = vadd.f32 0.0, %v818
      %v820 = vpop.f32.mrf.mxu0
      %821 = vmatprep.mubr.bf16.mxu0 0
      %822 = vmatmul.mubr.bf16.gmra.mxu0 %v698
      %v823 = vpop.f32.mrf.mxu0
      %v824 = vadd.f32 0.0, %v823
      %v825 = vpop.f32.mrf.mxu0
      %v826 = vpop.f32.mrf.mxu0
      %v827 = vadd.f32 0.0, %v826
      %v828 = vpop.f32.mrf.mxu0
      %829 = vmatprep.mubr.bf16.mxu0 0
      %830 = vmatmul.mubr.bf16.gmra.mxu0 %v701
      %v831 = vpop.f32.mrf.mxu0
      %v832 = vadd.f32 0.0, %v831
      %v833 = vpop.f32.mrf.mxu0
      %v834 = vpop.f32.mrf.mxu0
      %v835 = vadd.f32 0.0, %v834
      %v836 = vpop.f32.mrf.mxu0
      %837 = vmatprep.mubr.bf16.mxu0 0
      %838 = vmatmul.mubr.bf16.gmra.mxu0 %v704
      %v839 = vpop.f32.mrf.mxu0
      %v840 = vadd.f32 0.0, %v839
      %v841 = vpop.f32.mrf.mxu0
      %v842 = vpop.f32.mrf.mxu0
      %v843 = vadd.f32 0.0, %v842
      %v844 = vpop.f32.mrf.mxu0
      %845 = vmatprep.mubr.bf16.mxu0 0
      %846 = vmatmul.mubr.bf16.gmra.mxu0 %v707
      %v847 = vpop.f32.mrf.mxu0
      %v848 = vadd.f32 0.0, %v847
      %v849 = vpop.f32.mrf.mxu0
      %v850 = vpop.f32.mrf.mxu0
      %v851 = vadd.f32 0.0, %v850
      %v852 = vpop.f32.mrf.mxu0
      %853 = vmatprep.mubr.bf16.mxu0 0
      %854 = vmatmul.mubr.bf16.gmra.mxu0 %v710
      %v855 = vpop.f32.mrf.mxu0
      %v856 = vadd.f32 0.0, %v855
      %v857 = vpop.f32.mrf.mxu0
      %v858 = vpop.f32.mrf.mxu0
      %v859 = vadd.f32 0.0, %v858
      %v860 = vpop.f32.mrf.mxu0
      %861 = vmatprep.mubr.bf16.mxu0 0
      %862 = vmatmul.mubr.bf16.gmra.mxu0 %v713
      %v863 = vpop.f32.mrf.mxu0
      %v864 = vadd.f32 0.0, %v863
      %v865 = vpop.f32.mrf.mxu0
      %v866 = vpop.f32.mrf.mxu0
      %v867 = vadd.f32 0.0, %v866
      %v868 = vpop.f32.mrf.mxu0
      %869 = vmatprep.mubr.bf16.mxu0 0
      %870 = vmatmul.mubr.bf16.gmra.mxu0 %v716
      %v871 = vpop.f32.mrf.mxu0
      %v872 = vadd.f32 0.0, %v871
      %v873 = vpop.f32.mrf.mxu0
      %v874 = vpop.f32.mrf.mxu0
      %v875 = vadd.f32 0.0, %v874
      %v876 = vpop.f32.mrf.mxu0
      %877 = vmatprep.mubr.bf16.mxu0 0
      %878 = vmatmul.mubr.bf16.gmra.mxu0 %v719
      %v879 = vpop.f32.mrf.mxu0
      %v880 = vadd.f32 0.0, %v879
      %v881 = vpop.f32.mrf.mxu0
      %v882 = vpop.f32.mrf.mxu0
      %v883 = vadd.f32 0.0, %v882
      %v884 = vpop.f32.mrf.mxu0
      %885 = vdwg.mxu0
      %vm886 = vcmask 261120
      %887 = vst.msk [vmem:[%s282] sm:$0xff] %vm886, %v760
      %888 = vst.msk [vmem:[%s282 + $0x8] sm:$0xff] %vm886, %v763
      %889 = vst.msk [vmem:[%s282 + $0x10] sm:$0xff] %vm886, %v768
      %890 = vst.msk [vmem:[%s282 + $0x18] sm:$0xff] %vm886, %v771
      %891 = vst.msk [vmem:[%s282 + $0x20] sm:$0xff] %vm886, %v776
      %892 = vst.msk [vmem:[%s282 + $0x28] sm:$0xff] %vm886, %v779
      %893 = vst.msk [vmem:[%s282 + $0x30] sm:$0xff] %vm886, %v784
      %894 = vst.msk [vmem:[%s282 + $0x38] sm:$0xff] %vm886, %v787
      %895 = vst.msk [vmem:[%s282 + $0x40] sm:$0xff] %vm886, %v792
      %896 = vst.msk [vmem:[%s282 + $0x48] sm:$0xff] %vm886, %v795
      %897 = vst.msk [vmem:[%s282 + $0x50] sm:$0xff] %vm886, %v800
      %898 = vst.msk [vmem:[%s282 + $0x58] sm:$0xff] %vm886, %v803
      %899 = vst.msk [vmem:[%s282 + $0x60] sm:$0xff] %vm886, %v808
      %900 = vst.msk [vmem:[%s282 + $0x68] sm:$0xff] %vm886, %v811
      %901 = vst.msk [vmem:[%s282 + $0x70] sm:$0xff] %vm886, %v816
      %902 = vst.msk [vmem:[%s282 + $0x78] sm:$0xff] %vm886, %v819
      %903 = vst.msk [vmem:[%s282 + $0x80] sm:$0xff] %vm886, %v824
      %904 = vst.msk [vmem:[%s282 + $0x88] sm:$0xff] %vm886, %v827
      %905 = vst.msk [vmem:[%s282 + $0x90] sm:$0xff] %vm886, %v832
      %906 = vst.msk [vmem:[%s282 + $0x98] sm:$0xff] %vm886, %v835
      %907 = vst.msk [vmem:[%s282 + $0xa0] sm:$0xff] %vm886, %v840
      %908 = vst.msk [vmem:[%s282 + $0xa8] sm:$0xff] %vm886, %v843
      %909 = vst.msk [vmem:[%s282 + $0xb0] sm:$0xff] %vm886, %v848
      %910 = vst.msk [vmem:[%s282 + $0xb8] sm:$0xff] %vm886, %v851
      %911 = vst.msk [vmem:[%s282 + $0xc0] sm:$0xff] %vm886, %v856
      %912 = vst.msk [vmem:[%s282 + $0xc8] sm:$0xff] %vm886, %v859
      %913 = vst.msk [vmem:[%s282 + $0xd0] sm:$0xff] %vm886, %v864
      %914 = vst.msk [vmem:[%s282 + $0xd8] sm:$0xff] %vm886, %v867
      %915 = vst.msk [vmem:[%s282 + $0xe0] sm:$0xff] %vm886, %v872
      %916 = vst.msk [vmem:[%s282 + $0xe8] sm:$0xff] %vm886, %v875
      %917 = vst.msk [vmem:[%s282 + $0xf0] sm:$0xff] %vm886, %v880
      %918 = vst.msk [vmem:[%s282 + $0xf8] sm:$0xff] %vm886, %v883
      %v919 = vsel %vm886, %v760, 0.0
      %v920 = vsel %vm886, %v763, 0.0
      %v921 = vadd.f32 %v919, %v920
      %v922 = vsel %vm886, %v768, 0.0
      %v923 = vadd.f32 %v921, %v922
      %v924 = vsel %vm886, %v771, 0.0
      %v925 = vadd.f32 %v923, %v924
      %v926 = vsel %vm886, %v776, 0.0
      %v927 = vadd.f32 %v925, %v926
      %v928 = vsel %vm886, %v779, 0.0
      %v929 = vadd.f32 %v927, %v928
      %v930 = vsel %vm886, %v784, 0.0
      %v931 = vadd.f32 %v929, %v930
      %v932 = vsel %vm886, %v787, 0.0
      %v933 = vadd.f32 %v931, %v932
      %v934 = vsel %vm886, %v792, 0.0
      %v935 = vadd.f32 %v933, %v934
      %v936 = vsel %vm886, %v795, 0.0
      %v937 = vadd.f32 %v935, %v936
      %v938 = vsel %vm886, %v800, 0.0
      %v939 = vadd.f32 %v937, %v938
      %v940 = vsel %vm886, %v803, 0.0
      %v941 = vadd.f32 %v939, %v940
      %v942 = vsel %vm886, %v808, 0.0
      %v943 = vadd.f32 %v941, %v942
      %v944 = vsel %vm886, %v811, 0.0
      %v945 = vadd.f32 %v943, %v944
      %v946 = vsel %vm886, %v816, 0.0
      %v947 = vadd.f32 %v945, %v946
      %v948 = vsel %vm886, %v819, 0.0
      %v949 = vadd.f32 %v947, %v948
      %v950 = vsel %vm886, %v824, 0.0
      %v951 = vadd.f32 %v949, %v950
      %v952 = vsel %vm886, %v827, 0.0
      %v953 = vadd.f32 %v951, %v952
      %v954 = vsel %vm886, %v832, 0.0
      %v955 = vadd.f32 %v953, %v954
      %v956 = vsel %vm886, %v835, 0.0
      %v957 = vadd.f32 %v955, %v956
      %v958 = vsel %vm886, %v840, 0.0
      %v959 = vadd.f32 %v957, %v958
      %v960 = vsel %vm886, %v843, 0.0
      %v961 = vadd.f32 %v959, %v960
      %v962 = vsel %vm886, %v848, 0.0
      %v963 = vadd.f32 %v961, %v962
      %v964 = vsel %vm886, %v851, 0.0
      %v965 = vadd.f32 %v963, %v964
      %v966 = vsel %vm886, %v856, 0.0
      %v967 = vadd.f32 %v965, %v966
      %v968 = vsel %vm886, %v859, 0.0
      %v969 = vadd.f32 %v967, %v968
      %v970 = vsel %vm886, %v864, 0.0
      %v971 = vadd.f32 %v969, %v970
      %v972 = vsel %vm886, %v867, 0.0
      %v973 = vadd.f32 %v971, %v972
      %v974 = vsel %vm886, %v872, 0.0
      %v975 = vadd.f32 %v973, %v974
      %v976 = vsel %vm886, %v875, 0.0
      %v977 = vadd.f32 %v975, %v976
      %v978 = vsel %vm886, %v880, 0.0
      %v979 = vadd.f32 %v977, %v978
      %v980 = vsel %vm886, %v883, 0.0
      %v981 = vadd.f32 %v979, %v980
      %v982 = vrot.slane %v981, 4
      %v983 = vadd.f32 %v981, %v982
      %v984 = vrot.slane %v983, 2
      %v985 = vadd.f32 %v983, %v984
      %v986 = vrot.slane %v985, 1
      %v987 = vadd.f32 %v985, %v986
      %v988 = vmul.f32 %v760, %v760
      %v989 = vmul.f32 %v763, %v763
      %v990 = vmul.f32 %v768, %v768
      %v991 = vmul.f32 %v771, %v771
      %v992 = vmul.f32 %v776, %v776
      %v993 = vmul.f32 %v779, %v779
      %v994 = vmul.f32 %v784, %v784
      %v995 = vmul.f32 %v787, %v787
      %v996 = vmul.f32 %v792, %v792
      %v997 = vmul.f32 %v795, %v795
      %v998 = vmul.f32 %v800, %v800
      %v999 = vmul.f32 %v803, %v803
      %v1000 = vmul.f32 %v808, %v808
      %v1001 = vmul.f32 %v811, %v811
      %v1002 = vmul.f32 %v816, %v816
      %v1003 = vmul.f32 %v819, %v819
      %v1004 = vmul.f32 %v824, %v824
      %v1005 = vmul.f32 %v827, %v827
      %v1006 = vmul.f32 %v832, %v832
      %v1007 = vmul.f32 %v835, %v835
      %v1008 = vmul.f32 %v840, %v840
      %v1009 = vmul.f32 %v843, %v843
      %v1010 = vmul.f32 %v848, %v848
      %v1011 = vmul.f32 %v851, %v851
      %v1012 = vmul.f32 %v856, %v856
      %v1013 = vmul.f32 %v859, %v859
      %v1014 = vmul.f32 %v864, %v864
      %v1015 = vmul.f32 %v867, %v867
      %v1016 = vmul.f32 %v872, %v872
      %v1017 = vmul.f32 %v875, %v875
      %v1018 = vmul.f32 %v880, %v880
      %v1019 = vmul.f32 %v883, %v883
      %v1020 = vsel %vm886, %v988, 0.0
      %v1021 = vsel %vm886, %v989, 0.0
      %v1022 = vadd.f32 %v1020, %v1021
      %v1023 = vsel %vm886, %v990, 0.0
      %v1024 = vadd.f32 %v1022, %v1023
      %v1025 = vsel %vm886, %v991, 0.0
      %v1026 = vadd.f32 %v1024, %v1025
      %v1027 = vsel %vm886, %v992, 0.0
      %v1028 = vadd.f32 %v1026, %v1027
      %v1029 = vsel %vm886, %v993, 0.0
      %v1030 = vadd.f32 %v1028, %v1029
      %v1031 = vsel %vm886, %v994, 0.0
      %v1032 = vadd.f32 %v1030, %v1031
      %v1033 = vsel %vm886, %v995, 0.0
      %v1034 = vadd.f32 %v1032, %v1033
      %v1035 = vsel %vm886, %v996, 0.0
      %v1036 = vadd.f32 %v1034, %v1035
      %v1037 = vsel %vm886, %v997, 0.0
      %v1038 = vadd.f32 %v1036, %v1037
      %v1039 = vsel %vm886, %v998, 0.0
      %v1040 = vadd.f32 %v1038, %v1039
      %v1041 = vsel %vm886, %v999, 0.0
      %v1042 = vadd.f32 %v1040, %v1041
      %v1043 = vsel %vm886, %v1000, 0.0
      %v1044 = vadd.f32 %v1042, %v1043
      %v1045 = vsel %vm886, %v1001, 0.0
      %v1046 = vadd.f32 %v1044, %v1045
      %v1047 = vsel %vm886, %v1002, 0.0
      %v1048 = vadd.f32 %v1046, %v1047
      %v1049 = vsel %vm886, %v1003, 0.0
      %v1050 = vadd.f32 %v1048, %v1049
      %v1051 = vsel %vm886, %v1004, 0.0
      %v1052 = vadd.f32 %v1050, %v1051
      %v1053 = vsel %vm886, %v1005, 0.0
      %v1054 = vadd.f32 %v1052, %v1053
      %v1055 = vsel %vm886, %v1006, 0.0
      %v1056 = vadd.f32 %v1054, %v1055
      %v1057 = vsel %vm886, %v1007, 0.0
      %v1058 = vadd.f32 %v1056, %v1057
      %v1059 = vsel %vm886, %v1008, 0.0
      %v1060 = vadd.f32 %v1058, %v1059
      %v1061 = vsel %vm886, %v1009, 0.0
      %v1062 = vadd.f32 %v1060, %v1061
      %v1063 = vsel %vm886, %v1010, 0.0
      %v1064 = vadd.f32 %v1062, %v1063
      %v1065 = vsel %vm886, %v1011, 0.0
      %v1066 = vadd.f32 %v1064, %v1065
      %v1067 = vsel %vm886, %v1012, 0.0
      %v1068 = vadd.f32 %v1066, %v1067
      %v1069 = vsel %vm886, %v1013, 0.0
      %v1070 = vadd.f32 %v1068, %v1069
      %v1071 = vsel %vm886, %v1014, 0.0
      %v1072 = vadd.f32 %v1070, %v1071
      %v1073 = vsel %vm886, %v1015, 0.0
      %v1074 = vadd.f32 %v1072, %v1073
      %v1075 = vsel %vm886, %v1016, 0.0
      %v1076 = vadd.f32 %v1074, %v1075
      %v1077 = vsel %vm886, %v1017, 0.0
      %v1078 = vadd.f32 %v1076, %v1077
      %v1079 = vsel %vm886, %v1018, 0.0
      %v1080 = vadd.f32 %v1078, %v1079
      %v1081 = vsel %vm886, %v1019, 0.0
      %v1082 = vadd.f32 %v1080, %v1081
      %v1083 = vrot.slane %v1082, 4
      %v1084 = vadd.f32 %v1082, %v1083
      %v1085 = vrot.slane %v1084, 2
      %v1086 = vadd.f32 %v1084, %v1085
      %v1087 = vrot.slane %v1086, 1
      %v1088 = vadd.f32 %v1086, %v1087
      %vm1089 = vcmask 1040384
      %v1090 = vsel %vm1089, %v987, %v1088
      %vm1091 = vcmask 1041408
      %v1092 = vsel %vm1091, %v1090, 0.0
      %1093 = vst.msk [vmem:[%s287] sm:$0xff] %vm886, %v1092
      %s1094 = smul.u32 32, %s18
      %p1095 = scmp.lt.s32.totalorder %s1094, 95
      %s1096 = scalar_select %p1095, %s1094, 95
      %s1097 = smul.addr %s1096, 8
      %s1098 = scalar_lea.vmem %s5, %s1097
      %p1099 = scmp.lt.s32.totalorder %s18, 2
      %s1100 = scalar_select %p1099, %s18, 2
      %s1101 = smul.addr %s1100, 8
      %s1102 = scalar_lea.vmem %s6, %s1101
      // Predicated region
      $region41: #{bottleneck_forward.6} parent=39 // pred_check
        %p1103 = pneg %p151
      $region42: #{bottleneck_forward.6} parent=39 // pred_check_branch
        %1105 = sbr.rel (%p1103) target = $region44
      $region43: #{bottleneck_forward.6} parent=39 // pred_region
        %s1106 = smul.u32 32, %s18
      $region44: #{bottleneck_forward.6} parent=39 // pred_fallthru
        _
      // Predicated region
      $region45: #{bottleneck_forward.6} parent=39 // pred_check
        %p1107 = pneg %p177
      $region46: #{bottleneck_forward.6} parent=39 // pred_check_branch
        %1109 = sbr.rel (%p1107) target = $region48
      $region47: #{bottleneck_forward.6} parent=39 // pred_region
        _
      $region48: #{bottleneck_forward.6} parent=39 // pred_fallthru
        _
    $region40: #{bottleneck_forward.6} parent=5 // pred_fallthru
      _
    %p1110 = scmp.le.s32.totalorder 2, %s13
    // Predicated region
    $region49: #{bottleneck_forward.6} parent=5 // pred_check
      %p1111 = pneg %p1110
    $region50: #{bottleneck_forward.6} parent=5 // pred_check_branch
      %1113 = sbr.rel (%p1111) target = $region52
    $region51: #{bottleneck_forward.6} parent=5 // pred_region
      %s1114 = ssub.s32 %s13, 2
      // Predicated region
      $region53: #{bottleneck_forward.6} parent=51 // pred_check
        %p1115 = pneg %p157
      $region54: #{bottleneck_forward.6} parent=51 // pred_check_branch
        %1117 = sbr.rel (%p1115) target = $region56
      $region55: #{bottleneck_forward.6} parent=51 // pred_region
        %s1118 = smul.u32 32, %s19
        %p1119 = scmp.lt.s32.totalorder %s1118, 95
        %s1120 = scalar_select %p1119, %s1118, 95
        %s1121 = smul.addr %s1120, 8
        %s1122 = scalar_lea.vmem %s5, %s1121
      $region56: #{bottleneck_forward.6} parent=51 // pred_fallthru
        _
      // Predicated region
      $region57: #{bottleneck_forward.6} parent=51 // pred_check
        %p1123 = pneg %p183
      $region58: #{bottleneck_forward.6} parent=51 // pred_check_branch
        %1125 = sbr.rel (%p1123) target = $region60
      $region59: #{bottleneck_forward.6} parent=51 // pred_region
        %p1126 = scmp.lt.s32.totalorder %s19, 2
        %s1127 = scalar_select %p1126, %s19, 2
        %s1128 = smul.addr %s1127, 8
        %s1129 = scalar_lea.vmem %s6, %s1128
      $region60: #{bottleneck_forward.6} parent=51 // pred_fallthru
        _
    $region52: #{bottleneck_forward.6} parent=5 // pred_fallthru
      _
  $region6: #{bottleneck_forward.6} parent=0 // loop_footer
    %s17 = sadd.s32 1, %s13
  $region7: #{bottleneck_forward.6} parent=0 // loop_footer_branch
    %12 = sbr.rel target = $region3
  $region8: #{bottleneck_forward.6} parent=0 // loop_exit
    _

// kernel: bottleneck_forward.7
$region0: #{bottleneck_forward.7}
  #allocation0 [shape = 'u32[]', space=smem, size = 0x4, offset = 0x4, fixed_abs, tag = 'smem constant byte address 0x4 - core index']
  #allocation1 [shape = 'u32[144,128]{1,0:T(1,128)}', space=vmem, size = 0x12000, scoped, tag = 'internal scratch']
  %s0 = inlined_call_operand.vmem [shape: f32[768,32], index: 0, kind: input, shape index: {}]
  %s1 = inlined_call_operand.vmem [shape: f32[768,32], index: 1, kind: input, shape index: {}]
  %s2 = inlined_call_operand.vmem [shape: f32[1,32], index: 2, kind: input, shape index: {}]
  %s3 = inlined_call_operand.vmem [shape: f32[1,32], index: 3, kind: input, shape index: {}]
  %s4 = inlined_call_operand.vmem [shape: f32[768,32], index: 4, kind: output, shape index: {}]
  %s5 = sld [smem:[#allocation0]]
  $region49: #{bottleneck_forward.7} parent=0
    _
  %s7 = ssub.s32 1, %s5
  %s8 = scalar_select 0, %s7, %s5
  loop: start=0, step=1, limit=5
  $region2: #{bottleneck_forward.7} parent=0 // loop_pre_header
    _
  $region3: #{bottleneck_forward.7} parent=0 // loop_header
    %s10 = sphi 0, %s14
    %p11 = scmp.ge.s32.totalorder %s10, 5
    %s20 = sphi 0, %s22
    %s23 = sphi 0, %s20
    %s24 = sphi 0, %s23
    %s40 = sphi 0, %s24
    %s46 = sphi 0, %s48
    %s49 = sphi 0, %s46
    %s50 = sphi 0, %s49
    %s66 = sphi 0, %s50
    %s70 = sphi 0, %s70
    %s72 = sphi 0, %s70
    %s73 = sphi 0, %s72
    %s87 = sphi 0, %s73
    %s91 = sphi 0, %s91
    %s93 = sphi 0, %s91
    %s94 = sphi 0, %s93
    %s108 = sphi 0, %s94
    %s114 = sphi 0, %s116
    %s117 = sphi 0, %s114
    %s118 = sphi 0, %s117
    %s134 = sphi 0, %s118
  $region4: #{bottleneck_forward.7} parent=0 // loop_header_branch
    %13 = sbr.rel (%p11) target = $region8
  $region5: #{bottleneck_forward.7} parent=0 // loop_body
    %s15 = ssub.s32 %s10, 1
    %s16 = ssub.s32 %s10, 2
    %s17 = sadd.s32 %s10, 1
    %s18 = ssub.s32 %s10, %s17
    %p19 = scmp.eq.s32.totalorder %s18, 0
    %s21 = sadd.s32 %s20, 1
    %s22 = scalar_select %p19, %s20, %s21
    %p25 = pneg %p19
    %p26 = scmp.eq.s32.totalorder %s10, 2
    %p27 = por %p25, %p26
    %p28 = scmp.ne.s32.totalorder %s20, %s23
    %p29 = scmp.eq.s32.totalorder %s10, 0
    %p30 = por %p28, %p29
    %p31 = scmp.ne.s32.totalorder %s20, %s23
    %p32 = scmp.eq.s32.totalorder %s15, 2
    %p33 = por %p31, %p32
    %p34 = scmp.ne.s32.totalorder %s23, %s24
    %p35 = scmp.eq.s32.totalorder %s15, 0
    %p36 = por %p34, %p35
    %p37 = scmp.ne.s32.totalorder %s23, %s24
    %p38 = scmp.eq.s32.totalorder %s16, 2
    %p39 = por %p37, %p38
    %p41 = scmp.ne.s32.totalorder %s24, %s40
    %p42 = scmp.eq.s32.totalorder %s16, 0
    %p43 = por %p41, %p42
    %s44 = ssub.s32 %s10, %s17
    %p45 = scmp.eq.s32.totalorder %s44, 0
    %s47 = sadd.s32 %s46, 1
    %s48 = scalar_select %p45, %s46, %s47
    %p51 = pneg %p45
    %p52 = scmp.eq.s32.totalorder %s10, 2
    %p53 = por %p51, %p52
    %p54 = scmp.ne.s32.totalorder %s46, %s49
    %p55 = scmp.eq.s32.totalorder %s10, 0
    %p56 = por %p54, %p55
    %p57 = scmp.ne.s32.totalorder %s46, %s49
    %p58 = scmp.eq.s32.totalorder %s15, 2
    %p59 = por %p57, %p58
    %p60 = scmp.ne.s32.totalorder %s49, %s50
    %p61 = scmp.eq.s32.totalorder %s15, 0
    %p62 = por %p60, %p61
    %p63 = scmp.ne.s32.totalorder %s49, %s50
    %p64 = scmp.eq.s32.totalorder %s16, 2
    %p65 = por %p63, %p64
    %p67 = scmp.ne.s32.totalorder %s50, %s66
    %p68 = scmp.eq.s32.totalorder %s16, 0
    %p69 = por %p67, %p68
    %s71 = sadd.s32 %s70, 1
    %p74 = scmp.eq.s32.totalorder %s10, 2
    %p75 = scmp.ne.s32.totalorder %s70, %s72
    %p76 = scmp.eq.s32.totalorder %s10, 0
    %p77 = por %p75, %p76
    %p78 = scmp.ne.s32.totalorder %s70, %s72
    %p79 = scmp.eq.s32.totalorder %s15, 2
    %p80 = por %p78, %p79
    %p81 = scmp.ne.s32.totalorder %s72, %s73
    %p82 = scmp.eq.s32.totalorder %s15, 0
    %p83 = por %p81, %p82
    %p84 = scmp.ne.s32.totalorder %s72, %s73
    %p85 = scmp.eq.s32.totalorder %s16, 2
    %p86 = por %p84, %p85
    %p88 = scmp.ne.s32.totalorder %s73, %s87
    %p89 = scmp.eq.s32.totalorder %s16, 0
    %p90 = por %p88, %p89
    %s92 = sadd.s32 %s91, 1
    %p95 = scmp.eq.s32.totalorder %s10, 2
    %p96 = scmp.ne.s32.totalorder %s91, %s93
    %p97 = scmp.eq.s32.totalorder %s10, 0
    %p98 = por %p96, %p97
    %p99 = scmp.ne.s32.totalorder %s91, %s93
    %p100 = scmp.eq.s32.totalorder %s15, 2
    %p101 = por %p99, %p100
    %p102 = scmp.ne.s32.totalorder %s93, %s94
    %p103 = scmp.eq.s32.totalorder %s15, 0
    %p104 = por %p102, %p103
    %p105 = scmp.ne.s32.totalorder %s93, %s94
    %p106 = scmp.eq.s32.totalorder %s16, 2
    %p107 = por %p105, %p106
    %p109 = scmp.ne.s32.totalorder %s94, %s108
    %p110 = scmp.eq.s32.totalorder %s16, 0
    %p111 = por %p109, %p110
    %s112 = ssub.s32 %s10, %s17
    %p113 = scmp.eq.s32.totalorder %s112, 0
    %s115 = sadd.s32 %s114, 1
    %s116 = scalar_select %p113, %s114, %s115
    %p119 = pneg %p113
    %p120 = scmp.eq.s32.totalorder %s10, 2
    %p121 = por %p119, %p120
    %p122 = scmp.ne.s32.totalorder %s114, %s117
    %p123 = scmp.eq.s32.totalorder %s10, 0
    %p124 = por %p122, %p123
    %p125 = scmp.ne.s32.totalorder %s114, %s117
    %p126 = scmp.eq.s32.totalorder %s15, 2
    %p127 = por %p125, %p126
    %p128 = scmp.ne.s32.totalorder %s117, %s118
    %p129 = scmp.eq.s32.totalorder %s15, 0
    %p130 = por %p128, %p129
    %p131 = scmp.ne.s32.totalorder %s117, %s118
    %p132 = scmp.eq.s32.totalorder %s16, 2
    %p133 = por %p131, %p132
    %p135 = scmp.ne.s32.totalorder %s118, %s134
    %p136 = scmp.eq.s32.totalorder %s16, 0
    %p137 = por %p135, %p136
    %p138 = scmp.le.s32.totalorder 1, %s10
    %p139 = scmp.lt.s32.totalorder %s10, 4
    %p140 = pnand %p138, %p139
    %p141 = pneg %p140
    // Predicated region
    $region9: #{bottleneck_forward.7} parent=5 // pred_check
      _
    $region10: #{bottleneck_forward.7} parent=5 // pred_check_branch
      %143 = sbr.rel (%p140) target = $region12
    $region11: #{bottleneck_forward.7} parent=5 // pred_region
      %s144 = ssub.s32 %s10, 1
      // Predicated region
      $region13: #{bottleneck_forward.7} parent=11 // pred_check
        %p145 = pneg %p83
      $region14: #{bottleneck_forward.7} parent=11 // pred_check_branch
        %147 = sbr.rel (%p145) target = $region16
      $region15: #{bottleneck_forward.7} parent=11 // pred_region
        _
      $region16: #{bottleneck_forward.7} parent=11 // pred_fallthru
        _
      // Predicated region
      $region17: #{bottleneck_forward.7} parent=11 // pred_check
        %p148 = pneg %p104
      $region18: #{bottleneck_forward.7} parent=11 // pred_check_branch
        %150 = sbr.rel (%p148) target = $region20
      $region19: #{bottleneck_forward.7} parent=11 // pred_region
        _
      $region20: #{bottleneck_forward.7} parent=11 // pred_fallthru
        _
    $region12: #{bottleneck_forward.7} parent=5 // pred_fallthru
      _
    %p151 = scmp.lt.s32.totalorder %s10, 3
    // Predicated region
    $region21: #{bottleneck_forward.7} parent=5 // pred_check
      %p152 = pneg %p151
    $region22: #{bottleneck_forward.7} parent=5 // pred_check_branch
      %154 = sbr.rel (%p152) target = $region24
    $region23: #{bottleneck_forward.7} parent=5 // pred_region
      // Predicated region
      $region25: #{bottleneck_forward.7} parent=23 // pred_check
        %p155 = pneg %p30
      $region26: #{bottleneck_forward.7} parent=23 // pred_check_branch
        %157 = sbr.rel (%p155) target = $region28
      $region27: #{bottleneck_forward.7} parent=23 // pred_region
        %s158 = smul.u32 32, %s10
        %p159 = scmp.lt.s32.totalorder %s158, 95
        %s160 = scalar_select %p159, %s158, 95
        %s161 = smul.addr %s160, 8
        %s162 = scalar_lea.vmem %s0, %s161
        %s163 = smul.u32 32, %s10
      $region28: #{bottleneck_forward.7} parent=23 // pred_fallthru
        _
      // Predicated region
      $region29: #{bottleneck_forward.7} parent=23 // pred_check
        %p164 = pneg %p56
      $region30: #{bottleneck_forward.7} parent=23 // pred_check_branch
        %166 = sbr.rel (%p164) target = $region32
      $region31: #{bottleneck_forward.7} parent=23 // pred_region
        %s167 = smul.u32 32, %s10
        %p168 = scmp.lt.s32.totalorder %s167, 95
        %s169 = scalar_select %p168, %s167, 95
        %s170 = smul.addr %s169, 8
        %s171 = scalar_lea.vmem %s1, %s170
        %s172 = smul.u32 32, %s10
      $region32: #{bottleneck_forward.7} parent=23 // pred_fallthru
        _
    $region24: #{bottleneck_forward.7} parent=5 // pred_fallthru
      _
    %p173 = scmp.le.s32.totalorder 1, %s10
    %p174 = scmp.lt.s32.totalorder %s10, 4
    %p175 = pnand %p173, %p174
    %p176 = pneg %p175
    // Predicated region
    $region33: #{bottleneck_forward.7} parent=5 // pred_check
      _
    $region34: #{bottleneck_forward.7} parent=5 // pred_check_branch
      %178 = sbr.rel (%p175) target = $region36
    $region35: #{bottleneck_forward.7} parent=5 // pred_region
      %s179 = ssub.s32 %s10, 1
      %s180 = smul.u32 32, %s15
      %p181 = scmp.lt.s32.totalorder %s180, 95
      %s182 = scalar_select %p181, %s180, 95
      %s183 = smul.addr %s182, 8
      %s184 = scalar_lea.vmem %s0, %s183
      %p185 = pneg %p36
      %p186 = pneg %p33
      %s187 = smul.u32 32, %s15
      %p188 = scmp.lt.s32.totalorder %s187, 95
      %s189 = scalar_select %p188, %s187, 95
      %s190 = smul.addr %s189, 8
      %s191 = scalar_lea.vmem %s1, %s190
      %p192 = pneg %p62
      %p193 = pneg %p59
      %p194 = pneg %p83
      %p195 = pneg %p80
      %p196 = pneg %p104
      %p197 = pneg %p101
      %p198 = pneg %p130
      %p199 = pneg %p127
      %s200 = smul.u32 32, %s15
      %p201 = scmp.lt.s32.totalorder %s200, 95
      %s202 = scalar_select %p201, %s200, 95
      %s203 = smul.addr %s202, 8
      %s204 = scalar_lea.vmem %s4, %s203
      %s205 = smul.u32 32, %s15
      %p206 = scmp.lt.s32.totalorder %s205, 95
      %s207 = scalar_select %p206, %s205, 95
      %s208 = smul.addr %s207, 8
      %s209 = scalar_lea.vmem %s0, %s208
      %s210 = smul.u32 32, %s15
      %s211 = smul.u32 32, %s15
      %p212 = scmp.lt.s32.totalorder %s211, 95
      %s213 = scalar_select %p212, %s211, 95
      %s214 = smul.addr %s213, 8
      %s215 = scalar_lea.vmem %s1, %s214
      %s216 = smul.u32 32, %s15
      %s217 = smul.u32 32, %s15
      %p218 = scmp.lt.s32.totalorder %s217, 95
      %s219 = scalar_select %p218, %s217, 95
      %s220 = smul.addr %s219, 8
      %s221 = scalar_lea.vmem %s4, %s220
      %s222 = smul.u32 32, %s15
      %v223 = vld [vmem:[%s209] sm:$0xff]
      %v224 = vld [vmem:[%s209 + $0x8] sm:$0xff]
      %v225 = vld [vmem:[%s209 + $0x10] sm:$0xff]
      %v226 = vld [vmem:[%s209 + $0x18] sm:$0xff]
      %v227 = vld [vmem:[%s209 + $0x20] sm:$0xff]
      %v228 = vld [vmem:[%s209 + $0x28] sm:$0xff]
      %v229 = vld [vmem:[%s209 + $0x30] sm:$0xff]
      %v230 = vld [vmem:[%s209 + $0x38] sm:$0xff]
      %v231 = vld [vmem:[%s209 + $0x40] sm:$0xff]
      %v232 = vld [vmem:[%s209 + $0x48] sm:$0xff]
      %v233 = vld [vmem:[%s209 + $0x50] sm:$0xff]
      %v234 = vld [vmem:[%s209 + $0x58] sm:$0xff]
      %v235 = vld [vmem:[%s209 + $0x60] sm:$0xff]
      %v236 = vld [vmem:[%s209 + $0x68] sm:$0xff]
      %v237 = vld [vmem:[%s209 + $0x70] sm:$0xff]
      %v238 = vld [vmem:[%s209 + $0x78] sm:$0xff]
      %v239 = vld [vmem:[%s209 + $0x80] sm:$0xff]
      %v240 = vld [vmem:[%s209 + $0x88] sm:$0xff]
      %v241 = vld [vmem:[%s209 + $0x90] sm:$0xff]
      %v242 = vld [vmem:[%s209 + $0x98] sm:$0xff]
      %v243 = vld [vmem:[%s209 + $0xa0] sm:$0xff]
      %v244 = vld [vmem:[%s209 + $0xa8] sm:$0xff]
      %v245 = vld [vmem:[%s209 + $0xb0] sm:$0xff]
      %v246 = vld [vmem:[%s209 + $0xb8] sm:$0xff]
      %v247 = vld [vmem:[%s209 + $0xc0] sm:$0xff]
      %v248 = vld [vmem:[%s209 + $0xc8] sm:$0xff]
      %v249 = vld [vmem:[%s209 + $0xd0] sm:$0xff]
      %v250 = vld [vmem:[%s209 + $0xd8] sm:$0xff]
      %v251 = vld [vmem:[%s209 + $0xe0] sm:$0xff]
      %v252 = vld [vmem:[%s209 + $0xe8] sm:$0xff]
      %v253 = vld [vmem:[%s209 + $0xf0] sm:$0xff]
      %v254 = vld [vmem:[%s209 + $0xf8] sm:$0xff]
      %v255 = vld [vmem:[%s2] sm:$0x1]
      %v257 = vlaneseq
      %v258 = vshrl.u32 %v257, 7
      %v259 = vsub.s32 0, %v258
      %v260 = vrot.slane %v255, %v259
      %v262 = vmul.f32 %v223, %v260
      %v263 = vmul.f32 %v224, %v260
      %v264 = vmul.f32 %v225, %v260
      %v265 = vmul.f32 %v226, %v260
      %v266 = vmul.f32 %v227, %v260
      %v267 = vmul.f32 %v228, %v260
      %v268 = vmul.f32 %v229, %v260
      %v269 = vmul.f32 %v230, %v260
      %v270 = vmul.f32 %v231, %v260
      %v271 = vmul.f32 %v232, %v260
      %v272 = vmul.f32 %v233, %v260
      %v273 = vmul.f32 %v234, %v260
      %v274 = vmul.f32 %v235, %v260
      %v275 = vmul.f32 %v236, %v260
      %v276 = vmul.f32 %v237, %v260
      %v277 = vmul.f32 %v238, %v260
      %v278 = vmul.f32 %v239, %v260
      %v279 = vmul.f32 %v240, %v260
      %v280 = vmul.f32 %v241, %v260
      %v281 = vmul.f32 %v242, %v260
      %v282 = vmul.f32 %v243, %v260
      %v283 = vmul.f32 %v244, %v260
      %v284 = vmul.f32 %v245, %v260
      %v285 = vmul.f32 %v246, %v260
      %v286 = vmul.f32 %v247, %v260
      %v287 = vmul.f32 %v248, %v260
      %v288 = vmul.f32 %v249, %v260
      %v289 = vmul.f32 %v250, %v260
      %v290 = vmul.f32 %v251, %v260
      %v291 = vmul.f32 %v252, %v260
      %v292 = vmul.f32 %v253, %v260
      %v293 = vmul.f32 %v254, %v260
      %v294 = vld [vmem:[%s3] sm:$0x1]
      %v296 = vlaneseq
      %v297 = vshrl.u32 %v296, 7
      %v298 = vsub.s32 0, %v297
      %v299 = vrot.slane %v294, %v298
      %v301 = vadd.f32 %v262, %v299
      %v302 = vadd.f32 %v263, %v299
      %v303 = vadd.f32 %v264, %v299
      %v304 = vadd.f32 %v265, %v299
      %v305 = vadd.f32 %v266, %v299
      %v306 = vadd.f32 %v267, %v299
      %v307 = vadd.f32 %v268, %v299
      %v308 = vadd.f32 %v269, %v299
      %v309 = vadd.f32 %v270, %v299
      %v310 = vadd.f32 %v271, %v299
      %v311 = vadd.f32 %v272, %v299
      %v312 = vadd.f32 %v273, %v299
      %v313 = vadd.f32 %v274, %v299
      %v314 = vadd.f32 %v275, %v299
      %v315 = vadd.f32 %v276, %v299
      %v316 = vadd.f32 %v277, %v299
      %v317 = vadd.f32 %v278, %v299
      %v318 = vadd.f32 %v279, %v299
      %v319 = vadd.f32 %v280, %v299
      %v320 = vadd.f32 %v281, %v299
      %v321 = vadd.f32 %v282, %v299
      %v322 = vadd.f32 %v283, %v299
      %v323 = vadd.f32 %v284, %v299
      %v324 = vadd.f32 %v285, %v299
      %v325 = vadd.f32 %v286, %v299
      %v326 = vadd.f32 %v287, %v299
      %v327 = vadd.f32 %v288, %v299
      %v328 = vadd.f32 %v289, %v299
      %v329 = vadd.f32 %v290, %v299
      %v330 = vadd.f32 %v291, %v299
      %v331 = vadd.f32 %v292, %v299
      %v332 = vadd.f32 %v293, %v299
      %v333 = vld [vmem:[%s215] sm:$0xff]
      %v334 = vld [vmem:[%s215 + $0x8] sm:$0xff]
      %v335 = vld [vmem:[%s215 + $0x10] sm:$0xff]
      %v336 = vld [vmem:[%s215 + $0x18] sm:$0xff]
      %v337 = vld [vmem:[%s215 + $0x20] sm:$0xff]
      %v338 = vld [vmem:[%s215 + $0x28] sm:$0xff]
      %v339 = vld [vmem:[%s215 + $0x30] sm:$0xff]
      %v340 = vld [vmem:[%s215 + $0x38] sm:$0xff]
      %v341 = vld [vmem:[%s215 + $0x40] sm:$0xff]
      %v342 = vld [vmem:[%s215 + $0x48] sm:$0xff]
      %v343 = vld [vmem:[%s215 + $0x50] sm:$0xff]
      %v344 = vld [vmem:[%s215 + $0x58] sm:$0xff]
      %v345 = vld [vmem:[%s215 + $0x60] sm:$0xff]
      %v346 = vld [vmem:[%s215 + $0x68] sm:$0xff]
      %v347 = vld [vmem:[%s215 + $0x70] sm:$0xff]
      %v348 = vld [vmem:[%s215 + $0x78] sm:$0xff]
      %v349 = vld [vmem:[%s215 + $0x80] sm:$0xff]
      %v350 = vld [vmem:[%s215 + $0x88] sm:$0xff]
      %v351 = vld [vmem:[%s215 + $0x90] sm:$0xff]
      %v352 = vld [vmem:[%s215 + $0x98] sm:$0xff]
      %v353 = vld [vmem:[%s215 + $0xa0] sm:$0xff]
      %v354 = vld [vmem:[%s215 + $0xa8] sm:$0xff]
      %v355 = vld [vmem:[%s215 + $0xb0] sm:$0xff]
      %v356 = vld [vmem:[%s215 + $0xb8] sm:$0xff]
      %v357 = vld [vmem:[%s215 + $0xc0] sm:$0xff]
      %v358 = vld [vmem:[%s215 + $0xc8] sm:$0xff]
      %v359 = vld [vmem:[%s215 + $0xd0] sm:$0xff]
      %v360 = vld [vmem:[%s215 + $0xd8] sm:$0xff]
      %v361 = vld [vmem:[%s215 + $0xe0] sm:$0xff]
      %v362 = vld [vmem:[%s215 + $0xe8] sm:$0xff]
      %v363 = vld [vmem:[%s215 + $0xf0] sm:$0xff]
      %v364 = vld [vmem:[%s215 + $0xf8] sm:$0xff]
      %v365 = vadd.f32 %v301, %v333
      %v366 = vadd.f32 %v302, %v334
      %v367 = vadd.f32 %v303, %v335
      %v368 = vadd.f32 %v304, %v336
      %v369 = vadd.f32 %v305, %v337
      %v370 = vadd.f32 %v306, %v338
      %v371 = vadd.f32 %v307, %v339
      %v372 = vadd.f32 %v308, %v340
      %v373 = vadd.f32 %v309, %v341
      %v374 = vadd.f32 %v310, %v342
      %v375 = vadd.f32 %v311, %v343
      %v376 = vadd.f32 %v312, %v344
      %v377 = vadd.f32 %v313, %v345
      %v378 = vadd.f32 %v314, %v346
      %v379 = vadd.f32 %v315, %v347
      %v380 = vadd.f32 %v316, %v348
      %v381 = vadd.f32 %v317, %v349
      %v382 = vadd.f32 %v318, %v350
      %v383 = vadd.f32 %v319, %v351
      %v384 = vadd.f32 %v320, %v352
      %v385 = vadd.f32 %v321, %v353
      %v386 = vadd.f32 %v322, %v354
      %v387 = vadd.f32 %v323, %v355
      %v388 = vadd.f32 %v324, %v356
      %v389 = vadd.f32 %v325, %v357
      %v390 = vadd.f32 %v326, %v358
      %v391 = vadd.f32 %v327, %v359
      %v392 = vadd.f32 %v328, %v360
      %v393 = vadd.f32 %v329, %v361
      %v394 = vadd.f32 %v330, %v362
      %v395 = vadd.f32 %v331, %v363
      %v396 = vadd.f32 %v332, %v364
      %v397 = vmax.f32 %v365, 0.0
      %v398 = vmax.f32 %v366, 0.0
      %v399 = vmax.f32 %v367, 0.0
      %v400 = vmax.f32 %v368, 0.0
      %v401 = vmax.f32 %v369, 0.0
      %v402 = vmax.f32 %v370, 0.0
      %v403 = vmax.f32 %v371, 0.0
      %v404 = vmax.f32 %v372, 0.0
      %v405 = vmax.f32 %v373, 0.0
      %v406 = vmax.f32 %v374, 0.0
      %v407 = vmax.f32 %v375, 0.0
      %v408 = vmax.f32 %v376, 0.0
      %v409 = vmax.f32 %v377, 0.0
      %v410 = vmax.f32 %v378, 0.0
      %v411 = vmax.f32 %v379, 0.0
      %v412 = vmax.f32 %v380, 0.0
      %v413 = vmax.f32 %v381, 0.0
      %v414 = vmax.f32 %v382, 0.0
      %v415 = vmax.f32 %v383, 0.0
      %v416 = vmax.f32 %v384, 0.0
      %v417 = vmax.f32 %v385, 0.0
      %v418 = vmax.f32 %v386, 0.0
      %v419 = vmax.f32 %v387, 0.0
      %v420 = vmax.f32 %v388, 0.0
      %v421 = vmax.f32 %v389, 0.0
      %v422 = vmax.f32 %v390, 0.0
      %v423 = vmax.f32 %v391, 0.0
      %v424 = vmax.f32 %v392, 0.0
      %v425 = vmax.f32 %v393, 0.0
      %v426 = vmax.f32 %v394, 0.0
      %v427 = vmax.f32 %v395, 0.0
      %v428 = vmax.f32 %v396, 0.0
      %vm429 = vcmask 261120
      %430 = vst.msk [vmem:[%s221] sm:$0xff] %vm429, %v397
      %431 = vst.msk [vmem:[%s221 + $0x8] sm:$0xff] %vm429, %v398
      %432 = vst.msk [vmem:[%s221 + $0x10] sm:$0xff] %vm429, %v399
      %433 = vst.msk [vmem:[%s221 + $0x18] sm:$0xff] %vm429, %v400
      %434 = vst.msk [vmem:[%s221 + $0x20] sm:$0xff] %vm429, %v401
      %435 = vst.msk [vmem:[%s221 + $0x28] sm:$0xff] %vm429, %v402
      %436 = vst.msk [vmem:[%s221 + $0x30] sm:$0xff] %vm429, %v403
      %437 = vst.msk [vmem:[%s221 + $0x38] sm:$0xff] %vm429, %v404
      %438 = vst.msk [vmem:[%s221 + $0x40] sm:$0xff] %vm429, %v405
      %439 = vst.msk [vmem:[%s221 + $0x48] sm:$0xff] %vm429, %v406
      %440 = vst.msk [vmem:[%s221 + $0x50] sm:$0xff] %vm429, %v407
      %441 = vst.msk [vmem:[%s221 + $0x58] sm:$0xff] %vm429, %v408
      %442 = vst.msk [vmem:[%s221 + $0x60] sm:$0xff] %vm429, %v409
      %443 = vst.msk [vmem:[%s221 + $0x68] sm:$0xff] %vm429, %v410
      %444 = vst.msk [vmem:[%s221 + $0x70] sm:$0xff] %vm429, %v411
      %445 = vst.msk [vmem:[%s221 + $0x78] sm:$0xff] %vm429, %v412
      %446 = vst.msk [vmem:[%s221 + $0x80] sm:$0xff] %vm429, %v413
      %447 = vst.msk [vmem:[%s221 + $0x88] sm:$0xff] %vm429, %v414
      %448 = vst.msk [vmem:[%s221 + $0x90] sm:$0xff] %vm429, %v415
      %449 = vst.msk [vmem:[%s221 + $0x98] sm:$0xff] %vm429, %v416
      %450 = vst.msk [vmem:[%s221 + $0xa0] sm:$0xff] %vm429, %v417
      %451 = vst.msk [vmem:[%s221 + $0xa8] sm:$0xff] %vm429, %v418
      %452 = vst.msk [vmem:[%s221 + $0xb0] sm:$0xff] %vm429, %v419
      %453 = vst.msk [vmem:[%s221 + $0xb8] sm:$0xff] %vm429, %v420
      %454 = vst.msk [vmem:[%s221 + $0xc0] sm:$0xff] %vm429, %v421
      %455 = vst.msk [vmem:[%s221 + $0xc8] sm:$0xff] %vm429, %v422
      %456 = vst.msk [vmem:[%s221 + $0xd0] sm:$0xff] %vm429, %v423
      %457 = vst.msk [vmem:[%s221 + $0xd8] sm:$0xff] %vm429, %v424
      %458 = vst.msk [vmem:[%s221 + $0xe0] sm:$0xff] %vm429, %v425
      %459 = vst.msk [vmem:[%s221 + $0xe8] sm:$0xff] %vm429, %v426
      %460 = vst.msk [vmem:[%s221 + $0xf0] sm:$0xff] %vm429, %v427
      %461 = vst.msk [vmem:[%s221 + $0xf8] sm:$0xff] %vm429, %v428
      %s462 = smul.u32 32, %s15
      %p463 = scmp.lt.s32.totalorder %s462, 95
      %s464 = scalar_select %p463, %s462, 95
      %s465 = smul.addr %s464, 8
      %s466 = scalar_lea.vmem %s4, %s465
      // Predicated region
      $region37: #{bottleneck_forward.7} parent=35 // pred_check
        %p467 = pneg %p127
      $region38: #{bottleneck_forward.7} parent=35 // pred_check_branch
        %469 = sbr.rel (%p467) target = $region40
      $region39: #{bottleneck_forward.7} parent=35 // pred_region
        %s470 = smul.u32 32, %s15
      $region40: #{bottleneck_forward.7} parent=35 // pred_fallthru
        _
    $region36: #{bottleneck_forward.7} parent=5 // pred_fallthru
      _
    %p471 = scmp.le.s32.totalorder 2, %s10
    // Predicated region
    $region41: #{bottleneck_forward.7} parent=5 // pred_check
      %p472 = pneg %p471
    $region42: #{bottleneck_forward.7} parent=5 // pred_check_branch
      %474 = sbr.rel (%p472) target = $region44
    $region43: #{bottleneck_forward.7} parent=5 // pred_region
      %s475 = ssub.s32 %s10, 2
      // Predicated region
      $region45: #{bottleneck_forward.7} parent=43 // pred_check
        %p476 = pneg %p133
      $region46: #{bottleneck_forward.7} parent=43 // pred_check_branch
        %478 = sbr.rel (%p476) target = $region48
      $region47: #{bottleneck_forward.7} parent=43 // pred_region
        %s479 = smul.u32 32, %s16
        %p480 = scmp.lt.s32.totalorder %s479, 95
        %s481 = scalar_select %p480, %s479, 95
        %s482 = smul.addr %s481, 8
        %s483 = scalar_lea.vmem %s4, %s482
      $region48: #{bottleneck_forward.7} parent=43 // pred_fallthru
        _
    $region44: #{bottleneck_forward.7} parent=5 // pred_fallthru
      _
  $region6: #{bottleneck_forward.7} parent=0 // loop_footer
    %s14 = sadd.s32 1, %s10
  $region7: #{bottleneck_forward.7} parent=0 // loop_footer_branch
    %9 = sbr.rel target = $region3
  $region8: #{bottleneck_forward.7} parent=0 // loop_exit
    _

// kernel: bottleneck_forward.5
$region0: #{bottleneck_forward.5}
  #allocation0 [shape = 'u32[]', space=smem, size = 0x4, offset = 0x4, fixed_abs, tag = 'smem constant byte address 0x4 - core index']
  #allocation1 [shape = 'u32[144,128]{1,0:T(1,128)}', space=vmem, size = 0x12000, scoped, tag = 'internal scratch']
  #allocation2 [shape = 'bf16[768,8]{1,0:T(8,128)(2,1)}', space=vmem, size = 0x30000, scoped, tag = 'scratch operand']
  %s0 = inlined_call_operand.vmem [shape: f32[768,8], index: 0, kind: input, shape index: {}, may-alias: {0,1,2}]
  %s1 = inlined_call_operand.vmem [shape: f32[768,8], index: 1, kind: input, shape index: {}, may-alias: {0,1,2}]
  %s2 = inlined_call_operand.vmem [shape: f32[768,8], index: 2, kind: input, shape index: {}, may-alias: {0,1,2}]
  %s3 = inlined_call_operand.vmem [shape: f32[768,1], index: 3, kind: input, shape index: {}, may-alias: {3,4,5}]
  %s4 = inlined_call_operand.vmem [shape: f32[768,1], index: 4, kind: input, shape index: {}, may-alias: {3,4,5}]
  %s5 = inlined_call_operand.vmem [shape: f32[768,1], index: 5, kind: input, shape index: {}, may-alias: {3,4,5}]
  %s6 = inlined_call_operand.vmem [shape: f32[1,8], index: 6, kind: input, shape index: {}]
  %s7 = inlined_call_operand.vmem [shape: f32[1,8], index: 7, kind: input, shape index: {}]
  %s8 = inlined_call_operand.vmem [shape: bf16[9,8,8], index: 8, kind: input, shape index: {}]
  %s9 = inlined_call_operand.vmem [shape: f32[768,8], index: 9, kind: output, shape index: {0}]
  %s10 = inlined_call_operand.vmem [shape: f32[24,8], index: 10, kind: output, shape index: {1}]
  %11 = xla_tuple %s9, %s10
  %s12 = sld [smem:[#allocation0]]
  $region77: #{bottleneck_forward.5} parent=0
    _
  %s14 = ssub.s32 1, %s12
  %s15 = scalar_select 0, %s14, %s12
  loop: start=0, step=1, limit=5
  $region2: #{bottleneck_forward.5} parent=0 // loop_pre_header
    _
  $region3: #{bottleneck_forward.5} parent=0 // loop_header
    %s17 = sphi 0, %s21
    %p18 = scmp.ge.s32.totalorder %s17, 5
    %s33 = sphi 0, %s35
    %s36 = sphi 0, %s33
    %s37 = sphi 0, %s36
    %s53 = sphi 0, %s37
    %s59 = sphi 0, %s61
    %s62 = sphi 0, %s59
    %s63 = sphi 0, %s62
    %s79 = sphi 0, %s63
    %s91 = sphi 0, %s93
    %s94 = sphi 0, %s91
    %s95 = sphi 0, %s94
    %s111 = sphi 0, %s95
    %s123 = sphi 0, %s125
    %s126 = sphi 0, %s123
    %s127 = sphi 0, %s126
    %s143 = sphi 0, %s127
    %s149 = sphi 0, %s151
    %s152 = sphi 0, %s149
    %s153 = sphi 0, %s152
    %s169 = sphi 0, %s153
    %s181 = sphi 0, %s183
    %s184 = sphi 0, %s181
    %s185 = sphi 0, %s184
    %s201 = sphi 0, %s185
    %s205 = sphi 0, %s205
    %s207 = sphi 0, %s205
    %s208 = sphi 0, %s207
    %s222 = sphi 0, %s208
    %s226 = sphi 0, %s226
    %s228 = sphi 0, %s226
    %s229 = sphi 0, %s228
    %s243 = sphi 0, %s229
    %s247 = sphi 0, %s247
    %s249 = sphi 0, %s247
    %s250 = sphi 0, %s249
    %s264 = sphi 0, %s250
    %s270 = sphi 0, %s272
    %s273 = sphi 0, %s270
    %s274 = sphi 0, %s273
    %s290 = sphi 0, %s274
    %s296 = sphi 0, %s298
    %s299 = sphi 0, %s296
    %s300 = sphi 0, %s299
    %s316 = sphi 0, %s300
  $region4: #{bottleneck_forward.5} parent=0 // loop_header_branch
    %20 = sbr.rel (%p18) target = $region8
  $region5: #{bottleneck_forward.5} parent=0 // loop_body
    %s22 = ssub.s32 %s17, 1
    %s23 = ssub.s32 %s17, 2
    %s24 = sadd.s32 %s17, 1
    %s25 = ssub.s32 %s17, 1
    %p26 = scmp.gt.s32.totalorder %s25, 0
    %s27 = scalar_select %p26, %s25, 0
    %s28 = ssub.s32 %s24, 1
    %p29 = scmp.gt.s32.totalorder %s28, 0
    %s30 = scalar_select %p29, %s28, 0
    %s31 = ssub.s32 %s27, %s30
    %p32 = scmp.eq.s32.totalorder %s31, 0
    %s34 = sadd.s32 %s33, 1
    %s35 = scalar_select %p32, %s33, %s34
    %p38 = pneg %p32
    %p39 = scmp.eq.s32.totalorder %s17, 2
    %p40 = por %p38, %p39
    %p41 = scmp.ne.s32.totalorder %s33, %s36
    %p42 = scmp.eq.s32.totalorder %s17, 0
    %p43 = por %p41, %p42
    %p44 = scmp.ne.s32.totalorder %s33, %s36
    %p45 = scmp.eq.s32.totalorder %s22, 2
    %p46 = por %p44, %p45
    %p47 = scmp.ne.s32.totalorder %s36, %s37
    %p48 = scmp.eq.s32.totalorder %s22, 0
    %p49 = por %p47, %p48
    %p50 = scmp.ne.s32.totalorder %s36, %s37
    %p51 = scmp.eq.s32.totalorder %s23, 2
    %p52 = por %p50, %p51
    %p54 = scmp.ne.s32.totalorder %s37, %s53
    %p55 = scmp.eq.s32.totalorder %s23, 0
    %p56 = por %p54, %p55
    %s57 = ssub.s32 %s17, %s24
    %p58 = scmp.eq.s32.totalorder %s57, 0
    %s60 = sadd.s32 %s59, 1
    %s61 = scalar_select %p58, %s59, %s60
    %p64 = pneg %p58
    %p65 = scmp.eq.s32.totalorder %s17, 2
    %p66 = por %p64, %p65
    %p67 = scmp.ne.s32.totalorder %s59, %s62
    %p68 = scmp.eq.s32.totalorder %s17, 0
    %p69 = por %p67, %p68
    %p70 = scmp.ne.s32.totalorder %s59, %s62
    %p71 = scmp.eq.s32.totalorder %s22, 2
    %p72 = por %p70, %p71
    %p73 = scmp.ne.s32.totalorder %s62, %s63
    %p74 = scmp.eq.s32.totalorder %s22, 0
    %p75 = por %p73, %p74
    %p76 = scmp.ne.s32.totalorder %s62, %s63
    %p77 = scmp.eq.s32.totalorder %s23, 2
    %p78 = por %p76, %p77
    %p80 = scmp.ne.s32.totalorder %s63, %s79
    %p81 = scmp.eq.s32.totalorder %s23, 0
    %p82 = por %p80, %p81
    %s83 = sadd.s32 %s17, 1
    %p84 = scmp.lt.s32.totalorder %s83, 2
    %s85 = scalar_select %p84, %s83, 2
    %s86 = sadd.s32 %s24, 1
    %p87 = scmp.lt.s32.totalorder %s86, 2
    %s88 = scalar_select %p87, %s86, 2
    %s89 = ssub.s32 %s85, %s88
    %p90 = scmp.eq.s32.totalorder %s89, 0
    %s92 = sadd.s32 %s91, 1
    %s93 = scalar_select %p90, %s91, %s92
    %p96 = pneg %p90
    %p97 = scmp.eq.s32.totalorder %s17, 2
    %p98 = por %p96, %p97
    %p99 = scmp.ne.s32.totalorder %s91, %s94
    %p100 = scmp.eq.s32.totalorder %s17, 0
    %p101 = por %p99, %p100
    %p102 = scmp.ne.s32.totalorder %s91, %s94
    %p103 = scmp.eq.s32.totalorder %s22, 2
    %p104 = por %p102, %p103
    %p105 = scmp.ne.s32.totalorder %s94, %s95
    %p106 = scmp.eq.s32.totalorder %s22, 0
    %p107 = por %p105, %p106
    %p108 = scmp.ne.s32.totalorder %s94, %s95
    %p109 = scmp.eq.s32.totalorder %s23, 2
    %p110 = por %p108, %p109
    %p112 = scmp.ne.s32.totalorder %s95, %s111
    %p113 = scmp.eq.s32.totalorder %s23, 0
    %p114 = por %p112, %p113
    %s115 = ssub.s32 %s17, 1
    %p116 = scmp.gt.s32.totalorder %s115, 0
    %s117 = scalar_select %p116, %s115, 0
    %s118 = ssub.s32 %s24, 1
    %p119 = scmp.gt.s32.totalorder %s118, 0
    %s120 = scalar_select %p119, %s118, 0
    %s121 = ssub.s32 %s117, %s120
    %p122 = scmp.eq.s32.totalorder %s121, 0
    %s124 = sadd.s32 %s123, 1
    %s125 = scalar_select %p122, %s123, %s124
    %p128 = pneg %p122
    %p129 = scmp.eq.s32.totalorder %s17, 2
    %p130 = por %p128, %p129
    %p131 = scmp.ne.s32.totalorder %s123, %s126
    %p132 = scmp.eq.s32.totalorder %s17, 0
    %p133 = por %p131, %p132
    %p134 = scmp.ne.s32.totalorder %s123, %s126
    %p135 = scmp.eq.s32.totalorder %s22, 2
    %p136 = por %p134, %p135
    %p137 = scmp.ne.s32.totalorder %s126, %s127
    %p138 = scmp.eq.s32.totalorder %s22, 0
    %p139 = por %p137, %p138
    %p140 = scmp.ne.s32.totalorder %s126, %s127
    %p141 = scmp.eq.s32.totalorder %s23, 2
    %p142 = por %p140, %p141
    %p144 = scmp.ne.s32.totalorder %s127, %s143
    %p145 = scmp.eq.s32.totalorder %s23, 0
    %p146 = por %p144, %p145
    %s147 = ssub.s32 %s17, %s24
    %p148 = scmp.eq.s32.totalorder %s147, 0
    %s150 = sadd.s32 %s149, 1
    %s151 = scalar_select %p148, %s149, %s150
    %p154 = pneg %p148
    %p155 = scmp.eq.s32.totalorder %s17, 2
    %p156 = por %p154, %p155
    %p157 = scmp.ne.s32.totalorder %s149, %s152
    %p158 = scmp.eq.s32.totalorder %s17, 0
    %p159 = por %p157, %p158
    %p160 = scmp.ne.s32.totalorder %s149, %s152
    %p161 = scmp.eq.s32.totalorder %s22, 2
    %p162 = por %p160, %p161
    %p163 = scmp.ne.s32.totalorder %s152, %s153
    %p164 = scmp.eq.s32.totalorder %s22, 0
    %p165 = por %p163, %p164
    %p166 = scmp.ne.s32.totalorder %s152, %s153
    %p167 = scmp.eq.s32.totalorder %s23, 2
    %p168 = por %p166, %p167
    %p170 = scmp.ne.s32.totalorder %s153, %s169
    %p171 = scmp.eq.s32.totalorder %s23, 0
    %p172 = por %p170, %p171
    %s173 = sadd.s32 %s17, 1
    %p174 = scmp.lt.s32.totalorder %s173, 2
    %s175 = scalar_select %p174, %s173, 2
    %s176 = sadd.s32 %s24, 1
    %p177 = scmp.lt.s32.totalorder %s176, 2
    %s178 = scalar_select %p177, %s176, 2
    %s179 = ssub.s32 %s175, %s178
    %p180 = scmp.eq.s32.totalorder %s179, 0
    %s182 = sadd.s32 %s181, 1
    %s183 = scalar_select %p180, %s181, %s182
    %p186 = pneg %p180
    %p187 = scmp.eq.s32.totalorder %s17, 2
    %p188 = por %p186, %p187
    %p189 = scmp.ne.s32.totalorder %s181, %s184
    %p190 = scmp.eq.s32.totalorder %s17, 0
    %p191 = por %p189, %p190
    %p192 = scmp.ne.s32.totalorder %s181, %s184
    %p193 = scmp.eq.s32.totalorder %s22, 2
    %p194 = por %p192, %p193
    %p195 = scmp.ne.s32.totalorder %s184, %s185
    %p196 = scmp.eq.s32.totalorder %s22, 0
    %p197 = por %p195, %p196
    %p198 = scmp.ne.s32.totalorder %s184, %s185
    %p199 = scmp.eq.s32.totalorder %s23, 2
    %p200 = por %p198, %p199
    %p202 = scmp.ne.s32.totalorder %s185, %s201
    %p203 = scmp.eq.s32.totalorder %s23, 0
    %p204 = por %p202, %p203
    %s206 = sadd.s32 %s205, 1
    %p209 = scmp.eq.s32.totalorder %s17, 2
    %p210 = scmp.ne.s32.totalorder %s205, %s207
    %p211 = scmp.eq.s32.totalorder %s17, 0
    %p212 = por %p210, %p211
    %p213 = scmp.ne.s32.totalorder %s205, %s207
    %p214 = scmp.eq.s32.totalorder %s22, 2
    %p215 = por %p213, %p214
    %p216 = scmp.ne.s32.totalorder %s207, %s208
    %p217 = scmp.eq.s32.totalorder %s22, 0
    %p218 = por %p216, %p217
    %p219 = scmp.ne.s32.totalorder %s207, %s208
    %p220 = scmp.eq.s32.totalorder %s23, 2
    %p221 = por %p219, %p220
    %p223 = scmp.ne.s32.totalorder %s208, %s222
    %p224 = scmp.eq.s32.totalorder %s23, 0
    %p225 = por %p223, %p224
    %s227 = sadd.s32 %s226, 1
    %p230 = scmp.eq.s32.totalorder %s17, 2
    %p231 = scmp.ne.s32.totalorder %s226, %s228
    %p232 = scmp.eq.s32.totalorder %s17, 0
    %p233 = por %p231, %p232
    %p234 = scmp.ne.s32.totalorder %s226, %s228
    %p235 = scmp.eq.s32.totalorder %s22, 2
    %p236 = por %p234, %p235
    %p237 = scmp.ne.s32.totalorder %s228, %s229
    %p238 = scmp.eq.s32.totalorder %s22, 0
    %p239 = por %p237, %p238
    %p240 = scmp.ne.s32.totalorder %s228, %s229
    %p241 = scmp.eq.s32.totalorder %s23, 2
    %p242 = por %p240, %p241
    %p244 = scmp.ne.s32.totalorder %s229, %s243
    %p245 = scmp.eq.s32.totalorder %s23, 0
    %p246 = por %p244, %p245
    %s248 = sadd.s32 %s247, 1
    %p251 = scmp.eq.s32.totalorder %s17, 2
    %p252 = scmp.ne.s32.totalorder %s247, %s249
    %p253 = scmp.eq.s32.totalorder %s17, 0
    %p254 = por %p252, %p253
    %p255 = scmp.ne.s32.totalorder %s247, %s249
    %p256 = scmp.eq.s32.totalorder %s22, 2
    %p257 = por %p255, %p256
    %p258 = scmp.ne.s32.totalorder %s249, %s250
    %p259 = scmp.eq.s32.totalorder %s22, 0
    %p260 = por %p258, %p259
    %p261 = scmp.ne.s32.totalorder %s249, %s250
    %p262 = scmp.eq.s32.totalorder %s23, 2
    %p263 = por %p261, %p262
    %p265 = scmp.ne.s32.totalorder %s250, %s264
    %p266 = scmp.eq.s32.totalorder %s23, 0
    %p267 = por %p265, %p266
    %s268 = ssub.s32 %s17, %s24
    %p269 = scmp.eq.s32.totalorder %s268, 0
    %s271 = sadd.s32 %s270, 1
    %s272 = scalar_select %p269, %s270, %s271
    %p275 = pneg %p269
    %p276 = scmp.eq.s32.totalorder %s17, 2
    %p277 = por %p275, %p276
    %p278 = scmp.ne.s32.totalorder %s270, %s273
    %p279 = scmp.eq.s32.totalorder %s17, 0
    %p280 = por %p278, %p279
    %p281 = scmp.ne.s32.totalorder %s270, %s273
    %p282 = scmp.eq.s32.totalorder %s22, 2
    %p283 = por %p281, %p282
    %p284 = scmp.ne.s32.totalorder %s273, %s274
    %p285 = scmp.eq.s32.totalorder %s22, 0
    %p286 = por %p284, %p285
    %p287 = scmp.ne.s32.totalorder %s273, %s274
    %p288 = scmp.eq.s32.totalorder %s23, 2
    %p289 = por %p287, %p288
    %p291 = scmp.ne.s32.totalorder %s274, %s290
    %p292 = scmp.eq.s32.totalorder %s23, 0
    %p293 = por %p291, %p292
    %s294 = ssub.s32 %s17, %s24
    %p295 = scmp.eq.s32.totalorder %s294, 0
    %s297 = sadd.s32 %s296, 1
    %s298 = scalar_select %p295, %s296, %s297
    %p301 = pneg %p295
    %p302 = scmp.eq.s32.totalorder %s17, 2
    %p303 = por %p301, %p302
    %p304 = scmp.ne.s32.totalorder %s296, %s299
    %p305 = scmp.eq.s32.totalorder %s17, 0
    %p306 = por %p304, %p305
    %p307 = scmp.ne.s32.totalorder %s296, %s299
    %p308 = scmp.eq.s32.totalorder %s22, 2
    %p309 = por %p307, %p308
    %p310 = scmp.ne.s32.totalorder %s299, %s300
    %p311 = scmp.eq.s32.totalorder %s22, 0
    %p312 = por %p310, %p311
    %p313 = scmp.ne.s32.totalorder %s299, %s300
    %p314 = scmp.eq.s32.totalorder %s23, 2
    %p315 = por %p313, %p314
    %p317 = scmp.ne.s32.totalorder %s300, %s316
    %p318 = scmp.eq.s32.totalorder %s23, 0
    %p319 = por %p317, %p318
    %p320 = scmp.le.s32.totalorder 1, %s17
    %p321 = scmp.lt.s32.totalorder %s17, 4
    %p322 = pnand %p320, %p321
    %p323 = pneg %p322
    // Predicated region
    $region9: #{bottleneck_forward.5} parent=5 // pred_check
      _
    $region10: #{bottleneck_forward.5} parent=5 // pred_check_branch
      %325 = sbr.rel (%p322) target = $region12
    $region11: #{bottleneck_forward.5} parent=5 // pred_region
      %s326 = ssub.s32 %s17, 1
      // Predicated region
      $region13: #{bottleneck_forward.5} parent=11 // pred_check
        %p327 = pneg %p218
      $region14: #{bottleneck_forward.5} parent=11 // pred_check_branch
        %329 = sbr.rel (%p327) target = $region16
      $region15: #{bottleneck_forward.5} parent=11 // pred_region
        _
      $region16: #{bottleneck_forward.5} parent=11 // pred_fallthru
        _
      // Predicated region
      $region17: #{bottleneck_forward.5} parent=11 // pred_check
        %p330 = pneg %p239
      $region18: #{bottleneck_forward.5} parent=11 // pred_check_branch
        %332 = sbr.rel (%p330) target = $region20
      $region19: #{bottleneck_forward.5} parent=11 // pred_region
        _
      $region20: #{bottleneck_forward.5} parent=11 // pred_fallthru
        _
      // Predicated region
      $region21: #{bottleneck_forward.5} parent=11 // pred_check
        %p333 = pneg %p260
      $region22: #{bottleneck_forward.5} parent=11 // pred_check_branch
        %335 = sbr.rel (%p333) target = $region24
      $region23: #{bottleneck_forward.5} parent=11 // pred_region
        _
      $region24: #{bottleneck_forward.5} parent=11 // pred_fallthru
        _
    $region12: #{bottleneck_forward.5} parent=5 // pred_fallthru
      _
    %p336 = scmp.lt.s32.totalorder %s17, 3
    // Predicated region
    $region25: #{bottleneck_forward.5} parent=5 // pred_check
      %p337 = pneg %p336
    $region26: #{bottleneck_forward.5} parent=5 // pred_check_branch
      %339 = sbr.rel (%p337) target = $region28
    $region27: #{bottleneck_forward.5} parent=5 // pred_region
      // Predicated region
      $region29: #{bottleneck_forward.5} parent=27 // pred_check
        %p340 = pneg %p43
      $region30: #{bottleneck_forward.5} parent=27 // pred_check_branch
        %342 = sbr.rel (%p340) target = $region32
      $region31: #{bottleneck_forward.5} parent=27 // pred_region
        %s343 = ssub.s32 %s17, 1
        %p344 = scmp.gt.s32.totalorder %s343, 0
        %s345 = scalar_select %p344, %s343, 0
        %s346 = smul.u32 32, %s345
        %p347 = scmp.lt.s32.totalorder %s346, 95
        %s348 = scalar_select %p347, %s346, 95
        %s349 = smul.addr %s348, 8
        %s350 = scalar_lea.vmem %s0, %s349
        %s351 = ssub.s32 %s17, 1
        %p352 = scmp.gt.s32.totalorder %s351, 0
        %s353 = scalar_select %p352, %s351, 0
        %s354 = smul.u32 32, %s353
      $region32: #{bottleneck_forward.5} parent=27 // pred_fallthru
        _
      // Predicated region
      $region33: #{bottleneck_forward.5} parent=27 // pred_check
        %p355 = pneg %p69
      $region34: #{bottleneck_forward.5} parent=27 // pred_check_branch
        %357 = sbr.rel (%p355) target = $region36
      $region35: #{bottleneck_forward.5} parent=27 // pred_region
        %s358 = smul.u32 32, %s17
        %p359 = scmp.lt.s32.totalorder %s358, 95
        %s360 = scalar_select %p359, %s358, 95
        %s361 = smul.addr %s360, 8
        %s362 = scalar_lea.vmem %s1, %s361
        %s363 = smul.u32 32, %s17
      $region36: #{bottleneck_forward.5} parent=27 // pred_fallthru
        _
      // Predicated region
      $region37: #{bottleneck_forward.5} parent=27 // pred_check
        %p364 = pneg %p101
      $region38: #{bottleneck_forward.5} parent=27 // pred_check_branch
        %366 = sbr.rel (%p364) target = $region40
      $region39: #{bottleneck_forward.5} parent=27 // pred_region
        %s367 = sadd.s32 %s17, 1
        %p368 = scmp.lt.s32.totalorder %s367, 2
        %s369 = scalar_select %p368, %s367, 2
        %s370 = smul.u32 32, %s369
        %p371 = scmp.lt.s32.totalorder %s370, 95
        %s372 = scalar_select %p371, %s370, 95
        %s373 = smul.addr %s372, 8
        %s374 = scalar_lea.vmem %s2, %s373
        %s375 = sadd.s32 %s17, 1
        %p376 = scmp.lt.s32.totalorder %s375, 2
        %s377 = scalar_select %p376, %s375, 2
        %s378 = smul.u32 32, %s377
      $region40: #{bottleneck_forward.5} parent=27 // pred_fallthru
        _
      // Predicated region
      $region41: #{bottleneck_forward.5} parent=27 // pred_check
        %p379 = pneg %p133
      $region42: #{bottleneck_forward.5} parent=27 // pred_check_branch
        %381 = sbr.rel (%p379) target = $region44
      $region43: #{bottleneck_forward.5} parent=27 // pred_region
        %s382 = ssub.s32 %s17, 1
        %p383 = scmp.gt.s32.totalorder %s382, 0
        %s384 = scalar_select %p383, %s382, 0
        %s385 = smul.u32 32, %s384
        %p386 = scmp.lt.s32.totalorder %s385, 95
        %s387 = scalar_select %p386, %s385, 95
        %s388 = smul.addr %s387, 8
        %s389 = scalar_lea.vmem %s3, %s388
        %s390 = ssub.s32 %s17, 1
        %p391 = scmp.gt.s32.totalorder %s390, 0
        %s392 = scalar_select %p391, %s390, 0
        %s393 = smul.u32 32, %s392
      $region44: #{bottleneck_forward.5} parent=27 // pred_fallthru
        _
      // Predicated region
      $region45: #{bottleneck_forward.5} parent=27 // pred_check
        %p394 = pneg %p159
      $region46: #{bottleneck_forward.5} parent=27 // pred_check_branch
        %396 = sbr.rel (%p394) target = $region48
      $region47: #{bottleneck_forward.5} parent=27 // pred_region
        %s397 = smul.u32 32, %s17
        %p398 = scmp.lt.s32.totalorder %s397, 95
        %s399 = scalar_select %p398, %s397, 95
        %s400 = smul.addr %s399, 8
        %s401 = scalar_lea.vmem %s4, %s400
        %s402 = smul.u32 32, %s17
      $region48: #{bottleneck_forward.5} parent=27 // pred_fallthru
        _
      // Predicated region
      $region49: #{bottleneck_forward.5} parent=27 // pred_check
        %p403 = pneg %p191
      $region50: #{bottleneck_forward.5} parent=27 // pred_check_branch
        %405 = sbr.rel (%p403) target = $region52
      $region51: #{bottleneck_forward.5} parent=27 // pred_region
        %s406 = sadd.s32 %s17, 1
        %p407 = scmp.lt.s32.totalorder %s406, 2
        %s408 = scalar_select %p407, %s406, 2
        %s409 = smul.u32 32, %s408
        %p410 = scmp.lt.s32.totalorder %s409, 95
        %s411 = scalar_select %p410, %s409, 95
        %s412 = smul.addr %s411, 8
        %s413 = scalar_lea.vmem %s5, %s412
        %s414 = sadd.s32 %s17, 1
        %p415 = scmp.lt.s32.totalorder %s414, 2
        %s416 = scalar_select %p415, %s414, 2
        %s417 = smul.u32 32, %s416
      $region52: #{bottleneck_forward.5} parent=27 // pred_fallthru
        _
    $region28: #{bottleneck_forward.5} parent=5 // pred_fallthru
      _
    %p418 = scmp.le.s32.totalorder 1, %s17
    %p419 = scmp.lt.s32.totalorder %s17, 4
    %p420 = pnand %p418, %p419
    %p421 = pneg %p420
    // Predicated region
    $region53: #{bottleneck_forward.5} parent=5 // pred_check
      _
    $region54: #{bottleneck_forward.5} parent=5 // pred_check_branch
      %423 = sbr.rel (%p420) target = $region56
    $region55: #{bottleneck_forward.5} parent=5 // pred_region
      %s424 = ssub.s32 %s17, 1
      %s425 = ssub.s32 %s22, 1
      %p426 = scmp.gt.s32.totalorder %s425, 0
      %s427 = scalar_select %p426, %s425, 0
      %s428 = smul.u32 32, %s427
      %p429 = scmp.lt.s32.totalorder %s428, 95
      %s430 = scalar_select %p429, %s428, 95
      %s431 = smul.addr %s430, 8
      %s432 = scalar_lea.vmem %s0, %s431
      %p433 = pneg %p49
      %p434 = pneg %p46
      %s435 = smul.u32 32, %s22
      %p436 = scmp.lt.s32.totalorder %s435, 95
      %s437 = scalar_select %p436, %s435, 95
      %s438 = smul.addr %s437, 8
      %s439 = scalar_lea.vmem %s1, %s438
      %p440 = pneg %p75
      %p441 = pneg %p72
      %s442 = sadd.s32 %s22, 1
      %p443 = scmp.lt.s32.totalorder %s442, 2
      %s444 = scalar_select %p443, %s442, 2
      %s445 = smul.u32 32, %s444
      %p446 = scmp.lt.s32.totalorder %s445, 95
      %s447 = scalar_select %p446, %s445, 95
      %s448 = smul.addr %s447, 8
      %s449 = scalar_lea.vmem %s2, %s448
      %p450 = pneg %p107
      %p451 = pneg %p104
      %s452 = ssub.s32 %s22, 1
      %p453 = scmp.gt.s32.totalorder %s452, 0
      %s454 = scalar_select %p453, %s452, 0
      %s455 = smul.u32 32, %s454
      %p456 = scmp.lt.s32.totalorder %s455, 95
      %s457 = scalar_select %p456, %s455, 95
      %s458 = smul.addr %s457, 8
      %s459 = scalar_lea.vmem %s3, %s458
      %p460 = pneg %p139
      %p461 = pneg %p136
      %s462 = smul.u32 32, %s22
      %p463 = scmp.lt.s32.totalorder %s462, 95
      %s464 = scalar_select %p463, %s462, 95
      %s465 = smul.addr %s464, 8
      %s466 = scalar_lea.vmem %s4, %s465
      %p467 = pneg %p165
      %p468 = pneg %p162
      %s469 = sadd.s32 %s22, 1
      %p470 = scmp.lt.s32.totalorder %s469, 2
      %s471 = scalar_select %p470, %s469, 2
      %s472 = smul.u32 32, %s471
      %p473 = scmp.lt.s32.totalorder %s472, 95
      %s474 = scalar_select %p473, %s472, 95
      %s475 = smul.addr %s474, 8
      %s476 = scalar_lea.vmem %s5, %s475
      %p477 = pneg %p197
      %p478 = pneg %p194
      %p479 = pneg %p218
      %p480 = pneg %p215
      %p481 = pneg %p239
      %p482 = pneg %p236
      %p483 = pneg %p260
      %p484 = pneg %p257
      %p485 = pneg %p286
      %p486 = pneg %p283
      %s487 = smul.u32 32, %s22
      %p488 = scmp.lt.s32.totalorder %s487, 95
      %s489 = scalar_select %p488, %s487, 95
      %s490 = smul.addr %s489, 8
      %s491 = scalar_lea.vmem %s9, %s490
      %p492 = pneg %p312
      %p493 = pneg %p309
      %p494 = scmp.lt.s32.totalorder %s22, 2
      %s495 = scalar_select %p494, %s22, 2
      %s496 = smul.addr %s495, 8
      %s497 = scalar_lea.vmem %s10, %s496
      %s498 = ssub.s32 %s22, 1
      %p499 = scmp.gt.s32.totalorder %s498, 0
      %s500 = scalar_select %p499, %s498, 0
      %s501 = smul.u32 32, %s500
      %p502 = scmp.lt.s32.totalorder %s501, 95
      %s503 = scalar_select %p502, %s501, 95
      %s504 = smul.addr %s503, 8
      %s505 = scalar_lea.vmem %s0, %s504
      %s506 = ssub.s32 %s22, 1
      %p507 = scmp.gt.s32.totalorder %s506, 0
      %s508 = scalar_select %p507, %s506, 0
      %s509 = smul.u32 32, %s508
      %s510 = smul.u32 32, %s22
      %p511 = scmp.lt.s32.totalorder %s510, 95
      %s512 = scalar_select %p511, %s510, 95
      %s513 = smul.addr %s512, 8
      %s514 = scalar_lea.vmem %s1, %s513
      %s515 = smul.u32 32, %s22
      %s516 = sadd.s32 %s22, 1
      %p517 = scmp.lt.s32.totalorder %s516, 2
      %s518 = scalar_select %p517, %s516, 2
      %s519 = smul.u32 32, %s518
      %p520 = scmp.lt.s32.totalorder %s519, 95
      %s521 = scalar_select %p520, %s519, 95
      %s522 = smul.addr %s521, 8
      %s523 = scalar_lea.vmem %s2, %s522
      %s524 = sadd.s32 %s22, 1
      %p525 = scmp.lt.s32.totalorder %s524, 2
      %s526 = scalar_select %p525, %s524, 2
      %s527 = smul.u32 32, %s526
      %s528 = ssub.s32 %s22, 1
      %p529 = scmp.gt.s32.totalorder %s528, 0
      %s530 = scalar_select %p529, %s528, 0
      %s531 = smul.u32 32, %s530
      %p532 = scmp.lt.s32.totalorder %s531, 95
      %s533 = scalar_select %p532, %s531, 95
      %s534 = smul.addr %s533, 8
      %s535 = scalar_lea.vmem %s3, %s534
      %s536 = ssub.s32 %s22, 1
      %p537 = scmp.gt.s32.totalorder %s536, 0
      %s538 = scalar_select %p537, %s536, 0
      %s539 = smul.u32 32, %s538
      %s540 = smul.u32 32, %s22
      %p541 = scmp.lt.s32.totalorder %s540, 95
      %s542 = scalar_select %p541, %s540, 95
      %s543 = smul.addr %s542, 8
      %s544 = scalar_lea.vmem %s4, %s543
      %s545 = smul.u32 32, %s22
      %s546 = sadd.s32 %s22, 1
      %p547 = scmp.lt.s32.totalorder %s546, 2
      %s548 = scalar_select %p547, %s546, 2
      %s549 = smul.u32 32, %s548
      %p550 = scmp.lt.s32.totalorder %s549, 95
      %s551 = scalar_select %p550, %s549, 95
      %s552 = smul.addr %s551, 8
      %s553 = scalar_lea.vmem %s5, %s552
      %s554 = sadd.s32 %s22, 1
      %p555 = scmp.lt.s32.totalorder %s554, 2
      %s556 = scalar_select %p555, %s554, 2
      %s557 = smul.u32 32, %s556
      %s558 = smul.u32 32, %s22
      %p559 = scmp.lt.s32.totalorder %s558, 95
      %s560 = scalar_select %p559, %s558, 95
      %s561 = smul.addr %s560, 8
      %s562 = scalar_lea.vmem %s9, %s561
      %s563 = smul.u32 32, %s22
      %p564 = scmp.lt.s32.totalorder %s22, 2
      %s565 = scalar_select %p564, %s22, 2
      %s566 = smul.addr %s565, 8
      %s567 = scalar_lea.vmem %s10, %s566
      %v569 = vld [vmem:[%s505] sm:$0xff]
      %v570 = vld [vmem:[%s505 + $0x8] sm:$0xff]
      %v571 = vld [vmem:[%s505 + $0x10] sm:$0xff]
      %v572 = vld [vmem:[%s505 + $0x18] sm:$0xff]
      %v573 = vld [vmem:[%s505 + $0x20] sm:$0xff]
      %v574 = vld [vmem:[%s505 + $0x28] sm:$0xff]
      %v575 = vld [vmem:[%s505 + $0x30] sm:$0xff]
      %v576 = vld [vmem:[%s505 + $0x38] sm:$0xff]
      %v577 = vld [vmem:[%s505 + $0x40] sm:$0xff]
      %v578 = vld [vmem:[%s505 + $0x48] sm:$0xff]
      %v579 = vld [vmem:[%s505 + $0x50] sm:$0xff]
      %v580 = vld [vmem:[%s505 + $0x58] sm:$0xff]
      %v581 = vld [vmem:[%s505 + $0x60] sm:$0xff]
      %v582 = vld [vmem:[%s505 + $0x68] sm:$0xff]
      %v583 = vld [vmem:[%s505 + $0x70] sm:$0xff]
      %v584 = vld [vmem:[%s505 + $0x78] sm:$0xff]
      %v585 = vld [vmem:[%s505 + $0x80] sm:$0xff]
      %v586 = vld [vmem:[%s505 + $0x88] sm:$0xff]
      %v587 = vld [vmem:[%s505 + $0x90] sm:$0xff]
      %v588 = vld [vmem:[%s505 + $0x98] sm:$0xff]
      %v589 = vld [vmem:[%s505 + $0xa0] sm:$0xff]
      %v590 = vld [vmem:[%s505 + $0xa8] sm:$0xff]
      %v591 = vld [vmem:[%s505 + $0xb0] sm:$0xff]
      %v592 = vld [vmem:[%s505 + $0xb8] sm:$0xff]
      %v593 = vld [vmem:[%s505 + $0xc0] sm:$0xff]
      %v594 = vld [vmem:[%s505 + $0xc8] sm:$0xff]
      %v595 = vld [vmem:[%s505 + $0xd0] sm:$0xff]
      %v596 = vld [vmem:[%s505 + $0xd8] sm:$0xff]
      %v597 = vld [vmem:[%s505 + $0xe0] sm:$0xff]
      %v598 = vld [vmem:[%s505 + $0xe8] sm:$0xff]
      %v599 = vld [vmem:[%s505 + $0xf0] sm:$0xff]
      %v600 = vld [vmem:[%s505 + $0xf8] sm:$0xff]
      %v601 = vld [vmem:[%s6] sm:$0x1]
      %v603 = vlaneseq
      %v604 = vshrl.u32 %v603, 7
      %v605 = vsub.s32 0, %v604
      %v606 = vrot.slane %v601, %v605
      %v608 = vmul.f32 %v569, %v606
      %v609 = vmul.f32 %v570, %v606
      %v610 = vmul.f32 %v571, %v606
      %v611 = vmul.f32 %v572, %v606
      %v612 = vmul.f32 %v573, %v606
      %v613 = vmul.f32 %v574, %v606
      %v614 = vmul.f32 %v575, %v606
      %v615 = vmul.f32 %v576, %v606
      %v616 = vmul.f32 %v577, %v606
      %v617 = vmul.f32 %v578, %v606
      %v618 = vmul.f32 %v579, %v606
      %v619 = vmul.f32 %v580, %v606
      %v620 = vmul.f32 %v581, %v606
      %v621 = vmul.f32 %v582, %v606
      %v622 = vmul.f32 %v583, %v606
      %v623 = vmul.f32 %v584, %v606
      %v624 = vmul.f32 %v585, %v606
      %v625 = vmul.f32 %v586, %v606
      %v626 = vmul.f32 %v587, %v606
      %v627 = vmul.f32 %v588, %v606
      %v628 = vmul.f32 %v589, %v606
      %v629 = vmul.f32 %v590, %v606
      %v630 = vmul.f32 %v591, %v606
      %v631 = vmul.f32 %v592, %v606
      %v632 = vmul.f32 %v593, %v606
      %v633 = vmul.f32 %v594, %v606
      %v634 = vmul.f32 %v595, %v606
      %v635 = vmul.f32 %v596, %v606
      %v636 = vmul.f32 %v597, %v606
      %v637 = vmul.f32 %v598, %v606
      %v638 = vmul.f32 %v599, %v606
      %v639 = vmul.f32 %v600, %v606
      %v640 = vld [vmem:[%s7] sm:$0x1]
      %v642 = vlaneseq
      %v643 = vshrl.u32 %v642, 7
      %v644 = vsub.s32 0, %v643
      %v645 = vrot.slane %v640, %v644
      %v647 = vadd.f32 %v608, %v645
      %v648 = vadd.f32 %v609, %v645
      %v649 = vadd.f32 %v610, %v645
      %v650 = vadd.f32 %v611, %v645
      %v651 = vadd.f32 %v612, %v645
      %v652 = vadd.f32 %v613, %v645
      %v653 = vadd.f32 %v614, %v645
      %v654 = vadd.f32 %v615, %v645
      %v655 = vadd.f32 %v616, %v645
      %v656 = vadd.f32 %v617, %v645
      %v657 = vadd.f32 %v618, %v645
      %v658 = vadd.f32 %v619, %v645
      %v659 = vadd.f32 %v620, %v645
      %v660 = vadd.f32 %v621, %v645
      %v661 = vadd.f32 %v622, %v645
      %v662 = vadd.f32 %v623, %v645
      %v663 = vadd.f32 %v624, %v645
      %v664 = vadd.f32 %v625, %v645
      %v665 = vadd.f32 %v626, %v645
      %v666 = vadd.f32 %v627, %v645
      %v667 = vadd.f32 %v628, %v645
      %v668 = vadd.f32 %v629, %v645
      %v669 = vadd.f32 %v630, %v645
      %v670 = vadd.f32 %v631, %v645
      %v671 = vadd.f32 %v632, %v645
      %v672 = vadd.f32 %v633, %v645
      %v673 = vadd.f32 %v634, %v645
      %v674 = vadd.f32 %v635, %v645
      %v675 = vadd.f32 %v636, %v645
      %v676 = vadd.f32 %v637, %v645
      %v677 = vadd.f32 %v638, %v645
      %v678 = vadd.f32 %v639, %v645
      %v679 = vmax.f32 %v647, 0.0
      %v680 = vmax.f32 %v648, 0.0
      %v681 = vmax.f32 %v649, 0.0
      %v682 = vmax.f32 %v650, 0.0
      %v683 = vmax.f32 %v651, 0.0
      %v684 = vmax.f32 %v652, 0.0
      %v685 = vmax.f32 %v653, 0.0
      %v686 = vmax.f32 %v654, 0.0
      %v687 = vmax.f32 %v655, 0.0
      %v688 = vmax.f32 %v656, 0.0
      %v689 = vmax.f32 %v657, 0.0
      %v690 = vmax.f32 %v658, 0.0
      %v691 = vmax.f32 %v659, 0.0
      %v692 = vmax.f32 %v660, 0.0
      %v693 = vmax.f32 %v661, 0.0
      %v694 = vmax.f32 %v662, 0.0
      %v695 = vmax.f32 %v663, 0.0
      %v696 = vmax.f32 %v664, 0.0
      %v697 = vmax.f32 %v665, 0.0
      %v698 = vmax.f32 %v666, 0.0
      %v699 = vmax.f32 %v667, 0.0
      %v700 = vmax.f32 %v668, 0.0
      %v701 = vmax.f32 %v669, 0.0
      %v702 = vmax.f32 %v670, 0.0
      %v703 = vmax.f32 %v671, 0.0
      %v704 = vmax.f32 %v672, 0.0
      %v705 = vmax.f32 %v673, 0.0
      %v706 = vmax.f32 %v674, 0.0
      %v707 = vmax.f32 %v675, 0.0
      %v708 = vmax.f32 %v676, 0.0
      %v709 = vmax.f32 %v677, 0.0
      %v710 = vmax.f32 %v678, 0.0
      %v711 = vld [vmem:[%s535] sm:$0xff]
      %v712 = vld [vmem:[%s535 + $0x8] sm:$0xff]
      %v713 = vld [vmem:[%s535 + $0x10] sm:$0xff]
      %v714 = vld [vmem:[%s535 + $0x18] sm:$0xff]
      %v715 = vld [vmem:[%s535 + $0x20] sm:$0xff]
      %v716 = vld [vmem:[%s535 + $0x28] sm:$0xff]
      %v717 = vld [vmem:[%s535 + $0x30] sm:$0xff]
      %v718 = vld [vmem:[%s535 + $0x38] sm:$0xff]
      %v719 = vld [vmem:[%s535 + $0x40] sm:$0xff]
      %v720 = vld [vmem:[%s535 + $0x48] sm:$0xff]
      %v721 = vld [vmem:[%s535 + $0x50] sm:$0xff]
      %v722 = vld [vmem:[%s535 + $0x58] sm:$0xff]
      %v723 = vld [vmem:[%s535 + $0x60] sm:$0xff]
      %v724 = vld [vmem:[%s535 + $0x68] sm:$0xff]
      %v725 = vld [vmem:[%s535 + $0x70] sm:$0xff]
      %v726 = vld [vmem:[%s535 + $0x78] sm:$0xff]
      %v727 = vld [vmem:[%s535 + $0x80] sm:$0xff]
      %v728 = vld [vmem:[%s535 + $0x88] sm:$0xff]
      %v729 = vld [vmem:[%s535 + $0x90] sm:$0xff]
      %v730 = vld [vmem:[%s535 + $0x98] sm:$0xff]
      %v731 = vld [vmem:[%s535 + $0xa0] sm:$0xff]
      %v732 = vld [vmem:[%s535 + $0xa8] sm:$0xff]
      %v733 = vld [vmem:[%s535 + $0xb0] sm:$0xff]
      %v734 = vld [vmem:[%s535 + $0xb8] sm:$0xff]
      %v735 = vld [vmem:[%s535 + $0xc0] sm:$0xff]
      %v736 = vld [vmem:[%s535 + $0xc8] sm:$0xff]
      %v737 = vld [vmem:[%s535 + $0xd0] sm:$0xff]
      %v738 = vld [vmem:[%s535 + $0xd8] sm:$0xff]
      %v739 = vld [vmem:[%s535 + $0xe0] sm:$0xff]
      %v740 = vld [vmem:[%s535 + $0xe8] sm:$0xff]
      %v741 = vld [vmem:[%s535 + $0xf0] sm:$0xff]
      %v742 = vld [vmem:[%s535 + $0xf8] sm:$0xff]
      %744 = vset.pattern.permute.xlu0 0
      %745 = vperm.xlu0 %744, %v711
      %v746 = vpop.permute.xlu0 %745
      %749 = vset.pattern.permute.xlu0 0
      %750 = vperm.xlu0 %749, %v712
      %v751 = vpop.permute.xlu0 %750
      %754 = vset.pattern.permute.xlu0 0
      %755 = vperm.xlu0 %754, %v713
      %v756 = vpop.permute.xlu0 %755
      %759 = vset.pattern.permute.xlu0 0
      %760 = vperm.xlu0 %759, %v714
      %v761 = vpop.permute.xlu0 %760
      %764 = vset.pattern.permute.xlu0 0
      %765 = vperm.xlu0 %764, %v715
      %v766 = vpop.permute.xlu0 %765
      %769 = vset.pattern.permute.xlu0 0
      %770 = vperm.xlu0 %769, %v716
      %v771 = vpop.permute.xlu0 %770
      %774 = vset.pattern.permute.xlu0 0
      %775 = vperm.xlu0 %774, %v717
      %v776 = vpop.permute.xlu0 %775
      %779 = vset.pattern.permute.xlu0 0
      %780 = vperm.xlu0 %779, %v718
      %v781 = vpop.permute.xlu0 %780
      %784 = vset.pattern.permute.xlu0 0
      %785 = vperm.xlu0 %784, %v719
      %v786 = vpop.permute.xlu0 %785
      %789 = vset.pattern.permute.xlu0 0
      %790 = vperm.xlu0 %789, %v720
      %v791 = vpop.permute.xlu0 %790
      %794 = vset.pattern.permute.xlu0 0
      %795 = vperm.xlu0 %794, %v721
      %v796 = vpop.permute.xlu0 %795
      %799 = vset.pattern.permute.xlu0 0
      %800 = vperm.xlu0 %799, %v722
      %v801 = vpop.permute.xlu0 %800
      %804 = vset.pattern.permute.xlu0 0
      %805 = vperm.xlu0 %804, %v723
      %v806 = vpop.permute.xlu0 %805
      %809 = vset.pattern.permute.xlu0 0
      %810 = vperm.xlu0 %809, %v724
      %v811 = vpop.permute.xlu0 %810
      %814 = vset.pattern.permute.xlu0 0
      %815 = vperm.xlu0 %814, %v725
      %v816 = vpop.permute.xlu0 %815
      %819 = vset.pattern.permute.xlu0 0
      %820 = vperm.xlu0 %819, %v726
      %v821 = vpop.permute.xlu0 %820
      %824 = vset.pattern.permute.xlu0 0
      %825 = vperm.xlu0 %824, %v727
      %v826 = vpop.permute.xlu0 %825
      %829 = vset.pattern.permute.xlu0 0
      %830 = vperm.xlu0 %829, %v728
      %v831 = vpop.permute.xlu0 %830
      %834 = vset.pattern.permute.xlu0 0
      %835 = vperm.xlu0 %834, %v729
      %v836 = vpop.permute.xlu0 %835
      %839 = vset.pattern.permute.xlu0 0
      %840 = vperm.xlu0 %839, %v730
      %v841 = vpop.permute.xlu0 %840
      %844 = vset.pattern.permute.xlu0 0
      %845 = vperm.xlu0 %844, %v731
      %v846 = vpop.permute.xlu0 %845
      %849 = vset.pattern.permute.xlu0 0
      %850 = vperm.xlu0 %849, %v732
      %v851 = vpop.permute.xlu0 %850
      %854 = vset.pattern.permute.xlu0 0
      %855 = vperm.xlu0 %854, %v733
      %v856 = vpop.permute.xlu0 %855
      %859 = vset.pattern.permute.xlu0 0
      %860 = vperm.xlu0 %859, %v734
      %v861 = vpop.permute.xlu0 %860
      %864 = vset.pattern.permute.xlu0 0
      %865 = vperm.xlu0 %864, %v735
      %v866 = vpop.permute.xlu0 %865
      %869 = vset.pattern.permute.xlu0 0
      %870 = vperm.xlu0 %869, %v736
      %v871 = vpop.permute.xlu0 %870
      %874 = vset.pattern.permute.xlu0 0
      %875 = vperm.xlu0 %874, %v737
      %v876 = vpop.permute.xlu0 %875
      %879 = vset.pattern.permute.xlu0 0
      %880 = vperm.xlu0 %879, %v738
      %v881 = vpop.permute.xlu0 %880
      %884 = vset.pattern.permute.xlu0 0
      %885 = vperm.xlu0 %884, %v739
      %v886 = vpop.permute.xlu0 %885
      %889 = vset.pattern.permute.xlu0 0
      %890 = vperm.xlu0 %889, %v740
      %v891 = vpop.permute.xlu0 %890
      %894 = vset.pattern.permute.xlu0 0
      %895 = vperm.xlu0 %894, %v741
      %v896 = vpop.permute.xlu0 %895
      %899 = vset.pattern.permute.xlu0 0
      %900 = vperm.xlu0 %899, %v742
      %v901 = vpop.permute.xlu0 %900
      %v903 = vmul.f32 %v679, %v746
      %v904 = vmul.f32 %v680, %v751
      %v905 = vmul.f32 %v681, %v756
      %v906 = vmul.f32 %v682, %v761
      %v907 = vmul.f32 %v683, %v766
      %v908 = vmul.f32 %v684, %v771
      %v909 = vmul.f32 %v685, %v776
      %v910 = vmul.f32 %v686, %v781
      %v911 = vmul.f32 %v687, %v786
      %v912 = vmul.f32 %v688, %v791
      %v913 = vmul.f32 %v689, %v796
      %v914 = vmul.f32 %v690, %v801
      %v915 = vmul.f32 %v691, %v806
      %v916 = vmul.f32 %v692, %v811
      %v917 = vmul.f32 %v693, %v816
      %v918 = vmul.f32 %v694, %v821
      %v919 = vmul.f32 %v695, %v826
      %v920 = vmul.f32 %v696, %v831
      %v921 = vmul.f32 %v697, %v836
      %v922 = vmul.f32 %v698, %v841
      %v923 = vmul.f32 %v699, %v846
      %v924 = vmul.f32 %v700, %v851
      %v925 = vmul.f32 %v701, %v856
      %v926 = vmul.f32 %v702, %v861
      %v927 = vmul.f32 %v703, %v866
      %v928 = vmul.f32 %v704, %v871
      %v929 = vmul.f32 %v705, %v876
      %v930 = vmul.f32 %v706, %v881
      %v931 = vmul.f32 %v707, %v886
      %v932 = vmul.f32 %v708, %v891
      %v933 = vmul.f32 %v709, %v896
      %v934 = vmul.f32 %v710, %v901
      %v935 = vpack.c.bf16 %v904, %v903
      %v936 = vpack.c.bf16 %v906, %v905
      %v937 = vpack.c.bf16 %v908, %v907
      %v938 = vpack.c.bf16 %v910, %v909
      %v939 = vpack.c.bf16 %v912, %v911
      %v940 = vpack.c.bf16 %v914, %v913
      %v941 = vpack.c.bf16 %v916, %v915
      %v942 = vpack.c.bf16 %v918, %v917
      %v943 = vpack.c.bf16 %v920, %v919
      %v944 = vpack.c.bf16 %v922, %v921
      %v945 = vpack.c.bf16 %v924, %v923
      %v946 = vpack.c.bf16 %v926, %v925
      %v947 = vpack.c.bf16 %v928, %v927
      %v948 = vpack.c.bf16 %v930, %v929
      %v949 = vpack.c.bf16 %v932, %v931
      %v950 = vpack.c.bf16 %v934, %v933
      %v967 = vunpack.c.l.b16 %v935
      %v968 = vunpack.c.h.b16 %v935
      %v969 = vunpack.c.l.b16 %v936
      %v970 = vunpack.c.h.b16 %v936
      %v971 = vunpack.c.l.b16 %v937
      %v972 = vunpack.c.h.b16 %v937
      %v973 = vunpack.c.l.b16 %v938
      %v974 = vunpack.c.h.b16 %v938
      %v975 = vunpack.c.l.b16 %v939
      %v976 = vunpack.c.h.b16 %v939
      %v977 = vunpack.c.l.b16 %v940
      %v978 = vunpack.c.h.b16 %v940
      %v979 = vunpack.c.l.b16 %v941
      %v980 = vunpack.c.h.b16 %v941
      %v981 = vunpack.c.l.b16 %v942
      %v982 = vunpack.c.h.b16 %v942
      %v983 = vunpack.c.l.b16 %v943
      %v984 = vunpack.c.h.b16 %v943
      %v985 = vunpack.c.l.b16 %v944
      %v986 = vunpack.c.h.b16 %v944
      %v987 = vunpack.c.l.b16 %v945
      %v988 = vunpack.c.h.b16 %v945
      %v989 = vunpack.c.l.b16 %v946
      %v990 = vunpack.c.h.b16 %v946
      %v991 = vunpack.c.l.b16 %v947
      %v992 = vunpack.c.h.b16 %v947
      %v993 = vunpack.c.l.b16 %v948
      %v994 = vunpack.c.h.b16 %v948
      %v995 = vunpack.c.l.b16 %v949
      %v996 = vunpack.c.h.b16 %v949
      %v997 = vunpack.c.l.b16 %v950
      %v998 = vunpack.c.h.b16 %v950
      %v999 = vpack.c.b16 %v967, %v967
      %v1000 = vpack.c.b16 %v968, %v968
      %v1001 = vpack.c.b16 %v969, %v969
      %v1002 = vpack.c.b16 %v970, %v970
      %v1003 = vpack.c.b16 %v971, %v971
      %v1004 = vpack.c.b16 %v972, %v972
      %v1005 = vpack.c.b16 %v973, %v973
      %v1006 = vpack.c.b16 %v974, %v974
      %v1007 = vpack.c.b16 %v975, %v975
      %v1008 = vpack.c.b16 %v976, %v976
      %v1009 = vpack.c.b16 %v977, %v977
      %v1010 = vpack.c.b16 %v978, %v978
      %v1011 = vpack.c.b16 %v979, %v979
      %v1012 = vpack.c.b16 %v980, %v980
      %v1013 = vpack.c.b16 %v981, %v981
      %v1014 = vpack.c.b16 %v982, %v982
      %v1015 = vpack.c.b16 %v983, %v983
      %v1016 = vpack.c.b16 %v984, %v984
      %v1017 = vpack.c.b16 %v985, %v985
      %v1018 = vpack.c.b16 %v986, %v986
      %v1019 = vpack.c.b16 %v987, %v987
      %v1020 = vpack.c.b16 %v988, %v988
      %v1021 = vpack.c.b16 %v989, %v989
      %v1022 = vpack.c.b16 %v990, %v990
      %v1023 = vpack.c.b16 %v991, %v991
      %v1024 = vpack.c.b16 %v992, %v992
      %v1025 = vpack.c.b16 %v993, %v993
      %v1026 = vpack.c.b16 %v994, %v994
      %v1027 = vpack.c.b16 %v995, %v995
      %v1028 = vpack.c.b16 %v996, %v996
      %v1029 = vpack.c.b16 %v997, %v997
      %v1030 = vpack.c.b16 %v998, %v998
      %vm1063 = vcmask 60416
      %1064 = vst.msk [vmem:[#allocation2] sm:$0xf] %vm1063, %v999
      %1065 = vst.msk [vmem:[#allocation2 + $0x4] sm:$0xf] %vm1063, %v1000
      %1066 = vst.msk [vmem:[#allocation2 + $0x8] sm:$0xf] %vm1063, %v1001
      %1067 = vst.msk [vmem:[#allocation2 + $0xc] sm:$0xf] %vm1063, %v1002
      %1068 = vst.msk [vmem:[#allocation2 + $0x10] sm:$0xf] %vm1063, %v1003
      %1069 = vst.msk [vmem:[#allocation2 + $0x14] sm:$0xf] %vm1063, %v1004
      %1070 = vst.msk [vmem:[#allocation2 + $0x18] sm:$0xf] %vm1063, %v1005
      %1071 = vst.msk [vmem:[#allocation2 + $0x1c] sm:$0xf] %vm1063, %v1006
      %1072 = vst.msk [vmem:[#allocation2 + $0x20] sm:$0xf] %vm1063, %v1007
      %1073 = vst.msk [vmem:[#allocation2 + $0x24] sm:$0xf] %vm1063, %v1008
      %1074 = vst.msk [vmem:[#allocation2 + $0x28] sm:$0xf] %vm1063, %v1009
      %1075 = vst.msk [vmem:[#allocation2 + $0x2c] sm:$0xf] %vm1063, %v1010
      %1076 = vst.msk [vmem:[#allocation2 + $0x30] sm:$0xf] %vm1063, %v1011
      %1077 = vst.msk [vmem:[#allocation2 + $0x34] sm:$0xf] %vm1063, %v1012
      %1078 = vst.msk [vmem:[#allocation2 + $0x38] sm:$0xf] %vm1063, %v1013
      %1079 = vst.msk [vmem:[#allocation2 + $0x3c] sm:$0xf] %vm1063, %v1014
      %1080 = vst.msk [vmem:[#allocation2 + $0x40] sm:$0xf] %vm1063, %v1015
      %1081 = vst.msk [vmem:[#allocation2 + $0x44] sm:$0xf] %vm1063, %v1016
      %1082 = vst.msk [vmem:[#allocation2 + $0x48] sm:$0xf] %vm1063, %v1017
      %1083 = vst.msk [vmem:[#allocation2 + $0x4c] sm:$0xf] %vm1063, %v1018
      %1084 = vst.msk [vmem:[#allocation2 + $0x50] sm:$0xf] %vm1063, %v1019
      %1085 = vst.msk [vmem:[#allocation2 + $0x54] sm:$0xf] %vm1063, %v1020
      %1086 = vst.msk [vmem:[#allocation2 + $0x58] sm:$0xf] %vm1063, %v1021
      %1087 = vst.msk [vmem:[#allocation2 + $0x5c] sm:$0xf] %vm1063, %v1022
      %1088 = vst.msk [vmem:[#allocation2 + $0x60] sm:$0xf] %vm1063, %v1023
      %1089 = vst.msk [vmem:[#allocation2 + $0x64] sm:$0xf] %vm1063, %v1024
      %1090 = vst.msk [vmem:[#allocation2 + $0x68] sm:$0xf] %vm1063, %v1025
      %1091 = vst.msk [vmem:[#allocation2 + $0x6c] sm:$0xf] %vm1063, %v1026
      %1092 = vst.msk [vmem:[#allocation2 + $0x70] sm:$0xf] %vm1063, %v1027
      %1093 = vst.msk [vmem:[#allocation2 + $0x74] sm:$0xf] %vm1063, %v1028
      %1094 = vst.msk [vmem:[#allocation2 + $0x78] sm:$0xf] %vm1063, %v1029
      %1095 = vst.msk [vmem:[#allocation2 + $0x7c] sm:$0xf] %vm1063, %v1030
      %v1096 = vld [vmem:[%s514] sm:$0xff]
      %v1097 = vld [vmem:[%s514 + $0x8] sm:$0xff]
      %v1098 = vld [vmem:[%s514 + $0x10] sm:$0xff]
      %v1099 = vld [vmem:[%s514 + $0x18] sm:$0xff]
      %v1100 = vld [vmem:[%s514 + $0x20] sm:$0xff]
      %v1101 = vld [vmem:[%s514 + $0x28] sm:$0xff]
      %v1102 = vld [vmem:[%s514 + $0x30] sm:$0xff]
      %v1103 = vld [vmem:[%s514 + $0x38] sm:$0xff]
      %v1104 = vld [vmem:[%s514 + $0x40] sm:$0xff]
      %v1105 = vld [vmem:[%s514 + $0x48] sm:$0xff]
      %v1106 = vld [vmem:[%s514 + $0x50] sm:$0xff]
      %v1107 = vld [vmem:[%s514 + $0x58] sm:$0xff]
      %v1108 = vld [vmem:[%s514 + $0x60] sm:$0xff]
      %v1109 = vld [vmem:[%s514 + $0x68] sm:$0xff]
      %v1110 = vld [vmem:[%s514 + $0x70] sm:$0xff]
      %v1111 = vld [vmem:[%s514 + $0x78] sm:$0xff]
      %v1112 = vld [vmem:[%s514 + $0x80] sm:$0xff]
      %v1113 = vld [vmem:[%s514 + $0x88] sm:$0xff]
      %v1114 = vld [vmem:[%s514 + $0x90] sm:$0xff]
      %v1115 = vld [vmem:[%s514 + $0x98] sm:$0xff]
      %v1116 = vld [vmem:[%s514 + $0xa0] sm:$0xff]
      %v1117 = vld [vmem:[%s514 + $0xa8] sm:$0xff]
      %v1118 = vld [vmem:[%s514 + $0xb0] sm:$0xff]
      %v1119 = vld [vmem:[%s514 + $0xb8] sm:$0xff]
      %v1120 = vld [vmem:[%s514 + $0xc0] sm:$0xff]
      %v1121 = vld [vmem:[%s514 + $0xc8] sm:$0xff]
      %v1122 = vld [vmem:[%s514 + $0xd0] sm:$0xff]
      %v1123 = vld [vmem:[%s514 + $0xd8] sm:$0xff]
      %v1124 = vld [vmem:[%s514 + $0xe0] sm:$0xff]
      %v1125 = vld [vmem:[%s514 + $0xe8] sm:$0xff]
      %v1126 = vld [vmem:[%s514 + $0xf0] sm:$0xff]
      %v1127 = vld [vmem:[%s514 + $0xf8] sm:$0xff]
      %v1128 = vld [vmem:[%s6] sm:$0x1]
      %v1130 = vlaneseq
      %v1131 = vshrl.u32 %v1130, 7
      %v1132 = vsub.s32 0, %v1131
      %v1133 = vrot.slane %v1128, %v1132
      %v1135 = vmul.f32 %v1096, %v1133
      %v1136 = vmul.f32 %v1097, %v1133
      %v1137 = vmul.f32 %v1098, %v1133
      %v1138 = vmul.f32 %v1099, %v1133
      %v1139 = vmul.f32 %v1100, %v1133
      %v1140 = vmul.f32 %v1101, %v1133
      %v1141 = vmul.f32 %v1102, %v1133
      %v1142 = vmul.f32 %v1103, %v1133
      %v1143 = vmul.f32 %v1104, %v1133
      %v1144 = vmul.f32 %v1105, %v1133
      %v1145 = vmul.f32 %v1106, %v1133
      %v1146 = vmul.f32 %v1107, %v1133
      %v1147 = vmul.f32 %v1108, %v1133
      %v1148 = vmul.f32 %v1109, %v1133
      %v1149 = vmul.f32 %v1110, %v1133
      %v1150 = vmul.f32 %v1111, %v1133
      %v1151 = vmul.f32 %v1112, %v1133
      %v1152 = vmul.f32 %v1113, %v1133
      %v1153 = vmul.f32 %v1114, %v1133
      %v1154 = vmul.f32 %v1115, %v1133
      %v1155 = vmul.f32 %v1116, %v1133
      %v1156 = vmul.f32 %v1117, %v1133
      %v1157 = vmul.f32 %v1118, %v1133
      %v1158 = vmul.f32 %v1119, %v1133
      %v1159 = vmul.f32 %v1120, %v1133
      %v1160 = vmul.f32 %v1121, %v1133
      %v1161 = vmul.f32 %v1122, %v1133
      %v1162 = vmul.f32 %v1123, %v1133
      %v1163 = vmul.f32 %v1124, %v1133
      %v1164 = vmul.f32 %v1125, %v1133
      %v1165 = vmul.f32 %v1126, %v1133
      %v1166 = vmul.f32 %v1127, %v1133
      %v1167 = vld [vmem:[%s7] sm:$0x1]
      %v1169 = vlaneseq
      %v1170 = vshrl.u32 %v1169, 7
      %v1171 = vsub.s32 0, %v1170
      %v1172 = vrot.slane %v1167, %v1171
      %v1174 = vadd.f32 %v1135, %v1172
      %v1175 = vadd.f32 %v1136, %v1172
      %v1176 = vadd.f32 %v1137, %v1172
      %v1177 = vadd.f32 %v1138, %v1172
      %v1178 = vadd.f32 %v1139, %v1172
      %v1179 = vadd.f32 %v1140, %v1172
      %v1180 = vadd.f32 %v1141, %v1172
      %v1181 = vadd.f32 %v1142, %v1172
      %v1182 = vadd.f32 %v1143, %v1172
      %v1183 = vadd.f32 %v1144, %v1172
      %v1184 = vadd.f32 %v1145, %v1172
      %v1185 = vadd.f32 %v1146, %v1172
      %v1186 = vadd.f32 %v1147, %v1172
      %v1187 = vadd.f32 %v1148, %v1172
      %v1188 = vadd.f32 %v1149, %v1172
      %v1189 = vadd.f32 %v1150, %v1172
      %v1190 = vadd.f32 %v1151, %v1172
      %v1191 = vadd.f32 %v1152, %v1172
      %v1192 = vadd.f32 %v1153, %v1172
      %v1193 = vadd.f32 %v1154, %v1172
      %v1194 = vadd.f32 %v1155, %v1172
      %v1195 = vadd.f32 %v1156, %v1172
      %v1196 = vadd.f32 %v1157, %v1172
      %v1197 = vadd.f32 %v1158, %v1172
      %v1198 = vadd.f32 %v1159, %v1172
      %v1199 = vadd.f32 %v1160, %v1172
      %v1200 = vadd.f32 %v1161, %v1172
      %v1201 = vadd.f32 %v1162, %v1172
      %v1202 = vadd.f32 %v1163, %v1172
      %v1203 = vadd.f32 %v1164, %v1172
      %v1204 = vadd.f32 %v1165, %v1172
      %v1205 = vadd.f32 %v1166, %v1172
      %v1206 = vmax.f32 %v1174, 0.0
      %v1207 = vmax.f32 %v1175, 0.0
      %v1208 = vmax.f32 %v1176, 0.0
      %v1209 = vmax.f32 %v1177, 0.0
      %v1210 = vmax.f32 %v1178, 0.0
      %v1211 = vmax.f32 %v1179, 0.0
      %v1212 = vmax.f32 %v1180, 0.0
      %v1213 = vmax.f32 %v1181, 0.0
      %v1214 = vmax.f32 %v1182, 0.0
      %v1215 = vmax.f32 %v1183, 0.0
      %v1216 = vmax.f32 %v1184, 0.0
      %v1217 = vmax.f32 %v1185, 0.0
      %v1218 = vmax.f32 %v1186, 0.0
      %v1219 = vmax.f32 %v1187, 0.0
      %v1220 = vmax.f32 %v1188, 0.0
      %v1221 = vmax.f32 %v1189, 0.0
      %v1222 = vmax.f32 %v1190, 0.0
      %v1223 = vmax.f32 %v1191, 0.0
      %v1224 = vmax.f32 %v1192, 0.0
      %v1225 = vmax.f32 %v1193, 0.0
      %v1226 = vmax.f32 %v1194, 0.0
      %v1227 = vmax.f32 %v1195, 0.0
      %v1228 = vmax.f32 %v1196, 0.0
      %v1229 = vmax.f32 %v1197, 0.0
      %v1230 = vmax.f32 %v1198, 0.0
      %v1231 = vmax.f32 %v1199, 0.0
      %v1232 = vmax.f32 %v1200, 0.0
      %v1233 = vmax.f32 %v1201, 0.0
      %v1234 = vmax.f32 %v1202, 0.0
      %v1235 = vmax.f32 %v1203, 0.0
      %v1236 = vmax.f32 %v1204, 0.0
      %v1237 = vmax.f32 %v1205, 0.0
      %v1238 = vld [vmem:[%s544] sm:$0xff]
      %v1239 = vld [vmem:[%s544 + $0x8] sm:$0xff]
      %v1240 = vld [vmem:[%s544 + $0x10] sm:$0xff]
      %v1241 = vld [vmem:[%s544 + $0x18] sm:$0xff]
      %v1242 = vld [vmem:[%s544 + $0x20] sm:$0xff]
      %v1243 = vld [vmem:[%s544 + $0x28] sm:$0xff]
      %v1244 = vld [vmem:[%s544 + $0x30] sm:$0xff]
      %v1245 = vld [vmem:[%s544 + $0x38] sm:$0xff]
      %v1246 = vld [vmem:[%s544 + $0x40] sm:$0xff]
      %v1247 = vld [vmem:[%s544 + $0x48] sm:$0xff]
      %v1248 = vld [vmem:[%s544 + $0x50] sm:$0xff]
      %v1249 = vld [vmem:[%s544 + $0x58] sm:$0xff]
      %v1250 = vld [vmem:[%s544 + $0x60] sm:$0xff]
      %v1251 = vld [vmem:[%s544 + $0x68] sm:$0xff]
      %v1252 = vld [vmem:[%s544 + $0x70] sm:$0xff]
      %v1253 = vld [vmem:[%s544 + $0x78] sm:$0xff]
      %v1254 = vld [vmem:[%s544 + $0x80] sm:$0xff]
      %v1255 = vld [vmem:[%s544 + $0x88] sm:$0xff]
      %v1256 = vld [vmem:[%s544 + $0x90] sm:$0xff]
      %v1257 = vld [vmem:[%s544 + $0x98] sm:$0xff]
      %v1258 = vld [vmem:[%s544 + $0xa0] sm:$0xff]
      %v1259 = vld [vmem:[%s544 + $0xa8] sm:$0xff]
      %v1260 = vld [vmem:[%s544 + $0xb0] sm:$0xff]
      %v1261 = vld [vmem:[%s544 + $0xb8] sm:$0xff]
      %v1262 = vld [vmem:[%s544 + $0xc0] sm:$0xff]
      %v1263 = vld [vmem:[%s544 + $0xc8] sm:$0xff]
      %v1264 = vld [vmem:[%s544 + $0xd0] sm:$0xff]
      %v1265 = vld [vmem:[%s544 + $0xd8] sm:$0xff]
      %v1266 = vld [vmem:[%s544 + $0xe0] sm:$0xff]
      %v1267 = vld [vmem:[%s544 + $0xe8] sm:$0xff]
      %v1268 = vld [vmem:[%s544 + $0xf0] sm:$0xff]
      %v1269 = vld [vmem:[%s544 + $0xf8] sm:$0xff]
      %1271 = vset.pattern.permute.xlu0 0
      %1272 = vperm.xlu0 %1271, %v1238
      %v1273 = vpop.permute.xlu0 %1272
      %1276 = vset.pattern.permute.xlu0 0
      %1277 = vperm.xlu0 %1276, %v1239
      %v1278 = vpop.permute.xlu0 %1277
      %1281 = vset.pattern.permute.xlu0 0
      %1282 = vperm.xlu0 %1281, %v1240
      %v1283 = vpop.permute.xlu0 %1282
      %1286 = vset.pattern.permute.xlu0 0
      %1287 = vperm.xlu0 %1286, %v1241
      %v1288 = vpop.permute.xlu0 %1287
      %1291 = vset.pattern.permute.xlu0 0
      %1292 = vperm.xlu0 %1291, %v1242
      %v1293 = vpop.permute.xlu0 %1292
      %1296 = vset.pattern.permute.xlu0 0
      %1297 = vperm.xlu0 %1296, %v1243
      %v1298 = vpop.permute.xlu0 %1297
      %1301 = vset.pattern.permute.xlu0 0
      %1302 = vperm.xlu0 %1301, %v1244
      %v1303 = vpop.permute.xlu0 %1302
      %1306 = vset.pattern.permute.xlu0 0
      %1307 = vperm.xlu0 %1306, %v1245
      %v1308 = vpop.permute.xlu0 %1307
      %1311 = vset.pattern.permute.xlu0 0
      %1312 = vperm.xlu0 %1311, %v1246
      %v1313 = vpop.permute.xlu0 %1312
      %1316 = vset.pattern.permute.xlu0 0
      %1317 = vperm.xlu0 %1316, %v1247
      %v1318 = vpop.permute.xlu0 %1317
      %1321 = vset.pattern.permute.xlu0 0
      %1322 = vperm.xlu0 %1321, %v1248
      %v1323 = vpop.permute.xlu0 %1322
      %1326 = vset.pattern.permute.xlu0 0
      %1327 = vperm.xlu0 %1326, %v1249
      %v1328 = vpop.permute.xlu0 %1327
      %1331 = vset.pattern.permute.xlu0 0
      %1332 = vperm.xlu0 %1331, %v1250
      %v1333 = vpop.permute.xlu0 %1332
      %1336 = vset.pattern.permute.xlu0 0
      %1337 = vperm.xlu0 %1336, %v1251
      %v1338 = vpop.permute.xlu0 %1337
      %1341 = vset.pattern.permute.xlu0 0
      %1342 = vperm.xlu0 %1341, %v1252
      %v1343 = vpop.permute.xlu0 %1342
      %1346 = vset.pattern.permute.xlu0 0
      %1347 = vperm.xlu0 %1346, %v1253
      %v1348 = vpop.permute.xlu0 %1347
      %1351 = vset.pattern.permute.xlu0 0
      %1352 = vperm.xlu0 %1351, %v1254
      %v1353 = vpop.permute.xlu0 %1352
      %1356 = vset.pattern.permute.xlu0 0
      %1357 = vperm.xlu0 %1356, %v1255
      %v1358 = vpop.permute.xlu0 %1357
      %1361 = vset.pattern.permute.xlu0 0
      %1362 = vperm.xlu0 %1361, %v1256
      %v1363 = vpop.permute.xlu0 %1362
      %1366 = vset.pattern.permute.xlu0 0
      %1367 = vperm.xlu0 %1366, %v1257
      %v1368 = vpop.permute.xlu0 %1367
      %1371 = vset.pattern.permute.xlu0 0
      %1372 = vperm.xlu0 %1371, %v1258
      %v1373 = vpop.permute.xlu0 %1372
      %1376 = vset.pattern.permute.xlu0 0
      %1377 = vperm.xlu0 %1376, %v1259
      %v1378 = vpop.permute.xlu0 %1377
      %1381 = vset.pattern.permute.xlu0 0
      %1382 = vperm.xlu0 %1381, %v1260
      %v1383 = vpop.permute.xlu0 %1382
      %1386 = vset.pattern.permute.xlu0 0
      %1387 = vperm.xlu0 %1386, %v1261
      %v1388 = vpop.permute.xlu0 %1387
      %1391 = vset.pattern.permute.xlu0 0
      %1392 = vperm.xlu0 %1391, %v1262
      %v1393 = vpop.permute.xlu0 %1392
      %1396 = vset.pattern.permute.xlu0 0
      %1397 = vperm.xlu0 %1396, %v1263
      %v1398 = vpop.permute.xlu0 %1397
      %1401 = vset.pattern.permute.xlu0 0
      %1402 = vperm.xlu0 %1401, %v1264
      %v1403 = vpop.permute.xlu0 %1402
      %1406 = vset.pattern.permute.xlu0 0
      %1407 = vperm.xlu0 %1406, %v1265
      %v1408 = vpop.permute.xlu0 %1407
      %1411 = vset.pattern.permute.xlu0 0
      %1412 = vperm.xlu0 %1411, %v1266
      %v1413 = vpop.permute.xlu0 %1412
      %1416 = vset.pattern.permute.xlu0 0
      %1417 = vperm.xlu0 %1416, %v1267
      %v1418 = vpop.permute.xlu0 %1417
      %1421 = vset.pattern.permute.xlu0 0
      %1422 = vperm.xlu0 %1421, %v1268
      %v1423 = vpop.permute.xlu0 %1422
      %1426 = vset.pattern.permute.xlu0 0
      %1427 = vperm.xlu0 %1426, %v1269
      %v1428 = vpop.permute.xlu0 %1427
      %v1430 = vmul.f32 %v1206, %v1273
      %v1431 = vmul.f32 %v1207, %v1278
      %v1432 = vmul.f32 %v1208, %v1283
      %v1433 = vmul.f32 %v1209, %v1288
      %v1434 = vmul.f32 %v1210, %v1293
      %v1435 = vmul.f32 %v1211, %v1298
      %v1436 = vmul.f32 %v1212, %v1303
      %v1437 = vmul.f32 %v1213, %v1308
      %v1438 = vmul.f32 %v1214, %v1313
      %v1439 = vmul.f32 %v1215, %v1318
      %v1440 = vmul.f32 %v1216, %v1323
      %v1441 = vmul.f32 %v1217, %v1328
      %v1442 = vmul.f32 %v1218, %v1333
      %v1443 = vmul.f32 %v1219, %v1338
      %v1444 = vmul.f32 %v1220, %v1343
      %v1445 = vmul.f32 %v1221, %v1348
      %v1446 = vmul.f32 %v1222, %v1353
      %v1447 = vmul.f32 %v1223, %v1358
      %v1448 = vmul.f32 %v1224, %v1363
      %v1449 = vmul.f32 %v1225, %v1368
      %v1450 = vmul.f32 %v1226, %v1373
      %v1451 = vmul.f32 %v1227, %v1378
      %v1452 = vmul.f32 %v1228, %v1383
      %v1453 = vmul.f32 %v1229, %v1388
      %v1454 = vmul.f32 %v1230, %v1393
      %v1455 = vmul.f32 %v1231, %v1398
      %v1456 = vmul.f32 %v1232, %v1403
      %v1457 = vmul.f32 %v1233, %v1408
      %v1458 = vmul.f32 %v1234, %v1413
      %v1459 = vmul.f32 %v1235, %v1418
      %v1460 = vmul.f32 %v1236, %v1423
      %v1461 = vmul.f32 %v1237, %v1428
      %v1462 = vpack.c.bf16 %v1431, %v1430
      %v1463 = vpack.c.bf16 %v1433, %v1432
      %v1464 = vpack.c.bf16 %v1435, %v1434
      %v1465 = vpack.c.bf16 %v1437, %v1436
      %v1466 = vpack.c.bf16 %v1439, %v1438
      %v1467 = vpack.c.bf16 %v1441, %v1440
      %v1468 = vpack.c.bf16 %v1443, %v1442
      %v1469 = vpack.c.bf16 %v1445, %v1444
      %v1470 = vpack.c.bf16 %v1447, %v1446
      %v1471 = vpack.c.bf16 %v1449, %v1448
      %v1472 = vpack.c.bf16 %v1451, %v1450
      %v1473 = vpack.c.bf16 %v1453, %v1452
      %v1474 = vpack.c.bf16 %v1455, %v1454
      %v1475 = vpack.c.bf16 %v1457, %v1456
      %v1476 = vpack.c.bf16 %v1459, %v1458
      %v1477 = vpack.c.bf16 %v1461, %v1460
      %v1494 = vunpack.c.l.b16 %v1462
      %v1495 = vunpack.c.h.b16 %v1462
      %v1496 = vunpack.c.l.b16 %v1463
      %v1497 = vunpack.c.h.b16 %v1463
      %v1498 = vunpack.c.l.b16 %v1464
      %v1499 = vunpack.c.h.b16 %v1464
      %v1500 = vunpack.c.l.b16 %v1465
      %v1501 = vunpack.c.h.b16 %v1465
      %v1502 = vunpack.c.l.b16 %v1466
      %v1503 = vunpack.c.h.b16 %v1466
      %v1504 = vunpack.c.l.b16 %v1467
      %v1505 = vunpack.c.h.b16 %v1467
      %v1506 = vunpack.c.l.b16 %v1468
      %v1507 = vunpack.c.h.b16 %v1468
      %v1508 = vunpack.c.l.b16 %v1469
      %v1509 = vunpack.c.h.b16 %v1469
      %v1510 = vunpack.c.l.b16 %v1470
      %v1511 = vunpack.c.h.b16 %v1470
      %v1512 = vunpack.c.l.b16 %v1471
      %v1513 = vunpack.c.h.b16 %v1471
      %v1514 = vunpack.c.l.b16 %v1472
      %v1515 = vunpack.c.h.b16 %v1472
      %v1516 = vunpack.c.l.b16 %v1473
      %v1517 = vunpack.c.h.b16 %v1473
      %v1518 = vunpack.c.l.b16 %v1474
      %v1519 = vunpack.c.h.b16 %v1474
      %v1520 = vunpack.c.l.b16 %v1475
      %v1521 = vunpack.c.h.b16 %v1475
      %v1522 = vunpack.c.l.b16 %v1476
      %v1523 = vunpack.c.h.b16 %v1476
      %v1524 = vunpack.c.l.b16 %v1477
      %v1525 = vunpack.c.h.b16 %v1477
      %v1526 = vpack.c.b16 %v1494, %v1494
      %v1527 = vpack.c.b16 %v1495, %v1495
      %v1528 = vpack.c.b16 %v1496, %v1496
      %v1529 = vpack.c.b16 %v1497, %v1497
      %v1530 = vpack.c.b16 %v1498, %v1498
      %v1531 = vpack.c.b16 %v1499, %v1499
      %v1532 = vpack.c.b16 %v1500, %v1500
      %v1533 = vpack.c.b16 %v1501, %v1501
      %v1534 = vpack.c.b16 %v1502, %v1502
      %v1535 = vpack.c.b16 %v1503, %v1503
      %v1536 = vpack.c.b16 %v1504, %v1504
      %v1537 = vpack.c.b16 %v1505, %v1505
      %v1538 = vpack.c.b16 %v1506, %v1506
      %v1539 = vpack.c.b16 %v1507, %v1507
      %v1540 = vpack.c.b16 %v1508, %v1508
      %v1541 = vpack.c.b16 %v1509, %v1509
      %v1542 = vpack.c.b16 %v1510, %v1510
      %v1543 = vpack.c.b16 %v1511, %v1511
      %v1544 = vpack.c.b16 %v1512, %v1512
      %v1545 = vpack.c.b16 %v1513, %v1513
      %v1546 = vpack.c.b16 %v1514, %v1514
      %v1547 = vpack.c.b16 %v1515, %v1515
      %v1548 = vpack.c.b16 %v1516, %v1516
      %v1549 = vpack.c.b16 %v1517, %v1517
      %v1550 = vpack.c.b16 %v1518, %v1518
      %v1551 = vpack.c.b16 %v1519, %v1519
      %v1552 = vpack.c.b16 %v1520, %v1520
      %v1553 = vpack.c.b16 %v1521, %v1521
      %v1554 = vpack.c.b16 %v1522, %v1522
      %v1555 = vpack.c.b16 %v1523, %v1523
      %v1556 = vpack.c.b16 %v1524, %v1524
      %v1557 = vpack.c.b16 %v1525, %v1525
      %1590 = vst.msk [vmem:[#allocation2 + $0x80] sm:$0xf] %vm1063, %v1526
      %1591 = vst.msk [vmem:[#allocation2 + $0x84] sm:$0xf] %vm1063, %v1527
      %1592 = vst.msk [vmem:[#allocation2 + $0x88] sm:$0xf] %vm1063, %v1528
      %1593 = vst.msk [vmem:[#allocation2 + $0x8c] sm:$0xf] %vm1063, %v1529
      %1594 = vst.msk [vmem:[#allocation2 + $0x90] sm:$0xf] %vm1063, %v1530
      %1595 = vst.msk [vmem:[#allocation2 + $0x94] sm:$0xf] %vm1063, %v1531
      %1596 = vst.msk [vmem:[#allocation2 + $0x98] sm:$0xf] %vm1063, %v1532
      %1597 = vst.msk [vmem:[#allocation2 + $0x9c] sm:$0xf] %vm1063, %v1533
      %1598 = vst.msk [vmem:[#allocation2 + $0xa0] sm:$0xf] %vm1063, %v1534
      %1599 = vst.msk [vmem:[#allocation2 + $0xa4] sm:$0xf] %vm1063, %v1535
      %1600 = vst.msk [vmem:[#allocation2 + $0xa8] sm:$0xf] %vm1063, %v1536
      %1601 = vst.msk [vmem:[#allocation2 + $0xac] sm:$0xf] %vm1063, %v1537
      %1602 = vst.msk [vmem:[#allocation2 + $0xb0] sm:$0xf] %vm1063, %v1538
      %1603 = vst.msk [vmem:[#allocation2 + $0xb4] sm:$0xf] %vm1063, %v1539
      %1604 = vst.msk [vmem:[#allocation2 + $0xb8] sm:$0xf] %vm1063, %v1540
      %1605 = vst.msk [vmem:[#allocation2 + $0xbc] sm:$0xf] %vm1063, %v1541
      %1606 = vst.msk [vmem:[#allocation2 + $0xc0] sm:$0xf] %vm1063, %v1542
      %1607 = vst.msk [vmem:[#allocation2 + $0xc4] sm:$0xf] %vm1063, %v1543
      %1608 = vst.msk [vmem:[#allocation2 + $0xc8] sm:$0xf] %vm1063, %v1544
      %1609 = vst.msk [vmem:[#allocation2 + $0xcc] sm:$0xf] %vm1063, %v1545
      %1610 = vst.msk [vmem:[#allocation2 + $0xd0] sm:$0xf] %vm1063, %v1546
      %1611 = vst.msk [vmem:[#allocation2 + $0xd4] sm:$0xf] %vm1063, %v1547
      %1612 = vst.msk [vmem:[#allocation2 + $0xd8] sm:$0xf] %vm1063, %v1548
      %1613 = vst.msk [vmem:[#allocation2 + $0xdc] sm:$0xf] %vm1063, %v1549
      %1614 = vst.msk [vmem:[#allocation2 + $0xe0] sm:$0xf] %vm1063, %v1550
      %1615 = vst.msk [vmem:[#allocation2 + $0xe4] sm:$0xf] %vm1063, %v1551
      %1616 = vst.msk [vmem:[#allocation2 + $0xe8] sm:$0xf] %vm1063, %v1552
      %1617 = vst.msk [vmem:[#allocation2 + $0xec] sm:$0xf] %vm1063, %v1553
      %1618 = vst.msk [vmem:[#allocation2 + $0xf0] sm:$0xf] %vm1063, %v1554
      %1619 = vst.msk [vmem:[#allocation2 + $0xf4] sm:$0xf] %vm1063, %v1555
      %1620 = vst.msk [vmem:[#allocation2 + $0xf8] sm:$0xf] %vm1063, %v1556
      %1621 = vst.msk [vmem:[#allocation2 + $0xfc] sm:$0xf] %vm1063, %v1557
      %v1622 = vld [vmem:[%s523] sm:$0xff]
      %v1623 = vld [vmem:[%s523 + $0x8] sm:$0xff]
      %v1624 = vld [vmem:[%s523 + $0x10] sm:$0xff]
      %v1625 = vld [vmem:[%s523 + $0x18] sm:$0xff]
      %v1626 = vld [vmem:[%s523 + $0x20] sm:$0xff]
      %v1627 = vld [vmem:[%s523 + $0x28] sm:$0xff]
      %v1628 = vld [vmem:[%s523 + $0x30] sm:$0xff]
      %v1629 = vld [vmem:[%s523 + $0x38] sm:$0xff]
      %v1630 = vld [vmem:[%s523 + $0x40] sm:$0xff]
      %v1631 = vld [vmem:[%s523 + $0x48] sm:$0xff]
      %v1632 = vld [vmem:[%s523 + $0x50] sm:$0xff]
      %v1633 = vld [vmem:[%s523 + $0x58] sm:$0xff]
      %v1634 = vld [vmem:[%s523 + $0x60] sm:$0xff]
      %v1635 = vld [vmem:[%s523 + $0x68] sm:$0xff]
      %v1636 = vld [vmem:[%s523 + $0x70] sm:$0xff]
      %v1637 = vld [vmem:[%s523 + $0x78] sm:$0xff]
      %v1638 = vld [vmem:[%s523 + $0x80] sm:$0xff]
      %v1639 = vld [vmem:[%s523 + $0x88] sm:$0xff]
      %v1640 = vld [vmem:[%s523 + $0x90] sm:$0xff]
      %v1641 = vld [vmem:[%s523 + $0x98] sm:$0xff]
      %v1642 = vld [vmem:[%s523 + $0xa0] sm:$0xff]
      %v1643 = vld [vmem:[%s523 + $0xa8] sm:$0xff]
      %v1644 = vld [vmem:[%s523 + $0xb0] sm:$0xff]
      %v1645 = vld [vmem:[%s523 + $0xb8] sm:$0xff]
      %v1646 = vld [vmem:[%s523 + $0xc0] sm:$0xff]
      %v1647 = vld [vmem:[%s523 + $0xc8] sm:$0xff]
      %v1648 = vld [vmem:[%s523 + $0xd0] sm:$0xff]
      %v1649 = vld [vmem:[%s523 + $0xd8] sm:$0xff]
      %v1650 = vld [vmem:[%s523 + $0xe0] sm:$0xff]
      %v1651 = vld [vmem:[%s523 + $0xe8] sm:$0xff]
      %v1652 = vld [vmem:[%s523 + $0xf0] sm:$0xff]
      %v1653 = vld [vmem:[%s523 + $0xf8] sm:$0xff]
      %v1654 = vld [vmem:[%s6] sm:$0x1]
      %v1656 = vlaneseq
      %v1657 = vshrl.u32 %v1656, 7
      %v1658 = vsub.s32 0, %v1657
      %v1659 = vrot.slane %v1654, %v1658
      %v1661 = vmul.f32 %v1622, %v1659
      %v1662 = vmul.f32 %v1623, %v1659
      %v1663 = vmul.f32 %v1624, %v1659
      %v1664 = vmul.f32 %v1625, %v1659
      %v1665 = vmul.f32 %v1626, %v1659
      %v1666 = vmul.f32 %v1627, %v1659
      %v1667 = vmul.f32 %v1628, %v1659
      %v1668 = vmul.f32 %v1629, %v1659
      %v1669 = vmul.f32 %v1630, %v1659
      %v1670 = vmul.f32 %v1631, %v1659
      %v1671 = vmul.f32 %v1632, %v1659
      %v1672 = vmul.f32 %v1633, %v1659
      %v1673 = vmul.f32 %v1634, %v1659
      %v1674 = vmul.f32 %v1635, %v1659
      %v1675 = vmul.f32 %v1636, %v1659
      %v1676 = vmul.f32 %v1637, %v1659
      %v1677 = vmul.f32 %v1638, %v1659
      %v1678 = vmul.f32 %v1639, %v1659
      %v1679 = vmul.f32 %v1640, %v1659
      %v1680 = vmul.f32 %v1641, %v1659
      %v1681 = vmul.f32 %v1642, %v1659
      %v1682 = vmul.f32 %v1643, %v1659
      %v1683 = vmul.f32 %v1644, %v1659
      %v1684 = vmul.f32 %v1645, %v1659
      %v1685 = vmul.f32 %v1646, %v1659
      %v1686 = vmul.f32 %v1647, %v1659
      %v1687 = vmul.f32 %v1648, %v1659
      %v1688 = vmul.f32 %v1649, %v1659
      %v1689 = vmul.f32 %v1650, %v1659
      %v1690 = vmul.f32 %v1651, %v1659
      %v1691 = vmul.f32 %v1652, %v1659
      %v1692 = vmul.f32 %v1653, %v1659
      %v1693 = vld [vmem:[%s7] sm:$0x1]
      %v1695 = vlaneseq
      %v1696 = vshrl.u32 %v1695, 7
      %v1697 = vsub.s32 0, %v1696
      %v1698 = vrot.slane %v1693, %v1697
      %v1700 = vadd.f32 %v1661, %v1698
      %v1701 = vadd.f32 %v1662, %v1698
      %v1702 = vadd.f32 %v1663, %v1698
      %v1703 = vadd.f32 %v1664, %v1698
      %v1704 = vadd.f32 %v1665, %v1698
      %v1705 = vadd.f32 %v1666, %v1698
      %v1706 = vadd.f32 %v1667, %v1698
      %v1707 = vadd.f32 %v1668, %v1698
      %v1708 = vadd.f32 %v1669, %v1698
      %v1709 = vadd.f32 %v1670, %v1698
      %v1710 = vadd.f32 %v1671, %v1698
      %v1711 = vadd.f32 %v1672, %v1698
      %v1712 = vadd.f32 %v1673, %v1698
      %v1713 = vadd.f32 %v1674, %v1698
      %v1714 = vadd.f32 %v1675, %v1698
      %v1715 = vadd.f32 %v1676, %v1698
      %v1716 = vadd.f32 %v1677, %v1698
      %v1717 = vadd.f32 %v1678, %v1698
      %v1718 = vadd.f32 %v1679, %v1698
      %v1719 = vadd.f32 %v1680, %v1698
      %v1720 = vadd.f32 %v1681, %v1698
      %v1721 = vadd.f32 %v1682, %v1698
      %v1722 = vadd.f32 %v1683, %v1698
      %v1723 = vadd.f32 %v1684, %v1698
      %v1724 = vadd.f32 %v1685, %v1698
      %v1725 = vadd.f32 %v1686, %v1698
      %v1726 = vadd.f32 %v1687, %v1698
      %v1727 = vadd.f32 %v1688, %v1698
      %v1728 = vadd.f32 %v1689, %v1698
      %v1729 = vadd.f32 %v1690, %v1698
      %v1730 = vadd.f32 %v1691, %v1698
      %v1731 = vadd.f32 %v1692, %v1698
      %v1732 = vmax.f32 %v1700, 0.0
      %v1733 = vmax.f32 %v1701, 0.0
      %v1734 = vmax.f32 %v1702, 0.0
      %v1735 = vmax.f32 %v1703, 0.0
      %v1736 = vmax.f32 %v1704, 0.0
      %v1737 = vmax.f32 %v1705, 0.0
      %v1738 = vmax.f32 %v1706, 0.0
      %v1739 = vmax.f32 %v1707, 0.0
      %v1740 = vmax.f32 %v1708, 0.0
      %v1741 = vmax.f32 %v1709, 0.0
      %v1742 = vmax.f32 %v1710, 0.0
      %v1743 = vmax.f32 %v1711, 0.0
      %v1744 = vmax.f32 %v1712, 0.0
      %v1745 = vmax.f32 %v1713, 0.0
      %v1746 = vmax.f32 %v1714, 0.0
      %v1747 = vmax.f32 %v1715, 0.0
      %v1748 = vmax.f32 %v1716, 0.0
      %v1749 = vmax.f32 %v1717, 0.0
      %v1750 = vmax.f32 %v1718, 0.0
      %v1751 = vmax.f32 %v1719, 0.0
      %v1752 = vmax.f32 %v1720, 0.0
      %v1753 = vmax.f32 %v1721, 0.0
      %v1754 = vmax.f32 %v1722, 0.0
      %v1755 = vmax.f32 %v1723, 0.0
      %v1756 = vmax.f32 %v1724, 0.0
      %v1757 = vmax.f32 %v1725, 0.0
      %v1758 = vmax.f32 %v1726, 0.0
      %v1759 = vmax.f32 %v1727, 0.0
      %v1760 = vmax.f32 %v1728, 0.0
      %v1761 = vmax.f32 %v1729, 0.0
      %v1762 = vmax.f32 %v1730, 0.0
      %v1763 = vmax.f32 %v1731, 0.0
      %v1764 = vld [vmem:[%s553] sm:$0xff]
      %v1765 = vld [vmem:[%s553 + $0x8] sm:$0xff]
      %v1766 = vld [vmem:[%s553 + $0x10] sm:$0xff]
      %v1767 = vld [vmem:[%s553 + $0x18] sm:$0xff]
      %v1768 = vld [vmem:[%s553 + $0x20] sm:$0xff]
      %v1769 = vld [vmem:[%s553 + $0x28] sm:$0xff]
      %v1770 = vld [vmem:[%s553 + $0x30] sm:$0xff]
      %v1771 = vld [vmem:[%s553 + $0x38] sm:$0xff]
      %v1772 = vld [vmem:[%s553 + $0x40] sm:$0xff]
      %v1773 = vld [vmem:[%s553 + $0x48] sm:$0xff]
      %v1774 = vld [vmem:[%s553 + $0x50] sm:$0xff]
      %v1775 = vld [vmem:[%s553 + $0x58] sm:$0xff]
      %v1776 = vld [vmem:[%s553 + $0x60] sm:$0xff]
      %v1777 = vld [vmem:[%s553 + $0x68] sm:$0xff]
      %v1778 = vld [vmem:[%s553 + $0x70] sm:$0xff]
      %v1779 = vld [vmem:[%s553 + $0x78] sm:$0xff]
      %v1780 = vld [vmem:[%s553 + $0x80] sm:$0xff]
      %v1781 = vld [vmem:[%s553 + $0x88] sm:$0xff]
      %v1782 = vld [vmem:[%s553 + $0x90] sm:$0xff]
      %v1783 = vld [vmem:[%s553 + $0x98] sm:$0xff]
      %v1784 = vld [vmem:[%s553 + $0xa0] sm:$0xff]
      %v1785 = vld [vmem:[%s553 + $0xa8] sm:$0xff]
      %v1786 = vld [vmem:[%s553 + $0xb0] sm:$0xff]
      %v1787 = vld [vmem:[%s553 + $0xb8] sm:$0xff]
      %v1788 = vld [vmem:[%s553 + $0xc0] sm:$0xff]
      %v1789 = vld [vmem:[%s553 + $0xc8] sm:$0xff]
      %v1790 = vld [vmem:[%s553 + $0xd0] sm:$0xff]
      %v1791 = vld [vmem:[%s553 + $0xd8] sm:$0xff]
      %v1792 = vld [vmem:[%s553 + $0xe0] sm:$0xff]
      %v1793 = vld [vmem:[%s553 + $0xe8] sm:$0xff]
      %v1794 = vld [vmem:[%s553 + $0xf0] sm:$0xff]
      %v1795 = vld [vmem:[%s553 + $0xf8] sm:$0xff]
      %1797 = vset.pattern.permute.xlu0 0
      %1798 = vperm.xlu0 %1797, %v1764
      %v1799 = vpop.permute.xlu0 %1798
      %1802 = vset.pattern.permute.xlu0 0
      %1803 = vperm.xlu0 %1802, %v1765
      %v1804 = vpop.permute.xlu0 %1803
      %1807 = vset.pattern.permute.xlu0 0
      %1808 = vperm.xlu0 %1807, %v1766
      %v1809 = vpop.permute.xlu0 %1808
      %1812 = vset.pattern.permute.xlu0 0
      %1813 = vperm.xlu0 %1812, %v1767
      %v1814 = vpop.permute.xlu0 %1813
      %1817 = vset.pattern.permute.xlu0 0
      %1818 = vperm.xlu0 %1817, %v1768
      %v1819 = vpop.permute.xlu0 %1818
      %1822 = vset.pattern.permute.xlu0 0
      %1823 = vperm.xlu0 %1822, %v1769
      %v1824 = vpop.permute.xlu0 %1823
      %1827 = vset.pattern.permute.xlu0 0
      %1828 = vperm.xlu0 %1827, %v1770
      %v1829 = vpop.permute.xlu0 %1828
      %1832 = vset.pattern.permute.xlu0 0
      %1833 = vperm.xlu0 %1832, %v1771
      %v1834 = vpop.permute.xlu0 %1833
      %1837 = vset.pattern.permute.xlu0 0
      %1838 = vperm.xlu0 %1837, %v1772
      %v1839 = vpop.permute.xlu0 %1838
      %1842 = vset.pattern.permute.xlu0 0
      %1843 = vperm.xlu0 %1842, %v1773
      %v1844 = vpop.permute.xlu0 %1843
      %1847 = vset.pattern.permute.xlu0 0
      %1848 = vperm.xlu0 %1847, %v1774
      %v1849 = vpop.permute.xlu0 %1848
      %1852 = vset.pattern.permute.xlu0 0
      %1853 = vperm.xlu0 %1852, %v1775
      %v1854 = vpop.permute.xlu0 %1853
      %1857 = vset.pattern.permute.xlu0 0
      %1858 = vperm.xlu0 %1857, %v1776
      %v1859 = vpop.permute.xlu0 %1858
      %1862 = vset.pattern.permute.xlu0 0
      %1863 = vperm.xlu0 %1862, %v1777
      %v1864 = vpop.permute.xlu0 %1863
      %1867 = vset.pattern.permute.xlu0 0
      %1868 = vperm.xlu0 %1867, %v1778
      %v1869 = vpop.permute.xlu0 %1868
      %1872 = vset.pattern.permute.xlu0 0
      %1873 = vperm.xlu0 %1872, %v1779
      %v1874 = vpop.permute.xlu0 %1873
      %1877 = vset.pattern.permute.xlu0 0
      %1878 = vperm.xlu0 %1877, %v1780
      %v1879 = vpop.permute.xlu0 %1878
      %1882 = vset.pattern.permute.xlu0 0
      %1883 = vperm.xlu0 %1882, %v1781
      %v1884 = vpop.permute.xlu0 %1883
      %1887 = vset.pattern.permute.xlu0 0
      %1888 = vperm.xlu0 %1887, %v1782
      %v1889 = vpop.permute.xlu0 %1888
      %1892 = vset.pattern.permute.xlu0 0
      %1893 = vperm.xlu0 %1892, %v1783
      %v1894 = vpop.permute.xlu0 %1893
      %1897 = vset.pattern.permute.xlu0 0
      %1898 = vperm.xlu0 %1897, %v1784
      %v1899 = vpop.permute.xlu0 %1898
      %1902 = vset.pattern.permute.xlu0 0
      %1903 = vperm.xlu0 %1902, %v1785
      %v1904 = vpop.permute.xlu0 %1903
      %1907 = vset.pattern.permute.xlu0 0
      %1908 = vperm.xlu0 %1907, %v1786
      %v1909 = vpop.permute.xlu0 %1908
      %1912 = vset.pattern.permute.xlu0 0
      %1913 = vperm.xlu0 %1912, %v1787
      %v1914 = vpop.permute.xlu0 %1913
      %1917 = vset.pattern.permute.xlu0 0
      %1918 = vperm.xlu0 %1917, %v1788
      %v1919 = vpop.permute.xlu0 %1918
      %1922 = vset.pattern.permute.xlu0 0
      %1923 = vperm.xlu0 %1922, %v1789
      %v1924 = vpop.permute.xlu0 %1923
      %1927 = vset.pattern.permute.xlu0 0
      %1928 = vperm.xlu0 %1927, %v1790
      %v1929 = vpop.permute.xlu0 %1928
      %1932 = vset.pattern.permute.xlu0 0
      %1933 = vperm.xlu0 %1932, %v1791
      %v1934 = vpop.permute.xlu0 %1933
      %1937 = vset.pattern.permute.xlu0 0
      %1938 = vperm.xlu0 %1937, %v1792
      %v1939 = vpop.permute.xlu0 %1938
      %1942 = vset.pattern.permute.xlu0 0
      %1943 = vperm.xlu0 %1942, %v1793
      %v1944 = vpop.permute.xlu0 %1943
      %1947 = vset.pattern.permute.xlu0 0
      %1948 = vperm.xlu0 %1947, %v1794
      %v1949 = vpop.permute.xlu0 %1948
      %1952 = vset.pattern.permute.xlu0 0
      %1953 = vperm.xlu0 %1952, %v1795
      %v1954 = vpop.permute.xlu0 %1953
      %v1956 = vmul.f32 %v1732, %v1799
      %v1957 = vmul.f32 %v1733, %v1804
      %v1958 = vmul.f32 %v1734, %v1809
      %v1959 = vmul.f32 %v1735, %v1814
      %v1960 = vmul.f32 %v1736, %v1819
      %v1961 = vmul.f32 %v1737, %v1824
      %v1962 = vmul.f32 %v1738, %v1829
      %v1963 = vmul.f32 %v1739, %v1834
      %v1964 = vmul.f32 %v1740, %v1839
      %v1965 = vmul.f32 %v1741, %v1844
      %v1966 = vmul.f32 %v1742, %v1849
      %v1967 = vmul.f32 %v1743, %v1854
      %v1968 = vmul.f32 %v1744, %v1859
      %v1969 = vmul.f32 %v1745, %v1864
      %v1970 = vmul.f32 %v1746, %v1869
      %v1971 = vmul.f32 %v1747, %v1874
      %v1972 = vmul.f32 %v1748, %v1879
      %v1973 = vmul.f32 %v1749, %v1884
      %v1974 = vmul.f32 %v1750, %v1889
      %v1975 = vmul.f32 %v1751, %v1894
      %v1976 = vmul.f32 %v1752, %v1899
      %v1977 = vmul.f32 %v1753, %v1904
      %v1978 = vmul.f32 %v1754, %v1909
      %v1979 = vmul.f32 %v1755, %v1914
      %v1980 = vmul.f32 %v1756, %v1919
      %v1981 = vmul.f32 %v1757, %v1924
      %v1982 = vmul.f32 %v1758, %v1929
      %v1983 = vmul.f32 %v1759, %v1934
      %v1984 = vmul.f32 %v1760, %v1939
      %v1985 = vmul.f32 %v1761, %v1944
      %v1986 = vmul.f32 %v1762, %v1949
      %v1987 = vmul.f32 %v1763, %v1954
      %v1988 = vpack.c.bf16 %v1957, %v1956
      %v1989 = vpack.c.bf16 %v1959, %v1958
      %v1990 = vpack.c.bf16 %v1961, %v1960
      %v1991 = vpack.c.bf16 %v1963, %v1962
      %v1992 = vpack.c.bf16 %v1965, %v1964
      %v1993 = vpack.c.bf16 %v1967, %v1966
      %v1994 = vpack.c.bf16 %v1969, %v1968
      %v1995 = vpack.c.bf16 %v1971, %v1970
      %v1996 = vpack.c.bf16 %v1973, %v1972
      %v1997 = vpack.c.bf16 %v1975, %v1974
      %v1998 = vpack.c.bf16 %v1977, %v1976
      %v1999 = vpack.c.bf16 %v1979, %v1978
      %v2000 = vpack.c.bf16 %v1981, %v1980
      %v2001 = vpack.c.bf16 %v1983, %v1982
      %v2002 = vpack.c.bf16 %v1985, %v1984
      %v2003 = vpack.c.bf16 %v1987, %v1986
      %v2020 = vunpack.c.l.b16 %v1988
      %v2021 = vunpack.c.h.b16 %v1988
      %v2022 = vunpack.c.l.b16 %v1989
      %v2023 = vunpack.c.h.b16 %v1989
      %v2024 = vunpack.c.l.b16 %v1990
      %v2025 = vunpack.c.h.b16 %v1990
      %v2026 = vunpack.c.l.b16 %v1991
      %v2027 = vunpack.c.h.b16 %v1991
      %v2028 = vunpack.c.l.b16 %v1992
      %v2029 = vunpack.c.h.b16 %v1992
      %v2030 = vunpack.c.l.b16 %v1993
      %v2031 = vunpack.c.h.b16 %v1993
      %v2032 = vunpack.c.l.b16 %v1994
      %v2033 = vunpack.c.h.b16 %v1994
      %v2034 = vunpack.c.l.b16 %v1995
      %v2035 = vunpack.c.h.b16 %v1995
      %v2036 = vunpack.c.l.b16 %v1996
      %v2037 = vunpack.c.h.b16 %v1996
      %v2038 = vunpack.c.l.b16 %v1997
      %v2039 = vunpack.c.h.b16 %v1997
      %v2040 = vunpack.c.l.b16 %v1998
      %v2041 = vunpack.c.h.b16 %v1998
      %v2042 = vunpack.c.l.b16 %v1999
      %v2043 = vunpack.c.h.b16 %v1999
      %v2044 = vunpack.c.l.b16 %v2000
      %v2045 = vunpack.c.h.b16 %v2000
      %v2046 = vunpack.c.l.b16 %v2001
      %v2047 = vunpack.c.h.b16 %v2001
      %v2048 = vunpack.c.l.b16 %v2002
      %v2049 = vunpack.c.h.b16 %v2002
      %v2050 = vunpack.c.l.b16 %v2003
      %v2051 = vunpack.c.h.b16 %v2003
      %v2052 = vpack.c.b16 %v2020, %v2020
      %v2053 = vpack.c.b16 %v2021, %v2021
      %v2054 = vpack.c.b16 %v2022, %v2022
      %v2055 = vpack.c.b16 %v2023, %v2023
      %v2056 = vpack.c.b16 %v2024, %v2024
      %v2057 = vpack.c.b16 %v2025, %v2025
      %v2058 = vpack.c.b16 %v2026, %v2026
      %v2059 = vpack.c.b16 %v2027, %v2027
      %v2060 = vpack.c.b16 %v2028, %v2028
      %v2061 = vpack.c.b16 %v2029, %v2029
      %v2062 = vpack.c.b16 %v2030, %v2030
      %v2063 = vpack.c.b16 %v2031, %v2031
      %v2064 = vpack.c.b16 %v2032, %v2032
      %v2065 = vpack.c.b16 %v2033, %v2033
      %v2066 = vpack.c.b16 %v2034, %v2034
      %v2067 = vpack.c.b16 %v2035, %v2035
      %v2068 = vpack.c.b16 %v2036, %v2036
      %v2069 = vpack.c.b16 %v2037, %v2037
      %v2070 = vpack.c.b16 %v2038, %v2038
      %v2071 = vpack.c.b16 %v2039, %v2039
      %v2072 = vpack.c.b16 %v2040, %v2040
      %v2073 = vpack.c.b16 %v2041, %v2041
      %v2074 = vpack.c.b16 %v2042, %v2042
      %v2075 = vpack.c.b16 %v2043, %v2043
      %v2076 = vpack.c.b16 %v2044, %v2044
      %v2077 = vpack.c.b16 %v2045, %v2045
      %v2078 = vpack.c.b16 %v2046, %v2046
      %v2079 = vpack.c.b16 %v2047, %v2047
      %v2080 = vpack.c.b16 %v2048, %v2048
      %v2081 = vpack.c.b16 %v2049, %v2049
      %v2082 = vpack.c.b16 %v2050, %v2050
      %v2083 = vpack.c.b16 %v2051, %v2051
      %2116 = vst.msk [vmem:[#allocation2 + $0x100] sm:$0xf] %vm1063, %v2052
      %2117 = vst.msk [vmem:[#allocation2 + $0x104] sm:$0xf] %vm1063, %v2053
      %2118 = vst.msk [vmem:[#allocation2 + $0x108] sm:$0xf] %vm1063, %v2054
      %2119 = vst.msk [vmem:[#allocation2 + $0x10c] sm:$0xf] %vm1063, %v2055
      %2120 = vst.msk [vmem:[#allocation2 + $0x110] sm:$0xf] %vm1063, %v2056
      %2121 = vst.msk [vmem:[#allocation2 + $0x114] sm:$0xf] %vm1063, %v2057
      %2122 = vst.msk [vmem:[#allocation2 + $0x118] sm:$0xf] %vm1063, %v2058
      %2123 = vst.msk [vmem:[#allocation2 + $0x11c] sm:$0xf] %vm1063, %v2059
      %2124 = vst.msk [vmem:[#allocation2 + $0x120] sm:$0xf] %vm1063, %v2060
      %2125 = vst.msk [vmem:[#allocation2 + $0x124] sm:$0xf] %vm1063, %v2061
      %2126 = vst.msk [vmem:[#allocation2 + $0x128] sm:$0xf] %vm1063, %v2062
      %2127 = vst.msk [vmem:[#allocation2 + $0x12c] sm:$0xf] %vm1063, %v2063
      %2128 = vst.msk [vmem:[#allocation2 + $0x130] sm:$0xf] %vm1063, %v2064
      %2129 = vst.msk [vmem:[#allocation2 + $0x134] sm:$0xf] %vm1063, %v2065
      %2130 = vst.msk [vmem:[#allocation2 + $0x138] sm:$0xf] %vm1063, %v2066
      %2131 = vst.msk [vmem:[#allocation2 + $0x13c] sm:$0xf] %vm1063, %v2067
      %2132 = vst.msk [vmem:[#allocation2 + $0x140] sm:$0xf] %vm1063, %v2068
      %2133 = vst.msk [vmem:[#allocation2 + $0x144] sm:$0xf] %vm1063, %v2069
      %2134 = vst.msk [vmem:[#allocation2 + $0x148] sm:$0xf] %vm1063, %v2070
      %2135 = vst.msk [vmem:[#allocation2 + $0x14c] sm:$0xf] %vm1063, %v2071
      %2136 = vst.msk [vmem:[#allocation2 + $0x150] sm:$0xf] %vm1063, %v2072
      %2137 = vst.msk [vmem:[#allocation2 + $0x154] sm:$0xf] %vm1063, %v2073
      %2138 = vst.msk [vmem:[#allocation2 + $0x158] sm:$0xf] %vm1063, %v2074
      %2139 = vst.msk [vmem:[#allocation2 + $0x15c] sm:$0xf] %vm1063, %v2075
      %2140 = vst.msk [vmem:[#allocation2 + $0x160] sm:$0xf] %vm1063, %v2076
      %2141 = vst.msk [vmem:[#allocation2 + $0x164] sm:$0xf] %vm1063, %v2077
      %2142 = vst.msk [vmem:[#allocation2 + $0x168] sm:$0xf] %vm1063, %v2078
      %2143 = vst.msk [vmem:[#allocation2 + $0x16c] sm:$0xf] %vm1063, %v2079
      %2144 = vst.msk [vmem:[#allocation2 + $0x170] sm:$0xf] %vm1063, %v2080
      %2145 = vst.msk [vmem:[#allocation2 + $0x174] sm:$0xf] %vm1063, %v2081
      %2146 = vst.msk [vmem:[#allocation2 + $0x178] sm:$0xf] %vm1063, %v2082
      %2147 = vst.msk [vmem:[#allocation2 + $0x17c] sm:$0xf] %vm1063, %v2083
      %v2148 = vld [vmem:[#allocation2 + $0x74] sm:$0xc]
      %v2149 = vld [vmem:[#allocation2 + $0x78] sm:$0xf]
      %v2150 = vld [vmem:[#allocation2 + $0x7c] sm:$0xf]
      %v2151 = vld [vmem:[#allocation2 + $0x80] sm:$0xf]
      %v2152 = vld [vmem:[#allocation2 + $0x84] sm:$0xf]
      %v2153 = vld [vmem:[#allocation2 + $0x88] sm:$0xf]
      %v2154 = vld [vmem:[#allocation2 + $0x8c] sm:$0xf]
      %v2155 = vld [vmem:[#allocation2 + $0x90] sm:$0xf]
      %v2156 = vld [vmem:[#allocation2 + $0x94] sm:$0xf]
      %v2157 = vld [vmem:[#allocation2 + $0x98] sm:$0xf]
      %v2158 = vld [vmem:[#allocation2 + $0x9c] sm:$0xf]
      %v2159 = vld [vmem:[#allocation2 + $0xa0] sm:$0xf]
      %v2160 = vld [vmem:[#allocation2 + $0xa4] sm:$0xf]
      %v2161 = vld [vmem:[#allocation2 + $0xa8] sm:$0xf]
      %v2162 = vld [vmem:[#allocation2 + $0xac] sm:$0xf]
      %v2163 = vld [vmem:[#allocation2 + $0xb0] sm:$0xf]
      %v2164 = vld [vmem:[#allocation2 + $0xb4] sm:$0xf]
      %v2165 = vld [vmem:[#allocation2 + $0xb8] sm:$0xf]
      %v2166 = vld [vmem:[#allocation2 + $0xbc] sm:$0xf]
      %v2167 = vld [vmem:[#allocation2 + $0xc0] sm:$0xf]
      %v2168 = vld [vmem:[#allocation2 + $0xc4] sm:$0xf]
      %v2169 = vld [vmem:[#allocation2 + $0xc8] sm:$0xf]
      %v2170 = vld [vmem:[#allocation2 + $0xcc] sm:$0xf]
      %v2171 = vld [vmem:[#allocation2 + $0xd0] sm:$0xf]
      %v2172 = vld [vmem:[#allocation2 + $0xd4] sm:$0xf]
      %v2173 = vld [vmem:[#allocation2 + $0xd8] sm:$0xf]
      %v2174 = vld [vmem:[#allocation2 + $0xdc] sm:$0xf]
      %v2175 = vld [vmem:[#allocation2 + $0xe0] sm:$0xf]
      %v2176 = vld [vmem:[#allocation2 + $0xe4] sm:$0xf]
      %v2177 = vld [vmem:[#allocation2 + $0xe8] sm:$0xf]
      %v2178 = vld [vmem:[#allocation2 + $0xec] sm:$0xf]
      %v2179 = vld [vmem:[#allocation2 + $0xf0] sm:$0xf]
      %v2180 = vld [vmem:[#allocation2 + $0xf4] sm:$0x7]
      %v2181 = vld [vmem:[%s8] sm:$0xf]
      %v2182 = vld [vmem:[#allocation2 + $0x74] sm:$0x8]
      %s2183 = scalar_lea.vmem %s8, 4
      %v2184 = vld [vmem:[%s2183] sm:$0xf]
      %v2218 = vunpack.c.l.b16 %v2182
      %v2219 = vunpack.c.l.b16 %v2149
      %v2220 = vunpack.c.l.b16 %v2150
      %v2221 = vunpack.c.l.b16 %v2151
      %v2222 = vunpack.c.l.b16 %v2152
      %v2223 = vunpack.c.l.b16 %v2153
      %v2224 = vunpack.c.l.b16 %v2154
      %v2225 = vunpack.c.l.b16 %v2155
      %v2226 = vunpack.c.l.b16 %v2156
      %v2227 = vunpack.c.l.b16 %v2157
      %v2228 = vunpack.c.l.b16 %v2158
      %v2229 = vunpack.c.l.b16 %v2159
      %v2230 = vunpack.c.l.b16 %v2160
      %v2231 = vunpack.c.l.b16 %v2161
      %v2232 = vunpack.c.l.b16 %v2162
      %v2233 = vunpack.c.l.b16 %v2163
      %v2234 = vunpack.c.l.b16 %v2164
      %v2235 = vunpack.c.l.b16 %v2165
      %v2236 = vunpack.c.l.b16 %v2166
      %v2237 = vunpack.c.l.b16 %v2167
      %v2238 = vunpack.c.l.b16 %v2168
      %v2239 = vunpack.c.l.b16 %v2169
      %v2240 = vunpack.c.l.b16 %v2170
      %v2241 = vunpack.c.l.b16 %v2171
      %v2242 = vunpack.c.l.b16 %v2172
      %v2243 = vunpack.c.l.b16 %v2173
      %v2244 = vunpack.c.l.b16 %v2174
      %v2245 = vunpack.c.l.b16 %v2175
      %v2246 = vunpack.c.l.b16 %v2176
      %v2247 = vunpack.c.l.b16 %v2177
      %v2248 = vunpack.c.l.b16 %v2178
      %v2249 = vunpack.c.l.b16 %v2179
      %v2250 = vunpack.c.l.b16 %v2180
      %v2251 = vpack.c.b16 %v2219, %v2218
      %v2252 = vpack.c.b16 %v2221, %v2220
      %v2253 = vpack.c.b16 %v2223, %v2222
      %v2254 = vpack.c.b16 %v2225, %v2224
      %v2255 = vpack.c.b16 %v2227, %v2226
      %v2256 = vpack.c.b16 %v2229, %v2228
      %v2257 = vpack.c.b16 %v2231, %v2230
      %v2258 = vpack.c.b16 %v2233, %v2232
      %v2259 = vpack.c.b16 %v2235, %v2234
      %v2260 = vpack.c.b16 %v2237, %v2236
      %v2261 = vpack.c.b16 %v2239, %v2238
      %v2262 = vpack.c.b16 %v2241, %v2240
      %v2263 = vpack.c.b16 %v2243, %v2242
      %v2264 = vpack.c.b16 %v2245, %v2244
      %v2265 = vpack.c.b16 %v2247, %v2246
      %v2266 = vpack.c.b16 %v2249, %v2248
      %v2267 = vpack.c.b16 %v2250, %v2250
      %vm2268 = vcmask 1044480
      %v2269 = vrot.slane %v2251, 3
      %v2270 = vrot.slane %v2252, 3
      %v2271 = vsel %vm2268, %v2269, %v2270
      %v2272 = vrot.slane %v2253, 3
      %v2273 = vsel %vm2268, %v2270, %v2272
      %v2274 = vrot.slane %v2254, 3
      %v2275 = vsel %vm2268, %v2272, %v2274
      %v2276 = vrot.slane %v2255, 3
      %v2277 = vsel %vm2268, %v2274, %v2276
      %v2278 = vrot.slane %v2256, 3
      %v2279 = vsel %vm2268, %v2276, %v2278
      %v2280 = vrot.slane %v2257, 3
      %v2281 = vsel %vm2268, %v2278, %v2280
      %v2282 = vrot.slane %v2258, 3
      %v2283 = vsel %vm2268, %v2280, %v2282
      %v2284 = vrot.slane %v2259, 3
      %v2285 = vsel %vm2268, %v2282, %v2284
      %v2286 = vrot.slane %v2260, 3
      %v2287 = vsel %vm2268, %v2284, %v2286
      %v2288 = vrot.slane %v2261, 3
      %v2289 = vsel %vm2268, %v2286, %v2288
      %v2290 = vrot.slane %v2262, 3
      %v2291 = vsel %vm2268, %v2288, %v2290
      %v2292 = vrot.slane %v2263, 3
      %v2293 = vsel %vm2268, %v2290, %v2292
      %v2294 = vrot.slane %v2264, 3
      %v2295 = vsel %vm2268, %v2292, %v2294
      %v2296 = vrot.slane %v2265, 3
      %v2297 = vsel %vm2268, %v2294, %v2296
      %v2298 = vrot.slane %v2266, 3
      %v2299 = vsel %vm2268, %v2296, %v2298
      %v2300 = vrot.slane %v2267, 3
      %v2301 = vsel %vm2268, %v2298, %v2300
      %vm2302 = vcmask 64512
      %v2304 = vsel %vm2302, %v2271, 0
      %v2307 = vsel %vm2302, %v2273, 0
      %v2310 = vsel %vm2302, %v2275, 0
      %v2313 = vsel %vm2302, %v2277, 0
      %v2316 = vsel %vm2302, %v2279, 0
      %v2319 = vsel %vm2302, %v2281, 0
      %v2322 = vsel %vm2302, %v2283, 0
      %v2325 = vsel %vm2302, %v2285, 0
      %v2328 = vsel %vm2302, %v2287, 0
      %v2331 = vsel %vm2302, %v2289, 0
      %v2334 = vsel %vm2302, %v2291, 0
      %v2337 = vsel %vm2302, %v2293, 0
      %v2340 = vsel %vm2302, %v2295, 0
      %v2343 = vsel %vm2302, %v2297, 0
      %v2346 = vsel %vm2302, %v2299, 0
      %v2349 = vsel %vm2302, %v2301, 0
      %vm2351 = vcmask 1043456
      %v2353 = vsel %vm2351, %v2184, 0
      %2355 = vmatprep.subr.bf16.mxu0 0
      %2356 = vmatpush1.bf16.msra.mxu0 0
      %2357 = vmatprep.subr.bf16.mxu0 0
      %2358 = vmatpush1.bf16.msra.mxu0 0
      %2359 = vmatprep.subr.bf16.mxu0 0
      %2360 = vmatpush1.bf16.msra.mxu0 0
      %2361 = vmatprep.subr.bf16.mxu0 0
      %2362 = vmatpush1.bf16.msra.mxu0 0
      %2363 = vmatprep.subr.bf16.mxu0 0
      %2364 = vmatpush1.bf16.msra.mxu0 0
      %2365 = vmatprep.subr.bf16.mxu0 0
      %2366 = vmatpush1.bf16.msra.mxu0 0
      %2367 = vmatprep.subr.bf16.mxu0 0
      %2368 = vmatpush1.bf16.msra.mxu0 0
      %2369 = vmatprep.subr.bf16.mxu0 0
      %2370 = vmatpush1.bf16.msra.mxu0 %v2353
      %2371 = vmatprep.subr.bf16.mxu0 0
      %2372 = vmatpush2.bf16.msra.mxu0 0
      %2373 = vmatprep.subr.bf16.mxu0 0
      %2374 = vmatpush2.bf16.msra.mxu0 0
      %2375 = vmatprep.subr.bf16.mxu0 0
      %2376 = vmatpush2.bf16.msra.mxu0 0
      %2377 = vmatprep.subr.bf16.mxu0 0
      %2378 = vmatpush2.bf16.msra.mxu0 0
      %2379 = vmatprep.subr.bf16.mxu0 0
      %2380 = vmatpush2.bf16.msra.mxu0 0
      %2381 = vmatprep.subr.bf16.mxu0 0
      %2382 = vmatpush2.bf16.msra.mxu0 0
      %2383 = vmatprep.subr.bf16.mxu0 0
      %2384 = vmatpush2.bf16.msra.mxu0 0
      %2385 = vmatprep.subr.bf16.mxu0 0
      %2386 = vmatpush2.bf16.msra.mxu0 0
      %2387 = vmatprep.mubr.bf16.mxu0 0
      %2388 = vmatmul.mubr.bf16.gmra.mxu0 %v2304
      %v2389 = vpop.f32.mrf.mxu0
      %v2390 = vadd.f32 0.0, %v2389
      %v2391 = vpop.f32.mrf.mxu0
      %v2392 = vpop.f32.mrf.mxu0
      %v2393 = vadd.f32 0.0, %v2392
      %v2394 = vpop.f32.mrf.mxu0
      %2395 = vmatprep.mubr.bf16.mxu0 0
      %2396 = vmatmul.mubr.bf16.gmra.mxu0 %v2307
      %v2397 = vpop.f32.mrf.mxu0
      %v2398 = vadd.f32 0.0, %v2397
      %v2399 = vpop.f32.mrf.mxu0
      %v2400 = vpop.f32.mrf.mxu0
      %v2401 = vadd.f32 0.0, %v2400
      %v2402 = vpop.f32.mrf.mxu0
      %2403 = vmatprep.mubr.bf16.mxu0 0
      %2404 = vmatmul.mubr.bf16.gmra.mxu0 %v2310
      %v2405 = vpop.f32.mrf.mxu0
      %v2406 = vadd.f32 0.0, %v2405
      %v2407 = vpop.f32.mrf.mxu0
      %v2408 = vpop.f32.mrf.mxu0
      %v2409 = vadd.f32 0.0, %v2408
      %v2410 = vpop.f32.mrf.mxu0
      %2411 = vmatprep.mubr.bf16.mxu0 0
      %2412 = vmatmul.mubr.bf16.gmra.mxu0 %v2313
      %v2413 = vpop.f32.mrf.mxu0
      %v2414 = vadd.f32 0.0, %v2413
      %v2415 = vpop.f32.mrf.mxu0
      %v2416 = vpop.f32.mrf.mxu0
      %v2417 = vadd.f32 0.0, %v2416
      %v2418 = vpop.f32.mrf.mxu0
      %2419 = vmatprep.mubr.bf16.mxu0 0
      %2420 = vmatmul.mubr.bf16.gmra.mxu0 %v2316
      %v2421 = vpop.f32.mrf.mxu0
      %v2422 = vadd.f32 0.0, %v2421
      %v2423 = vpop.f32.mrf.mxu0
      %v2424 = vpop.f32.mrf.mxu0
      %v2425 = vadd.f32 0.0, %v2424
      %v2426 = vpop.f32.mrf.mxu0
      %2427 = vmatprep.mubr.bf16.mxu0 0
      %2428 = vmatmul.mubr.bf16.gmra.mxu0 %v2319
      %v2429 = vpop.f32.mrf.mxu0
      %v2430 = vadd.f32 0.0, %v2429
      %v2431 = vpop.f32.mrf.mxu0
      %v2432 = vpop.f32.mrf.mxu0
      %v2433 = vadd.f32 0.0, %v2432
      %v2434 = vpop.f32.mrf.mxu0
      %2435 = vmatprep.mubr.bf16.mxu0 0
      %2436 = vmatmul.mubr.bf16.gmra.mxu0 %v2322
      %v2437 = vpop.f32.mrf.mxu0
      %v2438 = vadd.f32 0.0, %v2437
      %v2439 = vpop.f32.mrf.mxu0
      %v2440 = vpop.f32.mrf.mxu0
      %v2441 = vadd.f32 0.0, %v2440
      %v2442 = vpop.f32.mrf.mxu0
      %2443 = vmatprep.mubr.bf16.mxu0 0
      %2444 = vmatmul.mubr.bf16.gmra.mxu0 %v2325
      %v2445 = vpop.f32.mrf.mxu0
      %v2446 = vadd.f32 0.0, %v2445
      %v2447 = vpop.f32.mrf.mxu0
      %v2448 = vpop.f32.mrf.mxu0
      %v2449 = vadd.f32 0.0, %v2448
      %v2450 = vpop.f32.mrf.mxu0
      %2451 = vmatprep.mubr.bf16.mxu0 0
      %2452 = vmatmul.mubr.bf16.gmra.mxu0 %v2328
      %v2453 = vpop.f32.mrf.mxu0
      %v2454 = vadd.f32 0.0, %v2453
      %v2455 = vpop.f32.mrf.mxu0
      %v2456 = vpop.f32.mrf.mxu0
      %v2457 = vadd.f32 0.0, %v2456
      %v2458 = vpop.f32.mrf.mxu0
      %2459 = vmatprep.mubr.bf16.mxu0 0
      %2460 = vmatmul.mubr.bf16.gmra.mxu0 %v2331
      %v2461 = vpop.f32.mrf.mxu0
      %v2462 = vadd.f32 0.0, %v2461
      %v2463 = vpop.f32.mrf.mxu0
      %v2464 = vpop.f32.mrf.mxu0
      %v2465 = vadd.f32 0.0, %v2464
      %v2466 = vpop.f32.mrf.mxu0
      %2467 = vmatprep.mubr.bf16.mxu0 0
      %2468 = vmatmul.mubr.bf16.gmra.mxu0 %v2334
      %v2469 = vpop.f32.mrf.mxu0
      %v2470 = vadd.f32 0.0, %v2469
      %v2471 = vpop.f32.mrf.mxu0
      %v2472 = vpop.f32.mrf.mxu0
      %v2473 = vadd.f32 0.0, %v2472
      %v2474 = vpop.f32.mrf.mxu0
      %2475 = vmatprep.mubr.bf16.mxu0 0
      %2476 = vmatmul.mubr.bf16.gmra.mxu0 %v2337
      %v2477 = vpop.f32.mrf.mxu0
      %v2478 = vadd.f32 0.0, %v2477
      %v2479 = vpop.f32.mrf.mxu0
      %v2480 = vpop.f32.mrf.mxu0
      %v2481 = vadd.f32 0.0, %v2480
      %v2482 = vpop.f32.mrf.mxu0
      %2483 = vmatprep.mubr.bf16.mxu0 0
      %2484 = vmatmul.mubr.bf16.gmra.mxu0 %v2340
      %v2485 = vpop.f32.mrf.mxu0
      %v2486 = vadd.f32 0.0, %v2485
      %v2487 = vpop.f32.mrf.mxu0
      %v2488 = vpop.f32.mrf.mxu0
      %v2489 = vadd.f32 0.0, %v2488
      %v2490 = vpop.f32.mrf.mxu0
      %2491 = vmatprep.mubr.bf16.mxu0 0
      %2492 = vmatmul.mubr.bf16.gmra.mxu0 %v2343
      %v2493 = vpop.f32.mrf.mxu0
      %v2494 = vadd.f32 0.0, %v2493
      %v2495 = vpop.f32.mrf.mxu0
      %v2496 = vpop.f32.mrf.mxu0
      %v2497 = vadd.f32 0.0, %v2496
      %v2498 = vpop.f32.mrf.mxu0
      %2499 = vmatprep.mubr.bf16.mxu0 0
      %2500 = vmatmul.mubr.bf16.gmra.mxu0 %v2346
      %v2501 = vpop.f32.mrf.mxu0
      %v2502 = vadd.f32 0.0, %v2501
      %v2503 = vpop.f32.mrf.mxu0
      %v2504 = vpop.f32.mrf.mxu0
      %v2505 = vadd.f32 0.0, %v2504
      %v2506 = vpop.f32.mrf.mxu0
      %2507 = vmatprep.mubr.bf16.mxu0 0
      %2508 = vmatmul.mubr.bf16.gmra.mxu0 %v2349
      %v2509 = vpop.f32.mrf.mxu0
      %v2510 = vadd.f32 0.0, %v2509
      %v2511 = vpop.f32.mrf.mxu0
      %v2512 = vpop.f32.mrf.mxu0
      %v2513 = vadd.f32 0.0, %v2512
      %v2514 = vpop.f32.mrf.mxu0
      %2515 = vdwg.mxu0
      %v2517 = vunpack.c.l.b16 %v2148
      %v2518 = vpack.c.b16 %v2219, %v2517
      %vm2519 = vsmask.f32 5376
      %v2521 = vshrl.u32 %v2518, 16
      %v2523 = vrot.slane %v2521, 2
      %v2524 = vshll.u32 %v2518, 16
      %v2526 = vrot.slane %v2524, 3
      %v2527 = vor.u32 %v2523, %v2526
      %v2529 = vshrl.u32 %v2252, 16
      %v2531 = vrot.slane %v2529, 2
      %v2532 = vshll.u32 %v2252, 16
      %v2534 = vrot.slane %v2532, 3
      %v2535 = vor.u32 %v2531, %v2534
      %v2536 = vsel %vm2519, %v2527, %v2535
      %v2538 = vshrl.u32 %v2253, 16
      %v2540 = vrot.slane %v2538, 2
      %v2541 = vshll.u32 %v2253, 16
      %v2543 = vrot.slane %v2541, 3
      %v2544 = vor.u32 %v2540, %v2543
      %v2545 = vsel %vm2519, %v2535, %v2544
      %v2547 = vshrl.u32 %v2254, 16
      %v2549 = vrot.slane %v2547, 2
      %v2550 = vshll.u32 %v2254, 16
      %v2552 = vrot.slane %v2550, 3
      %v2553 = vor.u32 %v2549, %v2552
      %v2554 = vsel %vm2519, %v2544, %v2553
      %v2556 = vshrl.u32 %v2255, 16
      %v2558 = vrot.slane %v2556, 2
      %v2559 = vshll.u32 %v2255, 16
      %v2561 = vrot.slane %v2559, 3
      %v2562 = vor.u32 %v2558, %v2561
      %v2563 = vsel %vm2519, %v2553, %v2562
      %v2565 = vshrl.u32 %v2256, 16
      %v2567 = vrot.slane %v2565, 2
      %v2568 = vshll.u32 %v2256, 16
      %v2570 = vrot.slane %v2568, 3
      %v2571 = vor.u32 %v2567, %v2570
      %v2572 = vsel %vm2519, %v2562, %v2571
      %v2574 = vshrl.u32 %v2257, 16
      %v2576 = vrot.slane %v2574, 2
      %v2577 = vshll.u32 %v2257, 16
      %v2579 = vrot.slane %v2577, 3
      %v2580 = vor.u32 %v2576, %v2579
      %v2581 = vsel %vm2519, %v2571, %v2580
      %v2583 = vshrl.u32 %v2258, 16
      %v2585 = vrot.slane %v2583, 2
      %v2586 = vshll.u32 %v2258, 16
      %v2588 = vrot.slane %v2586, 3
      %v2589 = vor.u32 %v2585, %v2588
      %v2590 = vsel %vm2519, %v2580, %v2589
      %v2592 = vshrl.u32 %v2259, 16
      %v2594 = vrot.slane %v2592, 2
      %v2595 = vshll.u32 %v2259, 16
      %v2597 = vrot.slane %v2595, 3
      %v2598 = vor.u32 %v2594, %v2597
      %v2599 = vsel %vm2519, %v2589, %v2598
      %v2601 = vshrl.u32 %v2260, 16
      %v2603 = vrot.slane %v2601, 2
      %v2604 = vshll.u32 %v2260, 16
      %v2606 = vrot.slane %v2604, 3
      %v2607 = vor.u32 %v2603, %v2606
      %v2608 = vsel %vm2519, %v2598, %v2607
      %v2610 = vshrl.u32 %v2261, 16
      %v2612 = vrot.slane %v2610, 2
      %v2613 = vshll.u32 %v2261, 16
      %v2615 = vrot.slane %v2613, 3
      %v2616 = vor.u32 %v2612, %v2615
      %v2617 = vsel %vm2519, %v2607, %v2616
      %v2619 = vshrl.u32 %v2262, 16
      %v2621 = vrot.slane %v2619, 2
      %v2622 = vshll.u32 %v2262, 16
      %v2624 = vrot.slane %v2622, 3
      %v2625 = vor.u32 %v2621, %v2624
      %v2626 = vsel %vm2519, %v2616, %v2625
      %v2628 = vshrl.u32 %v2263, 16
      %v2630 = vrot.slane %v2628, 2
      %v2631 = vshll.u32 %v2263, 16
      %v2633 = vrot.slane %v2631, 3
      %v2634 = vor.u32 %v2630, %v2633
      %v2635 = vsel %vm2519, %v2625, %v2634
      %v2637 = vshrl.u32 %v2264, 16
      %v2639 = vrot.slane %v2637, 2
      %v2640 = vshll.u32 %v2264, 16
      %v2642 = vrot.slane %v2640, 3
      %v2643 = vor.u32 %v2639, %v2642
      %v2644 = vsel %vm2519, %v2634, %v2643
      %v2646 = vshrl.u32 %v2265, 16
      %v2648 = vrot.slane %v2646, 2
      %v2649 = vshll.u32 %v2265, 16
      %v2651 = vrot.slane %v2649, 3
      %v2652 = vor.u32 %v2648, %v2651
      %v2653 = vsel %vm2519, %v2643, %v2652
      %v2655 = vshrl.u32 %v2266, 16
      %v2657 = vrot.slane %v2655, 2
      %v2658 = vshll.u32 %v2266, 16
      %v2660 = vrot.slane %v2658, 3
      %v2661 = vor.u32 %v2657, %v2660
      %v2662 = vsel %vm2519, %v2652, %v2661
      %v2664 = vshrl.u32 %v2267, 16
      %v2666 = vrot.slane %v2664, 2
      %v2667 = vshll.u32 %v2267, 16
      %v2669 = vrot.slane %v2667, 3
      %v2670 = vor.u32 %v2666, %v2669
      %v2671 = vsel %vm2519, %v2661, %v2670
      %v2673 = vsel %vm2302, %v2536, 0
      %v2676 = vsel %vm2302, %v2545, 0
      %v2679 = vsel %vm2302, %v2554, 0
      %v2682 = vsel %vm2302, %v2563, 0
      %v2685 = vsel %vm2302, %v2572, 0
      %v2688 = vsel %vm2302, %v2581, 0
      %v2691 = vsel %vm2302, %v2590, 0
      %v2694 = vsel %vm2302, %v2599, 0
      %v2697 = vsel %vm2302, %v2608, 0
      %v2700 = vsel %vm2302, %v2617, 0
      %v2703 = vsel %vm2302, %v2626, 0
      %v2706 = vsel %vm2302, %v2635, 0
      %v2709 = vsel %vm2302, %v2644, 0
      %v2712 = vsel %vm2302, %v2653, 0
      %v2715 = vsel %vm2302, %v2662, 0
      %v2718 = vsel %vm2302, %v2671, 0
      %v2721 = vsel %vm2351, %v2181, 0
      %2723 = vmatprep.subr.bf16.mxu0 0
      %2724 = vmatpush1.bf16.msra.mxu0 0
      %2725 = vmatprep.subr.bf16.mxu0 0
      %2726 = vmatpush1.bf16.msra.mxu0 0
      %2727 = vmatprep.subr.bf16.mxu0 0
      %2728 = vmatpush1.bf16.msra.mxu0 0
      %2729 = vmatprep.subr.bf16.mxu0 0
      %2730 = vmatpush1.bf16.msra.mxu0 0
      %2731 = vmatprep.subr.bf16.mxu0 0
      %2732 = vmatpush1.bf16.msra.mxu0 0
      %2733 = vmatprep.subr.bf16.mxu0 0
      %2734 = vmatpush1.bf16.msra.mxu0 0
      %2735 = vmatprep.subr.bf16.mxu0 0
      %2736 = vmatpush1.bf16.msra.mxu0 0
      %2737 = vmatprep.subr.bf16.mxu0 0
      %2738 = vmatpush1.bf16.msra.mxu0 %v2721
      %2739 = vmatprep.subr.bf16.mxu0 0
      %2740 = vmatpush2.bf16.msra.mxu0 0
      %2741 = vmatprep.subr.bf16.mxu0 0
      %2742 = vmatpush2.bf16.msra.mxu0 0
      %2743 = vmatprep.subr.bf16.mxu0 0
      %2744 = vmatpush2.bf16.msra.mxu0 0
      %2745 = vmatprep.subr.bf16.mxu0 0
      %2746 = vmatpush2.bf16.msra.mxu0 0
      %2747 = vmatprep.subr.bf16.mxu0 0
      %2748 = vmatpush2.bf16.msra.mxu0 0
      %2749 = vmatprep.subr.bf16.mxu0 0
      %2750 = vmatpush2.bf16.msra.mxu0 0
      %2751 = vmatprep.subr.bf16.mxu0 0
      %2752 = vmatpush2.bf16.msra.mxu0 0
      %2753 = vmatprep.subr.bf16.mxu0 0
      %2754 = vmatpush2.bf16.msra.mxu0 0
      %2755 = vmatprep.mubr.bf16.mxu0 0
      %2756 = vmatmul.mubr.bf16.gmra.mxu0 %v2673
      %v2757 = vpop.f32.mrf.mxu0
      %v2758 = vadd.f32 %v2390, %v2757
      %v2759 = vpop.f32.mrf.mxu0
      %v2760 = vpop.f32.mrf.mxu0
      %v2761 = vadd.f32 %v2393, %v2760
      %v2762 = vpop.f32.mrf.mxu0
      %2763 = vmatprep.mubr.bf16.mxu0 0
      %2764 = vmatmul.mubr.bf16.gmra.mxu0 %v2676
      %v2765 = vpop.f32.mrf.mxu0
      %v2766 = vadd.f32 %v2398, %v2765
      %v2767 = vpop.f32.mrf.mxu0
      %v2768 = vpop.f32.mrf.mxu0
      %v2769 = vadd.f32 %v2401, %v2768
      %v2770 = vpop.f32.mrf.mxu0
      %2771 = vmatprep.mubr.bf16.mxu0 0
      %2772 = vmatmul.mubr.bf16.gmra.mxu0 %v2679
      %v2773 = vpop.f32.mrf.mxu0
      %v2774 = vadd.f32 %v2406, %v2773
      %v2775 = vpop.f32.mrf.mxu0
      %v2776 = vpop.f32.mrf.mxu0
      %v2777 = vadd.f32 %v2409, %v2776
      %v2778 = vpop.f32.mrf.mxu0
      %2779 = vmatprep.mubr.bf16.mxu0 0
      %2780 = vmatmul.mubr.bf16.gmra.mxu0 %v2682
      %v2781 = vpop.f32.mrf.mxu0
      %v2782 = vadd.f32 %v2414, %v2781
      %v2783 = vpop.f32.mrf.mxu0
      %v2784 = vpop.f32.mrf.mxu0
      %v2785 = vadd.f32 %v2417, %v2784
      %v2786 = vpop.f32.mrf.mxu0
      %2787 = vmatprep.mubr.bf16.mxu0 0
      %2788 = vmatmul.mubr.bf16.gmra.mxu0 %v2685
      %v2789 = vpop.f32.mrf.mxu0
      %v2790 = vadd.f32 %v2422, %v2789
      %v2791 = vpop.f32.mrf.mxu0
      %v2792 = vpop.f32.mrf.mxu0
      %v2793 = vadd.f32 %v2425, %v2792
      %v2794 = vpop.f32.mrf.mxu0
      %2795 = vmatprep.mubr.bf16.mxu0 0
      %2796 = vmatmul.mubr.bf16.gmra.mxu0 %v2688
      %v2797 = vpop.f32.mrf.mxu0
      %v2798 = vadd.f32 %v2430, %v2797
      %v2799 = vpop.f32.mrf.mxu0
      %v2800 = vpop.f32.mrf.mxu0
      %v2801 = vadd.f32 %v2433, %v2800
      %v2802 = vpop.f32.mrf.mxu0
      %2803 = vmatprep.mubr.bf16.mxu0 0
      %2804 = vmatmul.mubr.bf16.gmra.mxu0 %v2691
      %v2805 = vpop.f32.mrf.mxu0
      %v2806 = vadd.f32 %v2438, %v2805
      %v2807 = vpop.f32.mrf.mxu0
      %v2808 = vpop.f32.mrf.mxu0
      %v2809 = vadd.f32 %v2441, %v2808
      %v2810 = vpop.f32.mrf.mxu0
      %2811 = vmatprep.mubr.bf16.mxu0 0
      %2812 = vmatmul.mubr.bf16.gmra.mxu0 %v2694
      %v2813 = vpop.f32.mrf.mxu0
      %v2814 = vadd.f32 %v2446, %v2813
      %v2815 = vpop.f32.mrf.mxu0
      %v2816 = vpop.f32.mrf.mxu0
      %v2817 = vadd.f32 %v2449, %v2816
      %v2818 = vpop.f32.mrf.mxu0
      %2819 = vmatprep.mubr.bf16.mxu0 0
      %2820 = vmatmul.mubr.bf16.gmra.mxu0 %v2697
      %v2821 = vpop.f32.mrf.mxu0
      %v2822 = vadd.f32 %v2454, %v2821
      %v2823 = vpop.f32.mrf.mxu0
      %v2824 = vpop.f32.mrf.mxu0
      %v2825 = vadd.f32 %v2457, %v2824
      %v2826 = vpop.f32.mrf.mxu0
      %2827 = vmatprep.mubr.bf16.mxu0 0
      %2828 = vmatmul.mubr.bf16.gmra.mxu0 %v2700
      %v2829 = vpop.f32.mrf.mxu0
      %v2830 = vadd.f32 %v2462, %v2829
      %v2831 = vpop.f32.mrf.mxu0
      %v2832 = vpop.f32.mrf.mxu0
      %v2833 = vadd.f32 %v2465, %v2832
      %v2834 = vpop.f32.mrf.mxu0
      %2835 = vmatprep.mubr.bf16.mxu0 0
      %2836 = vmatmul.mubr.bf16.gmra.mxu0 %v2703
      %v2837 = vpop.f32.mrf.mxu0
      %v2838 = vadd.f32 %v2470, %v2837
      %v2839 = vpop.f32.mrf.mxu0
      %v2840 = vpop.f32.mrf.mxu0
      %v2841 = vadd.f32 %v2473, %v2840
      %v2842 = vpop.f32.mrf.mxu0
      %2843 = vmatprep.mubr.bf16.mxu0 0
      %2844 = vmatmul.mubr.bf16.gmra.mxu0 %v2706
      %v2845 = vpop.f32.mrf.mxu0
      %v2846 = vadd.f32 %v2478, %v2845
      %v2847 = vpop.f32.mrf.mxu0
      %v2848 = vpop.f32.mrf.mxu0
      %v2849 = vadd.f32 %v2481, %v2848
      %v2850 = vpop.f32.mrf.mxu0
      %2851 = vmatprep.mubr.bf16.mxu0 0
      %2852 = vmatmul.mubr.bf16.gmra.mxu0 %v2709
      %v2853 = vpop.f32.mrf.mxu0
      %v2854 = vadd.f32 %v2486, %v2853
      %v2855 = vpop.f32.mrf.mxu0
      %v2856 = vpop.f32.mrf.mxu0
      %v2857 = vadd.f32 %v2489, %v2856
      %v2858 = vpop.f32.mrf.mxu0
      %2859 = vmatprep.mubr.bf16.mxu0 0
      %2860 = vmatmul.mubr.bf16.gmra.mxu0 %v2712
      %v2861 = vpop.f32.mrf.mxu0
      %v2862 = vadd.f32 %v2494, %v2861
      %v2863 = vpop.f32.mrf.mxu0
      %v2864 = vpop.f32.mrf.mxu0
      %v2865 = vadd.f32 %v2497, %v2864
      %v2866 = vpop.f32.mrf.mxu0
      %2867 = vmatprep.mubr.bf16.mxu0 0
      %2868 = vmatmul.mubr.bf16.gmra.mxu0 %v2715
      %v2869 = vpop.f32.mrf.mxu0
      %v2870 = vadd.f32 %v2502, %v2869
      %v2871 = vpop.f32.mrf.mxu0
      %v2872 = vpop.f32.mrf.mxu0
      %v2873 = vadd.f32 %v2505, %v2872
      %v2874 = vpop.f32.mrf.mxu0
      %2875 = vmatprep.mubr.bf16.mxu0 0
      %2876 = vmatmul.mubr.bf16.gmra.mxu0 %v2718
      %v2877 = vpop.f32.mrf.mxu0
      %v2878 = vadd.f32 %v2510, %v2877
      %v2879 = vpop.f32.mrf.mxu0
      %v2880 = vpop.f32.mrf.mxu0
      %v2881 = vadd.f32 %v2513, %v2880
      %v2882 = vpop.f32.mrf.mxu0
      %2883 = vdwg.mxu0
      %v2884 = vld [vmem:[#allocation2 + $0xf4] sm:$0xf]
      %s2885 = scalar_lea.vmem %s8, 8
      %v2886 = vld [vmem:[%s2885] sm:$0xf]
      %v2888 = vunpack.c.l.b16 %v2884
      %v2889 = vpack.c.b16 %v2888, %v2888
      %vm2890 = vsmask.f32 4352
      %v2892 = vshrl.u32 %v2251, 16
      %v2894 = vrot.slane %v2892, 3
      %v2895 = vshll.u32 %v2251, 16
      %v2897 = vrot.slane %v2895, 4
      %v2898 = vor.u32 %v2894, %v2897
      %v2899 = vrot.slane %v2529, 3
      %v2900 = vrot.slane %v2532, 4
      %v2901 = vor.u32 %v2899, %v2900
      %v2902 = vsel %vm2890, %v2898, %v2901
      %v2903 = vrot.slane %v2538, 3
      %v2904 = vrot.slane %v2541, 4
      %v2905 = vor.u32 %v2903, %v2904
      %v2906 = vsel %vm2890, %v2901, %v2905
      %v2907 = vrot.slane %v2547, 3
      %v2908 = vrot.slane %v2550, 4
      %v2909 = vor.u32 %v2907, %v2908
      %v2910 = vsel %vm2890, %v2905, %v2909
      %v2911 = vrot.slane %v2556, 3
      %v2912 = vrot.slane %v2559, 4
      %v2913 = vor.u32 %v2911, %v2912
      %v2914 = vsel %vm2890, %v2909, %v2913
      %v2915 = vrot.slane %v2565, 3
      %v2916 = vrot.slane %v2568, 4
      %v2917 = vor.u32 %v2915, %v2916
      %v2918 = vsel %vm2890, %v2913, %v2917
      %v2919 = vrot.slane %v2574, 3
      %v2920 = vrot.slane %v2577, 4
      %v2921 = vor.u32 %v2919, %v2920
      %v2922 = vsel %vm2890, %v2917, %v2921
      %v2923 = vrot.slane %v2583, 3
      %v2924 = vrot.slane %v2586, 4
      %v2925 = vor.u32 %v2923, %v2924
      %v2926 = vsel %vm2890, %v2921, %v2925
      %v2927 = vrot.slane %v2592, 3
      %v2928 = vrot.slane %v2595, 4
      %v2929 = vor.u32 %v2927, %v2928
      %v2930 = vsel %vm2890, %v2925, %v2929
      %v2931 = vrot.slane %v2601, 3
      %v2932 = vrot.slane %v2604, 4
      %v2933 = vor.u32 %v2931, %v2932
      %v2934 = vsel %vm2890, %v2929, %v2933
      %v2935 = vrot.slane %v2610, 3
      %v2936 = vrot.slane %v2613, 4
      %v2937 = vor.u32 %v2935, %v2936
      %v2938 = vsel %vm2890, %v2933, %v2937
      %v2939 = vrot.slane %v2619, 3
      %v2940 = vrot.slane %v2622, 4
      %v2941 = vor.u32 %v2939, %v2940
      %v2942 = vsel %vm2890, %v2937, %v2941
      %v2943 = vrot.slane %v2628, 3
      %v2944 = vrot.slane %v2631, 4
      %v2945 = vor.u32 %v2943, %v2944
      %v2946 = vsel %vm2890, %v2941, %v2945
      %v2947 = vrot.slane %v2637, 3
      %v2948 = vrot.slane %v2640, 4
      %v2949 = vor.u32 %v2947, %v2948
      %v2950 = vsel %vm2890, %v2945, %v2949
      %v2951 = vrot.slane %v2646, 3
      %v2952 = vrot.slane %v2649, 4
      %v2953 = vor.u32 %v2951, %v2952
      %v2954 = vsel %vm2890, %v2949, %v2953
      %v2955 = vrot.slane %v2655, 3
      %v2956 = vrot.slane %v2658, 4
      %v2957 = vor.u32 %v2955, %v2956
      %v2958 = vsel %vm2890, %v2953, %v2957
      %v2960 = vshrl.u32 %v2889, 16
      %v2962 = vrot.slane %v2960, 3
      %v2963 = vshll.u32 %v2889, 16
      %v2965 = vrot.slane %v2963, 4
      %v2966 = vor.u32 %v2962, %v2965
      %v2967 = vsel %vm2890, %v2957, %v2966
      %v2969 = vsel %vm2302, %v2902, 0
      %v2972 = vsel %vm2302, %v2906, 0
      %v2975 = vsel %vm2302, %v2910, 0
      %v2978 = vsel %vm2302, %v2914, 0
      %v2981 = vsel %vm2302, %v2918, 0
      %v2984 = vsel %vm2302, %v2922, 0
      %v2987 = vsel %vm2302, %v2926, 0
      %v2990 = vsel %vm2302, %v2930, 0
      %v2993 = vsel %vm2302, %v2934, 0
      %v2996 = vsel %vm2302, %v2938, 0
      %v2999 = vsel %vm2302, %v2942, 0
      %v3002 = vsel %vm2302, %v2946, 0
      %v3005 = vsel %vm2302, %v2950, 0
      %v3008 = vsel %vm2302, %v2954, 0
      %v3011 = vsel %vm2302, %v2958, 0
      %v3014 = vsel %vm2302, %v2967, 0
      %v3017 = vsel %vm2351, %v2886, 0
      %3019 = vmatprep.subr.bf16.mxu0 0
      %3020 = vmatpush1.bf16.msra.mxu0 0
      %3021 = vmatprep.subr.bf16.mxu0 0
      %3022 = vmatpush1.bf16.msra.mxu0 0
      %3023 = vmatprep.subr.bf16.mxu0 0
      %3024 = vmatpush1.bf16.msra.mxu0 0
      %3025 = vmatprep.subr.bf16.mxu0 0
      %3026 = vmatpush1.bf16.msra.mxu0 0
      %3027 = vmatprep.subr.bf16.mxu0 0
      %3028 = vmatpush1.bf16.msra.mxu0 0
      %3029 = vmatprep.subr.bf16.mxu0 0
      %3030 = vmatpush1.bf16.msra.mxu0 0
      %3031 = vmatprep.subr.bf16.mxu0 0
      %3032 = vmatpush1.bf16.msra.mxu0 0
      %3033 = vmatprep.subr.bf16.mxu0 0
      %3034 = vmatpush1.bf16.msra.mxu0 %v3017
      %3035 = vmatprep.subr.bf16.mxu0 0
      %3036 = vmatpush2.bf16.msra.mxu0 0
      %3037 = vmatprep.subr.bf16.mxu0 0
      %3038 = vmatpush2.bf16.msra.mxu0 0
      %3039 = vmatprep.subr.bf16.mxu0 0
      %3040 = vmatpush2.bf16.msra.mxu0 0
      %3041 = vmatprep.subr.bf16.mxu0 0
      %3042 = vmatpush2.bf16.msra.mxu0 0
      %3043 = vmatprep.subr.bf16.mxu0 0
      %3044 = vmatpush2.bf16.msra.mxu0 0
      %3045 = vmatprep.subr.bf16.mxu0 0
      %3046 = vmatpush2.bf16.msra.mxu0 0
      %3047 = vmatprep.subr.bf16.mxu0 0
      %3048 = vmatpush2.bf16.msra.mxu0 0
      %3049 = vmatprep.subr.bf16.mxu0 0
      %3050 = vmatpush2.bf16.msra.mxu0 0
      %3051 = vmatprep.mubr.bf16.mxu0 0
      %3052 = vmatmul.mubr.bf16.gmra.mxu0 %v2969
      %v3053 = vpop.f32.mrf.mxu0
      %v3054 = vadd.f32 0.0, %v3053
      %v3055 = vpop.f32.mrf.mxu0
      %v3056 = vpop.f32.mrf.mxu0
      %v3057 = vadd.f32 0.0, %v3056
      %v3058 = vpop.f32.mrf.mxu0
      %3059 = vmatprep.mubr.bf16.mxu0 0
      %3060 = vmatmul.mubr.bf16.gmra.mxu0 %v2972
      %v3061 = vpop.f32.mrf.mxu0
      %v3062 = vadd.f32 0.0, %v3061
      %v3063 = vpop.f32.mrf.mxu0
      %v3064 = vpop.f32.mrf.mxu0
      %v3065 = vadd.f32 0.0, %v3064
      %v3066 = vpop.f32.mrf.mxu0
      %3067 = vmatprep.mubr.bf16.mxu0 0
      %3068 = vmatmul.mubr.bf16.gmra.mxu0 %v2975
      %v3069 = vpop.f32.mrf.mxu0
      %v3070 = vadd.f32 0.0, %v3069
      %v3071 = vpop.f32.mrf.mxu0
      %v3072 = vpop.f32.mrf.mxu0
      %v3073 = vadd.f32 0.0, %v3072
      %v3074 = vpop.f32.mrf.mxu0
      %3075 = vmatprep.mubr.bf16.mxu0 0
      %3076 = vmatmul.mubr.bf16.gmra.mxu0 %v2978
      %v3077 = vpop.f32.mrf.mxu0
      %v3078 = vadd.f32 0.0, %v3077
      %v3079 = vpop.f32.mrf.mxu0
      %v3080 = vpop.f32.mrf.mxu0
      %v3081 = vadd.f32 0.0, %v3080
      %v3082 = vpop.f32.mrf.mxu0
      %3083 = vmatprep.mubr.bf16.mxu0 0
      %3084 = vmatmul.mubr.bf16.gmra.mxu0 %v2981
      %v3085 = vpop.f32.mrf.mxu0
      %v3086 = vadd.f32 0.0, %v3085
      %v3087 = vpop.f32.mrf.mxu0
      %v3088 = vpop.f32.mrf.mxu0
      %v3089 = vadd.f32 0.0, %v3088
      %v3090 = vpop.f32.mrf.mxu0
      %3091 = vmatprep.mubr.bf16.mxu0 0
      %3092 = vmatmul.mubr.bf16.gmra.mxu0 %v2984
      %v3093 = vpop.f32.mrf.mxu0
      %v3094 = vadd.f32 0.0, %v3093
      %v3095 = vpop.f32.mrf.mxu0
      %v3096 = vpop.f32.mrf.mxu0
      %v3097 = vadd.f32 0.0, %v3096
      %v3098 = vpop.f32.mrf.mxu0
      %3099 = vmatprep.mubr.bf16.mxu0 0
      %3100 = vmatmul.mubr.bf16.gmra.mxu0 %v2987
      %v3101 = vpop.f32.mrf.mxu0
      %v3102 = vadd.f32 0.0, %v3101
      %v3103 = vpop.f32.mrf.mxu0
      %v3104 = vpop.f32.mrf.mxu0
      %v3105 = vadd.f32 0.0, %v3104
      %v3106 = vpop.f32.mrf.mxu0
      %3107 = vmatprep.mubr.bf16.mxu0 0
      %3108 = vmatmul.mubr.bf16.gmra.mxu0 %v2990
      %v3109 = vpop.f32.mrf.mxu0
      %v3110 = vadd.f32 0.0, %v3109
      %v3111 = vpop.f32.mrf.mxu0
      %v3112 = vpop.f32.mrf.mxu0
      %v3113 = vadd.f32 0.0, %v3112
      %v3114 = vpop.f32.mrf.mxu0
      %3115 = vmatprep.mubr.bf16.mxu0 0
      %3116 = vmatmul.mubr.bf16.gmra.mxu0 %v2993
      %v3117 = vpop.f32.mrf.mxu0
      %v3118 = vadd.f32 0.0, %v3117
      %v3119 = vpop.f32.mrf.mxu0
      %v3120 = vpop.f32.mrf.mxu0
      %v3121 = vadd.f32 0.0, %v3120
      %v3122 = vpop.f32.mrf.mxu0
      %3123 = vmatprep.mubr.bf16.mxu0 0
      %3124 = vmatmul.mubr.bf16.gmra.mxu0 %v2996
      %v3125 = vpop.f32.mrf.mxu0
      %v3126 = vadd.f32 0.0, %v3125
      %v3127 = vpop.f32.mrf.mxu0
      %v3128 = vpop.f32.mrf.mxu0
      %v3129 = vadd.f32 0.0, %v3128
      %v3130 = vpop.f32.mrf.mxu0
      %3131 = vmatprep.mubr.bf16.mxu0 0
      %3132 = vmatmul.mubr.bf16.gmra.mxu0 %v2999
      %v3133 = vpop.f32.mrf.mxu0
      %v3134 = vadd.f32 0.0, %v3133
      %v3135 = vpop.f32.mrf.mxu0
      %v3136 = vpop.f32.mrf.mxu0
      %v3137 = vadd.f32 0.0, %v3136
      %v3138 = vpop.f32.mrf.mxu0
      %3139 = vmatprep.mubr.bf16.mxu0 0
      %3140 = vmatmul.mubr.bf16.gmra.mxu0 %v3002
      %v3141 = vpop.f32.mrf.mxu0
      %v3142 = vadd.f32 0.0, %v3141
      %v3143 = vpop.f32.mrf.mxu0
      %v3144 = vpop.f32.mrf.mxu0
      %v3145 = vadd.f32 0.0, %v3144
      %v3146 = vpop.f32.mrf.mxu0
      %3147 = vmatprep.mubr.bf16.mxu0 0
      %3148 = vmatmul.mubr.bf16.gmra.mxu0 %v3005
      %v3149 = vpop.f32.mrf.mxu0
      %v3150 = vadd.f32 0.0, %v3149
      %v3151 = vpop.f32.mrf.mxu0
      %v3152 = vpop.f32.mrf.mxu0
      %v3153 = vadd.f32 0.0, %v3152
      %v3154 = vpop.f32.mrf.mxu0
      %3155 = vmatprep.mubr.bf16.mxu0 0
      %3156 = vmatmul.mubr.bf16.gmra.mxu0 %v3008
      %v3157 = vpop.f32.mrf.mxu0
      %v3158 = vadd.f32 0.0, %v3157
      %v3159 = vpop.f32.mrf.mxu0
      %v3160 = vpop.f32.mrf.mxu0
      %v3161 = vadd.f32 0.0, %v3160
      %v3162 = vpop.f32.mrf.mxu0
      %3163 = vmatprep.mubr.bf16.mxu0 0
      %3164 = vmatmul.mubr.bf16.gmra.mxu0 %v3011
      %v3165 = vpop.f32.mrf.mxu0
      %v3166 = vadd.f32 0.0, %v3165
      %v3167 = vpop.f32.mrf.mxu0
      %v3168 = vpop.f32.mrf.mxu0
      %v3169 = vadd.f32 0.0, %v3168
      %v3170 = vpop.f32.mrf.mxu0
      %3171 = vmatprep.mubr.bf16.mxu0 0
      %3172 = vmatmul.mubr.bf16.gmra.mxu0 %v3014
      %v3173 = vpop.f32.mrf.mxu0
      %v3174 = vadd.f32 0.0, %v3173
      %v3175 = vpop.f32.mrf.mxu0
      %v3176 = vpop.f32.mrf.mxu0
      %v3177 = vadd.f32 0.0, %v3176
      %v3178 = vpop.f32.mrf.mxu0
      %3179 = vdwg.mxu0
      %v3180 = vadd.f32 %v2758, %v3054
      %v3181 = vadd.f32 %v2761, %v3057
      %v3182 = vadd.f32 %v2766, %v3062
      %v3183 = vadd.f32 %v2769, %v3065
      %v3184 = vadd.f32 %v2774, %v3070
      %v3185 = vadd.f32 %v2777, %v3073
      %v3186 = vadd.f32 %v2782, %v3078
      %v3187 = vadd.f32 %v2785, %v3081
      %v3188 = vadd.f32 %v2790, %v3086
      %v3189 = vadd.f32 %v2793, %v3089
      %v3190 = vadd.f32 %v2798, %v3094
      %v3191 = vadd.f32 %v2801, %v3097
      %v3192 = vadd.f32 %v2806, %v3102
      %v3193 = vadd.f32 %v2809, %v3105
      %v3194 = vadd.f32 %v2814, %v3110
      %v3195 = vadd.f32 %v2817, %v3113
      %v3196 = vadd.f32 %v2822, %v3118
      %v3197 = vadd.f32 %v2825, %v3121
      %v3198 = vadd.f32 %v2830, %v3126
      %v3199 = vadd.f32 %v2833, %v3129
      %v3200 = vadd.f32 %v2838, %v3134
      %v3201 = vadd.f32 %v2841, %v3137
      %v3202 = vadd.f32 %v2846, %v3142
      %v3203 = vadd.f32 %v2849, %v3145
      %v3204 = vadd.f32 %v2854, %v3150
      %v3205 = vadd.f32 %v2857, %v3153
      %v3206 = vadd.f32 %v2862, %v3158
      %v3207 = vadd.f32 %v2865, %v3161
      %v3208 = vadd.f32 %v2870, %v3166
      %v3209 = vadd.f32 %v2873, %v3169
      %v3210 = vadd.f32 %v2878, %v3174
      %v3211 = vadd.f32 %v2881, %v3177
      %v3212 = vld [vmem:[#allocation2 + $0x7c] sm:$0x8]
      %v3213 = vld [vmem:[#allocation2 + $0x80] sm:$0xf]
      %v3214 = vld [vmem:[#allocation2 + $0x84] sm:$0xf]
      %v3215 = vld [vmem:[#allocation2 + $0x88] sm:$0xf]
      %v3216 = vld [vmem:[#allocation2 + $0x8c] sm:$0xf]
      %v3217 = vld [vmem:[#allocation2 + $0x90] sm:$0xf]
      %v3218 = vld [vmem:[#allocation2 + $0x94] sm:$0xf]
      %v3219 = vld [vmem:[#allocation2 + $0x98] sm:$0xf]
      %v3220 = vld [vmem:[#allocation2 + $0x9c] sm:$0xf]
      %v3221 = vld [vmem:[#allocation2 + $0xa0] sm:$0xf]
      %v3222 = vld [vmem:[#allocation2 + $0xa4] sm:$0xf]
      %v3223 = vld [vmem:[#allocation2 + $0xa8] sm:$0xf]
      %v3224 = vld [vmem:[#allocation2 + $0xac] sm:$0xf]
      %v3225 = vld [vmem:[#allocation2 + $0xb0] sm:$0xf]
      %v3226 = vld [vmem:[#allocation2 + $0xb4] sm:$0xf]
      %v3227 = vld [vmem:[#allocation2 + $0xb8] sm:$0xf]
      %v3228 = vld [vmem:[#allocation2 + $0xbc] sm:$0xf]
      %v3229 = vld [vmem:[#allocation2 + $0xc0] sm:$0xf]
      %v3230 = vld [vmem:[#allocation2 + $0xc4] sm:$0xf]
      %v3231 = vld [vmem:[#allocation2 + $0xc8] sm:$0xf]
      %v3232 = vld [vmem:[#allocation2 + $0xcc] sm:$0xf]
      %v3233 = vld [vmem:[#allocation2 + $0xd0] sm:$0xf]
      %v3234 = vld [vmem:[#allocation2 + $0xd4] sm:$0xf]
      %v3235 = vld [vmem:[#allocation2 + $0xd8] sm:$0xf]
      %v3236 = vld [vmem:[#allocation2 + $0xdc] sm:$0xf]
      %v3237 = vld [vmem:[#allocation2 + $0xe0] sm:$0xf]
      %v3238 = vld [vmem:[#allocation2 + $0xe4] sm:$0xf]
      %v3239 = vld [vmem:[#allocation2 + $0xe8] sm:$0xf]
      %v3240 = vld [vmem:[#allocation2 + $0xec] sm:$0xf]
      %v3241 = vld [vmem:[#allocation2 + $0xf0] sm:$0xf]
      %v3242 = vld [vmem:[#allocation2 + $0xf4] sm:$0xf]
      %v3243 = vld [vmem:[#allocation2 + $0xf8] sm:$0xf]
      %v3244 = vld [vmem:[#allocation2 + $0xfc] sm:$0xf]
      %s3245 = scalar_lea.vmem %s8, 12
      %v3246 = vld [vmem:[%s3245] sm:$0xf]
      %v3280 = vunpack.c.l.b16 %v3212
      %v3281 = vunpack.c.l.b16 %v3213
      %v3282 = vunpack.c.l.b16 %v3214
      %v3283 = vunpack.c.l.b16 %v3215
      %v3284 = vunpack.c.l.b16 %v3216
      %v3285 = vunpack.c.l.b16 %v3217
      %v3286 = vunpack.c.l.b16 %v3218
      %v3287 = vunpack.c.l.b16 %v3219
      %v3288 = vunpack.c.l.b16 %v3220
      %v3289 = vunpack.c.l.b16 %v3221
      %v3290 = vunpack.c.l.b16 %v3222
      %v3291 = vunpack.c.l.b16 %v3223
      %v3292 = vunpack.c.l.b16 %v3224
      %v3293 = vunpack.c.l.b16 %v3225
      %v3294 = vunpack.c.l.b16 %v3226
      %v3295 = vunpack.c.l.b16 %v3227
      %v3296 = vunpack.c.l.b16 %v3228
      %v3297 = vunpack.c.l.b16 %v3229
      %v3298 = vunpack.c.l.b16 %v3230
      %v3299 = vunpack.c.l.b16 %v3231
      %v3300 = vunpack.c.l.b16 %v3232
      %v3301 = vunpack.c.l.b16 %v3233
      %v3302 = vunpack.c.l.b16 %v3234
      %v3303 = vunpack.c.l.b16 %v3235
      %v3304 = vunpack.c.l.b16 %v3236
      %v3305 = vunpack.c.l.b16 %v3237
      %v3306 = vunpack.c.l.b16 %v3238
      %v3307 = vunpack.c.l.b16 %v3239
      %v3308 = vunpack.c.l.b16 %v3240
      %v3309 = vunpack.c.l.b16 %v3241
      %v3310 = vunpack.c.l.b16 %v3242
      %v3311 = vunpack.c.l.b16 %v3243
      %v3312 = vunpack.c.l.b16 %v3244
      %v3313 = vpack.c.b16 %v3281, %v3280
      %v3314 = vpack.c.b16 %v3283, %v3282
      %v3315 = vpack.c.b16 %v3285, %v3284
      %v3316 = vpack.c.b16 %v3287, %v3286
      %v3317 = vpack.c.b16 %v3289, %v3288
      %v3318 = vpack.c.b16 %v3291, %v3290
      %v3319 = vpack.c.b16 %v3293, %v3292
      %v3320 = vpack.c.b16 %v3295, %v3294
      %v3321 = vpack.c.b16 %v3297, %v3296
      %v3322 = vpack.c.b16 %v3299, %v3298
      %v3323 = vpack.c.b16 %v3301, %v3300
      %v3324 = vpack.c.b16 %v3303, %v3302
      %v3325 = vpack.c.b16 %v3305, %v3304
      %v3326 = vpack.c.b16 %v3307, %v3306
      %v3327 = vpack.c.b16 %v3309, %v3308
      %v3328 = vpack.c.b16 %v3311, %v3310
      %v3329 = vpack.c.b16 %v3312, %v3312
      %v3331 = vshrl.u32 %v3313, 16
      %v3333 = vrot.slane %v3331, 3
      %v3334 = vshll.u32 %v3313, 16
      %v3336 = vrot.slane %v3334, 4
      %v3337 = vor.u32 %v3333, %v3336
      %v3339 = vshrl.u32 %v3314, 16
      %v3341 = vrot.slane %v3339, 3
      %v3342 = vshll.u32 %v3314, 16
      %v3344 = vrot.slane %v3342, 4
      %v3345 = vor.u32 %v3341, %v3344
      %v3346 = vsel %vm2890, %v3337, %v3345
      %v3348 = vshrl.u32 %v3315, 16
      %v3350 = vrot.slane %v3348, 3
      %v3351 = vshll.u32 %v3315, 16
      %v3353 = vrot.slane %v3351, 4
      %v3354 = vor.u32 %v3350, %v3353
      %v3355 = vsel %vm2890, %v3345, %v3354
      %v3357 = vshrl.u32 %v3316, 16
      %v3359 = vrot.slane %v3357, 3
      %v3360 = vshll.u32 %v3316, 16
      %v3362 = vrot.slane %v3360, 4
      %v3363 = vor.u32 %v3359, %v3362
      %v3364 = vsel %vm2890, %v3354, %v3363
      %v3366 = vshrl.u32 %v3317, 16
      %v3368 = vrot.slane %v3366, 3
      %v3369 = vshll.u32 %v3317, 16
      %v3371 = vrot.slane %v3369, 4
      %v3372 = vor.u32 %v3368, %v3371
      %v3373 = vsel %vm2890, %v3363, %v3372
      %v3375 = vshrl.u32 %v3318, 16
      %v3377 = vrot.slane %v3375, 3
      %v3378 = vshll.u32 %v3318, 16
      %v3380 = vrot.slane %v3378, 4
      %v3381 = vor.u32 %v3377, %v3380
      %v3382 = vsel %vm2890, %v3372, %v3381
      %v3384 = vshrl.u32 %v3319, 16
      %v3386 = vrot.slane %v3384, 3
      %v3387 = vshll.u32 %v3319, 16
      %v3389 = vrot.slane %v3387, 4
      %v3390 = vor.u32 %v3386, %v3389
      %v3391 = vsel %vm2890, %v3381, %v3390
      %v3393 = vshrl.u32 %v3320, 16
      %v3395 = vrot.slane %v3393, 3
      %v3396 = vshll.u32 %v3320, 16
      %v3398 = vrot.slane %v3396, 4
      %v3399 = vor.u32 %v3395, %v3398
      %v3400 = vsel %vm2890, %v3390, %v3399
      %v3402 = vshrl.u32 %v3321, 16
      %v3404 = vrot.slane %v3402, 3
      %v3405 = vshll.u32 %v3321, 16
      %v3407 = vrot.slane %v3405, 4
      %v3408 = vor.u32 %v3404, %v3407
      %v3409 = vsel %vm2890, %v3399, %v3408
      %v3411 = vshrl.u32 %v3322, 16
      %v3413 = vrot.slane %v3411, 3
      %v3414 = vshll.u32 %v3322, 16
      %v3416 = vrot.slane %v3414, 4
      %v3417 = vor.u32 %v3413, %v3416
      %v3418 = vsel %vm2890, %v3408, %v3417
      %v3420 = vshrl.u32 %v3323, 16
      %v3422 = vrot.slane %v3420, 3
      %v3423 = vshll.u32 %v3323, 16
      %v3425 = vrot.slane %v3423, 4
      %v3426 = vor.u32 %v3422, %v3425
      %v3427 = vsel %vm2890, %v3417, %v3426
      %v3429 = vshrl.u32 %v3324, 16
      %v3431 = vrot.slane %v3429, 3
      %v3432 = vshll.u32 %v3324, 16
      %v3434 = vrot.slane %v3432, 4
      %v3435 = vor.u32 %v3431, %v3434
      %v3436 = vsel %vm2890, %v3426, %v3435
      %v3438 = vshrl.u32 %v3325, 16
      %v3440 = vrot.slane %v3438, 3
      %v3441 = vshll.u32 %v3325, 16
      %v3443 = vrot.slane %v3441, 4
      %v3444 = vor.u32 %v3440, %v3443
      %v3445 = vsel %vm2890, %v3435, %v3444
      %v3447 = vshrl.u32 %v3326, 16
      %v3449 = vrot.slane %v3447, 3
      %v3450 = vshll.u32 %v3326, 16
      %v3452 = vrot.slane %v3450, 4
      %v3453 = vor.u32 %v3449, %v3452
      %v3454 = vsel %vm2890, %v3444, %v3453
      %v3456 = vshrl.u32 %v3327, 16
      %v3458 = vrot.slane %v3456, 3
      %v3459 = vshll.u32 %v3327, 16
      %v3461 = vrot.slane %v3459, 4
      %v3462 = vor.u32 %v3458, %v3461
      %v3463 = vsel %vm2890, %v3453, %v3462
      %v3465 = vshrl.u32 %v3328, 16
      %v3467 = vrot.slane %v3465, 3
      %v3468 = vshll.u32 %v3328, 16
      %v3470 = vrot.slane %v3468, 4
      %v3471 = vor.u32 %v3467, %v3470
      %v3472 = vsel %vm2890, %v3462, %v3471
      %v3474 = vshrl.u32 %v3329, 16
      %v3476 = vrot.slane %v3474, 3
      %v3477 = vshll.u32 %v3329, 16
      %v3479 = vrot.slane %v3477, 4
      %v3480 = vor.u32 %v3476, %v3479
      %v3481 = vsel %vm2890, %v3471, %v3480
      %v3483 = vsel %vm2302, %v3346, 0
      %v3486 = vsel %vm2302, %v3355, 0
      %v3489 = vsel %vm2302, %v3364, 0
      %v3492 = vsel %vm2302, %v3373, 0
      %v3495 = vsel %vm2302, %v3382, 0
      %v3498 = vsel %vm2302, %v3391, 0
      %v3501 = vsel %vm2302, %v3400, 0
      %v3504 = vsel %vm2302, %v3409, 0
      %v3507 = vsel %vm2302, %v3418, 0
      %v3510 = vsel %vm2302, %v3427, 0
      %v3513 = vsel %vm2302, %v3436, 0
      %v3516 = vsel %vm2302, %v3445, 0
      %v3519 = vsel %vm2302, %v3454, 0
      %v3522 = vsel %vm2302, %v3463, 0
      %v3525 = vsel %vm2302, %v3472, 0
      %v3528 = vsel %vm2302, %v3481, 0
      %v3531 = vsel %vm2351, %v3246, 0
      %3533 = vmatprep.subr.bf16.mxu0 0
      %3534 = vmatpush1.bf16.msra.mxu0 0
      %3535 = vmatprep.subr.bf16.mxu0 0
      %3536 = vmatpush1.bf16.msra.mxu0 0
      %3537 = vmatprep.subr.bf16.mxu0 0
      %3538 = vmatpush1.bf16.msra.mxu0 0
      %3539 = vmatprep.subr.bf16.mxu0 0
      %3540 = vmatpush1.bf16.msra.mxu0 0
      %3541 = vmatprep.subr.bf16.mxu0 0
      %3542 = vmatpush1.bf16.msra.mxu0 0
      %3543 = vmatprep.subr.bf16.mxu0 0
      %3544 = vmatpush1.bf16.msra.mxu0 0
      %3545 = vmatprep.subr.bf16.mxu0 0
      %3546 = vmatpush1.bf16.msra.mxu0 0
      %3547 = vmatprep.subr.bf16.mxu0 0
      %3548 = vmatpush1.bf16.msra.mxu0 %v3531
      %3549 = vmatprep.subr.bf16.mxu0 0
      %3550 = vmatpush2.bf16.msra.mxu0 0
      %3551 = vmatprep.subr.bf16.mxu0 0
      %3552 = vmatpush2.bf16.msra.mxu0 0
      %3553 = vmatprep.subr.bf16.mxu0 0
      %3554 = vmatpush2.bf16.msra.mxu0 0
      %3555 = vmatprep.subr.bf16.mxu0 0
      %3556 = vmatpush2.bf16.msra.mxu0 0
      %3557 = vmatprep.subr.bf16.mxu0 0
      %3558 = vmatpush2.bf16.msra.mxu0 0
      %3559 = vmatprep.subr.bf16.mxu0 0
      %3560 = vmatpush2.bf16.msra.mxu0 0
      %3561 = vmatprep.subr.bf16.mxu0 0
      %3562 = vmatpush2.bf16.msra.mxu0 0
      %3563 = vmatprep.subr.bf16.mxu0 0
      %3564 = vmatpush2.bf16.msra.mxu0 0
      %3565 = vmatprep.mubr.bf16.mxu0 0
      %3566 = vmatmul.mubr.bf16.gmra.mxu0 %v3483
      %v3567 = vpop.f32.mrf.mxu0
      %v3568 = vadd.f32 0.0, %v3567
      %v3569 = vpop.f32.mrf.mxu0
      %v3570 = vpop.f32.mrf.mxu0
      %v3571 = vadd.f32 0.0, %v3570
      %v3572 = vpop.f32.mrf.mxu0
      %3573 = vmatprep.mubr.bf16.mxu0 0
      %3574 = vmatmul.mubr.bf16.gmra.mxu0 %v3486
      %v3575 = vpop.f32.mrf.mxu0
      %v3576 = vadd.f32 0.0, %v3575
      %v3577 = vpop.f32.mrf.mxu0
      %v3578 = vpop.f32.mrf.mxu0
      %v3579 = vadd.f32 0.0, %v3578
      %v3580 = vpop.f32.mrf.mxu0
      %3581 = vmatprep.mubr.bf16.mxu0 0
      %3582 = vmatmul.mubr.bf16.gmra.mxu0 %v3489
      %v3583 = vpop.f32.mrf.mxu0
      %v3584 = vadd.f32 0.0, %v3583
      %v3585 = vpop.f32.mrf.mxu0
      %v3586 = vpop.f32.mrf.mxu0
      %v3587 = vadd.f32 0.0, %v3586
      %v3588 = vpop.f32.mrf.mxu0
      %3589 = vmatprep.mubr.bf16.mxu0 0
      %3590 = vmatmul.mubr.bf16.gmra.mxu0 %v3492
      %v3591 = vpop.f32.mrf.mxu0
      %v3592 = vadd.f32 0.0, %v3591
      %v3593 = vpop.f32.mrf.mxu0
      %v3594 = vpop.f32.mrf.mxu0
      %v3595 = vadd.f32 0.0, %v3594
      %v3596 = vpop.f32.mrf.mxu0
      %3597 = vmatprep.mubr.bf16.mxu0 0
      %3598 = vmatmul.mubr.bf16.gmra.mxu0 %v3495
      %v3599 = vpop.f32.mrf.mxu0
      %v3600 = vadd.f32 0.0, %v3599
      %v3601 = vpop.f32.mrf.mxu0
      %v3602 = vpop.f32.mrf.mxu0
      %v3603 = vadd.f32 0.0, %v3602
      %v3604 = vpop.f32.mrf.mxu0
      %3605 = vmatprep.mubr.bf16.mxu0 0
      %3606 = vmatmul.mubr.bf16.gmra.mxu0 %v3498
      %v3607 = vpop.f32.mrf.mxu0
      %v3608 = vadd.f32 0.0, %v3607
      %v3609 = vpop.f32.mrf.mxu0
      %v3610 = vpop.f32.mrf.mxu0
      %v3611 = vadd.f32 0.0, %v3610
      %v3612 = vpop.f32.mrf.mxu0
      %3613 = vmatprep.mubr.bf16.mxu0 0
      %3614 = vmatmul.mubr.bf16.gmra.mxu0 %v3501
      %v3615 = vpop.f32.mrf.mxu0
      %v3616 = vadd.f32 0.0, %v3615
      %v3617 = vpop.f32.mrf.mxu0
      %v3618 = vpop.f32.mrf.mxu0
      %v3619 = vadd.f32 0.0, %v3618
      %v3620 = vpop.f32.mrf.mxu0
      %3621 = vmatprep.mubr.bf16.mxu0 0
      %3622 = vmatmul.mubr.bf16.gmra.mxu0 %v3504
      %v3623 = vpop.f32.mrf.mxu0
      %v3624 = vadd.f32 0.0, %v3623
      %v3625 = vpop.f32.mrf.mxu0
      %v3626 = vpop.f32.mrf.mxu0
      %v3627 = vadd.f32 0.0, %v3626
      %v3628 = vpop.f32.mrf.mxu0
      %3629 = vmatprep.mubr.bf16.mxu0 0
      %3630 = vmatmul.mubr.bf16.gmra.mxu0 %v3507
      %v3631 = vpop.f32.mrf.mxu0
      %v3632 = vadd.f32 0.0, %v3631
      %v3633 = vpop.f32.mrf.mxu0
      %v3634 = vpop.f32.mrf.mxu0
      %v3635 = vadd.f32 0.0, %v3634
      %v3636 = vpop.f32.mrf.mxu0
      %3637 = vmatprep.mubr.bf16.mxu0 0
      %3638 = vmatmul.mubr.bf16.gmra.mxu0 %v3510
      %v3639 = vpop.f32.mrf.mxu0
      %v3640 = vadd.f32 0.0, %v3639
      %v3641 = vpop.f32.mrf.mxu0
      %v3642 = vpop.f32.mrf.mxu0
      %v3643 = vadd.f32 0.0, %v3642
      %v3644 = vpop.f32.mrf.mxu0
      %3645 = vmatprep.mubr.bf16.mxu0 0
      %3646 = vmatmul.mubr.bf16.gmra.mxu0 %v3513
      %v3647 = vpop.f32.mrf.mxu0
      %v3648 = vadd.f32 0.0, %v3647
      %v3649 = vpop.f32.mrf.mxu0
      %v3650 = vpop.f32.mrf.mxu0
      %v3651 = vadd.f32 0.0, %v3650
      %v3652 = vpop.f32.mrf.mxu0
      %3653 = vmatprep.mubr.bf16.mxu0 0
      %3654 = vmatmul.mubr.bf16.gmra.mxu0 %v3516
      %v3655 = vpop.f32.mrf.mxu0
      %v3656 = vadd.f32 0.0, %v3655
      %v3657 = vpop.f32.mrf.mxu0
      %v3658 = vpop.f32.mrf.mxu0
      %v3659 = vadd.f32 0.0, %v3658
      %v3660 = vpop.f32.mrf.mxu0
      %3661 = vmatprep.mubr.bf16.mxu0 0
      %3662 = vmatmul.mubr.bf16.gmra.mxu0 %v3519
      %v3663 = vpop.f32.mrf.mxu0
      %v3664 = vadd.f32 0.0, %v3663
      %v3665 = vpop.f32.mrf.mxu0
      %v3666 = vpop.f32.mrf.mxu0
      %v3667 = vadd.f32 0.0, %v3666
      %v3668 = vpop.f32.mrf.mxu0
      %3669 = vmatprep.mubr.bf16.mxu0 0
      %3670 = vmatmul.mubr.bf16.gmra.mxu0 %v3522
      %v3671 = vpop.f32.mrf.mxu0
      %v3672 = vadd.f32 0.0, %v3671
      %v3673 = vpop.f32.mrf.mxu0
      %v3674 = vpop.f32.mrf.mxu0
      %v3675 = vadd.f32 0.0, %v3674
      %v3676 = vpop.f32.mrf.mxu0
      %3677 = vmatprep.mubr.bf16.mxu0 0
      %3678 = vmatmul.mubr.bf16.gmra.mxu0 %v3525
      %v3679 = vpop.f32.mrf.mxu0
      %v3680 = vadd.f32 0.0, %v3679
      %v3681 = vpop.f32.mrf.mxu0
      %v3682 = vpop.f32.mrf.mxu0
      %v3683 = vadd.f32 0.0, %v3682
      %v3684 = vpop.f32.mrf.mxu0
      %3685 = vmatprep.mubr.bf16.mxu0 0
      %3686 = vmatmul.mubr.bf16.gmra.mxu0 %v3528
      %v3687 = vpop.f32.mrf.mxu0
      %v3688 = vadd.f32 0.0, %v3687
      %v3689 = vpop.f32.mrf.mxu0
      %v3690 = vpop.f32.mrf.mxu0
      %v3691 = vadd.f32 0.0, %v3690
      %v3692 = vpop.f32.mrf.mxu0
      %3693 = vdwg.mxu0
      %v3694 = vadd.f32 %v3180, %v3568
      %v3695 = vadd.f32 %v3181, %v3571
      %v3696 = vadd.f32 %v3182, %v3576
      %v3697 = vadd.f32 %v3183, %v3579
      %v3698 = vadd.f32 %v3184, %v3584
      %v3699 = vadd.f32 %v3185, %v3587
      %v3700 = vadd.f32 %v3186, %v3592
      %v3701 = vadd.f32 %v3187, %v3595
      %v3702 = vadd.f32 %v3188, %v3600
      %v3703 = vadd.f32 %v3189, %v3603
      %v3704 = vadd.f32 %v3190, %v3608
      %v3705 = vadd.f32 %v3191, %v3611
      %v3706 = vadd.f32 %v3192, %v3616
      %v3707 = vadd.f32 %v3193, %v3619
      %v3708 = vadd.f32 %v3194, %v3624
      %v3709 = vadd.f32 %v3195, %v3627
      %v3710 = vadd.f32 %v3196, %v3632
      %v3711 = vadd.f32 %v3197, %v3635
      %v3712 = vadd.f32 %v3198, %v3640
      %v3713 = vadd.f32 %v3199, %v3643
      %v3714 = vadd.f32 %v3200, %v3648
      %v3715 = vadd.f32 %v3201, %v3651
      %v3716 = vadd.f32 %v3202, %v3656
      %v3717 = vadd.f32 %v3203, %v3659
      %v3718 = vadd.f32 %v3204, %v3664
      %v3719 = vadd.f32 %v3205, %v3667
      %v3720 = vadd.f32 %v3206, %v3672
      %v3721 = vadd.f32 %v3207, %v3675
      %v3722 = vadd.f32 %v3208, %v3680
      %v3723 = vadd.f32 %v3209, %v3683
      %v3724 = vadd.f32 %v3210, %v3688
      %v3725 = vadd.f32 %v3211, %v3691
      %s3726 = scalar_lea.vmem %s8, 16
      %v3727 = vld [vmem:[%s3726] sm:$0xf]
      %v3728 = vpack.c.b16 %v3282, %v3281
      %v3729 = vpack.c.b16 %v3284, %v3283
      %v3730 = vpack.c.b16 %v3286, %v3285
      %v3731 = vpack.c.b16 %v3288, %v3287
      %v3732 = vpack.c.b16 %v3290, %v3289
      %v3733 = vpack.c.b16 %v3292, %v3291
      %v3734 = vpack.c.b16 %v3294, %v3293
      %v3735 = vpack.c.b16 %v3296, %v3295
      %v3736 = vpack.c.b16 %v3298, %v3297
      %v3737 = vpack.c.b16 %v3300, %v3299
      %v3738 = vpack.c.b16 %v3302, %v3301
      %v3739 = vpack.c.b16 %v3304, %v3303
      %v3740 = vpack.c.b16 %v3306, %v3305
      %v3741 = vpack.c.b16 %v3308, %v3307
      %v3742 = vpack.c.b16 %v3310, %v3309
      %v3743 = vpack.c.b16 %v3312, %v3311
      %v3745 = vsel %vm2302, %v3728, 0
      %v3748 = vsel %vm2302, %v3729, 0
      %v3751 = vsel %vm2302, %v3730, 0
      %v3754 = vsel %vm2302, %v3731, 0
      %v3757 = vsel %vm2302, %v3732, 0
      %v3760 = vsel %vm2302, %v3733, 0
      %v3763 = vsel %vm2302, %v3734, 0
      %v3766 = vsel %vm2302, %v3735, 0
      %v3769 = vsel %vm2302, %v3736, 0
      %v3772 = vsel %vm2302, %v3737, 0
      %v3775 = vsel %vm2302, %v3738, 0
      %v3778 = vsel %vm2302, %v3739, 0
      %v3781 = vsel %vm2302, %v3740, 0
      %v3784 = vsel %vm2302, %v3741, 0
      %v3787 = vsel %vm2302, %v3742, 0
      %v3790 = vsel %vm2302, %v3743, 0
      %v3793 = vsel %vm2351, %v3727, 0
      %3795 = vmatprep.subr.bf16.mxu0 0
      %3796 = vmatpush1.bf16.msra.mxu0 0
      %3797 = vmatprep.subr.bf16.mxu0 0
      %3798 = vmatpush1.bf16.msra.mxu0 0
      %3799 = vmatprep.subr.bf16.mxu0 0
      %3800 = vmatpush1.bf16.msra.mxu0 0
      %3801 = vmatprep.subr.bf16.mxu0 0
      %3802 = vmatpush1.bf16.msra.mxu0 0
      %3803 = vmatprep.subr.bf16.mxu0 0
      %3804 = vmatpush1.bf16.msra.mxu0 0
      %3805 = vmatprep.subr.bf16.mxu0 0
      %3806 = vmatpush1.bf16.msra.mxu0 0
      %3807 = vmatprep.subr.bf16.mxu0 0
      %3808 = vmatpush1.bf16.msra.mxu0 0
      %3809 = vmatprep.subr.bf16.mxu0 0
      %3810 = vmatpush1.bf16.msra.mxu0 %v3793
      %3811 = vmatprep.subr.bf16.mxu0 0
      %3812 = vmatpush2.bf16.msra.mxu0 0
      %3813 = vmatprep.subr.bf16.mxu0 0
      %3814 = vmatpush2.bf16.msra.mxu0 0
      %3815 = vmatprep.subr.bf16.mxu0 0
      %3816 = vmatpush2.bf16.msra.mxu0 0
      %3817 = vmatprep.subr.bf16.mxu0 0
      %3818 = vmatpush2.bf16.msra.mxu0 0
      %3819 = vmatprep.subr.bf16.mxu0 0
      %3820 = vmatpush2.bf16.msra.mxu0 0
      %3821 = vmatprep.subr.bf16.mxu0 0
      %3822 = vmatpush2.bf16.msra.mxu0 0
      %3823 = vmatprep.subr.bf16.mxu0 0
      %3824 = vmatpush2.bf16.msra.mxu0 0
      %3825 = vmatprep.subr.bf16.mxu0 0
      %3826 = vmatpush2.bf16.msra.mxu0 0
      %3827 = vmatprep.mubr.bf16.mxu0 0
      %3828 = vmatmul.mubr.bf16.gmra.mxu0 %v3745
      %v3829 = vpop.f32.mrf.mxu0
      %v3830 = vadd.f32 0.0, %v3829
      %v3831 = vpop.f32.mrf.mxu0
      %v3832 = vpop.f32.mrf.mxu0
      %v3833 = vadd.f32 0.0, %v3832
      %v3834 = vpop.f32.mrf.mxu0
      %3835 = vmatprep.mubr.bf16.mxu0 0
      %3836 = vmatmul.mubr.bf16.gmra.mxu0 %v3748
      %v3837 = vpop.f32.mrf.mxu0
      %v3838 = vadd.f32 0.0, %v3837
      %v3839 = vpop.f32.mrf.mxu0
      %v3840 = vpop.f32.mrf.mxu0
      %v3841 = vadd.f32 0.0, %v3840
      %v3842 = vpop.f32.mrf.mxu0
      %3843 = vmatprep.mubr.bf16.mxu0 0
      %3844 = vmatmul.mubr.bf16.gmra.mxu0 %v3751
      %v3845 = vpop.f32.mrf.mxu0
      %v3846 = vadd.f32 0.0, %v3845
      %v3847 = vpop.f32.mrf.mxu0
      %v3848 = vpop.f32.mrf.mxu0
      %v3849 = vadd.f32 0.0, %v3848
      %v3850 = vpop.f32.mrf.mxu0
      %3851 = vmatprep.mubr.bf16.mxu0 0
      %3852 = vmatmul.mubr.bf16.gmra.mxu0 %v3754
      %v3853 = vpop.f32.mrf.mxu0
      %v3854 = vadd.f32 0.0, %v3853
      %v3855 = vpop.f32.mrf.mxu0
      %v3856 = vpop.f32.mrf.mxu0
      %v3857 = vadd.f32 0.0, %v3856
      %v3858 = vpop.f32.mrf.mxu0
      %3859 = vmatprep.mubr.bf16.mxu0 0
      %3860 = vmatmul.mubr.bf16.gmra.mxu0 %v3757
      %v3861 = vpop.f32.mrf.mxu0
      %v3862 = vadd.f32 0.0, %v3861
      %v3863 = vpop.f32.mrf.mxu0
      %v3864 = vpop.f32.mrf.mxu0
      %v3865 = vadd.f32 0.0, %v3864
      %v3866 = vpop.f32.mrf.mxu0
      %3867 = vmatprep.mubr.bf16.mxu0 0
      %3868 = vmatmul.mubr.bf16.gmra.mxu0 %v3760
      %v3869 = vpop.f32.mrf.mxu0
      %v3870 = vadd.f32 0.0, %v3869
      %v3871 = vpop.f32.mrf.mxu0
      %v3872 = vpop.f32.mrf.mxu0
      %v3873 = vadd.f32 0.0, %v3872
      %v3874 = vpop.f32.mrf.mxu0
      %3875 = vmatprep.mubr.bf16.mxu0 0
      %3876 = vmatmul.mubr.bf16.gmra.mxu0 %v3763
      %v3877 = vpop.f32.mrf.mxu0
      %v3878 = vadd.f32 0.0, %v3877
      %v3879 = vpop.f32.mrf.mxu0
      %v3880 = vpop.f32.mrf.mxu0
      %v3881 = vadd.f32 0.0, %v3880
      %v3882 = vpop.f32.mrf.mxu0
      %3883 = vmatprep.mubr.bf16.mxu0 0
      %3884 = vmatmul.mubr.bf16.gmra.mxu0 %v3766
      %v3885 = vpop.f32.mrf.mxu0
      %v3886 = vadd.f32 0.0, %v3885
      %v3887 = vpop.f32.mrf.mxu0
      %v3888 = vpop.f32.mrf.mxu0
      %v3889 = vadd.f32 0.0, %v3888
      %v3890 = vpop.f32.mrf.mxu0
      %3891 = vmatprep.mubr.bf16.mxu0 0
      %3892 = vmatmul.mubr.bf16.gmra.mxu0 %v3769
      %v3893 = vpop.f32.mrf.mxu0
      %v3894 = vadd.f32 0.0, %v3893
      %v3895 = vpop.f32.mrf.mxu0
      %v3896 = vpop.f32.mrf.mxu0
      %v3897 = vadd.f32 0.0, %v3896
      %v3898 = vpop.f32.mrf.mxu0
      %3899 = vmatprep.mubr.bf16.mxu0 0
      %3900 = vmatmul.mubr.bf16.gmra.mxu0 %v3772
      %v3901 = vpop.f32.mrf.mxu0
      %v3902 = vadd.f32 0.0, %v3901
      %v3903 = vpop.f32.mrf.mxu0
      %v3904 = vpop.f32.mrf.mxu0
      %v3905 = vadd.f32 0.0, %v3904
      %v3906 = vpop.f32.mrf.mxu0
      %3907 = vmatprep.mubr.bf16.mxu0 0
      %3908 = vmatmul.mubr.bf16.gmra.mxu0 %v3775
      %v3909 = vpop.f32.mrf.mxu0
      %v3910 = vadd.f32 0.0, %v3909
      %v3911 = vpop.f32.mrf.mxu0
      %v3912 = vpop.f32.mrf.mxu0
      %v3913 = vadd.f32 0.0, %v3912
      %v3914 = vpop.f32.mrf.mxu0
      %3915 = vmatprep.mubr.bf16.mxu0 0
      %3916 = vmatmul.mubr.bf16.gmra.mxu0 %v3778
      %v3917 = vpop.f32.mrf.mxu0
      %v3918 = vadd.f32 0.0, %v3917
      %v3919 = vpop.f32.mrf.mxu0
      %v3920 = vpop.f32.mrf.mxu0
      %v3921 = vadd.f32 0.0, %v3920
      %v3922 = vpop.f32.mrf.mxu0
      %3923 = vmatprep.mubr.bf16.mxu0 0
      %3924 = vmatmul.mubr.bf16.gmra.mxu0 %v3781
      %v3925 = vpop.f32.mrf.mxu0
      %v3926 = vadd.f32 0.0, %v3925
      %v3927 = vpop.f32.mrf.mxu0
      %v3928 = vpop.f32.mrf.mxu0
      %v3929 = vadd.f32 0.0, %v3928
      %v3930 = vpop.f32.mrf.mxu0
      %3931 = vmatprep.mubr.bf16.mxu0 0
      %3932 = vmatmul.mubr.bf16.gmra.mxu0 %v3784
      %v3933 = vpop.f32.mrf.mxu0
      %v3934 = vadd.f32 0.0, %v3933
      %v3935 = vpop.f32.mrf.mxu0
      %v3936 = vpop.f32.mrf.mxu0
      %v3937 = vadd.f32 0.0, %v3936
      %v3938 = vpop.f32.mrf.mxu0
      %3939 = vmatprep.mubr.bf16.mxu0 0
      %3940 = vmatmul.mubr.bf16.gmra.mxu0 %v3787
      %v3941 = vpop.f32.mrf.mxu0
      %v3942 = vadd.f32 0.0, %v3941
      %v3943 = vpop.f32.mrf.mxu0
      %v3944 = vpop.f32.mrf.mxu0
      %v3945 = vadd.f32 0.0, %v3944
      %v3946 = vpop.f32.mrf.mxu0
      %3947 = vmatprep.mubr.bf16.mxu0 0
      %3948 = vmatmul.mubr.bf16.gmra.mxu0 %v3790
      %v3949 = vpop.f32.mrf.mxu0
      %v3950 = vadd.f32 0.0, %v3949
      %v3951 = vpop.f32.mrf.mxu0
      %v3952 = vpop.f32.mrf.mxu0
      %v3953 = vadd.f32 0.0, %v3952
      %v3954 = vpop.f32.mrf.mxu0
      %3955 = vdwg.mxu0
      %v3956 = vadd.f32 %v3694, %v3830
      %v3957 = vadd.f32 %v3695, %v3833
      %v3958 = vadd.f32 %v3696, %v3838
      %v3959 = vadd.f32 %v3697, %v3841
      %v3960 = vadd.f32 %v3698, %v3846
      %v3961 = vadd.f32 %v3699, %v3849
      %v3962 = vadd.f32 %v3700, %v3854
      %v3963 = vadd.f32 %v3701, %v3857
      %v3964 = vadd.f32 %v3702, %v3862
      %v3965 = vadd.f32 %v3703, %v3865
      %v3966 = vadd.f32 %v3704, %v3870
      %v3967 = vadd.f32 %v3705, %v3873
      %v3968 = vadd.f32 %v3706, %v3878
      %v3969 = vadd.f32 %v3707, %v3881
      %v3970 = vadd.f32 %v3708, %v3886
      %v3971 = vadd.f32 %v3709, %v3889
      %v3972 = vadd.f32 %v3710, %v3894
      %v3973 = vadd.f32 %v3711, %v3897
      %v3974 = vadd.f32 %v3712, %v3902
      %v3975 = vadd.f32 %v3713, %v3905
      %v3976 = vadd.f32 %v3714, %v3910
      %v3977 = vadd.f32 %v3715, %v3913
      %v3978 = vadd.f32 %v3716, %v3918
      %v3979 = vadd.f32 %v3717, %v3921
      %v3980 = vadd.f32 %v3718, %v3926
      %v3981 = vadd.f32 %v3719, %v3929
      %v3982 = vadd.f32 %v3720, %v3934
      %v3983 = vadd.f32 %v3721, %v3937
      %v3984 = vadd.f32 %v3722, %v3942
      %v3985 = vadd.f32 %v3723, %v3945
      %v3986 = vadd.f32 %v3724, %v3950
      %v3987 = vadd.f32 %v3725, %v3953
      %v3988 = vld [vmem:[#allocation2 + $0x80] sm:$0xf]
      %v3989 = vld [vmem:[#allocation2 + $0x84] sm:$0xf]
      %v3990 = vld [vmem:[#allocation2 + $0x88] sm:$0xf]
      %v3991 = vld [vmem:[#allocation2 + $0x8c] sm:$0xf]
      %v3992 = vld [vmem:[#allocation2 + $0x90] sm:$0xf]
      %v3993 = vld [vmem:[#allocation2 + $0x94] sm:$0xf]
      %v3994 = vld [vmem:[#allocation2 + $0x98] sm:$0xf]
      %v3995 = vld [vmem:[#allocation2 + $0x9c] sm:$0xf]
      %v3996 = vld [vmem:[#allocation2 + $0xa0] sm:$0xf]
      %v3997 = vld [vmem:[#allocation2 + $0xa4] sm:$0xf]
      %v3998 = vld [vmem:[#allocation2 + $0xa8] sm:$0xf]
      %v3999 = vld [vmem:[#allocation2 + $0xac] sm:$0xf]
      %v4000 = vld [vmem:[#allocation2 + $0xb0] sm:$0xf]
      %v4001 = vld [vmem:[#allocation2 + $0xb4] sm:$0xf]
      %v4002 = vld [vmem:[#allocation2 + $0xb8] sm:$0xf]
      %v4003 = vld [vmem:[#allocation2 + $0xbc] sm:$0xf]
      %v4004 = vld [vmem:[#allocation2 + $0xc0] sm:$0xf]
      %v4005 = vld [vmem:[#allocation2 + $0xc4] sm:$0xf]
      %v4006 = vld [vmem:[#allocation2 + $0xc8] sm:$0xf]
      %v4007 = vld [vmem:[#allocation2 + $0xcc] sm:$0xf]
      %v4008 = vld [vmem:[#allocation2 + $0xd0] sm:$0xf]
      %v4009 = vld [vmem:[#allocation2 + $0xd4] sm:$0xf]
      %v4010 = vld [vmem:[#allocation2 + $0xd8] sm:$0xf]
      %v4011 = vld [vmem:[#allocation2 + $0xdc] sm:$0xf]
      %v4012 = vld [vmem:[#allocation2 + $0xe0] sm:$0xf]
      %v4013 = vld [vmem:[#allocation2 + $0xe4] sm:$0xf]
      %v4014 = vld [vmem:[#allocation2 + $0xe8] sm:$0xf]
      %v4015 = vld [vmem:[#allocation2 + $0xec] sm:$0xf]
      %v4016 = vld [vmem:[#allocation2 + $0xf0] sm:$0xf]
      %v4017 = vld [vmem:[#allocation2 + $0xf4] sm:$0xf]
      %v4018 = vld [vmem:[#allocation2 + $0xf8] sm:$0xf]
      %v4019 = vld [vmem:[#allocation2 + $0xfc] sm:$0xf]
      %v4020 = vld [vmem:[#allocation2 + $0x100] sm:$0x1]
      %s4021 = scalar_lea.vmem %s8, 20
      %v4022 = vld [vmem:[%s4021] sm:$0xf]
      %v4056 = vunpack.c.l.b16 %v3988
      %v4057 = vunpack.c.l.b16 %v3989
      %v4058 = vunpack.c.l.b16 %v3990
      %v4059 = vunpack.c.l.b16 %v3991
      %v4060 = vunpack.c.l.b16 %v3992
      %v4061 = vunpack.c.l.b16 %v3993
      %v4062 = vunpack.c.l.b16 %v3994
      %v4063 = vunpack.c.l.b16 %v3995
      %v4064 = vunpack.c.l.b16 %v3996
      %v4065 = vunpack.c.l.b16 %v3997
      %v4066 = vunpack.c.l.b16 %v3998
      %v4067 = vunpack.c.l.b16 %v3999
      %v4068 = vunpack.c.l.b16 %v4000
      %v4069 = vunpack.c.l.b16 %v4001
      %v4070 = vunpack.c.l.b16 %v4002
      %v4071 = vunpack.c.l.b16 %v4003
      %v4072 = vunpack.c.l.b16 %v4004
      %v4073 = vunpack.c.l.b16 %v4005
      %v4074 = vunpack.c.l.b16 %v4006
      %v4075 = vunpack.c.l.b16 %v4007
      %v4076 = vunpack.c.l.b16 %v4008
      %v4077 = vunpack.c.l.b16 %v4009
      %v4078 = vunpack.c.l.b16 %v4010
      %v4079 = vunpack.c.l.b16 %v4011
      %v4080 = vunpack.c.l.b16 %v4012
      %v4081 = vunpack.c.l.b16 %v4013
      %v4082 = vunpack.c.l.b16 %v4014
      %v4083 = vunpack.c.l.b16 %v4015
      %v4084 = vunpack.c.l.b16 %v4016
      %v4085 = vunpack.c.l.b16 %v4017
      %v4086 = vunpack.c.l.b16 %v4018
      %v4087 = vunpack.c.l.b16 %v4019
      %v4088 = vunpack.c.l.b16 %v4020
      %v4089 = vpack.c.b16 %v4057, %v4056
      %v4090 = vpack.c.b16 %v4059, %v4058
      %v4091 = vpack.c.b16 %v4061, %v4060
      %v4092 = vpack.c.b16 %v4063, %v4062
      %v4093 = vpack.c.b16 %v4065, %v4064
      %v4094 = vpack.c.b16 %v4067, %v4066
      %v4095 = vpack.c.b16 %v4069, %v4068
      %v4096 = vpack.c.b16 %v4071, %v4070
      %v4097 = vpack.c.b16 %v4073, %v4072
      %v4098 = vpack.c.b16 %v4075, %v4074
      %v4099 = vpack.c.b16 %v4077, %v4076
      %v4100 = vpack.c.b16 %v4079, %v4078
      %v4101 = vpack.c.b16 %v4081, %v4080
      %v4102 = vpack.c.b16 %v4083, %v4082
      %v4103 = vpack.c.b16 %v4085, %v4084
      %v4104 = vpack.c.b16 %v4087, %v4086
      %v4105 = vpack.c.b16 %v4088, %v4088
      %vm4106 = vsmask.f32 7424
      %v4108 = vshrl.u32 %v4089, 16
      %v4110 = vshll.u32 %v4089, 16
      %v4112 = vrot.slane %v4110, 1
      %v4113 = vor.u32 %v4108, %v4112
      %v4115 = vshll.u32 %v4090, 16
      %v4117 = vrot.slane %v4115, 1
      %v4118 = vsel %vm4106, %v4113, %v4117
      %v4119 = vshrl.u32 %v4090, 16
      %v4121 = vor.u32 %v4119, %v4117
      %v4123 = vshll.u32 %v4091, 16
      %v4125 = vrot.slane %v4123, 1
      %v4126 = vsel %vm4106, %v4121, %v4125
      %v4127 = vshrl.u32 %v4091, 16
      %v4129 = vor.u32 %v4127, %v4125
      %v4131 = vshll.u32 %v4092, 16
      %v4133 = vrot.slane %v4131, 1
      %v4134 = vsel %vm4106, %v4129, %v4133
      %v4135 = vshrl.u32 %v4092, 16
      %v4137 = vor.u32 %v4135, %v4133
      %v4139 = vshll.u32 %v4093, 16
      %v4141 = vrot.slane %v4139, 1
      %v4142 = vsel %vm4106, %v4137, %v4141
      %v4143 = vshrl.u32 %v4093, 16
      %v4145 = vor.u32 %v4143, %v4141
      %v4147 = vshll.u32 %v4094, 16
      %v4149 = vrot.slane %v4147, 1
      %v4150 = vsel %vm4106, %v4145, %v4149
      %v4151 = vshrl.u32 %v4094, 16
      %v4153 = vor.u32 %v4151, %v4149
      %v4155 = vshll.u32 %v4095, 16
      %v4157 = vrot.slane %v4155, 1
      %v4158 = vsel %vm4106, %v4153, %v4157
      %v4159 = vshrl.u32 %v4095, 16
      %v4161 = vor.u32 %v4159, %v4157
      %v4163 = vshll.u32 %v4096, 16
      %v4165 = vrot.slane %v4163, 1
      %v4166 = vsel %vm4106, %v4161, %v4165
      %v4167 = vshrl.u32 %v4096, 16
      %v4169 = vor.u32 %v4167, %v4165
      %v4171 = vshll.u32 %v4097, 16
      %v4173 = vrot.slane %v4171, 1
      %v4174 = vsel %vm4106, %v4169, %v4173
      %v4175 = vshrl.u32 %v4097, 16
      %v4177 = vor.u32 %v4175, %v4173
      %v4179 = vshll.u32 %v4098, 16
      %v4181 = vrot.slane %v4179, 1
      %v4182 = vsel %vm4106, %v4177, %v4181
      %v4183 = vshrl.u32 %v4098, 16
      %v4185 = vor.u32 %v4183, %v4181
      %v4187 = vshll.u32 %v4099, 16
      %v4189 = vrot.slane %v4187, 1
      %v4190 = vsel %vm4106, %v4185, %v4189
      %v4191 = vshrl.u32 %v4099, 16
      %v4193 = vor.u32 %v4191, %v4189
      %v4195 = vshll.u32 %v4100, 16
      %v4197 = vrot.slane %v4195, 1
      %v4198 = vsel %vm4106, %v4193, %v4197
      %v4199 = vshrl.u32 %v4100, 16
      %v4201 = vor.u32 %v4199, %v4197
      %v4203 = vshll.u32 %v4101, 16
      %v4205 = vrot.slane %v4203, 1
      %v4206 = vsel %vm4106, %v4201, %v4205
      %v4207 = vshrl.u32 %v4101, 16
      %v4209 = vor.u32 %v4207, %v4205
      %v4211 = vshll.u32 %v4102, 16
      %v4213 = vrot.slane %v4211, 1
      %v4214 = vsel %vm4106, %v4209, %v4213
      %v4215 = vshrl.u32 %v4102, 16
      %v4217 = vor.u32 %v4215, %v4213
      %v4219 = vshll.u32 %v4103, 16
      %v4221 = vrot.slane %v4219, 1
      %v4222 = vsel %vm4106, %v4217, %v4221
      %v4223 = vshrl.u32 %v4103, 16
      %v4225 = vor.u32 %v4223, %v4221
      %v4227 = vshll.u32 %v4104, 16
      %v4229 = vrot.slane %v4227, 1
      %v4230 = vsel %vm4106, %v4225, %v4229
      %v4231 = vshrl.u32 %v4104, 16
      %v4233 = vor.u32 %v4231, %v4229
      %v4235 = vshll.u32 %v4105, 16
      %v4237 = vrot.slane %v4235, 1
      %v4238 = vsel %vm4106, %v4233, %v4237
      %v4240 = vsel %vm2302, %v4118, 0
      %v4243 = vsel %vm2302, %v4126, 0
      %v4246 = vsel %vm2302, %v4134, 0
      %v4249 = vsel %vm2302, %v4142, 0
      %v4252 = vsel %vm2302, %v4150, 0
      %v4255 = vsel %vm2302, %v4158, 0
      %v4258 = vsel %vm2302, %v4166, 0
      %v4261 = vsel %vm2302, %v4174, 0
      %v4264 = vsel %vm2302, %v4182, 0
      %v4267 = vsel %vm2302, %v4190, 0
      %v4270 = vsel %vm2302, %v4198, 0
      %v4273 = vsel %vm2302, %v4206, 0
      %v4276 = vsel %vm2302, %v4214, 0
      %v4279 = vsel %vm2302, %v4222, 0
      %v4282 = vsel %vm2302, %v4230, 0
      %v4285 = vsel %vm2302, %v4238, 0
      %v4288 = vsel %vm2351, %v4022, 0
      %4290 = vmatprep.subr.bf16.mxu0 0
      %4291 = vmatpush1.bf16.msra.mxu0 0
      %4292 = vmatprep.subr.bf16.mxu0 0
      %4293 = vmatpush1.bf16.msra.mxu0 0
      %4294 = vmatprep.subr.bf16.mxu0 0
      %4295 = vmatpush1.bf16.msra.mxu0 0
      %4296 = vmatprep.subr.bf16.mxu0 0
      %4297 = vmatpush1.bf16.msra.mxu0 0
      %4298 = vmatprep.subr.bf16.mxu0 0
      %4299 = vmatpush1.bf16.msra.mxu0 0
      %4300 = vmatprep.subr.bf16.mxu0 0
      %4301 = vmatpush1.bf16.msra.mxu0 0
      %4302 = vmatprep.subr.bf16.mxu0 0
      %4303 = vmatpush1.bf16.msra.mxu0 0
      %4304 = vmatprep.subr.bf16.mxu0 0
      %4305 = vmatpush1.bf16.msra.mxu0 %v4288
      %4306 = vmatprep.subr.bf16.mxu0 0
      %4307 = vmatpush2.bf16.msra.mxu0 0
      %4308 = vmatprep.subr.bf16.mxu0 0
      %4309 = vmatpush2.bf16.msra.mxu0 0
      %4310 = vmatprep.subr.bf16.mxu0 0
      %4311 = vmatpush2.bf16.msra.mxu0 0
      %4312 = vmatprep.subr.bf16.mxu0 0
      %4313 = vmatpush2.bf16.msra.mxu0 0
      %4314 = vmatprep.subr.bf16.mxu0 0
      %4315 = vmatpush2.bf16.msra.mxu0 0
      %4316 = vmatprep.subr.bf16.mxu0 0
      %4317 = vmatpush2.bf16.msra.mxu0 0
      %4318 = vmatprep.subr.bf16.mxu0 0
      %4319 = vmatpush2.bf16.msra.mxu0 0
      %4320 = vmatprep.subr.bf16.mxu0 0
      %4321 = vmatpush2.bf16.msra.mxu0 0
      %4322 = vmatprep.mubr.bf16.mxu0 0
      %4323 = vmatmul.mubr.bf16.gmra.mxu0 %v4240
      %v4324 = vpop.f32.mrf.mxu0
      %v4325 = vadd.f32 0.0, %v4324
      %v4326 = vpop.f32.mrf.mxu0
      %v4327 = vpop.f32.mrf.mxu0
      %v4328 = vadd.f32 0.0, %v4327
      %v4329 = vpop.f32.mrf.mxu0
      %4330 = vmatprep.mubr.bf16.mxu0 0
      %4331 = vmatmul.mubr.bf16.gmra.mxu0 %v4243
      %v4332 = vpop.f32.mrf.mxu0
      %v4333 = vadd.f32 0.0, %v4332
      %v4334 = vpop.f32.mrf.mxu0
      %v4335 = vpop.f32.mrf.mxu0
      %v4336 = vadd.f32 0.0, %v4335
      %v4337 = vpop.f32.mrf.mxu0
      %4338 = vmatprep.mubr.bf16.mxu0 0
      %4339 = vmatmul.mubr.bf16.gmra.mxu0 %v4246
      %v4340 = vpop.f32.mrf.mxu0
      %v4341 = vadd.f32 0.0, %v4340
      %v4342 = vpop.f32.mrf.mxu0
      %v4343 = vpop.f32.mrf.mxu0
      %v4344 = vadd.f32 0.0, %v4343
      %v4345 = vpop.f32.mrf.mxu0
      %4346 = vmatprep.mubr.bf16.mxu0 0
      %4347 = vmatmul.mubr.bf16.gmra.mxu0 %v4249
      %v4348 = vpop.f32.mrf.mxu0
      %v4349 = vadd.f32 0.0, %v4348
      %v4350 = vpop.f32.mrf.mxu0
      %v4351 = vpop.f32.mrf.mxu0
      %v4352 = vadd.f32 0.0, %v4351
      %v4353 = vpop.f32.mrf.mxu0
      %4354 = vmatprep.mubr.bf16.mxu0 0
      %4355 = vmatmul.mubr.bf16.gmra.mxu0 %v4252
      %v4356 = vpop.f32.mrf.mxu0
      %v4357 = vadd.f32 0.0, %v4356
      %v4358 = vpop.f32.mrf.mxu0
      %v4359 = vpop.f32.mrf.mxu0
      %v4360 = vadd.f32 0.0, %v4359
      %v4361 = vpop.f32.mrf.mxu0
      %4362 = vmatprep.mubr.bf16.mxu0 0
      %4363 = vmatmul.mubr.bf16.gmra.mxu0 %v4255
      %v4364 = vpop.f32.mrf.mxu0
      %v4365 = vadd.f32 0.0, %v4364
      %v4366 = vpop.f32.mrf.mxu0
      %v4367 = vpop.f32.mrf.mxu0
      %v4368 = vadd.f32 0.0, %v4367
      %v4369 = vpop.f32.mrf.mxu0
      %4370 = vmatprep.mubr.bf16.mxu0 0
      %4371 = vmatmul.mubr.bf16.gmra.mxu0 %v4258
      %v4372 = vpop.f32.mrf.mxu0
      %v4373 = vadd.f32 0.0, %v4372
      %v4374 = vpop.f32.mrf.mxu0
      %v4375 = vpop.f32.mrf.mxu0
      %v4376 = vadd.f32 0.0, %v4375
      %v4377 = vpop.f32.mrf.mxu0
      %4378 = vmatprep.mubr.bf16.mxu0 0
      %4379 = vmatmul.mubr.bf16.gmra.mxu0 %v4261
      %v4380 = vpop.f32.mrf.mxu0
      %v4381 = vadd.f32 0.0, %v4380
      %v4382 = vpop.f32.mrf.mxu0
      %v4383 = vpop.f32.mrf.mxu0
      %v4384 = vadd.f32 0.0, %v4383
      %v4385 = vpop.f32.mrf.mxu0
      %4386 = vmatprep.mubr.bf16.mxu0 0
      %4387 = vmatmul.mubr.bf16.gmra.mxu0 %v4264
      %v4388 = vpop.f32.mrf.mxu0
      %v4389 = vadd.f32 0.0, %v4388
      %v4390 = vpop.f32.mrf.mxu0
      %v4391 = vpop.f32.mrf.mxu0
      %v4392 = vadd.f32 0.0, %v4391
      %v4393 = vpop.f32.mrf.mxu0
      %4394 = vmatprep.mubr.bf16.mxu0 0
      %4395 = vmatmul.mubr.bf16.gmra.mxu0 %v4267
      %v4396 = vpop.f32.mrf.mxu0
      %v4397 = vadd.f32 0.0, %v4396
      %v4398 = vpop.f32.mrf.mxu0
      %v4399 = vpop.f32.mrf.mxu0
      %v4400 = vadd.f32 0.0, %v4399
      %v4401 = vpop.f32.mrf.mxu0
      %4402 = vmatprep.mubr.bf16.mxu0 0
      %4403 = vmatmul.mubr.bf16.gmra.mxu0 %v4270
      %v4404 = vpop.f32.mrf.mxu0
      %v4405 = vadd.f32 0.0, %v4404
      %v4406 = vpop.f32.mrf.mxu0
      %v4407 = vpop.f32.mrf.mxu0
      %v4408 = vadd.f32 0.0, %v4407
      %v4409 = vpop.f32.mrf.mxu0
      %4410 = vmatprep.mubr.bf16.mxu0 0
      %4411 = vmatmul.mubr.bf16.gmra.mxu0 %v4273
      %v4412 = vpop.f32.mrf.mxu0
      %v4413 = vadd.f32 0.0, %v4412
      %v4414 = vpop.f32.mrf.mxu0
      %v4415 = vpop.f32.mrf.mxu0
      %v4416 = vadd.f32 0.0, %v4415
      %v4417 = vpop.f32.mrf.mxu0
      %4418 = vmatprep.mubr.bf16.mxu0 0
      %4419 = vmatmul.mubr.bf16.gmra.mxu0 %v4276
      %v4420 = vpop.f32.mrf.mxu0
      %v4421 = vadd.f32 0.0, %v4420
      %v4422 = vpop.f32.mrf.mxu0
      %v4423 = vpop.f32.mrf.mxu0
      %v4424 = vadd.f32 0.0, %v4423
      %v4425 = vpop.f32.mrf.mxu0
      %4426 = vmatprep.mubr.bf16.mxu0 0
      %4427 = vmatmul.mubr.bf16.gmra.mxu0 %v4279
      %v4428 = vpop.f32.mrf.mxu0
      %v4429 = vadd.f32 0.0, %v4428
      %v4430 = vpop.f32.mrf.mxu0
      %v4431 = vpop.f32.mrf.mxu0
      %v4432 = vadd.f32 0.0, %v4431
      %v4433 = vpop.f32.mrf.mxu0
      %4434 = vmatprep.mubr.bf16.mxu0 0
      %4435 = vmatmul.mubr.bf16.gmra.mxu0 %v4282
      %v4436 = vpop.f32.mrf.mxu0
      %v4437 = vadd.f32 0.0, %v4436
      %v4438 = vpop.f32.mrf.mxu0
      %v4439 = vpop.f32.mrf.mxu0
      %v4440 = vadd.f32 0.0, %v4439
      %v4441 = vpop.f32.mrf.mxu0
      %4442 = vmatprep.mubr.bf16.mxu0 0
      %4443 = vmatmul.mubr.bf16.gmra.mxu0 %v4285
      %v4444 = vpop.f32.mrf.mxu0
      %v4445 = vadd.f32 0.0, %v4444
      %v4446 = vpop.f32.mrf.mxu0
      %v4447 = vpop.f32.mrf.mxu0
      %v4448 = vadd.f32 0.0, %v4447
      %v4449 = vpop.f32.mrf.mxu0
      %4450 = vdwg.mxu0
      %v4451 = vadd.f32 %v3956, %v4325
      %v4452 = vadd.f32 %v3957, %v4328
      %v4453 = vadd.f32 %v3958, %v4333
      %v4454 = vadd.f32 %v3959, %v4336
      %v4455 = vadd.f32 %v3960, %v4341
      %v4456 = vadd.f32 %v3961, %v4344
      %v4457 = vadd.f32 %v3962, %v4349
      %v4458 = vadd.f32 %v3963, %v4352
      %v4459 = vadd.f32 %v3964, %v4357
      %v4460 = vadd.f32 %v3965, %v4360
      %v4461 = vadd.f32 %v3966, %v4365
      %v4462 = vadd.f32 %v3967, %v4368
      %v4463 = vadd.f32 %v3968, %v4373
      %v4464 = vadd.f32 %v3969, %v4376
      %v4465 = vadd.f32 %v3970, %v4381
      %v4466 = vadd.f32 %v3971, %v4384
      %v4467 = vadd.f32 %v3972, %v4389
      %v4468 = vadd.f32 %v3973, %v4392
      %v4469 = vadd.f32 %v3974, %v4397
      %v4470 = vadd.f32 %v3975, %v4400
      %v4471 = vadd.f32 %v3976, %v4405
      %v4472 = vadd.f32 %v3977, %v4408
      %v4473 = vadd.f32 %v3978, %v4413
      %v4474 = vadd.f32 %v3979, %v4416
      %v4475 = vadd.f32 %v3980, %v4421
      %v4476 = vadd.f32 %v3981, %v4424
      %v4477 = vadd.f32 %v3982, %v4429
      %v4478 = vadd.f32 %v3983, %v4432
      %v4479 = vadd.f32 %v3984, %v4437
      %v4480 = vadd.f32 %v3985, %v4440
      %v4481 = vadd.f32 %v3986, %v4445
      %v4482 = vadd.f32 %v3987, %v4448
      %v4483 = vld [vmem:[#allocation2 + $0x88] sm:$0xf]
      %v4484 = vld [vmem:[#allocation2 + $0x8c] sm:$0xf]
      %v4485 = vld [vmem:[#allocation2 + $0x90] sm:$0xf]
      %v4486 = vld [vmem:[#allocation2 + $0x94] sm:$0xf]
      %v4487 = vld [vmem:[#allocation2 + $0x98] sm:$0xf]
      %v4488 = vld [vmem:[#allocation2 + $0x9c] sm:$0xf]
      %v4489 = vld [vmem:[#allocation2 + $0xa0] sm:$0xf]
      %v4490 = vld [vmem:[#allocation2 + $0xa4] sm:$0xf]
      %v4491 = vld [vmem:[#allocation2 + $0xa8] sm:$0xf]
      %v4492 = vld [vmem:[#allocation2 + $0xac] sm:$0xf]
      %v4493 = vld [vmem:[#allocation2 + $0xb0] sm:$0xf]
      %v4494 = vld [vmem:[#allocation2 + $0xb4] sm:$0xf]
      %v4495 = vld [vmem:[#allocation2 + $0xb8] sm:$0xf]
      %v4496 = vld [vmem:[#allocation2 + $0xbc] sm:$0xf]
      %v4497 = vld [vmem:[#allocation2 + $0xc0] sm:$0xf]
      %v4498 = vld [vmem:[#allocation2 + $0xc4] sm:$0xf]
      %v4499 = vld [vmem:[#allocation2 + $0xc8] sm:$0xf]
      %v4500 = vld [vmem:[#allocation2 + $0xcc] sm:$0xf]
      %v4501 = vld [vmem:[#allocation2 + $0xd0] sm:$0xf]
      %v4502 = vld [vmem:[#allocation2 + $0xd4] sm:$0xf]
      %v4503 = vld [vmem:[#allocation2 + $0xd8] sm:$0xf]
      %v4504 = vld [vmem:[#allocation2 + $0xdc] sm:$0xf]
      %v4505 = vld [vmem:[#allocation2 + $0xe0] sm:$0xf]
      %v4506 = vld [vmem:[#allocation2 + $0xe4] sm:$0xf]
      %v4507 = vld [vmem:[#allocation2 + $0xe8] sm:$0xf]
      %v4508 = vld [vmem:[#allocation2 + $0xec] sm:$0xf]
      %v4509 = vld [vmem:[#allocation2 + $0xf0] sm:$0xf]
      %v4510 = vld [vmem:[#allocation2 + $0xf4] sm:$0xf]
      %v4511 = vld [vmem:[#allocation2 + $0xf8] sm:$0xf]
      %v4512 = vld [vmem:[#allocation2 + $0xfc] sm:$0xf]
      %v4513 = vld [vmem:[#allocation2 + $0x100] sm:$0xf]
      %v4514 = vld [vmem:[#allocation2 + $0x104] sm:$0xf]
      %v4515 = vld [vmem:[#allocation2 + $0x108] sm:$0x1]
      %s4516 = scalar_lea.vmem %s8, 24
      %v4517 = vld [vmem:[%s4516] sm:$0xf]
      %v4551 = vunpack.c.l.b16 %v4483
      %v4552 = vunpack.c.l.b16 %v4484
      %v4553 = vunpack.c.l.b16 %v4485
      %v4554 = vunpack.c.l.b16 %v4486
      %v4555 = vunpack.c.l.b16 %v4487
      %v4556 = vunpack.c.l.b16 %v4488
      %v4557 = vunpack.c.l.b16 %v4489
      %v4558 = vunpack.c.l.b16 %v4490
      %v4559 = vunpack.c.l.b16 %v4491
      %v4560 = vunpack.c.l.b16 %v4492
      %v4561 = vunpack.c.l.b16 %v4493
      %v4562 = vunpack.c.l.b16 %v4494
      %v4563 = vunpack.c.l.b16 %v4495
      %v4564 = vunpack.c.l.b16 %v4496
      %v4565 = vunpack.c.l.b16 %v4497
      %v4566 = vunpack.c.l.b16 %v4498
      %v4567 = vunpack.c.l.b16 %v4499
      %v4568 = vunpack.c.l.b16 %v4500
      %v4569 = vunpack.c.l.b16 %v4501
      %v4570 = vunpack.c.l.b16 %v4502
      %v4571 = vunpack.c.l.b16 %v4503
      %v4572 = vunpack.c.l.b16 %v4504
      %v4573 = vunpack.c.l.b16 %v4505
      %v4574 = vunpack.c.l.b16 %v4506
      %v4575 = vunpack.c.l.b16 %v4507
      %v4576 = vunpack.c.l.b16 %v4508
      %v4577 = vunpack.c.l.b16 %v4509
      %v4578 = vunpack.c.l.b16 %v4510
      %v4579 = vunpack.c.l.b16 %v4511
      %v4580 = vunpack.c.l.b16 %v4512
      %v4581 = vunpack.c.l.b16 %v4513
      %v4582 = vunpack.c.l.b16 %v4514
      %v4583 = vunpack.c.l.b16 %v4515
      %v4584 = vpack.c.b16 %v4552, %v4551
      %v4585 = vpack.c.b16 %v4554, %v4553
      %v4586 = vpack.c.b16 %v4556, %v4555
      %v4587 = vpack.c.b16 %v4558, %v4557
      %v4588 = vpack.c.b16 %v4560, %v4559
      %v4589 = vpack.c.b16 %v4562, %v4561
      %v4590 = vpack.c.b16 %v4564, %v4563
      %v4591 = vpack.c.b16 %v4566, %v4565
      %v4592 = vpack.c.b16 %v4568, %v4567
      %v4593 = vpack.c.b16 %v4570, %v4569
      %v4594 = vpack.c.b16 %v4572, %v4571
      %v4595 = vpack.c.b16 %v4574, %v4573
      %v4596 = vpack.c.b16 %v4576, %v4575
      %v4597 = vpack.c.b16 %v4578, %v4577
      %v4598 = vpack.c.b16 %v4580, %v4579
      %v4599 = vpack.c.b16 %v4582, %v4581
      %v4600 = vpack.c.b16 %v4583, %v4583
      %v4602 = vshrl.u32 %v4584, 16
      %v4604 = vshll.u32 %v4584, 16
      %v4606 = vrot.slane %v4604, 1
      %v4607 = vor.u32 %v4602, %v4606
      %v4609 = vshll.u32 %v4585, 16
      %v4611 = vrot.slane %v4609, 1
      %v4612 = vsel %vm4106, %v4607, %v4611
      %v4613 = vshrl.u32 %v4585, 16
      %v4615 = vor.u32 %v4613, %v4611
      %v4617 = vshll.u32 %v4586, 16
      %v4619 = vrot.slane %v4617, 1
      %v4620 = vsel %vm4106, %v4615, %v4619
      %v4621 = vshrl.u32 %v4586, 16
      %v4623 = vor.u32 %v4621, %v4619
      %v4625 = vshll.u32 %v4587, 16
      %v4627 = vrot.slane %v4625, 1
      %v4628 = vsel %vm4106, %v4623, %v4627
      %v4629 = vshrl.u32 %v4587, 16
      %v4631 = vor.u32 %v4629, %v4627
      %v4633 = vshll.u32 %v4588, 16
      %v4635 = vrot.slane %v4633, 1
      %v4636 = vsel %vm4106, %v4631, %v4635
      %v4637 = vshrl.u32 %v4588, 16
      %v4639 = vor.u32 %v4637, %v4635
      %v4641 = vshll.u32 %v4589, 16
      %v4643 = vrot.slane %v4641, 1
      %v4644 = vsel %vm4106, %v4639, %v4643
      %v4645 = vshrl.u32 %v4589, 16
      %v4647 = vor.u32 %v4645, %v4643
      %v4649 = vshll.u32 %v4590, 16
      %v4651 = vrot.slane %v4649, 1
      %v4652 = vsel %vm4106, %v4647, %v4651
      %v4653 = vshrl.u32 %v4590, 16
      %v4655 = vor.u32 %v4653, %v4651
      %v4657 = vshll.u32 %v4591, 16
      %v4659 = vrot.slane %v4657, 1
      %v4660 = vsel %vm4106, %v4655, %v4659
      %v4661 = vshrl.u32 %v4591, 16
      %v4663 = vor.u32 %v4661, %v4659
      %v4665 = vshll.u32 %v4592, 16
      %v4667 = vrot.slane %v4665, 1
      %v4668 = vsel %vm4106, %v4663, %v4667
      %v4669 = vshrl.u32 %v4592, 16
      %v4671 = vor.u32 %v4669, %v4667
      %v4673 = vshll.u32 %v4593, 16
      %v4675 = vrot.slane %v4673, 1
      %v4676 = vsel %vm4106, %v4671, %v4675
      %v4677 = vshrl.u32 %v4593, 16
      %v4679 = vor.u32 %v4677, %v4675
      %v4681 = vshll.u32 %v4594, 16
      %v4683 = vrot.slane %v4681, 1
      %v4684 = vsel %vm4106, %v4679, %v4683
      %v4685 = vshrl.u32 %v4594, 16
      %v4687 = vor.u32 %v4685, %v4683
      %v4689 = vshll.u32 %v4595, 16
      %v4691 = vrot.slane %v4689, 1
      %v4692 = vsel %vm4106, %v4687, %v4691
      %v4693 = vshrl.u32 %v4595, 16
      %v4695 = vor.u32 %v4693, %v4691
      %v4697 = vshll.u32 %v4596, 16
      %v4699 = vrot.slane %v4697, 1
      %v4700 = vsel %vm4106, %v4695, %v4699
      %v4701 = vshrl.u32 %v4596, 16
      %v4703 = vor.u32 %v4701, %v4699
      %v4705 = vshll.u32 %v4597, 16
      %v4707 = vrot.slane %v4705, 1
      %v4708 = vsel %vm4106, %v4703, %v4707
      %v4709 = vshrl.u32 %v4597, 16
      %v4711 = vor.u32 %v4709, %v4707
      %v4713 = vshll.u32 %v4598, 16
      %v4715 = vrot.slane %v4713, 1
      %v4716 = vsel %vm4106, %v4711, %v4715
      %v4717 = vshrl.u32 %v4598, 16
      %v4719 = vor.u32 %v4717, %v4715
      %v4721 = vshll.u32 %v4599, 16
      %v4723 = vrot.slane %v4721, 1
      %v4724 = vsel %vm4106, %v4719, %v4723
      %v4725 = vshrl.u32 %v4599, 16
      %v4727 = vor.u32 %v4725, %v4723
      %v4729 = vshll.u32 %v4600, 16
      %v4731 = vrot.slane %v4729, 1
      %v4732 = vsel %vm4106, %v4727, %v4731
      %v4734 = vsel %vm2302, %v4612, 0
      %v4737 = vsel %vm2302, %v4620, 0
      %v4740 = vsel %vm2302, %v4628, 0
      %v4743 = vsel %vm2302, %v4636, 0
      %v4746 = vsel %vm2302, %v4644, 0
      %v4749 = vsel %vm2302, %v4652, 0
      %v4752 = vsel %vm2302, %v4660, 0
      %v4755 = vsel %vm2302, %v4668, 0
      %v4758 = vsel %vm2302, %v4676, 0
      %v4761 = vsel %vm2302, %v4684, 0
      %v4764 = vsel %vm2302, %v4692, 0
      %v4767 = vsel %vm2302, %v4700, 0
      %v4770 = vsel %vm2302, %v4708, 0
      %v4773 = vsel %vm2302, %v4716, 0
      %v4776 = vsel %vm2302, %v4724, 0
      %v4779 = vsel %vm2302, %v4732, 0
      %v4782 = vsel %vm2351, %v4517, 0
      %4784 = vmatprep.subr.bf16.mxu0 0
      %4785 = vmatpush1.bf16.msra.mxu0 0
      %4786 = vmatprep.subr.bf16.mxu0 0
      %4787 = vmatpush1.bf16.msra.mxu0 0
      %4788 = vmatprep.subr.bf16.mxu0 0
      %4789 = vmatpush1.bf16.msra.mxu0 0
      %4790 = vmatprep.subr.bf16.mxu0 0
      %4791 = vmatpush1.bf16.msra.mxu0 0
      %4792 = vmatprep.subr.bf16.mxu0 0
      %4793 = vmatpush1.bf16.msra.mxu0 0
      %4794 = vmatprep.subr.bf16.mxu0 0
      %4795 = vmatpush1.bf16.msra.mxu0 0
      %4796 = vmatprep.subr.bf16.mxu0 0
      %4797 = vmatpush1.bf16.msra.mxu0 0
      %4798 = vmatprep.subr.bf16.mxu0 0
      %4799 = vmatpush1.bf16.msra.mxu0 %v4782
      %4800 = vmatprep.subr.bf16.mxu0 0
      %4801 = vmatpush2.bf16.msra.mxu0 0
      %4802 = vmatprep.subr.bf16.mxu0 0
      %4803 = vmatpush2.bf16.msra.mxu0 0
      %4804 = vmatprep.subr.bf16.mxu0 0
      %4805 = vmatpush2.bf16.msra.mxu0 0
      %4806 = vmatprep.subr.bf16.mxu0 0
      %4807 = vmatpush2.bf16.msra.mxu0 0
      %4808 = vmatprep.subr.bf16.mxu0 0
      %4809 = vmatpush2.bf16.msra.mxu0 0
      %4810 = vmatprep.subr.bf16.mxu0 0
      %4811 = vmatpush2.bf16.msra.mxu0 0
      %4812 = vmatprep.subr.bf16.mxu0 0
      %4813 = vmatpush2.bf16.msra.mxu0 0
      %4814 = vmatprep.subr.bf16.mxu0 0
      %4815 = vmatpush2.bf16.msra.mxu0 0
      %4816 = vmatprep.mubr.bf16.mxu0 0
      %4817 = vmatmul.mubr.bf16.gmra.mxu0 %v4734
      %v4818 = vpop.f32.mrf.mxu0
      %v4819 = vadd.f32 0.0, %v4818
      %v4820 = vpop.f32.mrf.mxu0
      %v4821 = vpop.f32.mrf.mxu0
      %v4822 = vadd.f32 0.0, %v4821
      %v4823 = vpop.f32.mrf.mxu0
      %4824 = vmatprep.mubr.bf16.mxu0 0
      %4825 = vmatmul.mubr.bf16.gmra.mxu0 %v4737
      %v4826 = vpop.f32.mrf.mxu0
      %v4827 = vadd.f32 0.0, %v4826
      %v4828 = vpop.f32.mrf.mxu0
      %v4829 = vpop.f32.mrf.mxu0
      %v4830 = vadd.f32 0.0, %v4829
      %v4831 = vpop.f32.mrf.mxu0
      %4832 = vmatprep.mubr.bf16.mxu0 0
      %4833 = vmatmul.mubr.bf16.gmra.mxu0 %v4740
      %v4834 = vpop.f32.mrf.mxu0
      %v4835 = vadd.f32 0.0, %v4834
      %v4836 = vpop.f32.mrf.mxu0
      %v4837 = vpop.f32.mrf.mxu0
      %v4838 = vadd.f32 0.0, %v4837
      %v4839 = vpop.f32.mrf.mxu0
      %4840 = vmatprep.mubr.bf16.mxu0 0
      %4841 = vmatmul.mubr.bf16.gmra.mxu0 %v4743
      %v4842 = vpop.f32.mrf.mxu0
      %v4843 = vadd.f32 0.0, %v4842
      %v4844 = vpop.f32.mrf.mxu0
      %v4845 = vpop.f32.mrf.mxu0
      %v4846 = vadd.f32 0.0, %v4845
      %v4847 = vpop.f32.mrf.mxu0
      %4848 = vmatprep.mubr.bf16.mxu0 0
      %4849 = vmatmul.mubr.bf16.gmra.mxu0 %v4746
      %v4850 = vpop.f32.mrf.mxu0
      %v4851 = vadd.f32 0.0, %v4850
      %v4852 = vpop.f32.mrf.mxu0
      %v4853 = vpop.f32.mrf.mxu0
      %v4854 = vadd.f32 0.0, %v4853
      %v4855 = vpop.f32.mrf.mxu0
      %4856 = vmatprep.mubr.bf16.mxu0 0
      %4857 = vmatmul.mubr.bf16.gmra.mxu0 %v4749
      %v4858 = vpop.f32.mrf.mxu0
      %v4859 = vadd.f32 0.0, %v4858
      %v4860 = vpop.f32.mrf.mxu0
      %v4861 = vpop.f32.mrf.mxu0
      %v4862 = vadd.f32 0.0, %v4861
      %v4863 = vpop.f32.mrf.mxu0
      %4864 = vmatprep.mubr.bf16.mxu0 0
      %4865 = vmatmul.mubr.bf16.gmra.mxu0 %v4752
      %v4866 = vpop.f32.mrf.mxu0
      %v4867 = vadd.f32 0.0, %v4866
      %v4868 = vpop.f32.mrf.mxu0
      %v4869 = vpop.f32.mrf.mxu0
      %v4870 = vadd.f32 0.0, %v4869
      %v4871 = vpop.f32.mrf.mxu0
      %4872 = vmatprep.mubr.bf16.mxu0 0
      %4873 = vmatmul.mubr.bf16.gmra.mxu0 %v4755
      %v4874 = vpop.f32.mrf.mxu0
      %v4875 = vadd.f32 0.0, %v4874
      %v4876 = vpop.f32.mrf.mxu0
      %v4877 = vpop.f32.mrf.mxu0
      %v4878 = vadd.f32 0.0, %v4877
      %v4879 = vpop.f32.mrf.mxu0
      %4880 = vmatprep.mubr.bf16.mxu0 0
      %4881 = vmatmul.mubr.bf16.gmra.mxu0 %v4758
      %v4882 = vpop.f32.mrf.mxu0
      %v4883 = vadd.f32 0.0, %v4882
      %v4884 = vpop.f32.mrf.mxu0
      %v4885 = vpop.f32.mrf.mxu0
      %v4886 = vadd.f32 0.0, %v4885
      %v4887 = vpop.f32.mrf.mxu0
      %4888 = vmatprep.mubr.bf16.mxu0 0
      %4889 = vmatmul.mubr.bf16.gmra.mxu0 %v4761
      %v4890 = vpop.f32.mrf.mxu0
      %v4891 = vadd.f32 0.0, %v4890
      %v4892 = vpop.f32.mrf.mxu0
      %v4893 = vpop.f32.mrf.mxu0
      %v4894 = vadd.f32 0.0, %v4893
      %v4895 = vpop.f32.mrf.mxu0
      %4896 = vmatprep.mubr.bf16.mxu0 0
      %4897 = vmatmul.mubr.bf16.gmra.mxu0 %v4764
      %v4898 = vpop.f32.mrf.mxu0
      %v4899 = vadd.f32 0.0, %v4898
      %v4900 = vpop.f32.mrf.mxu0
      %v4901 = vpop.f32.mrf.mxu0
      %v4902 = vadd.f32 0.0, %v4901
      %v4903 = vpop.f32.mrf.mxu0
      %4904 = vmatprep.mubr.bf16.mxu0 0
      %4905 = vmatmul.mubr.bf16.gmra.mxu0 %v4767
      %v4906 = vpop.f32.mrf.mxu0
      %v4907 = vadd.f32 0.0, %v4906
      %v4908 = vpop.f32.mrf.mxu0
      %v4909 = vpop.f32.mrf.mxu0
      %v4910 = vadd.f32 0.0, %v4909
      %v4911 = vpop.f32.mrf.mxu0
      %4912 = vmatprep.mubr.bf16.mxu0 0
      %4913 = vmatmul.mubr.bf16.gmra.mxu0 %v4770
      %v4914 = vpop.f32.mrf.mxu0
      %v4915 = vadd.f32 0.0, %v4914
      %v4916 = vpop.f32.mrf.mxu0
      %v4917 = vpop.f32.mrf.mxu0
      %v4918 = vadd.f32 0.0, %v4917
      %v4919 = vpop.f32.mrf.mxu0
      %4920 = vmatprep.mubr.bf16.mxu0 0
      %4921 = vmatmul.mubr.bf16.gmra.mxu0 %v4773
      %v4922 = vpop.f32.mrf.mxu0
      %v4923 = vadd.f32 0.0, %v4922
      %v4924 = vpop.f32.mrf.mxu0
      %v4925 = vpop.f32.mrf.mxu0
      %v4926 = vadd.f32 0.0, %v4925
      %v4927 = vpop.f32.mrf.mxu0
      %4928 = vmatprep.mubr.bf16.mxu0 0
      %4929 = vmatmul.mubr.bf16.gmra.mxu0 %v4776
      %v4930 = vpop.f32.mrf.mxu0
      %v4931 = vadd.f32 0.0, %v4930
      %v4932 = vpop.f32.mrf.mxu0
      %v4933 = vpop.f32.mrf.mxu0
      %v4934 = vadd.f32 0.0, %v4933
      %v4935 = vpop.f32.mrf.mxu0
      %4936 = vmatprep.mubr.bf16.mxu0 0
      %4937 = vmatmul.mubr.bf16.gmra.mxu0 %v4779
      %v4938 = vpop.f32.mrf.mxu0
      %v4939 = vadd.f32 0.0, %v4938
      %v4940 = vpop.f32.mrf.mxu0
      %v4941 = vpop.f32.mrf.mxu0
      %v4942 = vadd.f32 0.0, %v4941
      %v4943 = vpop.f32.mrf.mxu0
      %4944 = vdwg.mxu0
      %v4945 = vadd.f32 %v4451, %v4819
      %v4946 = vadd.f32 %v4452, %v4822
      %v4947 = vadd.f32 %v4453, %v4827
      %v4948 = vadd.f32 %v4454, %v4830
      %v4949 = vadd.f32 %v4455, %v4835
      %v4950 = vadd.f32 %v4456, %v4838
      %v4951 = vadd.f32 %v4457, %v4843
      %v4952 = vadd.f32 %v4458, %v4846
      %v4953 = vadd.f32 %v4459, %v4851
      %v4954 = vadd.f32 %v4460, %v4854
      %v4955 = vadd.f32 %v4461, %v4859
      %v4956 = vadd.f32 %v4462, %v4862
      %v4957 = vadd.f32 %v4463, %v4867
      %v4958 = vadd.f32 %v4464, %v4870
      %v4959 = vadd.f32 %v4465, %v4875
      %v4960 = vadd.f32 %v4466, %v4878
      %v4961 = vadd.f32 %v4467, %v4883
      %v4962 = vadd.f32 %v4468, %v4886
      %v4963 = vadd.f32 %v4469, %v4891
      %v4964 = vadd.f32 %v4470, %v4894
      %v4965 = vadd.f32 %v4471, %v4899
      %v4966 = vadd.f32 %v4472, %v4902
      %v4967 = vadd.f32 %v4473, %v4907
      %v4968 = vadd.f32 %v4474, %v4910
      %v4969 = vadd.f32 %v4475, %v4915
      %v4970 = vadd.f32 %v4476, %v4918
      %v4971 = vadd.f32 %v4477, %v4923
      %v4972 = vadd.f32 %v4478, %v4926
      %v4973 = vadd.f32 %v4479, %v4931
      %v4974 = vadd.f32 %v4480, %v4934
      %v4975 = vadd.f32 %v4481, %v4939
      %v4976 = vadd.f32 %v4482, %v4942
      %v4977 = vld [vmem:[#allocation2 + $0x88] sm:$0xe]
      %s4978 = scalar_lea.vmem %s8, 28
      %v4979 = vld [vmem:[%s4978] sm:$0xf]
      %v4981 = vunpack.c.l.b16 %v4977
      %v4982 = vpack.c.b16 %v4552, %v4981
      %vm4983 = vcmask 1046528
      %v4984 = vrot.slane %v4982, 1
      %v4985 = vrot.slane %v4585, 1
      %v4986 = vsel %vm4983, %v4984, %v4985
      %v4987 = vrot.slane %v4586, 1
      %v4988 = vsel %vm4983, %v4985, %v4987
      %v4989 = vrot.slane %v4587, 1
      %v4990 = vsel %vm4983, %v4987, %v4989
      %v4991 = vrot.slane %v4588, 1
      %v4992 = vsel %vm4983, %v4989, %v4991
      %v4993 = vrot.slane %v4589, 1
      %v4994 = vsel %vm4983, %v4991, %v4993
      %v4995 = vrot.slane %v4590, 1
      %v4996 = vsel %vm4983, %v4993, %v4995
      %v4997 = vrot.slane %v4591, 1
      %v4998 = vsel %vm4983, %v4995, %v4997
      %v4999 = vrot.slane %v4592, 1
      %v5000 = vsel %vm4983, %v4997, %v4999
      %v5001 = vrot.slane %v4593, 1
      %v5002 = vsel %vm4983, %v4999, %v5001
      %v5003 = vrot.slane %v4594, 1
      %v5004 = vsel %vm4983, %v5001, %v5003
      %v5005 = vrot.slane %v4595, 1
      %v5006 = vsel %vm4983, %v5003, %v5005
      %v5007 = vrot.slane %v4596, 1
      %v5008 = vsel %vm4983, %v5005, %v5007
      %v5009 = vrot.slane %v4597, 1
      %v5010 = vsel %vm4983, %v5007, %v5009
      %v5011 = vrot.slane %v4598, 1
      %v5012 = vsel %vm4983, %v5009, %v5011
      %v5013 = vrot.slane %v4599, 1
      %v5014 = vsel %vm4983, %v5011, %v5013
      %v5015 = vrot.slane %v4600, 1
      %v5016 = vsel %vm4983, %v5013, %v5015
      %v5018 = vsel %vm2302, %v4986, 0
      %v5021 = vsel %vm2302, %v4988, 0
      %v5024 = vsel %vm2302, %v4990, 0
      %v5027 = vsel %vm2302, %v4992, 0
      %v5030 = vsel %vm2302, %v4994, 0
      %v5033 = vsel %vm2302, %v4996, 0
      %v5036 = vsel %vm2302, %v4998, 0
      %v5039 = vsel %vm2302, %v5000, 0
      %v5042 = vsel %vm2302, %v5002, 0
      %v5045 = vsel %vm2302, %v5004, 0
      %v5048 = vsel %vm2302, %v5006, 0
      %v5051 = vsel %vm2302, %v5008, 0
      %v5054 = vsel %vm2302, %v5010, 0
      %v5057 = vsel %vm2302, %v5012, 0
      %v5060 = vsel %vm2302, %v5014, 0
      %v5063 = vsel %vm2302, %v5016, 0
      %v5066 = vsel %vm2351, %v4979, 0
      %5068 = vmatprep.subr.bf16.mxu0 0
      %5069 = vmatpush1.bf16.msra.mxu0 0
      %5070 = vmatprep.subr.bf16.mxu0 0
      %5071 = vmatpush1.bf16.msra.mxu0 0
      %5072 = vmatprep.subr.bf16.mxu0 0
      %5073 = vmatpush1.bf16.msra.mxu0 0
      %5074 = vmatprep.subr.bf16.mxu0 0
      %5075 = vmatpush1.bf16.msra.mxu0 0
      %5076 = vmatprep.subr.bf16.mxu0 0
      %5077 = vmatpush1.bf16.msra.mxu0 0
      %5078 = vmatprep.subr.bf16.mxu0 0
      %5079 = vmatpush1.bf16.msra.mxu0 0
      %5080 = vmatprep.subr.bf16.mxu0 0
      %5081 = vmatpush1.bf16.msra.mxu0 0
      %5082 = vmatprep.subr.bf16.mxu0 0
      %5083 = vmatpush1.bf16.msra.mxu0 %v5066
      %5084 = vmatprep.subr.bf16.mxu0 0
      %5085 = vmatpush2.bf16.msra.mxu0 0
      %5086 = vmatprep.subr.bf16.mxu0 0
      %5087 = vmatpush2.bf16.msra.mxu0 0
      %5088 = vmatprep.subr.bf16.mxu0 0
      %5089 = vmatpush2.bf16.msra.mxu0 0
      %5090 = vmatprep.subr.bf16.mxu0 0
      %5091 = vmatpush2.bf16.msra.mxu0 0
      %5092 = vmatprep.subr.bf16.mxu0 0
      %5093 = vmatpush2.bf16.msra.mxu0 0
      %5094 = vmatprep.subr.bf16.mxu0 0
      %5095 = vmatpush2.bf16.msra.mxu0 0
      %5096 = vmatprep.subr.bf16.mxu0 0
      %5097 = vmatpush2.bf16.msra.mxu0 0
      %5098 = vmatprep.subr.bf16.mxu0 0
      %5099 = vmatpush2.bf16.msra.mxu0 0
      %5100 = vmatprep.mubr.bf16.mxu0 0
      %5101 = vmatmul.mubr.bf16.gmra.mxu0 %v5018
      %v5102 = vpop.f32.mrf.mxu0
      %v5103 = vadd.f32 0.0, %v5102
      %v5104 = vpop.f32.mrf.mxu0
      %v5105 = vpop.f32.mrf.mxu0
      %v5106 = vadd.f32 0.0, %v5105
      %v5107 = vpop.f32.mrf.mxu0
      %5108 = vmatprep.mubr.bf16.mxu0 0
      %5109 = vmatmul.mubr.bf16.gmra.mxu0 %v5021
      %v5110 = vpop.f32.mrf.mxu0
      %v5111 = vadd.f32 0.0, %v5110
      %v5112 = vpop.f32.mrf.mxu0
      %v5113 = vpop.f32.mrf.mxu0
      %v5114 = vadd.f32 0.0, %v5113
      %v5115 = vpop.f32.mrf.mxu0
      %5116 = vmatprep.mubr.bf16.mxu0 0
      %5117 = vmatmul.mubr.bf16.gmra.mxu0 %v5024
      %v5118 = vpop.f32.mrf.mxu0
      %v5119 = vadd.f32 0.0, %v5118
      %v5120 = vpop.f32.mrf.mxu0
      %v5121 = vpop.f32.mrf.mxu0
      %v5122 = vadd.f32 0.0, %v5121
      %v5123 = vpop.f32.mrf.mxu0
      %5124 = vmatprep.mubr.bf16.mxu0 0
      %5125 = vmatmul.mubr.bf16.gmra.mxu0 %v5027
      %v5126 = vpop.f32.mrf.mxu0
      %v5127 = vadd.f32 0.0, %v5126
      %v5128 = vpop.f32.mrf.mxu0
      %v5129 = vpop.f32.mrf.mxu0
      %v5130 = vadd.f32 0.0, %v5129
      %v5131 = vpop.f32.mrf.mxu0
      %5132 = vmatprep.mubr.bf16.mxu0 0
      %5133 = vmatmul.mubr.bf16.gmra.mxu0 %v5030
      %v5134 = vpop.f32.mrf.mxu0
      %v5135 = vadd.f32 0.0, %v5134
      %v5136 = vpop.f32.mrf.mxu0
      %v5137 = vpop.f32.mrf.mxu0
      %v5138 = vadd.f32 0.0, %v5137
      %v5139 = vpop.f32.mrf.mxu0
      %5140 = vmatprep.mubr.bf16.mxu0 0
      %5141 = vmatmul.mubr.bf16.gmra.mxu0 %v5033
      %v5142 = vpop.f32.mrf.mxu0
      %v5143 = vadd.f32 0.0, %v5142
      %v5144 = vpop.f32.mrf.mxu0
      %v5145 = vpop.f32.mrf.mxu0
      %v5146 = vadd.f32 0.0, %v5145
      %v5147 = vpop.f32.mrf.mxu0
      %5148 = vmatprep.mubr.bf16.mxu0 0
      %5149 = vmatmul.mubr.bf16.gmra.mxu0 %v5036
      %v5150 = vpop.f32.mrf.mxu0
      %v5151 = vadd.f32 0.0, %v5150
      %v5152 = vpop.f32.mrf.mxu0
      %v5153 = vpop.f32.mrf.mxu0
      %v5154 = vadd.f32 0.0, %v5153
      %v5155 = vpop.f32.mrf.mxu0
      %5156 = vmatprep.mubr.bf16.mxu0 0
      %5157 = vmatmul.mubr.bf16.gmra.mxu0 %v5039
      %v5158 = vpop.f32.mrf.mxu0
      %v5159 = vadd.f32 0.0, %v5158
      %v5160 = vpop.f32.mrf.mxu0
      %v5161 = vpop.f32.mrf.mxu0
      %v5162 = vadd.f32 0.0, %v5161
      %v5163 = vpop.f32.mrf.mxu0
      %5164 = vmatprep.mubr.bf16.mxu0 0
      %5165 = vmatmul.mubr.bf16.gmra.mxu0 %v5042
      %v5166 = vpop.f32.mrf.mxu0
      %v5167 = vadd.f32 0.0, %v5166
      %v5168 = vpop.f32.mrf.mxu0
      %v5169 = vpop.f32.mrf.mxu0
      %v5170 = vadd.f32 0.0, %v5169
      %v5171 = vpop.f32.mrf.mxu0
      %5172 = vmatprep.mubr.bf16.mxu0 0
      %5173 = vmatmul.mubr.bf16.gmra.mxu0 %v5045
      %v5174 = vpop.f32.mrf.mxu0
      %v5175 = vadd.f32 0.0, %v5174
      %v5176 = vpop.f32.mrf.mxu0
      %v5177 = vpop.f32.mrf.mxu0
      %v5178 = vadd.f32 0.0, %v5177
      %v5179 = vpop.f32.mrf.mxu0
      %5180 = vmatprep.mubr.bf16.mxu0 0
      %5181 = vmatmul.mubr.bf16.gmra.mxu0 %v5048
      %v5182 = vpop.f32.mrf.mxu0
      %v5183 = vadd.f32 0.0, %v5182
      %v5184 = vpop.f32.mrf.mxu0
      %v5185 = vpop.f32.mrf.mxu0
      %v5186 = vadd.f32 0.0, %v5185
      %v5187 = vpop.f32.mrf.mxu0
      %5188 = vmatprep.mubr.bf16.mxu0 0
      %5189 = vmatmul.mubr.bf16.gmra.mxu0 %v5051
      %v5190 = vpop.f32.mrf.mxu0
      %v5191 = vadd.f32 0.0, %v5190
      %v5192 = vpop.f32.mrf.mxu0
      %v5193 = vpop.f32.mrf.mxu0
      %v5194 = vadd.f32 0.0, %v5193
      %v5195 = vpop.f32.mrf.mxu0
      %5196 = vmatprep.mubr.bf16.mxu0 0
      %5197 = vmatmul.mubr.bf16.gmra.mxu0 %v5054
      %v5198 = vpop.f32.mrf.mxu0
      %v5199 = vadd.f32 0.0, %v5198
      %v5200 = vpop.f32.mrf.mxu0
      %v5201 = vpop.f32.mrf.mxu0
      %v5202 = vadd.f32 0.0, %v5201
      %v5203 = vpop.f32.mrf.mxu0
      %5204 = vmatprep.mubr.bf16.mxu0 0
      %5205 = vmatmul.mubr.bf16.gmra.mxu0 %v5057
      %v5206 = vpop.f32.mrf.mxu0
      %v5207 = vadd.f32 0.0, %v5206
      %v5208 = vpop.f32.mrf.mxu0
      %v5209 = vpop.f32.mrf.mxu0
      %v5210 = vadd.f32 0.0, %v5209
      %v5211 = vpop.f32.mrf.mxu0
      %5212 = vmatprep.mubr.bf16.mxu0 0
      %5213 = vmatmul.mubr.bf16.gmra.mxu0 %v5060
      %v5214 = vpop.f32.mrf.mxu0
      %v5215 = vadd.f32 0.0, %v5214
      %v5216 = vpop.f32.mrf.mxu0
      %v5217 = vpop.f32.mrf.mxu0
      %v5218 = vadd.f32 0.0, %v5217
      %v5219 = vpop.f32.mrf.mxu0
      %5220 = vmatprep.mubr.bf16.mxu0 0
      %5221 = vmatmul.mubr.bf16.gmra.mxu0 %v5063
      %v5222 = vpop.f32.mrf.mxu0
      %v5223 = vadd.f32 0.0, %v5222
      %v5224 = vpop.f32.mrf.mxu0
      %v5225 = vpop.f32.mrf.mxu0
      %v5226 = vadd.f32 0.0, %v5225
      %v5227 = vpop.f32.mrf.mxu0
      %5228 = vdwg.mxu0
      %v5229 = vadd.f32 %v4945, %v5103
      %v5230 = vadd.f32 %v4946, %v5106
      %v5231 = vadd.f32 %v4947, %v5111
      %v5232 = vadd.f32 %v4948, %v5114
      %v5233 = vadd.f32 %v4949, %v5119
      %v5234 = vadd.f32 %v4950, %v5122
      %v5235 = vadd.f32 %v4951, %v5127
      %v5236 = vadd.f32 %v4952, %v5130
      %v5237 = vadd.f32 %v4953, %v5135
      %v5238 = vadd.f32 %v4954, %v5138
      %v5239 = vadd.f32 %v4955, %v5143
      %v5240 = vadd.f32 %v4956, %v5146
      %v5241 = vadd.f32 %v4957, %v5151
      %v5242 = vadd.f32 %v4958, %v5154
      %v5243 = vadd.f32 %v4959, %v5159
      %v5244 = vadd.f32 %v4960, %v5162
      %v5245 = vadd.f32 %v4961, %v5167
      %v5246 = vadd.f32 %v4962, %v5170
      %v5247 = vadd.f32 %v4963, %v5175
      %v5248 = vadd.f32 %v4964, %v5178
      %v5249 = vadd.f32 %v4965, %v5183
      %v5250 = vadd.f32 %v4966, %v5186
      %v5251 = vadd.f32 %v4967, %v5191
      %v5252 = vadd.f32 %v4968, %v5194
      %v5253 = vadd.f32 %v4969, %v5199
      %v5254 = vadd.f32 %v4970, %v5202
      %v5255 = vadd.f32 %v4971, %v5207
      %v5256 = vadd.f32 %v4972, %v5210
      %v5257 = vadd.f32 %v4973, %v5215
      %v5258 = vadd.f32 %v4974, %v5218
      %v5259 = vadd.f32 %v4975, %v5223
      %v5260 = vadd.f32 %v4976, %v5226
      %v5261 = vld [vmem:[#allocation2 + $0x108] sm:$0x3]
      %s5262 = scalar_lea.vmem %s8, 32
      %v5263 = vld [vmem:[%s5262] sm:$0xf]
      %v5265 = vunpack.c.l.b16 %v5261
      %v5266 = vpack.c.b16 %v5265, %v5265
      %vm5267 = vsmask.f32 6400
      %v5269 = vshrl.u32 %v4982, 16
      %v5271 = vrot.slane %v5269, 1
      %v5272 = vshll.u32 %v4982, 16
      %v5274 = vrot.slane %v5272, 2
      %v5275 = vor.u32 %v5271, %v5274
      %v5276 = vrot.slane %v4613, 1
      %v5277 = vrot.slane %v4609, 2
      %v5278 = vor.u32 %v5276, %v5277
      %v5279 = vsel %vm5267, %v5275, %v5278
      %v5280 = vrot.slane %v4621, 1
      %v5281 = vrot.slane %v4617, 2
      %v5282 = vor.u32 %v5280, %v5281
      %v5283 = vsel %vm5267, %v5278, %v5282
      %v5284 = vrot.slane %v4629, 1
      %v5285 = vrot.slane %v4625, 2
      %v5286 = vor.u32 %v5284, %v5285
      %v5287 = vsel %vm5267, %v5282, %v5286
      %v5288 = vrot.slane %v4637, 1
      %v5289 = vrot.slane %v4633, 2
      %v5290 = vor.u32 %v5288, %v5289
      %v5291 = vsel %vm5267, %v5286, %v5290
      %v5292 = vrot.slane %v4645, 1
      %v5293 = vrot.slane %v4641, 2
      %v5294 = vor.u32 %v5292, %v5293
      %v5295 = vsel %vm5267, %v5290, %v5294
      %v5296 = vrot.slane %v4653, 1
      %v5297 = vrot.slane %v4649, 2
      %v5298 = vor.u32 %v5296, %v5297
      %v5299 = vsel %vm5267, %v5294, %v5298
      %v5300 = vrot.slane %v4661, 1
      %v5301 = vrot.slane %v4657, 2
      %v5302 = vor.u32 %v5300, %v5301
      %v5303 = vsel %vm5267, %v5298, %v5302
      %v5304 = vrot.slane %v4669, 1
      %v5305 = vrot.slane %v4665, 2
      %v5306 = vor.u32 %v5304, %v5305
      %v5307 = vsel %vm5267, %v5302, %v5306
      %v5308 = vrot.slane %v4677, 1
      %v5309 = vrot.slane %v4673, 2
      %v5310 = vor.u32 %v5308, %v5309
      %v5311 = vsel %vm5267, %v5306, %v5310
      %v5312 = vrot.slane %v4685, 1
      %v5313 = vrot.slane %v4681, 2
      %v5314 = vor.u32 %v5312, %v5313
      %v5315 = vsel %vm5267, %v5310, %v5314
      %v5316 = vrot.slane %v4693, 1
      %v5317 = vrot.slane %v4689, 2
      %v5318 = vor.u32 %v5316, %v5317
      %v5319 = vsel %vm5267, %v5314, %v5318
      %v5320 = vrot.slane %v4701, 1
      %v5321 = vrot.slane %v4697, 2
      %v5322 = vor.u32 %v5320, %v5321
      %v5323 = vsel %vm5267, %v5318, %v5322
      %v5324 = vrot.slane %v4709, 1
      %v5325 = vrot.slane %v4705, 2
      %v5326 = vor.u32 %v5324, %v5325
      %v5327 = vsel %vm5267, %v5322, %v5326
      %v5328 = vrot.slane %v4717, 1
      %v5329 = vrot.slane %v4713, 2
      %v5330 = vor.u32 %v5328, %v5329
      %v5331 = vsel %vm5267, %v5326, %v5330
      %v5332 = vrot.slane %v4725, 1
      %v5333 = vrot.slane %v4721, 2
      %v5334 = vor.u32 %v5332, %v5333
      %v5335 = vsel %vm5267, %v5330, %v5334
      %v5337 = vshrl.u32 %v5266, 16
      %v5339 = vrot.slane %v5337, 1
      %v5340 = vshll.u32 %v5266, 16
      %v5342 = vrot.slane %v5340, 2
      %v5343 = vor.u32 %v5339, %v5342
      %v5344 = vsel %vm5267, %v5334, %v5343
      %v5346 = vsel %vm2302, %v5279, 0
      %v5349 = vsel %vm2302, %v5283, 0
      %v5352 = vsel %vm2302, %v5287, 0
      %v5355 = vsel %vm2302, %v5291, 0
      %v5358 = vsel %vm2302, %v5295, 0
      %v5361 = vsel %vm2302, %v5299, 0
      %v5364 = vsel %vm2302, %v5303, 0
      %v5367 = vsel %vm2302, %v5307, 0
      %v5370 = vsel %vm2302, %v5311, 0
      %v5373 = vsel %vm2302, %v5315, 0
      %v5376 = vsel %vm2302, %v5319, 0
      %v5379 = vsel %vm2302, %v5323, 0
      %v5382 = vsel %vm2302, %v5327, 0
      %v5385 = vsel %vm2302, %v5331, 0
      %v5388 = vsel %vm2302, %v5335, 0
      %v5391 = vsel %vm2302, %v5344, 0
      %v5394 = vsel %vm2351, %v5263, 0
      %5396 = vmatprep.subr.bf16.mxu0 0
      %5397 = vmatpush1.bf16.msra.mxu0 0
      %5398 = vmatprep.subr.bf16.mxu0 0
      %5399 = vmatpush1.bf16.msra.mxu0 0
      %5400 = vmatprep.subr.bf16.mxu0 0
      %5401 = vmatpush1.bf16.msra.mxu0 0
      %5402 = vmatprep.subr.bf16.mxu0 0
      %5403 = vmatpush1.bf16.msra.mxu0 0
      %5404 = vmatprep.subr.bf16.mxu0 0
      %5405 = vmatpush1.bf16.msra.mxu0 0
      %5406 = vmatprep.subr.bf16.mxu0 0
      %5407 = vmatpush1.bf16.msra.mxu0 0
      %5408 = vmatprep.subr.bf16.mxu0 0
      %5409 = vmatpush1.bf16.msra.mxu0 0
      %5410 = vmatprep.subr.bf16.mxu0 0
      %5411 = vmatpush1.bf16.msra.mxu0 %v5394
      %5412 = vmatprep.subr.bf16.mxu0 0
      %5413 = vmatpush2.bf16.msra.mxu0 0
      %5414 = vmatprep.subr.bf16.mxu0 0
      %5415 = vmatpush2.bf16.msra.mxu0 0
      %5416 = vmatprep.subr.bf16.mxu0 0
      %5417 = vmatpush2.bf16.msra.mxu0 0
      %5418 = vmatprep.subr.bf16.mxu0 0
      %5419 = vmatpush2.bf16.msra.mxu0 0
      %5420 = vmatprep.subr.bf16.mxu0 0
      %5421 = vmatpush2.bf16.msra.mxu0 0
      %5422 = vmatprep.subr.bf16.mxu0 0
      %5423 = vmatpush2.bf16.msra.mxu0 0
      %5424 = vmatprep.subr.bf16.mxu0 0
      %5425 = vmatpush2.bf16.msra.mxu0 0
      %5426 = vmatprep.subr.bf16.mxu0 0
      %5427 = vmatpush2.bf16.msra.mxu0 0
      %5428 = vmatprep.mubr.bf16.mxu0 0
      %5429 = vmatmul.mubr.bf16.gmra.mxu0 %v5346
      %v5430 = vpop.f32.mrf.mxu0
      %v5431 = vadd.f32 0.0, %v5430
      %v5432 = vpop.f32.mrf.mxu0
      %v5433 = vpop.f32.mrf.mxu0
      %v5434 = vadd.f32 0.0, %v5433
      %v5435 = vpop.f32.mrf.mxu0
      %5436 = vmatprep.mubr.bf16.mxu0 0
      %5437 = vmatmul.mubr.bf16.gmra.mxu0 %v5349
      %v5438 = vpop.f32.mrf.mxu0
      %v5439 = vadd.f32 0.0, %v5438
      %v5440 = vpop.f32.mrf.mxu0
      %v5441 = vpop.f32.mrf.mxu0
      %v5442 = vadd.f32 0.0, %v5441
      %v5443 = vpop.f32.mrf.mxu0
      %5444 = vmatprep.mubr.bf16.mxu0 0
      %5445 = vmatmul.mubr.bf16.gmra.mxu0 %v5352
      %v5446 = vpop.f32.mrf.mxu0
      %v5447 = vadd.f32 0.0, %v5446
      %v5448 = vpop.f32.mrf.mxu0
      %v5449 = vpop.f32.mrf.mxu0
      %v5450 = vadd.f32 0.0, %v5449
      %v5451 = vpop.f32.mrf.mxu0
      %5452 = vmatprep.mubr.bf16.mxu0 0
      %5453 = vmatmul.mubr.bf16.gmra.mxu0 %v5355
      %v5454 = vpop.f32.mrf.mxu0
      %v5455 = vadd.f32 0.0, %v5454
      %v5456 = vpop.f32.mrf.mxu0
      %v5457 = vpop.f32.mrf.mxu0
      %v5458 = vadd.f32 0.0, %v5457
      %v5459 = vpop.f32.mrf.mxu0
      %5460 = vmatprep.mubr.bf16.mxu0 0
      %5461 = vmatmul.mubr.bf16.gmra.mxu0 %v5358
      %v5462 = vpop.f32.mrf.mxu0
      %v5463 = vadd.f32 0.0, %v5462
      %v5464 = vpop.f32.mrf.mxu0
      %v5465 = vpop.f32.mrf.mxu0
      %v5466 = vadd.f32 0.0, %v5465
      %v5467 = vpop.f32.mrf.mxu0
      %5468 = vmatprep.mubr.bf16.mxu0 0
      %5469 = vmatmul.mubr.bf16.gmra.mxu0 %v5361
      %v5470 = vpop.f32.mrf.mxu0
      %v5471 = vadd.f32 0.0, %v5470
      %v5472 = vpop.f32.mrf.mxu0
      %v5473 = vpop.f32.mrf.mxu0
      %v5474 = vadd.f32 0.0, %v5473
      %v5475 = vpop.f32.mrf.mxu0
      %5476 = vmatprep.mubr.bf16.mxu0 0
      %5477 = vmatmul.mubr.bf16.gmra.mxu0 %v5364
      %v5478 = vpop.f32.mrf.mxu0
      %v5479 = vadd.f32 0.0, %v5478
      %v5480 = vpop.f32.mrf.mxu0
      %v5481 = vpop.f32.mrf.mxu0
      %v5482 = vadd.f32 0.0, %v5481
      %v5483 = vpop.f32.mrf.mxu0
      %5484 = vmatprep.mubr.bf16.mxu0 0
      %5485 = vmatmul.mubr.bf16.gmra.mxu0 %v5367
      %v5486 = vpop.f32.mrf.mxu0
      %v5487 = vadd.f32 0.0, %v5486
      %v5488 = vpop.f32.mrf.mxu0
      %v5489 = vpop.f32.mrf.mxu0
      %v5490 = vadd.f32 0.0, %v5489
      %v5491 = vpop.f32.mrf.mxu0
      %5492 = vmatprep.mubr.bf16.mxu0 0
      %5493 = vmatmul.mubr.bf16.gmra.mxu0 %v5370
      %v5494 = vpop.f32.mrf.mxu0
      %v5495 = vadd.f32 0.0, %v5494
      %v5496 = vpop.f32.mrf.mxu0
      %v5497 = vpop.f32.mrf.mxu0
      %v5498 = vadd.f32 0.0, %v5497
      %v5499 = vpop.f32.mrf.mxu0
      %5500 = vmatprep.mubr.bf16.mxu0 0
      %5501 = vmatmul.mubr.bf16.gmra.mxu0 %v5373
      %v5502 = vpop.f32.mrf.mxu0
      %v5503 = vadd.f32 0.0, %v5502
      %v5504 = vpop.f32.mrf.mxu0
      %v5505 = vpop.f32.mrf.mxu0
      %v5506 = vadd.f32 0.0, %v5505
      %v5507 = vpop.f32.mrf.mxu0
      %5508 = vmatprep.mubr.bf16.mxu0 0
      %5509 = vmatmul.mubr.bf16.gmra.mxu0 %v5376
      %v5510 = vpop.f32.mrf.mxu0
      %v5511 = vadd.f32 0.0, %v5510
      %v5512 = vpop.f32.mrf.mxu0
      %v5513 = vpop.f32.mrf.mxu0
      %v5514 = vadd.f32 0.0, %v5513
      %v5515 = vpop.f32.mrf.mxu0
      %5516 = vmatprep.mubr.bf16.mxu0 0
      %5517 = vmatmul.mubr.bf16.gmra.mxu0 %v5379
      %v5518 = vpop.f32.mrf.mxu0
      %v5519 = vadd.f32 0.0, %v5518
      %v5520 = vpop.f32.mrf.mxu0
      %v5521 = vpop.f32.mrf.mxu0
      %v5522 = vadd.f32 0.0, %v5521
      %v5523 = vpop.f32.mrf.mxu0
      %5524 = vmatprep.mubr.bf16.mxu0 0
      %5525 = vmatmul.mubr.bf16.gmra.mxu0 %v5382
      %v5526 = vpop.f32.mrf.mxu0
      %v5527 = vadd.f32 0.0, %v5526
      %v5528 = vpop.f32.mrf.mxu0
      %v5529 = vpop.f32.mrf.mxu0
      %v5530 = vadd.f32 0.0, %v5529
      %v5531 = vpop.f32.mrf.mxu0
      %5532 = vmatprep.mubr.bf16.mxu0 0
      %5533 = vmatmul.mubr.bf16.gmra.mxu0 %v5385
      %v5534 = vpop.f32.mrf.mxu0
      %v5535 = vadd.f32 0.0, %v5534
      %v5536 = vpop.f32.mrf.mxu0
      %v5537 = vpop.f32.mrf.mxu0
      %v5538 = vadd.f32 0.0, %v5537
      %v5539 = vpop.f32.mrf.mxu0
      %5540 = vmatprep.mubr.bf16.mxu0 0
      %5541 = vmatmul.mubr.bf16.gmra.mxu0 %v5388
      %v5542 = vpop.f32.mrf.mxu0
      %v5543 = vadd.f32 0.0, %v5542
      %v5544 = vpop.f32.mrf.mxu0
      %v5545 = vpop.f32.mrf.mxu0
      %v5546 = vadd.f32 0.0, %v5545
      %v5547 = vpop.f32.mrf.mxu0
      %5548 = vmatprep.mubr.bf16.mxu0 0
      %5549 = vmatmul.mubr.bf16.gmra.mxu0 %v5391
      %v5550 = vpop.f32.mrf.mxu0
      %v5551 = vadd.f32 0.0, %v5550
      %v5552 = vpop.f32.mrf.mxu0
      %v5553 = vpop.f32.mrf.mxu0
      %v5554 = vadd.f32 0.0, %v5553
      %v5555 = vpop.f32.mrf.mxu0
      %5556 = vdwg.mxu0
      %v5557 = vadd.f32 %v5229, %v5431
      %v5558 = vadd.f32 %v5230, %v5434
      %v5559 = vadd.f32 %v5231, %v5439
      %v5560 = vadd.f32 %v5232, %v5442
      %v5561 = vadd.f32 %v5233, %v5447
      %v5562 = vadd.f32 %v5234, %v5450
      %v5563 = vadd.f32 %v5235, %v5455
      %v5564 = vadd.f32 %v5236, %v5458
      %v5565 = vadd.f32 %v5237, %v5463
      %v5566 = vadd.f32 %v5238, %v5466
      %v5567 = vadd.f32 %v5239, %v5471
      %v5568 = vadd.f32 %v5240, %v5474
      %v5569 = vadd.f32 %v5241, %v5479
      %v5570 = vadd.f32 %v5242, %v5482
      %v5571 = vadd.f32 %v5243, %v5487
      %v5572 = vadd.f32 %v5244, %v5490
      %v5573 = vadd.f32 %v5245, %v5495
      %v5574 = vadd.f32 %v5246, %v5498
      %v5575 = vadd.f32 %v5247, %v5503
      %v5576 = vadd.f32 %v5248, %v5506
      %v5577 = vadd.f32 %v5249, %v5511
      %v5578 = vadd.f32 %v5250, %v5514
      %v5579 = vadd.f32 %v5251, %v5519
      %v5580 = vadd.f32 %v5252, %v5522
      %v5581 = vadd.f32 %v5253, %v5527
      %v5582 = vadd.f32 %v5254, %v5530
      %v5583 = vadd.f32 %v5255, %v5535
      %v5584 = vadd.f32 %v5256, %v5538
      %v5585 = vadd.f32 %v5257, %v5543
      %v5586 = vadd.f32 %v5258, %v5546
      %v5587 = vadd.f32 %v5259, %v5551
      %v5588 = vadd.f32 %v5260, %v5554
      %v5589 = vld [vmem:[%s544] sm:$0xff]
      %v5590 = vld [vmem:[%s544 + $0x8] sm:$0xff]
      %v5591 = vld [vmem:[%s544 + $0x10] sm:$0xff]
      %v5592 = vld [vmem:[%s544 + $0x18] sm:$0xff]
      %v5593 = vld [vmem:[%s544 + $0x20] sm:$0xff]
      %v5594 = vld [vmem:[%s544 + $0x28] sm:$0xff]
      %v5595 = vld [vmem:[%s544 + $0x30] sm:$0xff]
      %v5596 = vld [vmem:[%s544 + $0x38] sm:$0xff]
      %v5597 = vld [vmem:[%s544 + $0x40] sm:$0xff]
      %v5598 = vld [vmem:[%s544 + $0x48] sm:$0xff]
      %v5599 = vld [vmem:[%s544 + $0x50] sm:$0xff]
      %v5600 = vld [vmem:[%s544 + $0x58] sm:$0xff]
      %v5601 = vld [vmem:[%s544 + $0x60] sm:$0xff]
      %v5602 = vld [vmem:[%s544 + $0x68] sm:$0xff]
      %v5603 = vld [vmem:[%s544 + $0x70] sm:$0xff]
      %v5604 = vld [vmem:[%s544 + $0x78] sm:$0xff]
      %v5605 = vld [vmem:[%s544 + $0x80] sm:$0xff]
      %v5606 = vld [vmem:[%s544 + $0x88] sm:$0xff]
      %v5607 = vld [vmem:[%s544 + $0x90] sm:$0xff]
      %v5608 = vld [vmem:[%s544 + $0x98] sm:$0xff]
      %v5609 = vld [vmem:[%s544 + $0xa0] sm:$0xff]
      %v5610 = vld [vmem:[%s544 + $0xa8] sm:$0xff]
      %v5611 = vld [vmem:[%s544 + $0xb0] sm:$0xff]
      %v5612 = vld [vmem:[%s544 + $0xb8] sm:$0xff]
      %v5613 = vld [vmem:[%s544 + $0xc0] sm:$0xff]
      %v5614 = vld [vmem:[%s544 + $0xc8] sm:$0xff]
      %v5615 = vld [vmem:[%s544 + $0xd0] sm:$0xff]
      %v5616 = vld [vmem:[%s544 + $0xd8] sm:$0xff]
      %v5617 = vld [vmem:[%s544 + $0xe0] sm:$0xff]
      %v5618 = vld [vmem:[%s544 + $0xe8] sm:$0xff]
      %v5619 = vld [vmem:[%s544 + $0xf0] sm:$0xff]
      %v5620 = vld [vmem:[%s544 + $0xf8] sm:$0xff]
      %5622 = vset.pattern.permute.xlu0 0
      %5623 = vperm.xlu0 %5622, %v5589
      %v5624 = vpop.permute.xlu0 %5623
      %5627 = vset.pattern.permute.xlu0 0
      %5628 = vperm.xlu0 %5627, %v5590
      %v5629 = vpop.permute.xlu0 %5628
      %5632 = vset.pattern.permute.xlu0 0
      %5633 = vperm.xlu0 %5632, %v5591
      %v5634 = vpop.permute.xlu0 %5633
      %5637 = vset.pattern.permute.xlu0 0
      %5638 = vperm.xlu0 %5637, %v5592
      %v5639 = vpop.permute.xlu0 %5638
      %5642 = vset.pattern.permute.xlu0 0
      %5643 = vperm.xlu0 %5642, %v5593
      %v5644 = vpop.permute.xlu0 %5643
      %5647 = vset.pattern.permute.xlu0 0
      %5648 = vperm.xlu0 %5647, %v5594
      %v5649 = vpop.permute.xlu0 %5648
      %5652 = vset.pattern.permute.xlu0 0
      %5653 = vperm.xlu0 %5652, %v5595
      %v5654 = vpop.permute.xlu0 %5653
      %5657 = vset.pattern.permute.xlu0 0
      %5658 = vperm.xlu0 %5657, %v5596
      %v5659 = vpop.permute.xlu0 %5658
      %5662 = vset.pattern.permute.xlu0 0
      %5663 = vperm.xlu0 %5662, %v5597
      %v5664 = vpop.permute.xlu0 %5663
      %5667 = vset.pattern.permute.xlu0 0
      %5668 = vperm.xlu0 %5667, %v5598
      %v5669 = vpop.permute.xlu0 %5668
      %5672 = vset.pattern.permute.xlu0 0
      %5673 = vperm.xlu0 %5672, %v5599
      %v5674 = vpop.permute.xlu0 %5673
      %5677 = vset.pattern.permute.xlu0 0
      %5678 = vperm.xlu0 %5677, %v5600
      %v5679 = vpop.permute.xlu0 %5678
      %5682 = vset.pattern.permute.xlu0 0
      %5683 = vperm.xlu0 %5682, %v5601
      %v5684 = vpop.permute.xlu0 %5683
      %5687 = vset.pattern.permute.xlu0 0
      %5688 = vperm.xlu0 %5687, %v5602
      %v5689 = vpop.permute.xlu0 %5688
      %5692 = vset.pattern.permute.xlu0 0
      %5693 = vperm.xlu0 %5692, %v5603
      %v5694 = vpop.permute.xlu0 %5693
      %5697 = vset.pattern.permute.xlu0 0
      %5698 = vperm.xlu0 %5697, %v5604
      %v5699 = vpop.permute.xlu0 %5698
      %5702 = vset.pattern.permute.xlu0 0
      %5703 = vperm.xlu0 %5702, %v5605
      %v5704 = vpop.permute.xlu0 %5703
      %5707 = vset.pattern.permute.xlu0 0
      %5708 = vperm.xlu0 %5707, %v5606
      %v5709 = vpop.permute.xlu0 %5708
      %5712 = vset.pattern.permute.xlu0 0
      %5713 = vperm.xlu0 %5712, %v5607
      %v5714 = vpop.permute.xlu0 %5713
      %5717 = vset.pattern.permute.xlu0 0
      %5718 = vperm.xlu0 %5717, %v5608
      %v5719 = vpop.permute.xlu0 %5718
      %5722 = vset.pattern.permute.xlu0 0
      %5723 = vperm.xlu0 %5722, %v5609
      %v5724 = vpop.permute.xlu0 %5723
      %5727 = vset.pattern.permute.xlu0 0
      %5728 = vperm.xlu0 %5727, %v5610
      %v5729 = vpop.permute.xlu0 %5728
      %5732 = vset.pattern.permute.xlu0 0
      %5733 = vperm.xlu0 %5732, %v5611
      %v5734 = vpop.permute.xlu0 %5733
      %5737 = vset.pattern.permute.xlu0 0
      %5738 = vperm.xlu0 %5737, %v5612
      %v5739 = vpop.permute.xlu0 %5738
      %5742 = vset.pattern.permute.xlu0 0
      %5743 = vperm.xlu0 %5742, %v5613
      %v5744 = vpop.permute.xlu0 %5743
      %5747 = vset.pattern.permute.xlu0 0
      %5748 = vperm.xlu0 %5747, %v5614
      %v5749 = vpop.permute.xlu0 %5748
      %5752 = vset.pattern.permute.xlu0 0
      %5753 = vperm.xlu0 %5752, %v5615
      %v5754 = vpop.permute.xlu0 %5753
      %5757 = vset.pattern.permute.xlu0 0
      %5758 = vperm.xlu0 %5757, %v5616
      %v5759 = vpop.permute.xlu0 %5758
      %5762 = vset.pattern.permute.xlu0 0
      %5763 = vperm.xlu0 %5762, %v5617
      %v5764 = vpop.permute.xlu0 %5763
      %5767 = vset.pattern.permute.xlu0 0
      %5768 = vperm.xlu0 %5767, %v5618
      %v5769 = vpop.permute.xlu0 %5768
      %5772 = vset.pattern.permute.xlu0 0
      %5773 = vperm.xlu0 %5772, %v5619
      %v5774 = vpop.permute.xlu0 %5773
      %5777 = vset.pattern.permute.xlu0 0
      %5778 = vperm.xlu0 %5777, %v5620
      %v5779 = vpop.permute.xlu0 %5778
      %v5781 = vmul.f32 %v5557, %v5624
      %v5782 = vmul.f32 %v5558, %v5629
      %v5783 = vmul.f32 %v5559, %v5634
      %v5784 = vmul.f32 %v5560, %v5639
      %v5785 = vmul.f32 %v5561, %v5644
      %v5786 = vmul.f32 %v5562, %v5649
      %v5787 = vmul.f32 %v5563, %v5654
      %v5788 = vmul.f32 %v5564, %v5659
      %v5789 = vmul.f32 %v5565, %v5664
      %v5790 = vmul.f32 %v5566, %v5669
      %v5791 = vmul.f32 %v5567, %v5674
      %v5792 = vmul.f32 %v5568, %v5679
      %v5793 = vmul.f32 %v5569, %v5684
      %v5794 = vmul.f32 %v5570, %v5689
      %v5795 = vmul.f32 %v5571, %v5694
      %v5796 = vmul.f32 %v5572, %v5699
      %v5797 = vmul.f32 %v5573, %v5704
      %v5798 = vmul.f32 %v5574, %v5709
      %v5799 = vmul.f32 %v5575, %v5714
      %v5800 = vmul.f32 %v5576, %v5719
      %v5801 = vmul.f32 %v5577, %v5724
      %v5802 = vmul.f32 %v5578, %v5729
      %v5803 = vmul.f32 %v5579, %v5734
      %v5804 = vmul.f32 %v5580, %v5739
      %v5805 = vmul.f32 %v5581, %v5744
      %v5806 = vmul.f32 %v5582, %v5749
      %v5807 = vmul.f32 %v5583, %v5754
      %v5808 = vmul.f32 %v5584, %v5759
      %v5809 = vmul.f32 %v5585, %v5764
      %v5810 = vmul.f32 %v5586, %v5769
      %v5811 = vmul.f32 %v5587, %v5774
      %v5812 = vmul.f32 %v5588, %v5779
      %5813 = vst.msk [vmem:[%s562] sm:$0xff] %vm2302, %v5781
      %5814 = vst.msk [vmem:[%s562 + $0x8] sm:$0xff] %vm2302, %v5782
      %5815 = vst.msk [vmem:[%s562 + $0x10] sm:$0xff] %vm2302, %v5783
      %5816 = vst.msk [vmem:[%s562 + $0x18] sm:$0xff] %vm2302, %v5784
      %5817 = vst.msk [vmem:[%s562 + $0x20] sm:$0xff] %vm2302, %v5785
      %5818 = vst.msk [vmem:[%s562 + $0x28] sm:$0xff] %vm2302, %v5786
      %5819 = vst.msk [vmem:[%s562 + $0x30] sm:$0xff] %vm2302, %v5787
      %5820 = vst.msk [vmem:[%s562 + $0x38] sm:$0xff] %vm2302, %v5788
      %5821 = vst.msk [vmem:[%s562 + $0x40] sm:$0xff] %vm2302, %v5789
      %5822 = vst.msk [vmem:[%s562 + $0x48] sm:$0xff] %vm2302, %v5790
      %5823 = vst.msk [vmem:[%s562 + $0x50] sm:$0xff] %vm2302, %v5791
      %5824 = vst.msk [vmem:[%s562 + $0x58] sm:$0xff] %vm2302, %v5792
      %5825 = vst.msk [vmem:[%s562 + $0x60] sm:$0xff] %vm2302, %v5793
      %5826 = vst.msk [vmem:[%s562 + $0x68] sm:$0xff] %vm2302, %v5794
      %5827 = vst.msk [vmem:[%s562 + $0x70] sm:$0xff] %vm2302, %v5795
      %5828 = vst.msk [vmem:[%s562 + $0x78] sm:$0xff] %vm2302, %v5796
      %5829 = vst.msk [vmem:[%s562 + $0x80] sm:$0xff] %vm2302, %v5797
      %5830 = vst.msk [vmem:[%s562 + $0x88] sm:$0xff] %vm2302, %v5798
      %5831 = vst.msk [vmem:[%s562 + $0x90] sm:$0xff] %vm2302, %v5799
      %5832 = vst.msk [vmem:[%s562 + $0x98] sm:$0xff] %vm2302, %v5800
      %5833 = vst.msk [vmem:[%s562 + $0xa0] sm:$0xff] %vm2302, %v5801
      %5834 = vst.msk [vmem:[%s562 + $0xa8] sm:$0xff] %vm2302, %v5802
      %5835 = vst.msk [vmem:[%s562 + $0xb0] sm:$0xff] %vm2302, %v5803
      %5836 = vst.msk [vmem:[%s562 + $0xb8] sm:$0xff] %vm2302, %v5804
      %5837 = vst.msk [vmem:[%s562 + $0xc0] sm:$0xff] %vm2302, %v5805
      %5838 = vst.msk [vmem:[%s562 + $0xc8] sm:$0xff] %vm2302, %v5806
      %5839 = vst.msk [vmem:[%s562 + $0xd0] sm:$0xff] %vm2302, %v5807
      %5840 = vst.msk [vmem:[%s562 + $0xd8] sm:$0xff] %vm2302, %v5808
      %5841 = vst.msk [vmem:[%s562 + $0xe0] sm:$0xff] %vm2302, %v5809
      %5842 = vst.msk [vmem:[%s562 + $0xe8] sm:$0xff] %vm2302, %v5810
      %5843 = vst.msk [vmem:[%s562 + $0xf0] sm:$0xff] %vm2302, %v5811
      %5844 = vst.msk [vmem:[%s562 + $0xf8] sm:$0xff] %vm2302, %v5812
      %v5845 = vsel %vm2302, %v5781, 0.0
      %v5846 = vsel %vm2302, %v5782, 0.0
      %v5847 = vadd.f32 %v5845, %v5846
      %v5848 = vsel %vm2302, %v5783, 0.0
      %v5849 = vadd.f32 %v5847, %v5848
      %v5850 = vsel %vm2302, %v5784, 0.0
      %v5851 = vadd.f32 %v5849, %v5850
      %v5852 = vsel %vm2302, %v5785, 0.0
      %v5853 = vadd.f32 %v5851, %v5852
      %v5854 = vsel %vm2302, %v5786, 0.0
      %v5855 = vadd.f32 %v5853, %v5854
      %v5856 = vsel %vm2302, %v5787, 0.0
      %v5857 = vadd.f32 %v5855, %v5856
      %v5858 = vsel %vm2302, %v5788, 0.0
      %v5859 = vadd.f32 %v5857, %v5858
      %v5860 = vsel %vm2302, %v5789, 0.0
      %v5861 = vadd.f32 %v5859, %v5860
      %v5862 = vsel %vm2302, %v5790, 0.0
      %v5863 = vadd.f32 %v5861, %v5862
      %v5864 = vsel %vm2302, %v5791, 0.0
      %v5865 = vadd.f32 %v5863, %v5864
      %v5866 = vsel %vm2302, %v5792, 0.0
      %v5867 = vadd.f32 %v5865, %v5866
      %v5868 = vsel %vm2302, %v5793, 0.0
      %v5869 = vadd.f32 %v5867, %v5868
      %v5870 = vsel %vm2302, %v5794, 0.0
      %v5871 = vadd.f32 %v5869, %v5870
      %v5872 = vsel %vm2302, %v5795, 0.0
      %v5873 = vadd.f32 %v5871, %v5872
      %v5874 = vsel %vm2302, %v5796, 0.0
      %v5875 = vadd.f32 %v5873, %v5874
      %v5876 = vsel %vm2302, %v5797, 0.0
      %v5877 = vadd.f32 %v5875, %v5876
      %v5878 = vsel %vm2302, %v5798, 0.0
      %v5879 = vadd.f32 %v5877, %v5878
      %v5880 = vsel %vm2302, %v5799, 0.0
      %v5881 = vadd.f32 %v5879, %v5880
      %v5882 = vsel %vm2302, %v5800, 0.0
      %v5883 = vadd.f32 %v5881, %v5882
      %v5884 = vsel %vm2302, %v5801, 0.0
      %v5885 = vadd.f32 %v5883, %v5884
      %v5886 = vsel %vm2302, %v5802, 0.0
      %v5887 = vadd.f32 %v5885, %v5886
      %v5888 = vsel %vm2302, %v5803, 0.0
      %v5889 = vadd.f32 %v5887, %v5888
      %v5890 = vsel %vm2302, %v5804, 0.0
      %v5891 = vadd.f32 %v5889, %v5890
      %v5892 = vsel %vm2302, %v5805, 0.0
      %v5893 = vadd.f32 %v5891, %v5892
      %v5894 = vsel %vm2302, %v5806, 0.0
      %v5895 = vadd.f32 %v5893, %v5894
      %v5896 = vsel %vm2302, %v5807, 0.0
      %v5897 = vadd.f32 %v5895, %v5896
      %v5898 = vsel %vm2302, %v5808, 0.0
      %v5899 = vadd.f32 %v5897, %v5898
      %v5900 = vsel %vm2302, %v5809, 0.0
      %v5901 = vadd.f32 %v5899, %v5900
      %v5902 = vsel %vm2302, %v5810, 0.0
      %v5903 = vadd.f32 %v5901, %v5902
      %v5904 = vsel %vm2302, %v5811, 0.0
      %v5905 = vadd.f32 %v5903, %v5904
      %v5906 = vsel %vm2302, %v5812, 0.0
      %v5907 = vadd.f32 %v5905, %v5906
      %v5908 = vrot.slane %v5907, 4
      %v5909 = vadd.f32 %v5907, %v5908
      %v5910 = vrot.slane %v5909, 2
      %v5911 = vadd.f32 %v5909, %v5910
      %v5912 = vrot.slane %v5911, 1
      %v5913 = vadd.f32 %v5911, %v5912
      %v5914 = vmul.f32 %v5781, %v5781
      %v5915 = vmul.f32 %v5782, %v5782
      %v5916 = vmul.f32 %v5783, %v5783
      %v5917 = vmul.f32 %v5784, %v5784
      %v5918 = vmul.f32 %v5785, %v5785
      %v5919 = vmul.f32 %v5786, %v5786
      %v5920 = vmul.f32 %v5787, %v5787
      %v5921 = vmul.f32 %v5788, %v5788
      %v5922 = vmul.f32 %v5789, %v5789
      %v5923 = vmul.f32 %v5790, %v5790
      %v5924 = vmul.f32 %v5791, %v5791
      %v5925 = vmul.f32 %v5792, %v5792
      %v5926 = vmul.f32 %v5793, %v5793
      %v5927 = vmul.f32 %v5794, %v5794
      %v5928 = vmul.f32 %v5795, %v5795
      %v5929 = vmul.f32 %v5796, %v5796
      %v5930 = vmul.f32 %v5797, %v5797
      %v5931 = vmul.f32 %v5798, %v5798
      %v5932 = vmul.f32 %v5799, %v5799
      %v5933 = vmul.f32 %v5800, %v5800
      %v5934 = vmul.f32 %v5801, %v5801
      %v5935 = vmul.f32 %v5802, %v5802
      %v5936 = vmul.f32 %v5803, %v5803
      %v5937 = vmul.f32 %v5804, %v5804
      %v5938 = vmul.f32 %v5805, %v5805
      %v5939 = vmul.f32 %v5806, %v5806
      %v5940 = vmul.f32 %v5807, %v5807
      %v5941 = vmul.f32 %v5808, %v5808
      %v5942 = vmul.f32 %v5809, %v5809
      %v5943 = vmul.f32 %v5810, %v5810
      %v5944 = vmul.f32 %v5811, %v5811
      %v5945 = vmul.f32 %v5812, %v5812
      %v5946 = vsel %vm2302, %v5914, 0.0
      %v5947 = vsel %vm2302, %v5915, 0.0
      %v5948 = vadd.f32 %v5946, %v5947
      %v5949 = vsel %vm2302, %v5916, 0.0
      %v5950 = vadd.f32 %v5948, %v5949
      %v5951 = vsel %vm2302, %v5917, 0.0
      %v5952 = vadd.f32 %v5950, %v5951
      %v5953 = vsel %vm2302, %v5918, 0.0
      %v5954 = vadd.f32 %v5952, %v5953
      %v5955 = vsel %vm2302, %v5919, 0.0
      %v5956 = vadd.f32 %v5954, %v5955
      %v5957 = vsel %vm2302, %v5920, 0.0
      %v5958 = vadd.f32 %v5956, %v5957
      %v5959 = vsel %vm2302, %v5921, 0.0
      %v5960 = vadd.f32 %v5958, %v5959
      %v5961 = vsel %vm2302, %v5922, 0.0
      %v5962 = vadd.f32 %v5960, %v5961
      %v5963 = vsel %vm2302, %v5923, 0.0
      %v5964 = vadd.f32 %v5962, %v5963
      %v5965 = vsel %vm2302, %v5924, 0.0
      %v5966 = vadd.f32 %v5964, %v5965
      %v5967 = vsel %vm2302, %v5925, 0.0
      %v5968 = vadd.f32 %v5966, %v5967
      %v5969 = vsel %vm2302, %v5926, 0.0
      %v5970 = vadd.f32 %v5968, %v5969
      %v5971 = vsel %vm2302, %v5927, 0.0
      %v5972 = vadd.f32 %v5970, %v5971
      %v5973 = vsel %vm2302, %v5928, 0.0
      %v5974 = vadd.f32 %v5972, %v5973
      %v5975 = vsel %vm2302, %v5929, 0.0
      %v5976 = vadd.f32 %v5974, %v5975
      %v5977 = vsel %vm2302, %v5930, 0.0
      %v5978 = vadd.f32 %v5976, %v5977
      %v5979 = vsel %vm2302, %v5931, 0.0
      %v5980 = vadd.f32 %v5978, %v5979
      %v5981 = vsel %vm2302, %v5932, 0.0
      %v5982 = vadd.f32 %v5980, %v5981
      %v5983 = vsel %vm2302, %v5933, 0.0
      %v5984 = vadd.f32 %v5982, %v5983
      %v5985 = vsel %vm2302, %v5934, 0.0
      %v5986 = vadd.f32 %v5984, %v5985
      %v5987 = vsel %vm2302, %v5935, 0.0
      %v5988 = vadd.f32 %v5986, %v5987
      %v5989 = vsel %vm2302, %v5936, 0.0
      %v5990 = vadd.f32 %v5988, %v5989
      %v5991 = vsel %vm2302, %v5937, 0.0
      %v5992 = vadd.f32 %v5990, %v5991
      %v5993 = vsel %vm2302, %v5938, 0.0
      %v5994 = vadd.f32 %v5992, %v5993
      %v5995 = vsel %vm2302, %v5939, 0.0
      %v5996 = vadd.f32 %v5994, %v5995
      %v5997 = vsel %vm2302, %v5940, 0.0
      %v5998 = vadd.f32 %v5996, %v5997
      %v5999 = vsel %vm2302, %v5941, 0.0
      %v6000 = vadd.f32 %v5998, %v5999
      %v6001 = vsel %vm2302, %v5942, 0.0
      %v6002 = vadd.f32 %v6000, %v6001
      %v6003 = vsel %vm2302, %v5943, 0.0
      %v6004 = vadd.f32 %v6002, %v6003
      %v6005 = vsel %vm2302, %v5944, 0.0
      %v6006 = vadd.f32 %v6004, %v6005
      %v6007 = vsel %vm2302, %v5945, 0.0
      %v6008 = vadd.f32 %v6006, %v6007
      %v6009 = vrot.slane %v6008, 4
      %v6010 = vadd.f32 %v6008, %v6009
      %v6011 = vrot.slane %v6010, 2
      %v6012 = vadd.f32 %v6010, %v6011
      %v6013 = vrot.slane %v6012, 1
      %v6014 = vadd.f32 %v6012, %v6013
      %vm6015 = vcmask 1040384
      %v6016 = vsel %vm6015, %v5913, %v6014
      %vm6017 = vcmask 1041408
      %v6018 = vsel %vm6017, %v6016, 0.0
      %6019 = vst.msk [vmem:[%s567] sm:$0xff] %vm2302, %v6018
      %s6020 = smul.u32 32, %s22
      %p6021 = scmp.lt.s32.totalorder %s6020, 95
      %s6022 = scalar_select %p6021, %s6020, 95
      %s6023 = smul.addr %s6022, 8
      %s6024 = scalar_lea.vmem %s9, %s6023
      %p6025 = scmp.lt.s32.totalorder %s22, 2
      %s6026 = scalar_select %p6025, %s22, 2
      %s6027 = smul.addr %s6026, 8
      %s6028 = scalar_lea.vmem %s10, %s6027
      // Predicated region
      $region57: #{bottleneck_forward.5} parent=55 // pred_check
        %p6029 = pneg %p283
      $region58: #{bottleneck_forward.5} parent=55 // pred_check_branch
        %6031 = sbr.rel (%p6029) target = $region60
      $region59: #{bottleneck_forward.5} parent=55 // pred_region
        %s6032 = smul.u32 32, %s22
      $region60: #{bottleneck_forward.5} parent=55 // pred_fallthru
        _
      // Predicated region
      $region61: #{bottleneck_forward.5} parent=55 // pred_check
        %p6033 = pneg %p309
      $region62: #{bottleneck_forward.5} parent=55 // pred_check_branch
        %6035 = sbr.rel (%p6033) target = $region64
      $region63: #{bottleneck_forward.5} parent=55 // pred_region
        _
      $region64: #{bottleneck_forward.5} parent=55 // pred_fallthru
        _
    $region56: #{bottleneck_forward.5} parent=5 // pred_fallthru
      _
    %p6036 = scmp.le.s32.totalorder 2, %s17
    // Predicated region
    $region65: #{bottleneck_forward.5} parent=5 // pred_check
      %p6037 = pneg %p6036
    $region66: #{bottleneck_forward.5} parent=5 // pred_check_branch
      %6039 = sbr.rel (%p6037) target = $region68
    $region67: #{bottleneck_forward.5} parent=5 // pred_region
      %s6040 = ssub.s32 %s17, 2
      // Predicated region
      $region69: #{bottleneck_forward.5} parent=67 // pred_check
        %p6041 = pneg %p289
      $region70: #{bottleneck_forward.5} parent=67 // pred_check_branch
        %6043 = sbr.rel (%p6041) target = $region72
      $region71: #{bottleneck_forward.5} parent=67 // pred_region
        %s6044 = smul.u32 32, %s23
        %p6045 = scmp.lt.s32.totalorder %s6044, 95
        %s6046 = scalar_select %p6045, %s6044, 95
        %s6047 = smul.addr %s6046, 8
        %s6048 = scalar_lea.vmem %s9, %s6047
      $region72: #{bottleneck_forward.5} parent=67 // pred_fallthru
        _
      // Predicated region
      $region73: #{bottleneck_forward.5} parent=67 // pred_check
        %p6049 = pneg %p315
      $region74: #{bottleneck_forward.5} parent=67 // pred_check_branch
        %6051 = sbr.rel (%p6049) target = $region76
      $region75: #{bottleneck_forward.5} parent=67 // pred_region
        %p6052 = scmp.lt.s32.totalorder %s23, 2
        %s6053 = scalar_select %p6052, %s23, 2
        %s6054 = smul.addr %s6053, 8
        %s6055 = scalar_lea.vmem %s10, %s6054
      $region76: #{bottleneck_forward.5} parent=67 // pred_fallthru
        _
    $region68: #{bottleneck_forward.5} parent=5 // pred_fallthru
      _
  $region6: #{bottleneck_forward.5} parent=0 // loop_footer
    %s21 = sadd.s32 1, %s17
  $region7: #{bottleneck_forward.5} parent=0 // loop_footer_branch
    %16 = sbr.rel target = $region3
  $region8: #{bottleneck_forward.5} parent=0 // loop_exit
    _

</llo_original>
